<compile_context>
chip_gen: v7x
topology: tpu7x:2x2x1
jax: 0.10.0
libtpu: 0.0.40
codegen_flags: <defaults>
</compile_context>

<pallas_src>
import jax
import jax.numpy as jnp
from jax.experimental import pallas as pl
from jax.experimental.pallas import tpu as pltpu

NUM_CLASSES = 10
CIN = 3
COUT = 16                    # conv output channels
H = W = 64                   # fc1 = 16*32*32 forces a 64x64 input image
PH = PW = H // 2             # pooled spatial = 32
S = PH * PW                  # 1024 pooled positions per image
KDIM = CIN * 3 * 3           # 27 real im2col taps
KPAD = 32                    # padded taps per pooling phase -> 4*32 = 128 contraction
FC1 = 128
FC2 = 64
KFULL = COUT * S             # 16384 fc1 contraction length
KT = 2                       # fc1 K tiles (grid steps)
TK = KFULL // KT             # 8192 per-step K tile


# ---------------------------------------------------------------------------
# Fused kernel: conv+pool (step 0) -> fc1 K-tiled accumulation -> fc2 -> fc3
# ---------------------------------------------------------------------------
def fused_kernel(patches_ref, wbd_ref, bconv_ref,
                 w1_ref, b1_ref, w2_ref, b2_ref, w3_ref, b3_ref,
                 o_ref, pooled_ref, acc_ref):
    nb = pooled_ref.shape[0]
    k = pl.program_id(0)

    # ---- step 0: conv3x3(pad=1) + bias + ReLU + maxpool2x2, all images ------
    @pl.when(k == 0)
    def _():
        acc_ref[...] = jnp.zeros_like(acc_ref)
        # one block-diagonal MXU matmul covering all 4 pooling phases & images:
        y = jnp.dot(wbd_ref[...], patches_ref[...],          # (64,128)@(128,B*1024)
                    preferred_element_type=jnp.float32)      # -> (64, B*1024) f32
        m = jnp.maximum(jnp.maximum(y[0 * COUT:1 * COUT], y[1 * COUT:2 * COUT]),
                        jnp.maximum(y[2 * COUT:3 * COUT], y[3 * COUT:4 * COUT]))
        # relu(max(conv) + b) == maxpool(relu(conv + b)): bias is constant over
        # the pool window and ReLU is monotone.
        m = jnp.maximum(m + bconv_ref[...], 0.0)             # (COUT, B*S) f32
        # scatter once into PyTorch flatten order: pooled[b, c*S + s]
        for b in range(nb):
            for c in range(COUT):
                pooled_ref[b:b + 1, c * S:(c + 1) * S] = m[c:c + 1, b * S:(b + 1) * S]

    # ---- every step: fc1 partial — ONE batched dot (B, TK) @ (TK, FC1) -------
    off = pl.multiple_of(k * TK, TK)
    a = pooled_ref[:, pl.ds(off, TK)].astype(jnp.bfloat16)   # (B, TK) bf16
    acc_ref[...] += jnp.dot(a, w1_ref[...],                  # (TK, FC1) bf16 tile
                            preferred_element_type=jnp.float32)

    # ---- last step: bias + ReLU, dropout(eval)=identity, fc2 -> ReLU -> fc3 --
    @pl.when(k == pl.num_programs(0) - 1)
    def _():
        h1 = jnp.maximum(acc_ref[...] + b1_ref[...], 0.0)
        # TODO(synk): nn.Dropout(0.3) is identity under inference/eval semantics.
        h2 = jnp.maximum(jnp.dot(h1, w2_ref[...],
                                 preferred_element_type=jnp.float32) + b2_ref[...],
                         0.0)
        o_ref[...] = (jnp.dot(h2, w3_ref[...],
                              preferred_element_type=jnp.float32) + b3_ref[...])


# ---------------------------------------------------------------------------
# Cheap JAX glue: phase-split im2col (9 contiguous slices + reshape/transpose)
# rows = phase*32 + (ci*9 + kh*3 + kw), cols = image*1024 + pooled pos (y*32+x)
# ---------------------------------------------------------------------------
def _phase_split_patches(x):
    B = x.shape[0]
    xp = jnp.pad(x, ((0, 0), (0, 0), (1, 1), (1, 1)))              # (B,3,66,66)
    taps = [xp[:, :, kh:kh + H, kw:kw + W]                         # 9 shifted views
            for kh in range(3) for kw in range(3)]
    v = jnp.stack(taps, axis=2)                                    # (B,3,9,64,64)
    v = v.reshape(B, CIN, 9, PH, 2, PW, 2)                         # b,ci,t,py,dy,px,dx
    v = v.transpose(4, 6, 1, 2, 0, 3, 5)                           # dy,dx,ci,t,b,py,px
    p = v.reshape(4, KDIM, B, S)
    p = jnp.pad(p, ((0, 0), (0, KPAD - KDIM), (0, 0), (0, 0)))     # zero taps 27..31
    return p.reshape(4 * KPAD, B * S)                              # (128, B*1024)


@jax.jit
def image_nn_forward(x, params):
    B = x.shape[0]
    patches = _phase_split_patches(x).astype(jnp.bfloat16)         # (128, B*S) bf16

    wk = params["w_conv"].reshape(COUT, KDIM)                      # (16,27)
    wk = jnp.pad(wk, ((0, 0), (0, KPAD - KDIM)))                   # (16,32)
    wbd = jnp.kron(jnp.eye(4, dtype=wk.dtype), wk).astype(jnp.bfloat16)  # (64,128)
    bconv = params["b_conv"].reshape(COUT, 1)
    w1 = params["w1"].astype(jnp.bfloat16)                         # (16384,128) bf16
    b1 = params["b1"].reshape(1, FC1)
    b2 = params["b2"].reshape(1, FC2)
    b3 = params["b3"].reshape(1, NUM_CLASSES)

    return pl.pallas_call(
        fused_kernel,
        out_shape=jax.ShapeDtypeStruct((B, NUM_CLASSES), jnp.float32),
        grid_spec=pltpu.PrefetchScalarGridSpec(
            num_scalar_prefetch=0,
            grid=(KT,),
            in_specs=[
                pl.BlockSpec((4 * KPAD, B * S), lambda k: (0, 0)),        # patches
                pl.BlockSpec((4 * COUT, 4 * KPAD), lambda k: (0, 0)),     # wbd
                pl.BlockSpec((COUT, 1), lambda k: (0, 0)),                # bconv
                pl.BlockSpec((TK, FC1), lambda k: (k, 0)),                # w1 K tile
                pl.BlockSpec((1, FC1), lambda k: (0, 0)),                 # b1
                pl.BlockSpec((FC1, FC2), lambda k: (0, 0)),               # w2
                pl.BlockSpec((1, FC2), lambda k: (0, 0)),                 # b2
                pl.BlockSpec((FC2, NUM_CLASSES), lambda k: (0, 0)),       # w3
                pl.BlockSpec((1, NUM_CLASSES), lambda k: (0, 0)),         # b3
            ],
            out_specs=pl.BlockSpec((B, NUM_CLASSES), lambda k: (0, 0)),
            scratch_shapes=[pltpu.VMEM((B, KFULL), jnp.float32),   # pooled, flat
                            pltpu.VMEM((B, FC1), jnp.float32)],    # fc1 accumulator
        ),
        compiler_params=pltpu.CompilerParams(
            dimension_semantics=("arbitrary",)),
    )(patches, wbd, bconv, w1, b1, params["w2"], b2, params["w3"], b3)


# ---------------------------------------------------------------------------
# Pure-JAX reference (mirrors the PyTorch forward exactly, eval-mode dropout)
# ---------------------------------------------------------------------------
def reference_forward(x, p):
    y = jax.lax.conv_general_dilated(
        x, p["w_conv"], window_strides=(1, 1), padding=((1, 1), (1, 1)),
        dimension_numbers=("NCHW", "OIHW", "NCHW"))
    y = jnp.maximum(y + p["b_conv"][None, :, None, None], 0.0)
    y = y.reshape(y.shape[0], COUT, PH, 2, PW, 2).max(axis=(3, 5))
    flat = y.reshape(y.shape[0], -1)
    h1 = jnp.maximum(flat @ p["w1"] + p["b1"], 0.0)
    h2 = jnp.maximum(h1 @ p["w2"] + p["b2"], 0.0)
    return h2 @ p["w3"] + p["b3"]


if __name__ == "__main__":
    key = jax.random.PRNGKey(0)
    keys = jax.random.split(key, 9)

    def init(k, shape, fan_in):
        bound = 1.0 / (fan_in ** 0.5)
        return jax.random.uniform(k, shape, jnp.float32, -bound, bound)

    params = {
        "w_conv": init(keys[0], (COUT, CIN, 3, 3), CIN * 9),
        "b_conv": init(keys[1], (COUT,), CIN * 9),
        "w1": init(keys[2], (COUT * S, FC1), COUT * S),
        "b1": init(keys[3], (FC1,), COUT * S),
        "w2": init(keys[4], (FC1, FC2), FC1),
        "b2": init(keys[5], (FC2,), FC1),
        "w3": init(keys[6], (FC2, NUM_CLASSES), FC2),
        "b3": init(keys[7], (NUM_CLASSES,), FC2),
    }

    x = jax.random.normal(keys[8], (2, CIN, H, W), jnp.float32)

    out = image_nn_forward(x, params)
    jax.block_until_ready(out)
    assert out.shape == (2, NUM_CLASSES) and out.dtype == jnp.float32

    ref = reference_forward(x, params)
    # tolerance relaxed vs. pure f32: fc1 weights / patches are streamed as bf16
    # (accumulation stays f32); measured error is O(1e-3) on the logits.
    assert jnp.allclose(out, ref, rtol=1e-2, atol=1e-2), (out, ref)

    print("KERNEL_OK")
</pallas_src>

<mosaic_0001>
module attributes {stable_mosaic.version = 11 : i64} {
  func.func @fused_kernel(%arg0: i32, %arg1: memref<128x2048xbf16, #tpu.memory_space<vmem>>, %arg2: memref<64x128xbf16, #tpu.memory_space<vmem>>, %arg3: memref<16x1xf32, #tpu.memory_space<vmem>>, %arg4: memref<8192x128xbf16, #tpu.memory_space<vmem>>, %arg5: memref<1x128xf32, #tpu.memory_space<vmem>>, %arg6: memref<128x64xf32, #tpu.memory_space<vmem>>, %arg7: memref<1x64xf32, #tpu.memory_space<vmem>>, %arg8: memref<64x10xf32, #tpu.memory_space<vmem>>, %arg9: memref<1x10xf32, #tpu.memory_space<vmem>>, %arg10: memref<2x10xf32, #tpu.memory_space<vmem>>, %arg11: memref<2x16384xf32, #tpu.memory_space<vmem>>, %arg12: memref<2x128xf32, #tpu.memory_space<vmem>>) attributes {dimension_semantics = [#tpu.dimension_semantics<arbitrary>], iteration_bounds = array<i64: 2>, scalar_prefetch = 0 : i64, scratch_operands = 2 : i64, tpu.core_type = #tpu.core_type<tc>, window_params = [{pipeline_mode = #tpu.pipeline_mode<synchronous>, transform_indices = @transform_0, window_bounds = array<i64: 128, 2048>}, {pipeline_mode = #tpu.pipeline_mode<synchronous>, transform_indices = @transform_1, window_bounds = array<i64: 64, 128>}, {pipeline_mode = #tpu.pipeline_mode<synchronous>, transform_indices = @transform_2, window_bounds = array<i64: 16, 1>}, {transform_indices = @transform_3, window_bounds = array<i64: 8192, 128>}, {pipeline_mode = #tpu.pipeline_mode<synchronous>, transform_indices = @transform_4, window_bounds = array<i64: 1, 128>}, {pipeline_mode = #tpu.pipeline_mode<synchronous>, transform_indices = @transform_5, window_bounds = array<i64: 128, 64>}, {pipeline_mode = #tpu.pipeline_mode<synchronous>, transform_indices = @transform_6, window_bounds = array<i64: 1, 64>}, {pipeline_mode = #tpu.pipeline_mode<synchronous>, transform_indices = @transform_7, window_bounds = array<i64: 64, 10>}, {pipeline_mode = #tpu.pipeline_mode<synchronous>, transform_indices = @transform_8, window_bounds = array<i64: 1, 10>}, {pipeline_mode = #tpu.pipeline_mode<synchronous>, transform_indices = @transform_9, window_bounds = array<i64: 2, 10>}]} {
    %c0_i32 = arith.constant 0 : i32
    %0 = arith.cmpi eq, %arg0, %c0_i32 : i32
    %1 = arith.extui %0 : i1 to i32
    %c0_i32_0 = arith.constant 0 : i32
    %2 = arith.cmpi ne, %1, %c0_i32_0 : i32
    scf.if %2 {
      %cst_8 = arith.constant 0.000000e+00 : f32
      %16 = vector.broadcast %cst_8 : f32 to vector<2x128xf32>
      %c0_9 = arith.constant 0 : index
      %c0_10 = arith.constant 0 : index
      %17 = vector.load %arg12[%c0_9, %c0_10] : memref<2x128xf32, #tpu.memory_space<vmem>>, vector<2x128xf32>
      tpu.vector_store %arg12[%c0_9, %c0_10], %16 {strides = array<i32>} : memref<2x128xf32, #tpu.memory_space<vmem>>, vector<2x128xf32>,
      %c0_11 = arith.constant 0 : index
      %c0_12 = arith.constant 0 : index
      %18 = vector.load %arg2[%c0_11, %c0_12] : memref<64x128xbf16, #tpu.memory_space<vmem>>, vector<64x128xbf16>
      %c0_13 = arith.constant 0 : index
      %c0_14 = arith.constant 0 : index
      %19 = vector.load %arg1[%c0_13, %c0_14] : memref<128x2048xbf16, #tpu.memory_space<vmem>>, vector<128x2048xbf16>
      %cst_15 = arith.constant dense<0.000000e+00> : vector<64x2048xf32>
      %20 = tpu.matmul %18, %19, %cst_15 {dimension_numbers = #tpu.dot_dimension_numbers<[1], [0], [0], [1], [0, 0, 1, 1], [], []>} : vector<64x128xbf16>, vector<128x2048xbf16>, vector<64x2048xf32> -> vector<64x2048xf32>
      %21 = vector.extract_strided_slice %20 {offsets = [0, 0], sizes = [16, 2048], strides = [1, 1]} : vector<64x2048xf32> to vector<16x2048xf32>
      %22 = vector.extract_strided_slice %20 {offsets = [16, 0], sizes = [16, 2048], strides = [1, 1]} : vector<64x2048xf32> to vector<16x2048xf32>
      %23 = arith.maximumf %21, %22 : vector<16x2048xf32>
      %24 = vector.extract_strided_slice %20 {offsets = [32, 0], sizes = [16, 2048], strides = [1, 1]} : vector<64x2048xf32> to vector<16x2048xf32>
      %25 = vector.extract_strided_slice %20 {offsets = [48, 0], sizes = [16, 2048], strides = [1, 1]} : vector<64x2048xf32> to vector<16x2048xf32>
      %26 = arith.maximumf %24, %25 : vector<16x2048xf32>
      %27 = arith.maximumf %23, %26 : vector<16x2048xf32>
      %c0_16 = arith.constant 0 : index
      %c0_17 = arith.constant 0 : index
      %28 = vector.load %arg3[%c0_16, %c0_17] : memref<16x1xf32, #tpu.memory_space<vmem>>, vector<16x1xf32>
      %29 = vector.broadcast %28 : vector<16x1xf32> to vector<16x2048xf32>
      %30 = arith.addf %27, %29 : vector<16x2048xf32>
      %cst_18 = arith.constant 0.000000e+00 : f32
      %31 = vector.broadcast %cst_18 : f32 to vector<16x2048xf32>
      %32 = arith.maximumf %30, %31 : vector<16x2048xf32>
      %33 = vector.extract_strided_slice %32 {offsets = [0, 0], sizes = [1, 1024], strides = [1, 1]} : vector<16x2048xf32> to vector<1x1024xf32>
      %c0_19 = arith.constant 0 : index
      %c0_20 = arith.constant 0 : index
      %34 = vector.load %arg11[%c0_19, %c0_20] : memref<2x16384xf32, #tpu.memory_space<vmem>>, vector<1x1024xf32>
      tpu.vector_store %arg11[%c0_19, %c0_20], %33 {strides = array<i32>} : memref<2x16384xf32, #tpu.memory_space<vmem>>, vector<1x1024xf32>,
      %35 = vector.extract_strided_slice %32 {offsets = [1, 0], sizes = [1, 1024], strides = [1, 1]} : vector<16x2048xf32> to vector<1x1024xf32>
      %c0_21 = arith.constant 0 : index
      %c1024 = arith.constant 1024 : index
      %36 = vector.load %arg11[%c0_21, %c1024] : memref<2x16384xf32, #tpu.memory_space<vmem>>, vector<1x1024xf32>
      tpu.vector_store %arg11[%c0_21, %c1024], %35 {strides = array<i32>} : memref<2x16384xf32, #tpu.memory_space<vmem>>, vector<1x1024xf32>,
      %37 = vector.extract_strided_slice %32 {offsets = [2, 0], sizes = [1, 1024], strides = [1, 1]} : vector<16x2048xf32> to vector<1x1024xf32>
      %c0_22 = arith.constant 0 : index
      %c2048 = arith.constant 2048 : index
      %38 = vector.load %arg11[%c0_22, %c2048] : memref<2x16384xf32, #tpu.memory_space<vmem>>, vector<1x1024xf32>
      tpu.vector_store %arg11[%c0_22, %c2048], %37 {strides = array<i32>} : memref<2x16384xf32, #tpu.memory_space<vmem>>, vector<1x1024xf32>,
      %39 = vector.extract_strided_slice %32 {offsets = [3, 0], sizes = [1, 1024], strides = [1, 1]} : vector<16x2048xf32> to vector<1x1024xf32>
      %c0_23 = arith.constant 0 : index
      %c3072 = arith.constant 3072 : index
      %40 = vector.load %arg11[%c0_23, %c3072] : memref<2x16384xf32, #tpu.memory_space<vmem>>, vector<1x1024xf32>
      tpu.vector_store %arg11[%c0_23, %c3072], %39 {strides = array<i32>} : memref<2x16384xf32, #tpu.memory_space<vmem>>, vector<1x1024xf32>,
      %41 = vector.extract_strided_slice %32 {offsets = [4, 0], sizes = [1, 1024], strides = [1, 1]} : vector<16x2048xf32> to vector<1x1024xf32>
      %c0_24 = arith.constant 0 : index
      %c4096 = arith.constant 4096 : index
      %42 = vector.load %arg11[%c0_24, %c4096] : memref<2x16384xf32, #tpu.memory_space<vmem>>, vector<1x1024xf32>
      tpu.vector_store %arg11[%c0_24, %c4096], %41 {strides = array<i32>} : memref<2x16384xf32, #tpu.memory_space<vmem>>, vector<1x1024xf32>,
      %43 = vector.extract_strided_slice %32 {offsets = [5, 0], sizes = [1, 1024], strides = [1, 1]} : vector<16x2048xf32> to vector<1x1024xf32>
      %c0_25 = arith.constant 0 : index
      %c5120 = arith.constant 5120 : index
      %44 = vector.load %arg11[%c0_25, %c5120] : memref<2x16384xf32, #tpu.memory_space<vmem>>, vector<1x1024xf32>
      tpu.vector_store %arg11[%c0_25, %c5120], %43 {strides = array<i32>} : memref<2x16384xf32, #tpu.memory_space<vmem>>, vector<1x1024xf32>,
      %45 = vector.extract_strided_slice %32 {offsets = [6, 0], sizes = [1, 1024], strides = [1, 1]} : vector<16x2048xf32> to vector<1x1024xf32>
      %c0_26 = arith.constant 0 : index
      %c6144 = arith.constant 6144 : index
      %46 = vector.load %arg11[%c0_26, %c6144] : memref<2x16384xf32, #tpu.memory_space<vmem>>, vector<1x1024xf32>
      tpu.vector_store %arg11[%c0_26, %c6144], %45 {strides = array<i32>} : memref<2x16384xf32, #tpu.memory_space<vmem>>, vector<1x1024xf32>,
      %47 = vector.extract_strided_slice %32 {offsets = [7, 0], sizes = [1, 1024], strides = [1, 1]} : vector<16x2048xf32> to vector<1x1024xf32>
      %c0_27 = arith.constant 0 : index
      %c7168 = arith.constant 7168 : index
      %48 = vector.load %arg11[%c0_27, %c7168] : memref<2x16384xf32, #tpu.memory_space<vmem>>, vector<1x1024xf32>
      tpu.vector_store %arg11[%c0_27, %c7168], %47 {strides = array<i32>} : memref<2x16384xf32, #tpu.memory_space<vmem>>, vector<1x1024xf32>,
      %49 = vector.extract_strided_slice %32 {offsets = [8, 0], sizes = [1, 1024], strides = [1, 1]} : vector<16x2048xf32> to vector<1x1024xf32>
      %c0_28 = arith.constant 0 : index
      %c8192 = arith.constant 8192 : index
      %50 = vector.load %arg11[%c0_28, %c8192] : memref<2x16384xf32, #tpu.memory_space<vmem>>, vector<1x1024xf32>
      tpu.vector_store %arg11[%c0_28, %c8192], %49 {strides = array<i32>} : memref<2x16384xf32, #tpu.memory_space<vmem>>, vector<1x1024xf32>,
      %51 = vector.extract_strided_slice %32 {offsets = [9, 0], sizes = [1, 1024], strides = [1, 1]} : vector<16x2048xf32> to vector<1x1024xf32>
      %c0_29 = arith.constant 0 : index
      %c9216 = arith.constant 9216 : index
      %52 = vector.load %arg11[%c0_29, %c9216] : memref<2x16384xf32, #tpu.memory_space<vmem>>, vector<1x1024xf32>
      tpu.vector_store %arg11[%c0_29, %c9216], %51 {strides = array<i32>} : memref<2x16384xf32, #tpu.memory_space<vmem>>, vector<1x1024xf32>,
      %53 = vector.extract_strided_slice %32 {offsets = [10, 0], sizes = [1, 1024], strides = [1, 1]} : vector<16x2048xf32> to vector<1x1024xf32>
      %c0_30 = arith.constant 0 : index
      %c10240 = arith.constant 10240 : index
      %54 = vector.load %arg11[%c0_30, %c10240] : memref<2x16384xf32, #tpu.memory_space<vmem>>, vector<1x1024xf32>
      tpu.vector_store %arg11[%c0_30, %c10240], %53 {strides = array<i32>} : memref<2x16384xf32, #tpu.memory_space<vmem>>, vector<1x1024xf32>,
      %55 = vector.extract_strided_slice %32 {offsets = [11, 0], sizes = [1, 1024], strides = [1, 1]} : vector<16x2048xf32> to vector<1x1024xf32>
      %c0_31 = arith.constant 0 : index
      %c11264 = arith.constant 11264 : index
      %56 = vector.load %arg11[%c0_31, %c11264] : memref<2x16384xf32, #tpu.memory_space<vmem>>, vector<1x1024xf32>
      tpu.vector_store %arg11[%c0_31, %c11264], %55 {strides = array<i32>} : memref<2x16384xf32, #tpu.memory_space<vmem>>, vector<1x1024xf32>,
      %57 = vector.extract_strided_slice %32 {offsets = [12, 0], sizes = [1, 1024], strides = [1, 1]} : vector<16x2048xf32> to vector<1x1024xf32>
      %c0_32 = arith.constant 0 : index
      %c12288 = arith.constant 12288 : index
      %58 = vector.load %arg11[%c0_32, %c12288] : memref<2x16384xf32, #tpu.memory_space<vmem>>, vector<1x1024xf32>
      tpu.vector_store %arg11[%c0_32, %c12288], %57 {strides = array<i32>} : memref<2x16384xf32, #tpu.memory_space<vmem>>, vector<1x1024xf32>,
      %59 = vector.extract_strided_slice %32 {offsets = [13, 0], sizes = [1, 1024], strides = [1, 1]} : vector<16x2048xf32> to vector<1x1024xf32>
      %c0_33 = arith.constant 0 : index
      %c13312 = arith.constant 13312 : index
      %60 = vector.load %arg11[%c0_33, %c13312] : memref<2x16384xf32, #tpu.memory_space<vmem>>, vector<1x1024xf32>
      tpu.vector_store %arg11[%c0_33, %c13312], %59 {strides = array<i32>} : memref<2x16384xf32, #tpu.memory_space<vmem>>, vector<1x1024xf32>,
      %61 = vector.extract_strided_slice %32 {offsets = [14, 0], sizes = [1, 1024], strides = [1, 1]} : vector<16x2048xf32> to vector<1x1024xf32>
      %c0_34 = arith.constant 0 : index
      %c14336 = arith.constant 14336 : index
      %62 = vector.load %arg11[%c0_34, %c14336] : memref<2x16384xf32, #tpu.memory_space<vmem>>, vector<1x1024xf32>
      tpu.vector_store %arg11[%c0_34, %c14336], %61 {strides = array<i32>} : memref<2x16384xf32, #tpu.memory_space<vmem>>, vector<1x1024xf32>,
      %63 = vector.extract_strided_slice %32 {offsets = [15, 0], sizes = [1, 1024], strides = [1, 1]} : vector<16x2048xf32> to vector<1x1024xf32>
      %c0_35 = arith.constant 0 : index
      %c15360 = arith.constant 15360 : index
      %64 = vector.load %arg11[%c0_35, %c15360] : memref<2x16384xf32, #tpu.memory_space<vmem>>, vector<1x1024xf32>
      tpu.vector_store %arg11[%c0_35, %c15360], %63 {strides = array<i32>} : memref<2x16384xf32, #tpu.memory_space<vmem>>, vector<1x1024xf32>,
      %65 = vector.extract_strided_slice %32 {offsets = [0, 1024], sizes = [1, 1024], strides = [1, 1]} : vector<16x2048xf32> to vector<1x1024xf32>
      %c1 = arith.constant 1 : index
      %c0_36 = arith.constant 0 : index
      %66 = vector.load %arg11[%c1, %c0_36] : memref<2x16384xf32, #tpu.memory_space<vmem>>, vector<1x1024xf32>
      tpu.vector_store %arg11[%c1, %c0_36], %65 {strides = array<i32>} : memref<2x16384xf32, #tpu.memory_space<vmem>>, vector<1x1024xf32>,
      %67 = vector.extract_strided_slice %32 {offsets = [1, 1024], sizes = [1, 1024], strides = [1, 1]} : vector<16x2048xf32> to vector<1x1024xf32>
      %c1_37 = arith.constant 1 : index
      %c1024_38 = arith.constant 1024 : index
      %68 = vector.load %arg11[%c1_37, %c1024_38] : memref<2x16384xf32, #tpu.memory_space<vmem>>, vector<1x1024xf32>
      tpu.vector_store %arg11[%c1_37, %c1024_38], %67 {strides = array<i32>} : memref<2x16384xf32, #tpu.memory_space<vmem>>, vector<1x1024xf32>,
      %69 = vector.extract_strided_slice %32 {offsets = [2, 1024], sizes = [1, 1024], strides = [1, 1]} : vector<16x2048xf32> to vector<1x1024xf32>
      %c1_39 = arith.constant 1 : index
      %c2048_40 = arith.constant 2048 : index
      %70 = vector.load %arg11[%c1_39, %c2048_40] : memref<2x16384xf32, #tpu.memory_space<vmem>>, vector<1x1024xf32>
      tpu.vector_store %arg11[%c1_39, %c2048_40], %69 {strides = array<i32>} : memref<2x16384xf32, #tpu.memory_space<vmem>>, vector<1x1024xf32>,
      %71 = vector.extract_strided_slice %32 {offsets = [3, 1024], sizes = [1, 1024], strides = [1, 1]} : vector<16x2048xf32> to vector<1x1024xf32>
      %c1_41 = arith.constant 1 : index
      %c3072_42 = arith.constant 3072 : index
      %72 = vector.load %arg11[%c1_41, %c3072_42] : memref<2x16384xf32, #tpu.memory_space<vmem>>, vector<1x1024xf32>
      tpu.vector_store %arg11[%c1_41, %c3072_42], %71 {strides = array<i32>} : memref<2x16384xf32, #tpu.memory_space<vmem>>, vector<1x1024xf32>,
      %73 = vector.extract_strided_slice %32 {offsets = [4, 1024], sizes = [1, 1024], strides = [1, 1]} : vector<16x2048xf32> to vector<1x1024xf32>
      %c1_43 = arith.constant 1 : index
      %c4096_44 = arith.constant 4096 : index
      %74 = vector.load %arg11[%c1_43, %c4096_44] : memref<2x16384xf32, #tpu.memory_space<vmem>>, vector<1x1024xf32>
      tpu.vector_store %arg11[%c1_43, %c4096_44], %73 {strides = array<i32>} : memref<2x16384xf32, #tpu.memory_space<vmem>>, vector<1x1024xf32>,
      %75 = vector.extract_strided_slice %32 {offsets = [5, 1024], sizes = [1, 1024], strides = [1, 1]} : vector<16x2048xf32> to vector<1x1024xf32>
      %c1_45 = arith.constant 1 : index
      %c5120_46 = arith.constant 5120 : index
      %76 = vector.load %arg11[%c1_45, %c5120_46] : memref<2x16384xf32, #tpu.memory_space<vmem>>, vector<1x1024xf32>
      tpu.vector_store %arg11[%c1_45, %c5120_46], %75 {strides = array<i32>} : memref<2x16384xf32, #tpu.memory_space<vmem>>, vector<1x1024xf32>,
      %77 = vector.extract_strided_slice %32 {offsets = [6, 1024], sizes = [1, 1024], strides = [1, 1]} : vector<16x2048xf32> to vector<1x1024xf32>
      %c1_47 = arith.constant 1 : index
      %c6144_48 = arith.constant 6144 : index
      %78 = vector.load %arg11[%c1_47, %c6144_48] : memref<2x16384xf32, #tpu.memory_space<vmem>>, vector<1x1024xf32>
      tpu.vector_store %arg11[%c1_47, %c6144_48], %77 {strides = array<i32>} : memref<2x16384xf32, #tpu.memory_space<vmem>>, vector<1x1024xf32>,
      %79 = vector.extract_strided_slice %32 {offsets = [7, 1024], sizes = [1, 1024], strides = [1, 1]} : vector<16x2048xf32> to vector<1x1024xf32>
      %c1_49 = arith.constant 1 : index
      %c7168_50 = arith.constant 7168 : index
      %80 = vector.load %arg11[%c1_49, %c7168_50] : memref<2x16384xf32, #tpu.memory_space<vmem>>, vector<1x1024xf32>
      tpu.vector_store %arg11[%c1_49, %c7168_50], %79 {strides = array<i32>} : memref<2x16384xf32, #tpu.memory_space<vmem>>, vector<1x1024xf32>,
      %81 = vector.extract_strided_slice %32 {offsets = [8, 1024], sizes = [1, 1024], strides = [1, 1]} : vector<16x2048xf32> to vector<1x1024xf32>
      %c1_51 = arith.constant 1 : index
      %c8192_52 = arith.constant 8192 : index
      %82 = vector.load %arg11[%c1_51, %c8192_52] : memref<2x16384xf32, #tpu.memory_space<vmem>>, vector<1x1024xf32>
      tpu.vector_store %arg11[%c1_51, %c8192_52], %81 {strides = array<i32>} : memref<2x16384xf32, #tpu.memory_space<vmem>>, vector<1x1024xf32>,
      %83 = vector.extract_strided_slice %32 {offsets = [9, 1024], sizes = [1, 1024], strides = [1, 1]} : vector<16x2048xf32> to vector<1x1024xf32>
      %c1_53 = arith.constant 1 : index
      %c9216_54 = arith.constant 9216 : index
      %84 = vector.load %arg11[%c1_53, %c9216_54] : memref<2x16384xf32, #tpu.memory_space<vmem>>, vector<1x1024xf32>
      tpu.vector_store %arg11[%c1_53, %c9216_54], %83 {strides = array<i32>} : memref<2x16384xf32, #tpu.memory_space<vmem>>, vector<1x1024xf32>,
      %85 = vector.extract_strided_slice %32 {offsets = [10, 1024], sizes = [1, 1024], strides = [1, 1]} : vector<16x2048xf32> to vector<1x1024xf32>
      %c1_55 = arith.constant 1 : index
      %c10240_56 = arith.constant 10240 : index
      %86 = vector.load %arg11[%c1_55, %c10240_56] : memref<2x16384xf32, #tpu.memory_space<vmem>>, vector<1x1024xf32>
      tpu.vector_store %arg11[%c1_55, %c10240_56], %85 {strides = array<i32>} : memref<2x16384xf32, #tpu.memory_space<vmem>>, vector<1x1024xf32>,
      %87 = vector.extract_strided_slice %32 {offsets = [11, 1024], sizes = [1, 1024], strides = [1, 1]} : vector<16x2048xf32> to vector<1x1024xf32>
      %c1_57 = arith.constant 1 : index
      %c11264_58 = arith.constant 11264 : index
      %88 = vector.load %arg11[%c1_57, %c11264_58] : memref<2x16384xf32, #tpu.memory_space<vmem>>, vector<1x1024xf32>
      tpu.vector_store %arg11[%c1_57, %c11264_58], %87 {strides = array<i32>} : memref<2x16384xf32, #tpu.memory_space<vmem>>, vector<1x1024xf32>,
      %89 = vector.extract_strided_slice %32 {offsets = [12, 1024], sizes = [1, 1024], strides = [1, 1]} : vector<16x2048xf32> to vector<1x1024xf32>
      %c1_59 = arith.constant 1 : index
      %c12288_60 = arith.constant 12288 : index
      %90 = vector.load %arg11[%c1_59, %c12288_60] : memref<2x16384xf32, #tpu.memory_space<vmem>>, vector<1x1024xf32>
      tpu.vector_store %arg11[%c1_59, %c12288_60], %89 {strides = array<i32>} : memref<2x16384xf32, #tpu.memory_space<vmem>>, vector<1x1024xf32>,
      %91 = vector.extract_strided_slice %32 {offsets = [13, 1024], sizes = [1, 1024], strides = [1, 1]} : vector<16x2048xf32> to vector<1x1024xf32>
      %c1_61 = arith.constant 1 : index
      %c13312_62 = arith.constant 13312 : index
      %92 = vector.load %arg11[%c1_61, %c13312_62] : memref<2x16384xf32, #tpu.memory_space<vmem>>, vector<1x1024xf32>
      tpu.vector_store %arg11[%c1_61, %c13312_62], %91 {strides = array<i32>} : memref<2x16384xf32, #tpu.memory_space<vmem>>, vector<1x1024xf32>,
      %93 = vector.extract_strided_slice %32 {offsets = [14, 1024], sizes = [1, 1024], strides = [1, 1]} : vector<16x2048xf32> to vector<1x1024xf32>
      %c1_63 = arith.constant 1 : index
      %c14336_64 = arith.constant 14336 : index
      %94 = vector.load %arg11[%c1_63, %c14336_64] : memref<2x16384xf32, #tpu.memory_space<vmem>>, vector<1x1024xf32>
      tpu.vector_store %arg11[%c1_63, %c14336_64], %93 {strides = array<i32>} : memref<2x16384xf32, #tpu.memory_space<vmem>>, vector<1x1024xf32>,
      %95 = vector.extract_strided_slice %32 {offsets = [15, 1024], sizes = [1, 1024], strides = [1, 1]} : vector<16x2048xf32> to vector<1x1024xf32>
      %c1_65 = arith.constant 1 : index
      %c15360_66 = arith.constant 15360 : index
      %96 = vector.load %arg11[%c1_65, %c15360_66] : memref<2x16384xf32, #tpu.memory_space<vmem>>, vector<1x1024xf32>
      tpu.vector_store %arg11[%c1_65, %c15360_66], %95 {strides = array<i32>} : memref<2x16384xf32, #tpu.memory_space<vmem>>, vector<1x1024xf32>,
    } else {
    }
    %c8192_i32 = arith.constant 8192 : i32
    %3 = arith.muli %arg0, %c8192_i32 : i32
    %4 = tpu.assume_multiple %3, 8192 : i32
    %c0 = arith.constant 0 : index
    %5 = arith.index_cast %4 : i32 to index
    %6 = vector.load %arg11[%c0, %5] : memref<2x16384xf32, #tpu.memory_space<vmem>>, vector<2x8192xf32>
    %7 = arith.truncf %6 : vector<2x8192xf32> to vector<2x8192xbf16>
    %c0_1 = arith.constant 0 : index
    %c0_2 = arith.constant 0 : index
    %8 = vector.load %arg12[%c0_1, %c0_2] : memref<2x128xf32, #tpu.memory_space<vmem>>, vector<2x128xf32>
    %c0_3 = arith.constant 0 : index
    %c0_4 = arith.constant 0 : index
    %9 = vector.load %arg4[%c0_3, %c0_4] : memref<8192x128xbf16, #tpu.memory_space<vmem>>, vector<8192x128xbf16>
    %cst = arith.constant dense<0.000000e+00> : vector<2x128xf32>
    %10 = tpu.matmul %7, %9, %cst {dimension_numbers = #tpu.dot_dimension_numbers<[1], [0], [0], [1], [0, 0, 1, 1], [], []>} : vector<2x8192xbf16>, vector<8192x128xbf16>, vector<2x128xf32> -> vector<2x128xf32>
    %11 = arith.addf %8, %10 : vector<2x128xf32>
    %c0_5 = arith.constant 0 : index
    %c0_6 = arith.constant 0 : index
    %12 = vector.load %arg12[%c0_5, %c0_6] : memref<2x128xf32, #tpu.memory_space<vmem>>, vector<2x128xf32>
    tpu.vector_store %arg12[%c0_5, %c0_6], %11 {strides = array<i32>} : memref<2x128xf32, #tpu.memory_space<vmem>>, vector<2x128xf32>,
    %c1_i32 = arith.constant 1 : i32
    %13 = arith.cmpi eq, %arg0, %c1_i32 : i32
    %14 = arith.extui %13 : i1 to i32
    %c0_i32_7 = arith.constant 0 : i32
    %15 = arith.cmpi ne, %14, %c0_i32_7 : i32
    scf.if %15 {
      %c0_8 = arith.constant 0 : index
      %c0_9 = arith.constant 0 : index
      %16 = vector.load %arg12[%c0_8, %c0_9] : memref<2x128xf32, #tpu.memory_space<vmem>>, vector<2x128xf32>
      %c0_10 = arith.constant 0 : index
      %c0_11 = arith.constant 0 : index
      %17 = vector.load %arg5[%c0_10, %c0_11] : memref<1x128xf32, #tpu.memory_space<vmem>>, vector<1x128xf32>
      %18 = vector.broadcast %17 : vector<1x128xf32> to vector<2x128xf32>
      %19 = arith.addf %16, %18 : vector<2x128xf32>
      %cst_12 = arith.constant 0.000000e+00 : f32
      %20 = vector.broadcast %cst_12 : f32 to vector<2x128xf32>
      %21 = arith.maximumf %19, %20 : vector<2x128xf32>
      %c0_13 = arith.constant 0 : index
      %c0_14 = arith.constant 0 : index
      %22 = vector.load %arg6[%c0_13, %c0_14] : memref<128x64xf32, #tpu.memory_space<vmem>>, vector<128x64xf32>
      %cst_15 = arith.constant dense<0.000000e+00> : vector<2x64xf32>
      %23 = tpu.matmul %21, %22, %cst_15 {dimension_numbers = #tpu.dot_dimension_numbers<[1], [0], [0], [1], [0, 0, 1, 1], [], []>} : vector<2x128xf32>, vector<128x64xf32>, vector<2x64xf32> -> vector<2x64xf32>
      %c0_16 = arith.constant 0 : index
      %c0_17 = arith.constant 0 : index
      %24 = vector.load %arg7[%c0_16, %c0_17] : memref<1x64xf32, #tpu.memory_space<vmem>>, vector<1x64xf32>
      %25 = vector.broadcast %24 : vector<1x64xf32> to vector<2x64xf32>
      %26 = arith.addf %23, %25 : vector<2x64xf32>
      %cst_18 = arith.constant 0.000000e+00 : f32
      %27 = vector.broadcast %cst_18 : f32 to vector<2x64xf32>
      %28 = arith.maximumf %26, %27 : vector<2x64xf32>
      %c0_19 = arith.constant 0 : index
      %c0_20 = arith.constant 0 : index
      %29 = vector.load %arg8[%c0_19, %c0_20] : memref<64x10xf32, #tpu.memory_space<vmem>>, vector<64x10xf32>
      %cst_21 = arith.constant dense<0.000000e+00> : vector<2x10xf32>
      %30 = tpu.matmul %28, %29, %cst_21 {dimension_numbers = #tpu.dot_dimension_numbers<[1], [0], [0], [1], [0, 0, 1, 1], [], []>} : vector<2x64xf32>, vector<64x10xf32>, vector<2x10xf32> -> vector<2x10xf32>
      %c0_22 = arith.constant 0 : index
      %c0_23 = arith.constant 0 : index
      %31 = vector.load %arg9[%c0_22, %c0_23] : memref<1x10xf32, #tpu.memory_space<vmem>>, vector<1x10xf32>
      %32 = vector.broadcast %31 : vector<1x10xf32> to vector<2x10xf32>
      %33 = arith.addf %30, %32 : vector<2x10xf32>
      %c0_24 = arith.constant 0 : index
      %c0_25 = arith.constant 0 : index
      %34 = vector.load %arg10[%c0_24, %c0_25] : memref<2x10xf32, #tpu.memory_space<vmem>>, vector<2x10xf32>
      tpu.vector_store %arg10[%c0_24, %c0_25], %33 {strides = array<i32>} : memref<2x10xf32, #tpu.memory_space<vmem>>, vector<2x10xf32>,
    } else {
    }
    return
  }
  func.func @transform_0(%arg0: i32) -> (i32, i32) {
    %c0_i32 = arith.constant 0 : i32
    %c0_i32_0 = arith.constant 0 : i32
    %c0_i32_1 = arith.constant 0 : i32
    return %c0_i32, %c0_i32_0 : i32, i32
  }
  func.func @transform_1(%arg0: i32) -> (i32, i32) {
    %c0_i32 = arith.constant 0 : i32
    %c0_i32_0 = arith.constant 0 : i32
    %c0_i32_1 = arith.constant 0 : i32
    return %c0_i32, %c0_i32_0 : i32, i32
  }
  func.func @transform_2(%arg0: i32) -> (i32, i32) {
    %c0_i32 = arith.constant 0 : i32
    %c0_i32_0 = arith.constant 0 : i32
    %c0_i32_1 = arith.constant 0 : i32
    return %c0_i32, %c0_i32_0 : i32, i32
  }
  func.func @transform_3(%arg0: i32) -> (i32, i32) {
    %c0_i32 = arith.constant 0 : i32
    %c0_i32_0 = arith.constant 0 : i32
    return %arg0, %c0_i32 : i32, i32
  }
  func.func @transform_4(%arg0: i32) -> (i32, i32) {
    %c0_i32 = arith.constant 0 : i32
    %c0_i32_0 = arith.constant 0 : i32
    %c0_i32_1 = arith.constant 0 : i32
    return %c0_i32, %c0_i32_0 : i32, i32
  }
  func.func @transform_5(%arg0: i32) -> (i32, i32) {
    %c0_i32 = arith.constant 0 : i32
    %c0_i32_0 = arith.constant 0 : i32
    %c0_i32_1 = arith.constant 0 : i32
    return %c0_i32, %c0_i32_0 : i32, i32
  }
  func.func @transform_6(%arg0: i32) -> (i32, i32) {
    %c0_i32 = arith.constant 0 : i32
    %c0_i32_0 = arith.constant 0 : i32
    %c0_i32_1 = arith.constant 0 : i32
    return %c0_i32, %c0_i32_0 : i32, i32
  }
  func.func @transform_7(%arg0: i32) -> (i32, i32) {
    %c0_i32 = arith.constant 0 : i32
    %c0_i32_0 = arith.constant 0 : i32
    %c0_i32_1 = arith.constant 0 : i32
    return %c0_i32, %c0_i32_0 : i32, i32
  }
  func.func @transform_8(%arg0: i32) -> (i32, i32) {
    %c0_i32 = arith.constant 0 : i32
    %c0_i32_0 = arith.constant 0 : i32
    %c0_i32_1 = arith.constant 0 : i32
    return %c0_i32, %c0_i32_0 : i32, i32
  }
  func.func @transform_9(%arg0: i32) -> (i32, i32) {
    %c0_i32 = arith.constant 0 : i32
    %c0_i32_0 = arith.constant 0 : i32
    %c0_i32_1 = arith.constant 0 : i32
    return %c0_i32, %c0_i32_0 : i32, i32
  }
}

</mosaic_0001>

<llo_original>
// kernel: image_nn_forward.1
$region0: #{image_nn_forward.1}
  #allocation0 [shape = 'u32[]', space=smem, size = 0x4, offset = 0x4, fixed_abs, tag = 'smem constant byte address 0x4 - core index']
  #allocation1 [shape = 'u32[144,128]{1,0:T(1,128)}', space=vmem, size = 0x12000, scoped, tag = 'internal scratch']
  #allocation2 [shape = 'f32[2,16384]{1,0:T(2,128)}', space=vmem, size = 0x20000, scoped, tag = 'scratch operand']
  #allocation3 [shape = 'f32[2,128]{1,0:T(2,128)}', space=vmem, size = 0x400, scoped, tag = 'scratch operand']
  %s0 = inlined_call_operand.vmem [shape: bf16[128,2048], index: 0, kind: input, shape index: {}]
  %s1 = inlined_call_operand.vmem [shape: bf16[64,128], index: 1, kind: input, shape index: {}]
  %s2 = inlined_call_operand.vmem [shape: f32[16,1], index: 2, kind: input, shape index: {}]
  %s3 = inlined_call_operand.vmem [shape: bf16[16384,128], index: 3, kind: input, shape index: {}]
  %s4 = inlined_call_operand.vmem [shape: f32[1,128], index: 4, kind: input, shape index: {}]
  %s5 = inlined_call_operand.vmem [shape: f32[128,64], index: 5, kind: input, shape index: {}]
  %s6 = inlined_call_operand.vmem [shape: f32[1,64], index: 6, kind: input, shape index: {}]
  %s7 = inlined_call_operand.vmem [shape: f32[64,10], index: 7, kind: input, shape index: {}]
  %s8 = inlined_call_operand.vmem [shape: f32[1,10], index: 8, kind: input, shape index: {}]
  %s9 = inlined_call_operand.hbm [shape: f32[2,10], index: 9, kind: output, shape index: {}]
  %s10 = sld [smem:[#allocation0]]
  $region77: #{image_nn_forward.1} parent=0
    _
  %s12 = ssub.s32 1, %s10
  %s13 = scalar_select 0, %s12, %s10
  $region1: #{image_nn_forward.1} parent=0
    #allocation4 [shape = 'u8[1024]{0}', space=vmem, size = 0x400, scoped, tag = 'output window, operand 0, single buffered']
    #allocation5 [shape = 's32[2]{0}', space=sflag, size = 0x8, scoped, tag = 'scoped memory for image_nn_forward.1']
    %14 = vsyncpa [#allocation5], 0
    loop: start=0, step=1, limit=4
    $region2: #{image_nn_forward.1} parent=1 // loop_pre_header
      _
    $region3: #{image_nn_forward.1} parent=1 // loop_header
      %s16 = sphi 0, %s20
      %p17 = scmp.ge.s32.totalorder %s16, 4
      %s24 = sphi 0, %s24
      %s26 = sphi 0, %s24
      %s27 = sphi 0, %s26
      %s41 = sphi 0, %s27
      %s45 = sphi 0, %s45
      %s47 = sphi 0, %s45
      %s48 = sphi 0, %s47
      %s62 = sphi 0, %s48
      %s66 = sphi 0, %s66
      %s68 = sphi 0, %s66
      %s69 = sphi 0, %s68
      %s83 = sphi 0, %s69
      %s89 = sphi 0, %s91
      %s92 = sphi 0, %s89
      %s93 = sphi 0, %s92
      %s109 = sphi 0, %s93
      %s113 = sphi 0, %s113
      %s115 = sphi 0, %s113
      %s116 = sphi 0, %s115
      %s130 = sphi 0, %s116
      %s134 = sphi 0, %s134
      %s136 = sphi 0, %s134
      %s137 = sphi 0, %s136
      %s151 = sphi 0, %s137
      %s155 = sphi 0, %s155
      %s157 = sphi 0, %s155
      %s158 = sphi 0, %s157
      %s172 = sphi 0, %s158
      %s176 = sphi 0, %s176
      %s178 = sphi 0, %s176
      %s179 = sphi 0, %s178
      %s193 = sphi 0, %s179
      %s197 = sphi 0, %s197
      %s199 = sphi 0, %s197
      %s200 = sphi 0, %s199
      %s214 = sphi 0, %s200
      %s218 = sphi 0, %s218
      %s220 = sphi 0, %s218
      %s221 = sphi 0, %s220
      %s235 = sphi 0, %s221
    $region4: #{image_nn_forward.1} parent=1 // loop_header_branch
      %19 = sbr.rel (%p17) target = $region8
    $region5: #{image_nn_forward.1} parent=1 // loop_body
      %s21 = ssub.s32 %s16, 1
      %s22 = ssub.s32 %s16, 2
      %s23 = sadd.s32 %s16, 1
      %s25 = sadd.s32 %s24, 1
      %p28 = scmp.eq.s32.totalorder %s16, 1
      %p29 = scmp.ne.s32.totalorder %s24, %s26
      %p30 = scmp.eq.s32.totalorder %s16, 0
      %p31 = por %p29, %p30
      %p32 = scmp.ne.s32.totalorder %s24, %s26
      %p33 = scmp.eq.s32.totalorder %s21, 1
      %p34 = por %p32, %p33
      %p35 = scmp.ne.s32.totalorder %s26, %s27
      %p36 = scmp.eq.s32.totalorder %s21, 0
      %p37 = por %p35, %p36
      %p38 = scmp.ne.s32.totalorder %s26, %s27
      %p39 = scmp.eq.s32.totalorder %s22, 1
      %p40 = por %p38, %p39
      %p42 = scmp.ne.s32.totalorder %s27, %s41
      %p43 = scmp.eq.s32.totalorder %s22, 0
      %p44 = por %p42, %p43
      %s46 = sadd.s32 %s45, 1
      %p49 = scmp.eq.s32.totalorder %s16, 1
      %p50 = scmp.ne.s32.totalorder %s45, %s47
      %p51 = scmp.eq.s32.totalorder %s16, 0
      %p52 = por %p50, %p51
      %p53 = scmp.ne.s32.totalorder %s45, %s47
      %p54 = scmp.eq.s32.totalorder %s21, 1
      %p55 = por %p53, %p54
      %p56 = scmp.ne.s32.totalorder %s47, %s48
      %p57 = scmp.eq.s32.totalorder %s21, 0
      %p58 = por %p56, %p57
      %p59 = scmp.ne.s32.totalorder %s47, %s48
      %p60 = scmp.eq.s32.totalorder %s22, 1
      %p61 = por %p59, %p60
      %p63 = scmp.ne.s32.totalorder %s48, %s62
      %p64 = scmp.eq.s32.totalorder %s22, 0
      %p65 = por %p63, %p64
      %s67 = sadd.s32 %s66, 1
      %p70 = scmp.eq.s32.totalorder %s16, 1
      %p71 = scmp.ne.s32.totalorder %s66, %s68
      %p72 = scmp.eq.s32.totalorder %s16, 0
      %p73 = por %p71, %p72
      %p74 = scmp.ne.s32.totalorder %s66, %s68
      %p75 = scmp.eq.s32.totalorder %s21, 1
      %p76 = por %p74, %p75
      %p77 = scmp.ne.s32.totalorder %s68, %s69
      %p78 = scmp.eq.s32.totalorder %s21, 0
      %p79 = por %p77, %p78
      %p80 = scmp.ne.s32.totalorder %s68, %s69
      %p81 = scmp.eq.s32.totalorder %s22, 1
      %p82 = por %p80, %p81
      %p84 = scmp.ne.s32.totalorder %s69, %s83
      %p85 = scmp.eq.s32.totalorder %s22, 0
      %p86 = por %p84, %p85
      %s87 = ssub.s32 %s16, %s23
      %p88 = scmp.eq.s32.totalorder %s87, 0
      %s90 = sadd.s32 %s89, 1
      %s91 = scalar_select %p88, %s89, %s90
      %p94 = pneg %p88
      %p95 = scmp.eq.s32.totalorder %s16, 1
      %p96 = por %p94, %p95
      %p97 = scmp.ne.s32.totalorder %s89, %s92
      %p98 = scmp.eq.s32.totalorder %s16, 0
      %p99 = por %p97, %p98
      %p100 = scmp.ne.s32.totalorder %s89, %s92
      %p101 = scmp.eq.s32.totalorder %s21, 1
      %p102 = por %p100, %p101
      %p103 = scmp.ne.s32.totalorder %s92, %s93
      %p104 = scmp.eq.s32.totalorder %s21, 0
      %p105 = por %p103, %p104
      %p106 = scmp.ne.s32.totalorder %s92, %s93
      %p107 = scmp.eq.s32.totalorder %s22, 1
      %p108 = por %p106, %p107
      %p110 = scmp.ne.s32.totalorder %s93, %s109
      %p111 = scmp.eq.s32.totalorder %s22, 0
      %p112 = por %p110, %p111
      %s114 = sadd.s32 %s113, 1
      %p117 = scmp.eq.s32.totalorder %s16, 1
      %p118 = scmp.ne.s32.totalorder %s113, %s115
      %p119 = scmp.eq.s32.totalorder %s16, 0
      %p120 = por %p118, %p119
      %p121 = scmp.ne.s32.totalorder %s113, %s115
      %p122 = scmp.eq.s32.totalorder %s21, 1
      %p123 = por %p121, %p122
      %p124 = scmp.ne.s32.totalorder %s115, %s116
      %p125 = scmp.eq.s32.totalorder %s21, 0
      %p126 = por %p124, %p125
      %p127 = scmp.ne.s32.totalorder %s115, %s116
      %p128 = scmp.eq.s32.totalorder %s22, 1
      %p129 = por %p127, %p128
      %p131 = scmp.ne.s32.totalorder %s116, %s130
      %p132 = scmp.eq.s32.totalorder %s22, 0
      %p133 = por %p131, %p132
      %s135 = sadd.s32 %s134, 1
      %p138 = scmp.eq.s32.totalorder %s16, 1
      %p139 = scmp.ne.s32.totalorder %s134, %s136
      %p140 = scmp.eq.s32.totalorder %s16, 0
      %p141 = por %p139, %p140
      %p142 = scmp.ne.s32.totalorder %s134, %s136
      %p143 = scmp.eq.s32.totalorder %s21, 1
      %p144 = por %p142, %p143
      %p145 = scmp.ne.s32.totalorder %s136, %s137
      %p146 = scmp.eq.s32.totalorder %s21, 0
      %p147 = por %p145, %p146
      %p148 = scmp.ne.s32.totalorder %s136, %s137
      %p149 = scmp.eq.s32.totalorder %s22, 1
      %p150 = por %p148, %p149
      %p152 = scmp.ne.s32.totalorder %s137, %s151
      %p153 = scmp.eq.s32.totalorder %s22, 0
      %p154 = por %p152, %p153
      %s156 = sadd.s32 %s155, 1
      %p159 = scmp.eq.s32.totalorder %s16, 1
      %p160 = scmp.ne.s32.totalorder %s155, %s157
      %p161 = scmp.eq.s32.totalorder %s16, 0
      %p162 = por %p160, %p161
      %p163 = scmp.ne.s32.totalorder %s155, %s157
      %p164 = scmp.eq.s32.totalorder %s21, 1
      %p165 = por %p163, %p164
      %p166 = scmp.ne.s32.totalorder %s157, %s158
      %p167 = scmp.eq.s32.totalorder %s21, 0
      %p168 = por %p166, %p167
      %p169 = scmp.ne.s32.totalorder %s157, %s158
      %p170 = scmp.eq.s32.totalorder %s22, 1
      %p171 = por %p169, %p170
      %p173 = scmp.ne.s32.totalorder %s158, %s172
      %p174 = scmp.eq.s32.totalorder %s22, 0
      %p175 = por %p173, %p174
      %s177 = sadd.s32 %s176, 1
      %p180 = scmp.eq.s32.totalorder %s16, 1
      %p181 = scmp.ne.s32.totalorder %s176, %s178
      %p182 = scmp.eq.s32.totalorder %s16, 0
      %p183 = por %p181, %p182
      %p184 = scmp.ne.s32.totalorder %s176, %s178
      %p185 = scmp.eq.s32.totalorder %s21, 1
      %p186 = por %p184, %p185
      %p187 = scmp.ne.s32.totalorder %s178, %s179
      %p188 = scmp.eq.s32.totalorder %s21, 0
      %p189 = por %p187, %p188
      %p190 = scmp.ne.s32.totalorder %s178, %s179
      %p191 = scmp.eq.s32.totalorder %s22, 1
      %p192 = por %p190, %p191
      %p194 = scmp.ne.s32.totalorder %s179, %s193
      %p195 = scmp.eq.s32.totalorder %s22, 0
      %p196 = por %p194, %p195
      %s198 = sadd.s32 %s197, 1
      %p201 = scmp.eq.s32.totalorder %s16, 1
      %p202 = scmp.ne.s32.totalorder %s197, %s199
      %p203 = scmp.eq.s32.totalorder %s16, 0
      %p204 = por %p202, %p203
      %p205 = scmp.ne.s32.totalorder %s197, %s199
      %p206 = scmp.eq.s32.totalorder %s21, 1
      %p207 = por %p205, %p206
      %p208 = scmp.ne.s32.totalorder %s199, %s200
      %p209 = scmp.eq.s32.totalorder %s21, 0
      %p210 = por %p208, %p209
      %p211 = scmp.ne.s32.totalorder %s199, %s200
      %p212 = scmp.eq.s32.totalorder %s22, 1
      %p213 = por %p211, %p212
      %p215 = scmp.ne.s32.totalorder %s200, %s214
      %p216 = scmp.eq.s32.totalorder %s22, 0
      %p217 = por %p215, %p216
      %s219 = sadd.s32 %s218, 1
      %p222 = scmp.eq.s32.totalorder %s16, 1
      %p223 = scmp.ne.s32.totalorder %s218, %s220
      %p224 = scmp.eq.s32.totalorder %s16, 0
      %p225 = por %p223, %p224
      %p226 = scmp.ne.s32.totalorder %s218, %s220
      %p227 = scmp.eq.s32.totalorder %s21, 1
      %p228 = por %p226, %p227
      %p229 = scmp.ne.s32.totalorder %s220, %s221
      %p230 = scmp.eq.s32.totalorder %s21, 0
      %p231 = por %p229, %p230
      %p232 = scmp.ne.s32.totalorder %s220, %s221
      %p233 = scmp.eq.s32.totalorder %s22, 1
      %p234 = por %p232, %p233
      %p236 = scmp.ne.s32.totalorder %s221, %s235
      %p237 = scmp.eq.s32.totalorder %s22, 0
      %p238 = por %p236, %p237
      %p239 = scmp.le.s32.totalorder 1, %s16
      %p240 = scmp.lt.s32.totalorder %s16, 3
      %p241 = pnand %p239, %p240
      %p242 = pneg %p241
      // Predicated region
      $region9: #{image_nn_forward.1} parent=5 // pred_check
        _
      $region10: #{image_nn_forward.1} parent=5 // pred_check_branch
        %244 = sbr.rel (%p241) target = $region12
      $region11: #{image_nn_forward.1} parent=5 // pred_region
        %s245 = ssub.s32 %s16, 1
        // Predicated region
        $region13: #{image_nn_forward.1} parent=11 // pred_check
          %p246 = pneg %p37
        $region14: #{image_nn_forward.1} parent=11 // pred_check_branch
          %248 = sbr.rel (%p246) target = $region16
        $region15: #{image_nn_forward.1} parent=11 // pred_region
          _
        $region16: #{image_nn_forward.1} parent=11 // pred_fallthru
          _
        // Predicated region
        $region17: #{image_nn_forward.1} parent=11 // pred_check
          %p249 = pneg %p58
        $region18: #{image_nn_forward.1} parent=11 // pred_check_branch
          %251 = sbr.rel (%p249) target = $region20
        $region19: #{image_nn_forward.1} parent=11 // pred_region
          _
        $region20: #{image_nn_forward.1} parent=11 // pred_fallthru
          _
        // Predicated region
        $region21: #{image_nn_forward.1} parent=11 // pred_check
          %p252 = pneg %p79
        $region22: #{image_nn_forward.1} parent=11 // pred_check_branch
          %254 = sbr.rel (%p252) target = $region24
        $region23: #{image_nn_forward.1} parent=11 // pred_region
          _
        $region24: #{image_nn_forward.1} parent=11 // pred_fallthru
          _
        // Predicated region
        $region25: #{image_nn_forward.1} parent=11 // pred_check
          %p255 = pneg %p126
        $region26: #{image_nn_forward.1} parent=11 // pred_check_branch
          %257 = sbr.rel (%p255) target = $region28
        $region27: #{image_nn_forward.1} parent=11 // pred_region
          _
        $region28: #{image_nn_forward.1} parent=11 // pred_fallthru
          _
        // Predicated region
        $region29: #{image_nn_forward.1} parent=11 // pred_check
          %p258 = pneg %p147
        $region30: #{image_nn_forward.1} parent=11 // pred_check_branch
          %260 = sbr.rel (%p258) target = $region32
        $region31: #{image_nn_forward.1} parent=11 // pred_region
          _
        $region32: #{image_nn_forward.1} parent=11 // pred_fallthru
          _
        // Predicated region
        $region33: #{image_nn_forward.1} parent=11 // pred_check
          %p261 = pneg %p168
        $region34: #{image_nn_forward.1} parent=11 // pred_check_branch
          %263 = sbr.rel (%p261) target = $region36
        $region35: #{image_nn_forward.1} parent=11 // pred_region
          _
        $region36: #{image_nn_forward.1} parent=11 // pred_fallthru
          _
        // Predicated region
        $region37: #{image_nn_forward.1} parent=11 // pred_check
          %p264 = pneg %p189
        $region38: #{image_nn_forward.1} parent=11 // pred_check_branch
          %266 = sbr.rel (%p264) target = $region40
        $region39: #{image_nn_forward.1} parent=11 // pred_region
          _
        $region40: #{image_nn_forward.1} parent=11 // pred_fallthru
          _
        // Predicated region
        $region41: #{image_nn_forward.1} parent=11 // pred_check
          %p267 = pneg %p210
        $region42: #{image_nn_forward.1} parent=11 // pred_check_branch
          %269 = sbr.rel (%p267) target = $region44
        $region43: #{image_nn_forward.1} parent=11 // pred_region
          _
        $region44: #{image_nn_forward.1} parent=11 // pred_fallthru
          _
      $region12: #{image_nn_forward.1} parent=5 // pred_fallthru
        _
      %p270 = scmp.lt.s32.totalorder %s16, 2
      // Predicated region
      $region45: #{image_nn_forward.1} parent=5 // pred_check
        %p271 = pneg %p270
      $region46: #{image_nn_forward.1} parent=5 // pred_check_branch
        %273 = sbr.rel (%p271) target = $region48
      $region47: #{image_nn_forward.1} parent=5 // pred_region
        // Predicated region
        $region49: #{image_nn_forward.1} parent=47 // pred_check
          %p274 = pneg %p99
        $region50: #{image_nn_forward.1} parent=47 // pred_check_branch
          %276 = sbr.rel (%p274) target = $region52
        $region51: #{image_nn_forward.1} parent=47 // pred_region
          %s277 = smul.u32 1024, %s16
          %p278 = scmp.lt.s32.totalorder %s277, 2047
          %s279 = scalar_select %p278, %s277, 2047
          %s280 = smul.addr %s279, 4
          %s281 = scalar_lea.vmem %s3, %s280
          %s282 = smul.u32 1024, %s16
        $region52: #{image_nn_forward.1} parent=47 // pred_fallthru
          _
      $region48: #{image_nn_forward.1} parent=5 // pred_fallthru
        _
      %p283 = scmp.le.s32.totalorder 1, %s16
      %p284 = scmp.lt.s32.totalorder %s16, 3
      %p285 = pnand %p283, %p284
      %p286 = pneg %p285
      // Predicated region
      $region53: #{image_nn_forward.1} parent=5 // pred_check
        _
      $region54: #{image_nn_forward.1} parent=5 // pred_check_branch
        %288 = sbr.rel (%p285) target = $region56
      $region55: #{image_nn_forward.1} parent=5 // pred_region
        %s289 = ssub.s32 %s16, 1
        %p290 = pneg %p37
        %p291 = pneg %p34
        %p292 = pneg %p58
        %p293 = pneg %p55
        %p294 = pneg %p79
        %p295 = pneg %p76
        %s296 = smul.u32 1024, %s21
        %p297 = scmp.lt.s32.totalorder %s296, 2047
        %s298 = scalar_select %p297, %s296, 2047
        %s299 = smul.addr %s298, 4
        %s300 = scalar_lea.vmem %s3, %s299
        %p301 = pneg %p105
        %p302 = pneg %p102
        %p303 = pneg %p126
        %p304 = pneg %p123
        %p305 = pneg %p147
        %p306 = pneg %p144
        %p307 = pneg %p168
        %p308 = pneg %p165
        %p309 = pneg %p189
        %p310 = pneg %p186
        %p311 = pneg %p210
        %p312 = pneg %p207
        %p313 = pneg %p231
        %p314 = pneg %p228
        %s315 = smul.u32 1024, %s21
        %p316 = scmp.lt.s32.totalorder %s315, 2047
        %s317 = scalar_select %p316, %s315, 2047
        %s318 = smul.addr %s317, 4
        %s319 = scalar_lea.vmem %s3, %s318
        %s320 = smul.u32 1024, %s21
        %p322 = scmp.eq.s32.totalorder %s21, 0
        // Predicated region
        $region57: #{image_nn_forward.1} parent=55 // pred_check
          %p323 = pneg %p322
        $region58: #{image_nn_forward.1} parent=55 // pred_check_branch
          %325 = sbr.rel (%p323) target = $region60
        $region59: #{image_nn_forward.1} parent=55 // pred_region
          %326 = vst [vmem:[#allocation3] sm:$0x3] 0.0
          %v327 = vld [vmem:[%s1] sm:$0xf]
          %v328 = vld [vmem:[%s1 + $0x4] sm:$0xf]
          %v329 = vld [vmem:[%s1 + $0x8] sm:$0xf]
          %v330 = vld [vmem:[%s1 + $0xc] sm:$0xf]
          %v331 = vld [vmem:[%s1 + $0x10] sm:$0xf]
          %v332 = vld [vmem:[%s1 + $0x14] sm:$0xf]
          %v333 = vld [vmem:[%s1 + $0x18] sm:$0xf]
          %v334 = vld [vmem:[%s1 + $0x1c] sm:$0xf]
          %v335 = vld [vmem:[%s0] sm:$0xff]
          %v336 = vld [vmem:[%s0 + $0x8] sm:$0xff]
          %v337 = vld [vmem:[%s0 + $0x10] sm:$0xff]
          %v338 = vld [vmem:[%s0 + $0x18] sm:$0xff]
          %v339 = vld [vmem:[%s0 + $0x20] sm:$0xff]
          %v340 = vld [vmem:[%s0 + $0x28] sm:$0xff]
          %v341 = vld [vmem:[%s0 + $0x30] sm:$0xff]
          %v342 = vld [vmem:[%s0 + $0x38] sm:$0xff]
          %v343 = vld [vmem:[%s0 + $0x40] sm:$0xff]
          %v344 = vld [vmem:[%s0 + $0x48] sm:$0xff]
          %v345 = vld [vmem:[%s0 + $0x50] sm:$0xff]
          %v346 = vld [vmem:[%s0 + $0x58] sm:$0xff]
          %v347 = vld [vmem:[%s0 + $0x60] sm:$0xff]
          %v348 = vld [vmem:[%s0 + $0x68] sm:$0xff]
          %v349 = vld [vmem:[%s0 + $0x70] sm:$0xff]
          %v350 = vld [vmem:[%s0 + $0x78] sm:$0xff]
          %v351 = vld [vmem:[%s0 + $0x80] sm:$0xff]
          %v352 = vld [vmem:[%s0 + $0x88] sm:$0xff]
          %v353 = vld [vmem:[%s0 + $0x90] sm:$0xff]
          %v354 = vld [vmem:[%s0 + $0x98] sm:$0xff]
          %v355 = vld [vmem:[%s0 + $0xa0] sm:$0xff]
          %v356 = vld [vmem:[%s0 + $0xa8] sm:$0xff]
          %v357 = vld [vmem:[%s0 + $0xb0] sm:$0xff]
          %v358 = vld [vmem:[%s0 + $0xb8] sm:$0xff]
          %v359 = vld [vmem:[%s0 + $0xc0] sm:$0xff]
          %v360 = vld [vmem:[%s0 + $0xc8] sm:$0xff]
          %v361 = vld [vmem:[%s0 + $0xd0] sm:$0xff]
          %v362 = vld [vmem:[%s0 + $0xd8] sm:$0xff]
          %v363 = vld [vmem:[%s0 + $0xe0] sm:$0xff]
          %v364 = vld [vmem:[%s0 + $0xe8] sm:$0xff]
          %v365 = vld [vmem:[%s0 + $0xf0] sm:$0xff]
          %v366 = vld [vmem:[%s0 + $0xf8] sm:$0xff]
          %v367 = vld [vmem:[%s0 + $0x100] sm:$0xff]
          %v368 = vld [vmem:[%s0 + $0x108] sm:$0xff]
          %v369 = vld [vmem:[%s0 + $0x110] sm:$0xff]
          %v370 = vld [vmem:[%s0 + $0x118] sm:$0xff]
          %v371 = vld [vmem:[%s0 + $0x120] sm:$0xff]
          %v372 = vld [vmem:[%s0 + $0x128] sm:$0xff]
          %v373 = vld [vmem:[%s0 + $0x130] sm:$0xff]
          %v374 = vld [vmem:[%s0 + $0x138] sm:$0xff]
          %v375 = vld [vmem:[%s0 + $0x140] sm:$0xff]
          %v376 = vld [vmem:[%s0 + $0x148] sm:$0xff]
          %v377 = vld [vmem:[%s0 + $0x150] sm:$0xff]
          %v378 = vld [vmem:[%s0 + $0x158] sm:$0xff]
          %v379 = vld [vmem:[%s0 + $0x160] sm:$0xff]
          %v380 = vld [vmem:[%s0 + $0x168] sm:$0xff]
          %v381 = vld [vmem:[%s0 + $0x170] sm:$0xff]
          %v382 = vld [vmem:[%s0 + $0x178] sm:$0xff]
          %v383 = vld [vmem:[%s0 + $0x180] sm:$0xff]
          %v384 = vld [vmem:[%s0 + $0x188] sm:$0xff]
          %v385 = vld [vmem:[%s0 + $0x190] sm:$0xff]
          %v386 = vld [vmem:[%s0 + $0x198] sm:$0xff]
          %v387 = vld [vmem:[%s0 + $0x1a0] sm:$0xff]
          %v388 = vld [vmem:[%s0 + $0x1a8] sm:$0xff]
          %v389 = vld [vmem:[%s0 + $0x1b0] sm:$0xff]
          %v390 = vld [vmem:[%s0 + $0x1b8] sm:$0xff]
          %v391 = vld [vmem:[%s0 + $0x1c0] sm:$0xff]
          %v392 = vld [vmem:[%s0 + $0x1c8] sm:$0xff]
          %v393 = vld [vmem:[%s0 + $0x1d0] sm:$0xff]
          %v394 = vld [vmem:[%s0 + $0x1d8] sm:$0xff]
          %v395 = vld [vmem:[%s0 + $0x1e0] sm:$0xff]
          %v396 = vld [vmem:[%s0 + $0x1e8] sm:$0xff]
          %v397 = vld [vmem:[%s0 + $0x1f0] sm:$0xff]
          %v398 = vld [vmem:[%s0 + $0x1f8] sm:$0xff]
          %v399 = vld [vmem:[%s0 + $0x200] sm:$0xff]
          %v400 = vld [vmem:[%s0 + $0x208] sm:$0xff]
          %v401 = vld [vmem:[%s0 + $0x210] sm:$0xff]
          %v402 = vld [vmem:[%s0 + $0x218] sm:$0xff]
          %v403 = vld [vmem:[%s0 + $0x220] sm:$0xff]
          %v404 = vld [vmem:[%s0 + $0x228] sm:$0xff]
          %v405 = vld [vmem:[%s0 + $0x230] sm:$0xff]
          %v406 = vld [vmem:[%s0 + $0x238] sm:$0xff]
          %v407 = vld [vmem:[%s0 + $0x240] sm:$0xff]
          %v408 = vld [vmem:[%s0 + $0x248] sm:$0xff]
          %v409 = vld [vmem:[%s0 + $0x250] sm:$0xff]
          %v410 = vld [vmem:[%s0 + $0x258] sm:$0xff]
          %v411 = vld [vmem:[%s0 + $0x260] sm:$0xff]
          %v412 = vld [vmem:[%s0 + $0x268] sm:$0xff]
          %v413 = vld [vmem:[%s0 + $0x270] sm:$0xff]
          %v414 = vld [vmem:[%s0 + $0x278] sm:$0xff]
          %v415 = vld [vmem:[%s0 + $0x280] sm:$0xff]
          %v416 = vld [vmem:[%s0 + $0x288] sm:$0xff]
          %v417 = vld [vmem:[%s0 + $0x290] sm:$0xff]
          %v418 = vld [vmem:[%s0 + $0x298] sm:$0xff]
          %v419 = vld [vmem:[%s0 + $0x2a0] sm:$0xff]
          %v420 = vld [vmem:[%s0 + $0x2a8] sm:$0xff]
          %v421 = vld [vmem:[%s0 + $0x2b0] sm:$0xff]
          %v422 = vld [vmem:[%s0 + $0x2b8] sm:$0xff]
          %v423 = vld [vmem:[%s0 + $0x2c0] sm:$0xff]
          %v424 = vld [vmem:[%s0 + $0x2c8] sm:$0xff]
          %v425 = vld [vmem:[%s0 + $0x2d0] sm:$0xff]
          %v426 = vld [vmem:[%s0 + $0x2d8] sm:$0xff]
          %v427 = vld [vmem:[%s0 + $0x2e0] sm:$0xff]
          %v428 = vld [vmem:[%s0 + $0x2e8] sm:$0xff]
          %v429 = vld [vmem:[%s0 + $0x2f0] sm:$0xff]
          %v430 = vld [vmem:[%s0 + $0x2f8] sm:$0xff]
          %v431 = vld [vmem:[%s0 + $0x300] sm:$0xff]
          %v432 = vld [vmem:[%s0 + $0x308] sm:$0xff]
          %v433 = vld [vmem:[%s0 + $0x310] sm:$0xff]
          %v434 = vld [vmem:[%s0 + $0x318] sm:$0xff]
          %v435 = vld [vmem:[%s0 + $0x320] sm:$0xff]
          %v436 = vld [vmem:[%s0 + $0x328] sm:$0xff]
          %v437 = vld [vmem:[%s0 + $0x330] sm:$0xff]
          %v438 = vld [vmem:[%s0 + $0x338] sm:$0xff]
          %v439 = vld [vmem:[%s0 + $0x340] sm:$0xff]
          %v440 = vld [vmem:[%s0 + $0x348] sm:$0xff]
          %v441 = vld [vmem:[%s0 + $0x350] sm:$0xff]
          %v442 = vld [vmem:[%s0 + $0x358] sm:$0xff]
          %v443 = vld [vmem:[%s0 + $0x360] sm:$0xff]
          %v444 = vld [vmem:[%s0 + $0x368] sm:$0xff]
          %v445 = vld [vmem:[%s0 + $0x370] sm:$0xff]
          %v446 = vld [vmem:[%s0 + $0x378] sm:$0xff]
          %v447 = vld [vmem:[%s0 + $0x380] sm:$0xff]
          %v448 = vld [vmem:[%s0 + $0x388] sm:$0xff]
          %v449 = vld [vmem:[%s0 + $0x390] sm:$0xff]
          %v450 = vld [vmem:[%s0 + $0x398] sm:$0xff]
          %v451 = vld [vmem:[%s0 + $0x3a0] sm:$0xff]
          %v452 = vld [vmem:[%s0 + $0x3a8] sm:$0xff]
          %v453 = vld [vmem:[%s0 + $0x3b0] sm:$0xff]
          %v454 = vld [vmem:[%s0 + $0x3b8] sm:$0xff]
          %v455 = vld [vmem:[%s0 + $0x3c0] sm:$0xff]
          %v456 = vld [vmem:[%s0 + $0x3c8] sm:$0xff]
          %v457 = vld [vmem:[%s0 + $0x3d0] sm:$0xff]
          %v458 = vld [vmem:[%s0 + $0x3d8] sm:$0xff]
          %v459 = vld [vmem:[%s0 + $0x3e0] sm:$0xff]
          %v460 = vld [vmem:[%s0 + $0x3e8] sm:$0xff]
          %v461 = vld [vmem:[%s0 + $0x3f0] sm:$0xff]
          %v462 = vld [vmem:[%s0 + $0x3f8] sm:$0xff]
          %v471 = vunpack.c.l.b16 %v327
          %v472 = vunpack.c.l.b16 %v328
          %v473 = vunpack.c.l.b16 %v329
          %v474 = vunpack.c.l.b16 %v330
          %v475 = vunpack.c.l.b16 %v331
          %v476 = vunpack.c.l.b16 %v332
          %v477 = vunpack.c.l.b16 %v333
          %v478 = vunpack.c.l.b16 %v334
          %v479 = vpack.c.b16 %v472, %v471
          %v480 = vpack.c.b16 %v474, %v473
          %v481 = vpack.c.b16 %v476, %v475
          %v482 = vpack.c.b16 %v478, %v477
          %v615 = vunpack.c.l.b16 %v335
          %v616 = vunpack.c.h.b16 %v335
          %v617 = vunpack.c.l.b16 %v336
          %v618 = vunpack.c.h.b16 %v336
          %v619 = vunpack.c.l.b16 %v337
          %v620 = vunpack.c.h.b16 %v337
          %v621 = vunpack.c.l.b16 %v338
          %v622 = vunpack.c.h.b16 %v338
          %v623 = vunpack.c.l.b16 %v339
          %v624 = vunpack.c.h.b16 %v339
          %v625 = vunpack.c.l.b16 %v340
          %v626 = vunpack.c.h.b16 %v340
          %v627 = vunpack.c.l.b16 %v341
          %v628 = vunpack.c.h.b16 %v341
          %v629 = vunpack.c.l.b16 %v342
          %v630 = vunpack.c.h.b16 %v342
          %v631 = vunpack.c.l.b16 %v343
          %v632 = vunpack.c.h.b16 %v343
          %v633 = vunpack.c.l.b16 %v344
          %v634 = vunpack.c.h.b16 %v344
          %v635 = vunpack.c.l.b16 %v345
          %v636 = vunpack.c.h.b16 %v345
          %v637 = vunpack.c.l.b16 %v346
          %v638 = vunpack.c.h.b16 %v346
          %v639 = vunpack.c.l.b16 %v347
          %v640 = vunpack.c.h.b16 %v347
          %v641 = vunpack.c.l.b16 %v348
          %v642 = vunpack.c.h.b16 %v348
          %v643 = vunpack.c.l.b16 %v349
          %v644 = vunpack.c.h.b16 %v349
          %v645 = vunpack.c.l.b16 %v350
          %v646 = vunpack.c.h.b16 %v350
          %v647 = vunpack.c.l.b16 %v351
          %v648 = vunpack.c.h.b16 %v351
          %v649 = vunpack.c.l.b16 %v352
          %v650 = vunpack.c.h.b16 %v352
          %v651 = vunpack.c.l.b16 %v353
          %v652 = vunpack.c.h.b16 %v353
          %v653 = vunpack.c.l.b16 %v354
          %v654 = vunpack.c.h.b16 %v354
          %v655 = vunpack.c.l.b16 %v355
          %v656 = vunpack.c.h.b16 %v355
          %v657 = vunpack.c.l.b16 %v356
          %v658 = vunpack.c.h.b16 %v356
          %v659 = vunpack.c.l.b16 %v357
          %v660 = vunpack.c.h.b16 %v357
          %v661 = vunpack.c.l.b16 %v358
          %v662 = vunpack.c.h.b16 %v358
          %v663 = vunpack.c.l.b16 %v359
          %v664 = vunpack.c.h.b16 %v359
          %v665 = vunpack.c.l.b16 %v360
          %v666 = vunpack.c.h.b16 %v360
          %v667 = vunpack.c.l.b16 %v361
          %v668 = vunpack.c.h.b16 %v361
          %v669 = vunpack.c.l.b16 %v362
          %v670 = vunpack.c.h.b16 %v362
          %v671 = vunpack.c.l.b16 %v363
          %v672 = vunpack.c.h.b16 %v363
          %v673 = vunpack.c.l.b16 %v364
          %v674 = vunpack.c.h.b16 %v364
          %v675 = vunpack.c.l.b16 %v365
          %v676 = vunpack.c.h.b16 %v365
          %v677 = vunpack.c.l.b16 %v366
          %v678 = vunpack.c.h.b16 %v366
          %v679 = vunpack.c.l.b16 %v367
          %v680 = vunpack.c.h.b16 %v367
          %v681 = vunpack.c.l.b16 %v368
          %v682 = vunpack.c.h.b16 %v368
          %v683 = vunpack.c.l.b16 %v369
          %v684 = vunpack.c.h.b16 %v369
          %v685 = vunpack.c.l.b16 %v370
          %v686 = vunpack.c.h.b16 %v370
          %v687 = vunpack.c.l.b16 %v371
          %v688 = vunpack.c.h.b16 %v371
          %v689 = vunpack.c.l.b16 %v372
          %v690 = vunpack.c.h.b16 %v372
          %v691 = vunpack.c.l.b16 %v373
          %v692 = vunpack.c.h.b16 %v373
          %v693 = vunpack.c.l.b16 %v374
          %v694 = vunpack.c.h.b16 %v374
          %v695 = vunpack.c.l.b16 %v375
          %v696 = vunpack.c.h.b16 %v375
          %v697 = vunpack.c.l.b16 %v376
          %v698 = vunpack.c.h.b16 %v376
          %v699 = vunpack.c.l.b16 %v377
          %v700 = vunpack.c.h.b16 %v377
          %v701 = vunpack.c.l.b16 %v378
          %v702 = vunpack.c.h.b16 %v378
          %v703 = vunpack.c.l.b16 %v379
          %v704 = vunpack.c.h.b16 %v379
          %v705 = vunpack.c.l.b16 %v380
          %v706 = vunpack.c.h.b16 %v380
          %v707 = vunpack.c.l.b16 %v381
          %v708 = vunpack.c.h.b16 %v381
          %v709 = vunpack.c.l.b16 %v382
          %v710 = vunpack.c.h.b16 %v382
          %v711 = vunpack.c.l.b16 %v383
          %v712 = vunpack.c.h.b16 %v383
          %v713 = vunpack.c.l.b16 %v384
          %v714 = vunpack.c.h.b16 %v384
          %v715 = vunpack.c.l.b16 %v385
          %v716 = vunpack.c.h.b16 %v385
          %v717 = vunpack.c.l.b16 %v386
          %v718 = vunpack.c.h.b16 %v386
          %v719 = vunpack.c.l.b16 %v387
          %v720 = vunpack.c.h.b16 %v387
          %v721 = vunpack.c.l.b16 %v388
          %v722 = vunpack.c.h.b16 %v388
          %v723 = vunpack.c.l.b16 %v389
          %v724 = vunpack.c.h.b16 %v389
          %v725 = vunpack.c.l.b16 %v390
          %v726 = vunpack.c.h.b16 %v390
          %v727 = vunpack.c.l.b16 %v391
          %v728 = vunpack.c.h.b16 %v391
          %v729 = vunpack.c.l.b16 %v392
          %v730 = vunpack.c.h.b16 %v392
          %v731 = vunpack.c.l.b16 %v393
          %v732 = vunpack.c.h.b16 %v393
          %v733 = vunpack.c.l.b16 %v394
          %v734 = vunpack.c.h.b16 %v394
          %v735 = vunpack.c.l.b16 %v395
          %v736 = vunpack.c.h.b16 %v395
          %v737 = vunpack.c.l.b16 %v396
          %v738 = vunpack.c.h.b16 %v396
          %v739 = vunpack.c.l.b16 %v397
          %v740 = vunpack.c.h.b16 %v397
          %v741 = vunpack.c.l.b16 %v398
          %v742 = vunpack.c.h.b16 %v398
          %v743 = vunpack.c.l.b16 %v399
          %v744 = vunpack.c.h.b16 %v399
          %v745 = vunpack.c.l.b16 %v400
          %v746 = vunpack.c.h.b16 %v400
          %v747 = vunpack.c.l.b16 %v401
          %v748 = vunpack.c.h.b16 %v401
          %v749 = vunpack.c.l.b16 %v402
          %v750 = vunpack.c.h.b16 %v402
          %v751 = vunpack.c.l.b16 %v403
          %v752 = vunpack.c.h.b16 %v403
          %v753 = vunpack.c.l.b16 %v404
          %v754 = vunpack.c.h.b16 %v404
          %v755 = vunpack.c.l.b16 %v405
          %v756 = vunpack.c.h.b16 %v405
          %v757 = vunpack.c.l.b16 %v406
          %v758 = vunpack.c.h.b16 %v406
          %v759 = vunpack.c.l.b16 %v407
          %v760 = vunpack.c.h.b16 %v407
          %v761 = vunpack.c.l.b16 %v408
          %v762 = vunpack.c.h.b16 %v408
          %v763 = vunpack.c.l.b16 %v409
          %v764 = vunpack.c.h.b16 %v409
          %v765 = vunpack.c.l.b16 %v410
          %v766 = vunpack.c.h.b16 %v410
          %v767 = vunpack.c.l.b16 %v411
          %v768 = vunpack.c.h.b16 %v411
          %v769 = vunpack.c.l.b16 %v412
          %v770 = vunpack.c.h.b16 %v412
          %v771 = vunpack.c.l.b16 %v413
          %v772 = vunpack.c.h.b16 %v413
          %v773 = vunpack.c.l.b16 %v414
          %v774 = vunpack.c.h.b16 %v414
          %v775 = vunpack.c.l.b16 %v415
          %v776 = vunpack.c.h.b16 %v415
          %v777 = vunpack.c.l.b16 %v416
          %v778 = vunpack.c.h.b16 %v416
          %v779 = vunpack.c.l.b16 %v417
          %v780 = vunpack.c.h.b16 %v417
          %v781 = vunpack.c.l.b16 %v418
          %v782 = vunpack.c.h.b16 %v418
          %v783 = vunpack.c.l.b16 %v419
          %v784 = vunpack.c.h.b16 %v419
          %v785 = vunpack.c.l.b16 %v420
          %v786 = vunpack.c.h.b16 %v420
          %v787 = vunpack.c.l.b16 %v421
          %v788 = vunpack.c.h.b16 %v421
          %v789 = vunpack.c.l.b16 %v422
          %v790 = vunpack.c.h.b16 %v422
          %v791 = vunpack.c.l.b16 %v423
          %v792 = vunpack.c.h.b16 %v423
          %v793 = vunpack.c.l.b16 %v424
          %v794 = vunpack.c.h.b16 %v424
          %v795 = vunpack.c.l.b16 %v425
          %v796 = vunpack.c.h.b16 %v425
          %v797 = vunpack.c.l.b16 %v426
          %v798 = vunpack.c.h.b16 %v426
          %v799 = vunpack.c.l.b16 %v427
          %v800 = vunpack.c.h.b16 %v427
          %v801 = vunpack.c.l.b16 %v428
          %v802 = vunpack.c.h.b16 %v428
          %v803 = vunpack.c.l.b16 %v429
          %v804 = vunpack.c.h.b16 %v429
          %v805 = vunpack.c.l.b16 %v430
          %v806 = vunpack.c.h.b16 %v430
          %v807 = vunpack.c.l.b16 %v431
          %v808 = vunpack.c.h.b16 %v431
          %v809 = vunpack.c.l.b16 %v432
          %v810 = vunpack.c.h.b16 %v432
          %v811 = vunpack.c.l.b16 %v433
          %v812 = vunpack.c.h.b16 %v433
          %v813 = vunpack.c.l.b16 %v434
          %v814 = vunpack.c.h.b16 %v434
          %v815 = vunpack.c.l.b16 %v435
          %v816 = vunpack.c.h.b16 %v435
          %v817 = vunpack.c.l.b16 %v436
          %v818 = vunpack.c.h.b16 %v436
          %v819 = vunpack.c.l.b16 %v437
          %v820 = vunpack.c.h.b16 %v437
          %v821 = vunpack.c.l.b16 %v438
          %v822 = vunpack.c.h.b16 %v438
          %v823 = vunpack.c.l.b16 %v439
          %v824 = vunpack.c.h.b16 %v439
          %v825 = vunpack.c.l.b16 %v440
          %v826 = vunpack.c.h.b16 %v440
          %v827 = vunpack.c.l.b16 %v441
          %v828 = vunpack.c.h.b16 %v441
          %v829 = vunpack.c.l.b16 %v442
          %v830 = vunpack.c.h.b16 %v442
          %v831 = vunpack.c.l.b16 %v443
          %v832 = vunpack.c.h.b16 %v443
          %v833 = vunpack.c.l.b16 %v444
          %v834 = vunpack.c.h.b16 %v444
          %v835 = vunpack.c.l.b16 %v445
          %v836 = vunpack.c.h.b16 %v445
          %v837 = vunpack.c.l.b16 %v446
          %v838 = vunpack.c.h.b16 %v446
          %v839 = vunpack.c.l.b16 %v447
          %v840 = vunpack.c.h.b16 %v447
          %v841 = vunpack.c.l.b16 %v448
          %v842 = vunpack.c.h.b16 %v448
          %v843 = vunpack.c.l.b16 %v449
          %v844 = vunpack.c.h.b16 %v449
          %v845 = vunpack.c.l.b16 %v450
          %v846 = vunpack.c.h.b16 %v450
          %v847 = vunpack.c.l.b16 %v451
          %v848 = vunpack.c.h.b16 %v451
          %v849 = vunpack.c.l.b16 %v452
          %v850 = vunpack.c.h.b16 %v452
          %v851 = vunpack.c.l.b16 %v453
          %v852 = vunpack.c.h.b16 %v453
          %v853 = vunpack.c.l.b16 %v454
          %v854 = vunpack.c.h.b16 %v454
          %v855 = vunpack.c.l.b16 %v455
          %v856 = vunpack.c.h.b16 %v455
          %v857 = vunpack.c.l.b16 %v456
          %v858 = vunpack.c.h.b16 %v456
          %v859 = vunpack.c.l.b16 %v457
          %v860 = vunpack.c.h.b16 %v457
          %v861 = vunpack.c.l.b16 %v458
          %v862 = vunpack.c.h.b16 %v458
          %v863 = vunpack.c.l.b16 %v459
          %v864 = vunpack.c.h.b16 %v459
          %v865 = vunpack.c.l.b16 %v460
          %v866 = vunpack.c.h.b16 %v460
          %v867 = vunpack.c.l.b16 %v461
          %v868 = vunpack.c.h.b16 %v461
          %v869 = vunpack.c.l.b16 %v462
          %v870 = vunpack.c.h.b16 %v462
          %v871 = vpack.c.b16 %v631, %v615
          %v872 = vpack.c.b16 %v632, %v616
          %v873 = vpack.c.b16 %v633, %v617
          %v874 = vpack.c.b16 %v634, %v618
          %v875 = vpack.c.b16 %v635, %v619
          %v876 = vpack.c.b16 %v636, %v620
          %v877 = vpack.c.b16 %v637, %v621
          %v878 = vpack.c.b16 %v638, %v622
          %v879 = vpack.c.b16 %v639, %v623
          %v880 = vpack.c.b16 %v640, %v624
          %v881 = vpack.c.b16 %v641, %v625
          %v882 = vpack.c.b16 %v642, %v626
          %v883 = vpack.c.b16 %v643, %v627
          %v884 = vpack.c.b16 %v644, %v628
          %v885 = vpack.c.b16 %v645, %v629
          %v886 = vpack.c.b16 %v646, %v630
          %v887 = vpack.c.b16 %v663, %v647
          %v888 = vpack.c.b16 %v664, %v648
          %v889 = vpack.c.b16 %v665, %v649
          %v890 = vpack.c.b16 %v666, %v650
          %v891 = vpack.c.b16 %v667, %v651
          %v892 = vpack.c.b16 %v668, %v652
          %v893 = vpack.c.b16 %v669, %v653
          %v894 = vpack.c.b16 %v670, %v654
          %v895 = vpack.c.b16 %v671, %v655
          %v896 = vpack.c.b16 %v672, %v656
          %v897 = vpack.c.b16 %v673, %v657
          %v898 = vpack.c.b16 %v674, %v658
          %v899 = vpack.c.b16 %v675, %v659
          %v900 = vpack.c.b16 %v676, %v660
          %v901 = vpack.c.b16 %v677, %v661
          %v902 = vpack.c.b16 %v678, %v662
          %v903 = vpack.c.b16 %v695, %v679
          %v904 = vpack.c.b16 %v696, %v680
          %v905 = vpack.c.b16 %v697, %v681
          %v906 = vpack.c.b16 %v698, %v682
          %v907 = vpack.c.b16 %v699, %v683
          %v908 = vpack.c.b16 %v700, %v684
          %v909 = vpack.c.b16 %v701, %v685
          %v910 = vpack.c.b16 %v702, %v686
          %v911 = vpack.c.b16 %v703, %v687
          %v912 = vpack.c.b16 %v704, %v688
          %v913 = vpack.c.b16 %v705, %v689
          %v914 = vpack.c.b16 %v706, %v690
          %v915 = vpack.c.b16 %v707, %v691
          %v916 = vpack.c.b16 %v708, %v692
          %v917 = vpack.c.b16 %v709, %v693
          %v918 = vpack.c.b16 %v710, %v694
          %v919 = vpack.c.b16 %v727, %v711
          %v920 = vpack.c.b16 %v728, %v712
          %v921 = vpack.c.b16 %v729, %v713
          %v922 = vpack.c.b16 %v730, %v714
          %v923 = vpack.c.b16 %v731, %v715
          %v924 = vpack.c.b16 %v732, %v716
          %v925 = vpack.c.b16 %v733, %v717
          %v926 = vpack.c.b16 %v734, %v718
          %v927 = vpack.c.b16 %v735, %v719
          %v928 = vpack.c.b16 %v736, %v720
          %v929 = vpack.c.b16 %v737, %v721
          %v930 = vpack.c.b16 %v738, %v722
          %v931 = vpack.c.b16 %v739, %v723
          %v932 = vpack.c.b16 %v740, %v724
          %v933 = vpack.c.b16 %v741, %v725
          %v934 = vpack.c.b16 %v742, %v726
          %v935 = vpack.c.b16 %v759, %v743
          %v936 = vpack.c.b16 %v760, %v744
          %v937 = vpack.c.b16 %v761, %v745
          %v938 = vpack.c.b16 %v762, %v746
          %v939 = vpack.c.b16 %v763, %v747
          %v940 = vpack.c.b16 %v764, %v748
          %v941 = vpack.c.b16 %v765, %v749
          %v942 = vpack.c.b16 %v766, %v750
          %v943 = vpack.c.b16 %v767, %v751
          %v944 = vpack.c.b16 %v768, %v752
          %v945 = vpack.c.b16 %v769, %v753
          %v946 = vpack.c.b16 %v770, %v754
          %v947 = vpack.c.b16 %v771, %v755
          %v948 = vpack.c.b16 %v772, %v756
          %v949 = vpack.c.b16 %v773, %v757
          %v950 = vpack.c.b16 %v774, %v758
          %v951 = vpack.c.b16 %v791, %v775
          %v952 = vpack.c.b16 %v792, %v776
          %v953 = vpack.c.b16 %v793, %v777
          %v954 = vpack.c.b16 %v794, %v778
          %v955 = vpack.c.b16 %v795, %v779
          %v956 = vpack.c.b16 %v796, %v780
          %v957 = vpack.c.b16 %v797, %v781
          %v958 = vpack.c.b16 %v798, %v782
          %v959 = vpack.c.b16 %v799, %v783
          %v960 = vpack.c.b16 %v800, %v784
          %v961 = vpack.c.b16 %v801, %v785
          %v962 = vpack.c.b16 %v802, %v786
          %v963 = vpack.c.b16 %v803, %v787
          %v964 = vpack.c.b16 %v804, %v788
          %v965 = vpack.c.b16 %v805, %v789
          %v966 = vpack.c.b16 %v806, %v790
          %v967 = vpack.c.b16 %v823, %v807
          %v968 = vpack.c.b16 %v824, %v808
          %v969 = vpack.c.b16 %v825, %v809
          %v970 = vpack.c.b16 %v826, %v810
          %v971 = vpack.c.b16 %v827, %v811
          %v972 = vpack.c.b16 %v828, %v812
          %v973 = vpack.c.b16 %v829, %v813
          %v974 = vpack.c.b16 %v830, %v814
          %v975 = vpack.c.b16 %v831, %v815
          %v976 = vpack.c.b16 %v832, %v816
          %v977 = vpack.c.b16 %v833, %v817
          %v978 = vpack.c.b16 %v834, %v818
          %v979 = vpack.c.b16 %v835, %v819
          %v980 = vpack.c.b16 %v836, %v820
          %v981 = vpack.c.b16 %v837, %v821
          %v982 = vpack.c.b16 %v838, %v822
          %v983 = vpack.c.b16 %v855, %v839
          %v984 = vpack.c.b16 %v856, %v840
          %v985 = vpack.c.b16 %v857, %v841
          %v986 = vpack.c.b16 %v858, %v842
          %v987 = vpack.c.b16 %v859, %v843
          %v988 = vpack.c.b16 %v860, %v844
          %v989 = vpack.c.b16 %v861, %v845
          %v990 = vpack.c.b16 %v862, %v846
          %v991 = vpack.c.b16 %v863, %v847
          %v992 = vpack.c.b16 %v864, %v848
          %v993 = vpack.c.b16 %v865, %v849
          %v994 = vpack.c.b16 %v866, %v850
          %v995 = vpack.c.b16 %v867, %v851
          %v996 = vpack.c.b16 %v868, %v852
          %v997 = vpack.c.b16 %v869, %v853
          %v998 = vpack.c.b16 %v870, %v854
          %1127 = vmatprep.subr.bf16.mxu0 %v872
          %1128 = vmatpush1.bf16.msra.mxu0 %v871
          %1129 = vmatprep.subr.bf16.mxu0 %v888
          %1130 = vmatpush1.bf16.msra.mxu0 %v887
          %1131 = vmatprep.subr.bf16.mxu0 %v904
          %1132 = vmatpush1.bf16.msra.mxu0 %v903
          %1133 = vmatprep.subr.bf16.mxu0 %v920
          %1134 = vmatpush1.bf16.msra.mxu0 %v919
          %1135 = vmatprep.subr.bf16.mxu0 %v936
          %1136 = vmatpush1.bf16.msra.mxu0 %v935
          %1137 = vmatprep.subr.bf16.mxu0 %v952
          %1138 = vmatpush1.bf16.msra.mxu0 %v951
          %1139 = vmatprep.subr.bf16.mxu0 %v968
          %1140 = vmatpush1.bf16.msra.mxu0 %v967
          %1141 = vmatprep.subr.bf16.mxu0 %v984
          %1142 = vmatpush1.bf16.msra.mxu0 %v983
          %1143 = vmatprep.subr.bf16.mxu0 0
          %1144 = vmatpush1.bf16.msra.mxu0 0
          %1145 = vmatprep.subr.bf16.mxu0 0
          %1146 = vmatpush1.bf16.msra.mxu0 0
          %1147 = vmatprep.subr.bf16.mxu0 0
          %1148 = vmatpush1.bf16.msra.mxu0 0
          %1149 = vmatprep.subr.bf16.mxu0 0
          %1150 = vmatpush1.bf16.msra.mxu0 0
          %1151 = vmatprep.subr.bf16.mxu0 0
          %1152 = vmatpush1.bf16.msra.mxu0 0
          %1153 = vmatprep.subr.bf16.mxu0 0
          %1154 = vmatpush1.bf16.msra.mxu0 0
          %1155 = vmatprep.subr.bf16.mxu0 0
          %1156 = vmatpush1.bf16.msra.mxu0 0
          %1157 = vmatprep.subr.bf16.mxu0 0
          %1158 = vmatpush1.bf16.msra.mxu0 0
          %1159 = vmatprep.mubr.bf16.mxu0 0
          %1160 = vmatmul.mubr.bf16.gmra.mrb[0].mxu0 %v479
          %v1161 = vpop.f32.mrb[0].mxu0
          %v1162 = vadd.f32 0.0, %v1161
          %v1163 = vpop.f32.mrb[0].mxu0
          %v1164 = vadd.f32 0.0, %v1163
          %v1165 = vpop.f32.mrb[0].mxu0
          %v1166 = vadd.f32 0.0, %v1165
          %v1167 = vpop.f32.mrb[0].mxu0
          %v1168 = vadd.f32 0.0, %v1167
          %1169 = vmatprep.mubr.bf16.mxu0 0
          %1170 = vmatmul.mubr.bf16.gmra.mrb[0].mxu0 %v480
          %v1171 = vpop.f32.mrb[0].mxu0
          %v1172 = vadd.f32 0.0, %v1171
          %v1173 = vpop.f32.mrb[0].mxu0
          %v1174 = vadd.f32 0.0, %v1173
          %v1175 = vpop.f32.mrb[0].mxu0
          %v1176 = vadd.f32 0.0, %v1175
          %v1177 = vpop.f32.mrb[0].mxu0
          %v1178 = vadd.f32 0.0, %v1177
          %1179 = vmatprep.mubr.bf16.mxu0 0
          %1180 = vmatmul.mubr.bf16.gmra.mrb[0].mxu0 %v481
          %v1181 = vpop.f32.mrb[0].mxu0
          %v1182 = vadd.f32 0.0, %v1181
          %v1183 = vpop.f32.mrb[0].mxu0
          %v1184 = vadd.f32 0.0, %v1183
          %v1185 = vpop.f32.mrb[0].mxu0
          %v1186 = vadd.f32 0.0, %v1185
          %v1187 = vpop.f32.mrb[0].mxu0
          %v1188 = vadd.f32 0.0, %v1187
          %1189 = vmatprep.mubr.bf16.mxu0 0
          %1190 = vmatmul.mubr.bf16.gmra.mrb[0].mxu0 %v482
          %v1191 = vpop.f32.mrb[0].mxu0
          %v1192 = vadd.f32 0.0, %v1191
          %v1193 = vpop.f32.mrb[0].mxu0
          %v1194 = vadd.f32 0.0, %v1193
          %v1195 = vpop.f32.mrb[0].mxu0
          %v1196 = vadd.f32 0.0, %v1195
          %v1197 = vpop.f32.mrb[0].mxu0
          %v1198 = vadd.f32 0.0, %v1197
          %1199 = vdwg.mxu0
          %1200 = vmatprep.subr.bf16.mxu0 %v874
          %1201 = vmatpush1.bf16.msra.mxu0 %v873
          %1202 = vmatprep.subr.bf16.mxu0 %v890
          %1203 = vmatpush1.bf16.msra.mxu0 %v889
          %1204 = vmatprep.subr.bf16.mxu0 %v906
          %1205 = vmatpush1.bf16.msra.mxu0 %v905
          %1206 = vmatprep.subr.bf16.mxu0 %v922
          %1207 = vmatpush1.bf16.msra.mxu0 %v921
          %1208 = vmatprep.subr.bf16.mxu0 %v938
          %1209 = vmatpush1.bf16.msra.mxu0 %v937
          %1210 = vmatprep.subr.bf16.mxu0 %v954
          %1211 = vmatpush1.bf16.msra.mxu0 %v953
          %1212 = vmatprep.subr.bf16.mxu0 %v970
          %1213 = vmatpush1.bf16.msra.mxu0 %v969
          %1214 = vmatprep.subr.bf16.mxu0 %v986
          %1215 = vmatpush1.bf16.msra.mxu0 %v985
          %1216 = vmatprep.subr.bf16.mxu0 0
          %1217 = vmatpush1.bf16.msra.mxu0 0
          %1218 = vmatprep.subr.bf16.mxu0 0
          %1219 = vmatpush1.bf16.msra.mxu0 0
          %1220 = vmatprep.subr.bf16.mxu0 0
          %1221 = vmatpush1.bf16.msra.mxu0 0
          %1222 = vmatprep.subr.bf16.mxu0 0
          %1223 = vmatpush1.bf16.msra.mxu0 0
          %1224 = vmatprep.subr.bf16.mxu0 0
          %1225 = vmatpush1.bf16.msra.mxu0 0
          %1226 = vmatprep.subr.bf16.mxu0 0
          %1227 = vmatpush1.bf16.msra.mxu0 0
          %1228 = vmatprep.subr.bf16.mxu0 0
          %1229 = vmatpush1.bf16.msra.mxu0 0
          %1230 = vmatprep.subr.bf16.mxu0 0
          %1231 = vmatpush1.bf16.msra.mxu0 0
          %1232 = vmatprep.mubr.bf16.mxu0 0
          %1233 = vmatmul.mubr.bf16.gmra.mrb[0].mxu0 %v479
          %v1234 = vpop.f32.mrb[0].mxu0
          %v1235 = vadd.f32 0.0, %v1234
          %v1236 = vpop.f32.mrb[0].mxu0
          %v1237 = vadd.f32 0.0, %v1236
          %v1238 = vpop.f32.mrb[0].mxu0
          %v1239 = vadd.f32 0.0, %v1238
          %v1240 = vpop.f32.mrb[0].mxu0
          %v1241 = vadd.f32 0.0, %v1240
          %1242 = vmatprep.mubr.bf16.mxu0 0
          %1243 = vmatmul.mubr.bf16.gmra.mrb[0].mxu0 %v480
          %v1244 = vpop.f32.mrb[0].mxu0
          %v1245 = vadd.f32 0.0, %v1244
          %v1246 = vpop.f32.mrb[0].mxu0
          %v1247 = vadd.f32 0.0, %v1246
          %v1248 = vpop.f32.mrb[0].mxu0
          %v1249 = vadd.f32 0.0, %v1248
          %v1250 = vpop.f32.mrb[0].mxu0
          %v1251 = vadd.f32 0.0, %v1250
          %1252 = vmatprep.mubr.bf16.mxu0 0
          %1253 = vmatmul.mubr.bf16.gmra.mrb[0].mxu0 %v481
          %v1254 = vpop.f32.mrb[0].mxu0
          %v1255 = vadd.f32 0.0, %v1254
          %v1256 = vpop.f32.mrb[0].mxu0
          %v1257 = vadd.f32 0.0, %v1256
          %v1258 = vpop.f32.mrb[0].mxu0
          %v1259 = vadd.f32 0.0, %v1258
          %v1260 = vpop.f32.mrb[0].mxu0
          %v1261 = vadd.f32 0.0, %v1260
          %1262 = vmatprep.mubr.bf16.mxu0 0
          %1263 = vmatmul.mubr.bf16.gmra.mrb[0].mxu0 %v482
          %v1264 = vpop.f32.mrb[0].mxu0
          %v1265 = vadd.f32 0.0, %v1264
          %v1266 = vpop.f32.mrb[0].mxu0
          %v1267 = vadd.f32 0.0, %v1266
          %v1268 = vpop.f32.mrb[0].mxu0
          %v1269 = vadd.f32 0.0, %v1268
          %v1270 = vpop.f32.mrb[0].mxu0
          %v1271 = vadd.f32 0.0, %v1270
          %1272 = vdwg.mxu0
          %1273 = vmatprep.subr.bf16.mxu0 %v876
          %1274 = vmatpush1.bf16.msra.mxu0 %v875
          %1275 = vmatprep.subr.bf16.mxu0 %v892
          %1276 = vmatpush1.bf16.msra.mxu0 %v891
          %1277 = vmatprep.subr.bf16.mxu0 %v908
          %1278 = vmatpush1.bf16.msra.mxu0 %v907
          %1279 = vmatprep.subr.bf16.mxu0 %v924
          %1280 = vmatpush1.bf16.msra.mxu0 %v923
          %1281 = vmatprep.subr.bf16.mxu0 %v940
          %1282 = vmatpush1.bf16.msra.mxu0 %v939
          %1283 = vmatprep.subr.bf16.mxu0 %v956
          %1284 = vmatpush1.bf16.msra.mxu0 %v955
          %1285 = vmatprep.subr.bf16.mxu0 %v972
          %1286 = vmatpush1.bf16.msra.mxu0 %v971
          %1287 = vmatprep.subr.bf16.mxu0 %v988
          %1288 = vmatpush1.bf16.msra.mxu0 %v987
          %1289 = vmatprep.subr.bf16.mxu0 0
          %1290 = vmatpush1.bf16.msra.mxu0 0
          %1291 = vmatprep.subr.bf16.mxu0 0
          %1292 = vmatpush1.bf16.msra.mxu0 0
          %1293 = vmatprep.subr.bf16.mxu0 0
          %1294 = vmatpush1.bf16.msra.mxu0 0
          %1295 = vmatprep.subr.bf16.mxu0 0
          %1296 = vmatpush1.bf16.msra.mxu0 0
          %1297 = vmatprep.subr.bf16.mxu0 0
          %1298 = vmatpush1.bf16.msra.mxu0 0
          %1299 = vmatprep.subr.bf16.mxu0 0
          %1300 = vmatpush1.bf16.msra.mxu0 0
          %1301 = vmatprep.subr.bf16.mxu0 0
          %1302 = vmatpush1.bf16.msra.mxu0 0
          %1303 = vmatprep.subr.bf16.mxu0 0
          %1304 = vmatpush1.bf16.msra.mxu0 0
          %1305 = vmatprep.mubr.bf16.mxu0 0
          %1306 = vmatmul.mubr.bf16.gmra.mrb[0].mxu0 %v479
          %v1307 = vpop.f32.mrb[0].mxu0
          %v1308 = vadd.f32 0.0, %v1307
          %v1309 = vpop.f32.mrb[0].mxu0
          %v1310 = vadd.f32 0.0, %v1309
          %v1311 = vpop.f32.mrb[0].mxu0
          %v1312 = vadd.f32 0.0, %v1311
          %v1313 = vpop.f32.mrb[0].mxu0
          %v1314 = vadd.f32 0.0, %v1313
          %1315 = vmatprep.mubr.bf16.mxu0 0
          %1316 = vmatmul.mubr.bf16.gmra.mrb[0].mxu0 %v480
          %v1317 = vpop.f32.mrb[0].mxu0
          %v1318 = vadd.f32 0.0, %v1317
          %v1319 = vpop.f32.mrb[0].mxu0
          %v1320 = vadd.f32 0.0, %v1319
          %v1321 = vpop.f32.mrb[0].mxu0
          %v1322 = vadd.f32 0.0, %v1321
          %v1323 = vpop.f32.mrb[0].mxu0
          %v1324 = vadd.f32 0.0, %v1323
          %1325 = vmatprep.mubr.bf16.mxu0 0
          %1326 = vmatmul.mubr.bf16.gmra.mrb[0].mxu0 %v481
          %v1327 = vpop.f32.mrb[0].mxu0
          %v1328 = vadd.f32 0.0, %v1327
          %v1329 = vpop.f32.mrb[0].mxu0
          %v1330 = vadd.f32 0.0, %v1329
          %v1331 = vpop.f32.mrb[0].mxu0
          %v1332 = vadd.f32 0.0, %v1331
          %v1333 = vpop.f32.mrb[0].mxu0
          %v1334 = vadd.f32 0.0, %v1333
          %1335 = vmatprep.mubr.bf16.mxu0 0
          %1336 = vmatmul.mubr.bf16.gmra.mrb[0].mxu0 %v482
          %v1337 = vpop.f32.mrb[0].mxu0
          %v1338 = vadd.f32 0.0, %v1337
          %v1339 = vpop.f32.mrb[0].mxu0
          %v1340 = vadd.f32 0.0, %v1339
          %v1341 = vpop.f32.mrb[0].mxu0
          %v1342 = vadd.f32 0.0, %v1341
          %v1343 = vpop.f32.mrb[0].mxu0
          %v1344 = vadd.f32 0.0, %v1343
          %1345 = vdwg.mxu0
          %1346 = vmatprep.subr.bf16.mxu0 %v878
          %1347 = vmatpush1.bf16.msra.mxu0 %v877
          %1348 = vmatprep.subr.bf16.mxu0 %v894
          %1349 = vmatpush1.bf16.msra.mxu0 %v893
          %1350 = vmatprep.subr.bf16.mxu0 %v910
          %1351 = vmatpush1.bf16.msra.mxu0 %v909
          %1352 = vmatprep.subr.bf16.mxu0 %v926
          %1353 = vmatpush1.bf16.msra.mxu0 %v925
          %1354 = vmatprep.subr.bf16.mxu0 %v942
          %1355 = vmatpush1.bf16.msra.mxu0 %v941
          %1356 = vmatprep.subr.bf16.mxu0 %v958
          %1357 = vmatpush1.bf16.msra.mxu0 %v957
          %1358 = vmatprep.subr.bf16.mxu0 %v974
          %1359 = vmatpush1.bf16.msra.mxu0 %v973
          %1360 = vmatprep.subr.bf16.mxu0 %v990
          %1361 = vmatpush1.bf16.msra.mxu0 %v989
          %1362 = vmatprep.subr.bf16.mxu0 0
          %1363 = vmatpush1.bf16.msra.mxu0 0
          %1364 = vmatprep.subr.bf16.mxu0 0
          %1365 = vmatpush1.bf16.msra.mxu0 0
          %1366 = vmatprep.subr.bf16.mxu0 0
          %1367 = vmatpush1.bf16.msra.mxu0 0
          %1368 = vmatprep.subr.bf16.mxu0 0
          %1369 = vmatpush1.bf16.msra.mxu0 0
          %1370 = vmatprep.subr.bf16.mxu0 0
          %1371 = vmatpush1.bf16.msra.mxu0 0
          %1372 = vmatprep.subr.bf16.mxu0 0
          %1373 = vmatpush1.bf16.msra.mxu0 0
          %1374 = vmatprep.subr.bf16.mxu0 0
          %1375 = vmatpush1.bf16.msra.mxu0 0
          %1376 = vmatprep.subr.bf16.mxu0 0
          %1377 = vmatpush1.bf16.msra.mxu0 0
          %1378 = vmatprep.mubr.bf16.mxu0 0
          %1379 = vmatmul.mubr.bf16.gmra.mrb[0].mxu0 %v479
          %v1380 = vpop.f32.mrb[0].mxu0
          %v1381 = vadd.f32 0.0, %v1380
          %v1382 = vpop.f32.mrb[0].mxu0
          %v1383 = vadd.f32 0.0, %v1382
          %v1384 = vpop.f32.mrb[0].mxu0
          %v1385 = vadd.f32 0.0, %v1384
          %v1386 = vpop.f32.mrb[0].mxu0
          %v1387 = vadd.f32 0.0, %v1386
          %1388 = vmatprep.mubr.bf16.mxu0 0
          %1389 = vmatmul.mubr.bf16.gmra.mrb[0].mxu0 %v480
          %v1390 = vpop.f32.mrb[0].mxu0
          %v1391 = vadd.f32 0.0, %v1390
          %v1392 = vpop.f32.mrb[0].mxu0
          %v1393 = vadd.f32 0.0, %v1392
          %v1394 = vpop.f32.mrb[0].mxu0
          %v1395 = vadd.f32 0.0, %v1394
          %v1396 = vpop.f32.mrb[0].mxu0
          %v1397 = vadd.f32 0.0, %v1396
          %1398 = vmatprep.mubr.bf16.mxu0 0
          %1399 = vmatmul.mubr.bf16.gmra.mrb[0].mxu0 %v481
          %v1400 = vpop.f32.mrb[0].mxu0
          %v1401 = vadd.f32 0.0, %v1400
          %v1402 = vpop.f32.mrb[0].mxu0
          %v1403 = vadd.f32 0.0, %v1402
          %v1404 = vpop.f32.mrb[0].mxu0
          %v1405 = vadd.f32 0.0, %v1404
          %v1406 = vpop.f32.mrb[0].mxu0
          %v1407 = vadd.f32 0.0, %v1406
          %1408 = vmatprep.mubr.bf16.mxu0 0
          %1409 = vmatmul.mubr.bf16.gmra.mrb[0].mxu0 %v482
          %v1410 = vpop.f32.mrb[0].mxu0
          %v1411 = vadd.f32 0.0, %v1410
          %v1412 = vpop.f32.mrb[0].mxu0
          %v1413 = vadd.f32 0.0, %v1412
          %v1414 = vpop.f32.mrb[0].mxu0
          %v1415 = vadd.f32 0.0, %v1414
          %v1416 = vpop.f32.mrb[0].mxu0
          %v1417 = vadd.f32 0.0, %v1416
          %1418 = vdwg.mxu0
          %1419 = vmatprep.subr.bf16.mxu0 %v880
          %1420 = vmatpush1.bf16.msra.mxu0 %v879
          %1421 = vmatprep.subr.bf16.mxu0 %v896
          %1422 = vmatpush1.bf16.msra.mxu0 %v895
          %1423 = vmatprep.subr.bf16.mxu0 %v912
          %1424 = vmatpush1.bf16.msra.mxu0 %v911
          %1425 = vmatprep.subr.bf16.mxu0 %v928
          %1426 = vmatpush1.bf16.msra.mxu0 %v927
          %1427 = vmatprep.subr.bf16.mxu0 %v944
          %1428 = vmatpush1.bf16.msra.mxu0 %v943
          %1429 = vmatprep.subr.bf16.mxu0 %v960
          %1430 = vmatpush1.bf16.msra.mxu0 %v959
          %1431 = vmatprep.subr.bf16.mxu0 %v976
          %1432 = vmatpush1.bf16.msra.mxu0 %v975
          %1433 = vmatprep.subr.bf16.mxu0 %v992
          %1434 = vmatpush1.bf16.msra.mxu0 %v991
          %1435 = vmatprep.subr.bf16.mxu0 0
          %1436 = vmatpush1.bf16.msra.mxu0 0
          %1437 = vmatprep.subr.bf16.mxu0 0
          %1438 = vmatpush1.bf16.msra.mxu0 0
          %1439 = vmatprep.subr.bf16.mxu0 0
          %1440 = vmatpush1.bf16.msra.mxu0 0
          %1441 = vmatprep.subr.bf16.mxu0 0
          %1442 = vmatpush1.bf16.msra.mxu0 0
          %1443 = vmatprep.subr.bf16.mxu0 0
          %1444 = vmatpush1.bf16.msra.mxu0 0
          %1445 = vmatprep.subr.bf16.mxu0 0
          %1446 = vmatpush1.bf16.msra.mxu0 0
          %1447 = vmatprep.subr.bf16.mxu0 0
          %1448 = vmatpush1.bf16.msra.mxu0 0
          %1449 = vmatprep.subr.bf16.mxu0 0
          %1450 = vmatpush1.bf16.msra.mxu0 0
          %1451 = vmatprep.mubr.bf16.mxu0 0
          %1452 = vmatmul.mubr.bf16.gmra.mrb[0].mxu0 %v479
          %v1453 = vpop.f32.mrb[0].mxu0
          %v1454 = vadd.f32 0.0, %v1453
          %v1455 = vpop.f32.mrb[0].mxu0
          %v1456 = vadd.f32 0.0, %v1455
          %v1457 = vpop.f32.mrb[0].mxu0
          %v1458 = vadd.f32 0.0, %v1457
          %v1459 = vpop.f32.mrb[0].mxu0
          %v1460 = vadd.f32 0.0, %v1459
          %1461 = vmatprep.mubr.bf16.mxu0 0
          %1462 = vmatmul.mubr.bf16.gmra.mrb[0].mxu0 %v480
          %v1463 = vpop.f32.mrb[0].mxu0
          %v1464 = vadd.f32 0.0, %v1463
          %v1465 = vpop.f32.mrb[0].mxu0
          %v1466 = vadd.f32 0.0, %v1465
          %v1467 = vpop.f32.mrb[0].mxu0
          %v1468 = vadd.f32 0.0, %v1467
          %v1469 = vpop.f32.mrb[0].mxu0
          %v1470 = vadd.f32 0.0, %v1469
          %1471 = vmatprep.mubr.bf16.mxu0 0
          %1472 = vmatmul.mubr.bf16.gmra.mrb[0].mxu0 %v481
          %v1473 = vpop.f32.mrb[0].mxu0
          %v1474 = vadd.f32 0.0, %v1473
          %v1475 = vpop.f32.mrb[0].mxu0
          %v1476 = vadd.f32 0.0, %v1475
          %v1477 = vpop.f32.mrb[0].mxu0
          %v1478 = vadd.f32 0.0, %v1477
          %v1479 = vpop.f32.mrb[0].mxu0
          %v1480 = vadd.f32 0.0, %v1479
          %1481 = vmatprep.mubr.bf16.mxu0 0
          %1482 = vmatmul.mubr.bf16.gmra.mrb[0].mxu0 %v482
          %v1483 = vpop.f32.mrb[0].mxu0
          %v1484 = vadd.f32 0.0, %v1483
          %v1485 = vpop.f32.mrb[0].mxu0
          %v1486 = vadd.f32 0.0, %v1485
          %v1487 = vpop.f32.mrb[0].mxu0
          %v1488 = vadd.f32 0.0, %v1487
          %v1489 = vpop.f32.mrb[0].mxu0
          %v1490 = vadd.f32 0.0, %v1489
          %1491 = vdwg.mxu0
          %1492 = vmatprep.subr.bf16.mxu0 %v882
          %1493 = vmatpush1.bf16.msra.mxu0 %v881
          %1494 = vmatprep.subr.bf16.mxu0 %v898
          %1495 = vmatpush1.bf16.msra.mxu0 %v897
          %1496 = vmatprep.subr.bf16.mxu0 %v914
          %1497 = vmatpush1.bf16.msra.mxu0 %v913
          %1498 = vmatprep.subr.bf16.mxu0 %v930
          %1499 = vmatpush1.bf16.msra.mxu0 %v929
          %1500 = vmatprep.subr.bf16.mxu0 %v946
          %1501 = vmatpush1.bf16.msra.mxu0 %v945
          %1502 = vmatprep.subr.bf16.mxu0 %v962
          %1503 = vmatpush1.bf16.msra.mxu0 %v961
          %1504 = vmatprep.subr.bf16.mxu0 %v978
          %1505 = vmatpush1.bf16.msra.mxu0 %v977
          %1506 = vmatprep.subr.bf16.mxu0 %v994
          %1507 = vmatpush1.bf16.msra.mxu0 %v993
          %1508 = vmatprep.subr.bf16.mxu0 0
          %1509 = vmatpush1.bf16.msra.mxu0 0
          %1510 = vmatprep.subr.bf16.mxu0 0
          %1511 = vmatpush1.bf16.msra.mxu0 0
          %1512 = vmatprep.subr.bf16.mxu0 0
          %1513 = vmatpush1.bf16.msra.mxu0 0
          %1514 = vmatprep.subr.bf16.mxu0 0
          %1515 = vmatpush1.bf16.msra.mxu0 0
          %1516 = vmatprep.subr.bf16.mxu0 0
          %1517 = vmatpush1.bf16.msra.mxu0 0
          %1518 = vmatprep.subr.bf16.mxu0 0
          %1519 = vmatpush1.bf16.msra.mxu0 0
          %1520 = vmatprep.subr.bf16.mxu0 0
          %1521 = vmatpush1.bf16.msra.mxu0 0
          %1522 = vmatprep.subr.bf16.mxu0 0
          %1523 = vmatpush1.bf16.msra.mxu0 0
          %1524 = vmatprep.mubr.bf16.mxu0 0
          %1525 = vmatmul.mubr.bf16.gmra.mrb[0].mxu0 %v479
          %v1526 = vpop.f32.mrb[0].mxu0
          %v1527 = vadd.f32 0.0, %v1526
          %v1528 = vpop.f32.mrb[0].mxu0
          %v1529 = vadd.f32 0.0, %v1528
          %v1530 = vpop.f32.mrb[0].mxu0
          %v1531 = vadd.f32 0.0, %v1530
          %v1532 = vpop.f32.mrb[0].mxu0
          %v1533 = vadd.f32 0.0, %v1532
          %1534 = vmatprep.mubr.bf16.mxu0 0
          %1535 = vmatmul.mubr.bf16.gmra.mrb[0].mxu0 %v480
          %v1536 = vpop.f32.mrb[0].mxu0
          %v1537 = vadd.f32 0.0, %v1536
          %v1538 = vpop.f32.mrb[0].mxu0
          %v1539 = vadd.f32 0.0, %v1538
          %v1540 = vpop.f32.mrb[0].mxu0
          %v1541 = vadd.f32 0.0, %v1540
          %v1542 = vpop.f32.mrb[0].mxu0
          %v1543 = vadd.f32 0.0, %v1542
          %1544 = vmatprep.mubr.bf16.mxu0 0
          %1545 = vmatmul.mubr.bf16.gmra.mrb[0].mxu0 %v481
          %v1546 = vpop.f32.mrb[0].mxu0
          %v1547 = vadd.f32 0.0, %v1546
          %v1548 = vpop.f32.mrb[0].mxu0
          %v1549 = vadd.f32 0.0, %v1548
          %v1550 = vpop.f32.mrb[0].mxu0
          %v1551 = vadd.f32 0.0, %v1550
          %v1552 = vpop.f32.mrb[0].mxu0
          %v1553 = vadd.f32 0.0, %v1552
          %1554 = vmatprep.mubr.bf16.mxu0 0
          %1555 = vmatmul.mubr.bf16.gmra.mrb[0].mxu0 %v482
          %v1556 = vpop.f32.mrb[0].mxu0
          %v1557 = vadd.f32 0.0, %v1556
          %v1558 = vpop.f32.mrb[0].mxu0
          %v1559 = vadd.f32 0.0, %v1558
          %v1560 = vpop.f32.mrb[0].mxu0
          %v1561 = vadd.f32 0.0, %v1560
          %v1562 = vpop.f32.mrb[0].mxu0
          %v1563 = vadd.f32 0.0, %v1562
          %1564 = vdwg.mxu0
          %1565 = vmatprep.subr.bf16.mxu0 %v884
          %1566 = vmatpush1.bf16.msra.mxu0 %v883
          %1567 = vmatprep.subr.bf16.mxu0 %v900
          %1568 = vmatpush1.bf16.msra.mxu0 %v899
          %1569 = vmatprep.subr.bf16.mxu0 %v916
          %1570 = vmatpush1.bf16.msra.mxu0 %v915
          %1571 = vmatprep.subr.bf16.mxu0 %v932
          %1572 = vmatpush1.bf16.msra.mxu0 %v931
          %1573 = vmatprep.subr.bf16.mxu0 %v948
          %1574 = vmatpush1.bf16.msra.mxu0 %v947
          %1575 = vmatprep.subr.bf16.mxu0 %v964
          %1576 = vmatpush1.bf16.msra.mxu0 %v963
          %1577 = vmatprep.subr.bf16.mxu0 %v980
          %1578 = vmatpush1.bf16.msra.mxu0 %v979
          %1579 = vmatprep.subr.bf16.mxu0 %v996
          %1580 = vmatpush1.bf16.msra.mxu0 %v995
          %1581 = vmatprep.subr.bf16.mxu0 0
          %1582 = vmatpush1.bf16.msra.mxu0 0
          %1583 = vmatprep.subr.bf16.mxu0 0
          %1584 = vmatpush1.bf16.msra.mxu0 0
          %1585 = vmatprep.subr.bf16.mxu0 0
          %1586 = vmatpush1.bf16.msra.mxu0 0
          %1587 = vmatprep.subr.bf16.mxu0 0
          %1588 = vmatpush1.bf16.msra.mxu0 0
          %1589 = vmatprep.subr.bf16.mxu0 0
          %1590 = vmatpush1.bf16.msra.mxu0 0
          %1591 = vmatprep.subr.bf16.mxu0 0
          %1592 = vmatpush1.bf16.msra.mxu0 0
          %1593 = vmatprep.subr.bf16.mxu0 0
          %1594 = vmatpush1.bf16.msra.mxu0 0
          %1595 = vmatprep.subr.bf16.mxu0 0
          %1596 = vmatpush1.bf16.msra.mxu0 0
          %1597 = vmatprep.mubr.bf16.mxu0 0
          %1598 = vmatmul.mubr.bf16.gmra.mrb[0].mxu0 %v479
          %v1599 = vpop.f32.mrb[0].mxu0
          %v1600 = vadd.f32 0.0, %v1599
          %v1601 = vpop.f32.mrb[0].mxu0
          %v1602 = vadd.f32 0.0, %v1601
          %v1603 = vpop.f32.mrb[0].mxu0
          %v1604 = vadd.f32 0.0, %v1603
          %v1605 = vpop.f32.mrb[0].mxu0
          %v1606 = vadd.f32 0.0, %v1605
          %1607 = vmatprep.mubr.bf16.mxu0 0
          %1608 = vmatmul.mubr.bf16.gmra.mrb[0].mxu0 %v480
          %v1609 = vpop.f32.mrb[0].mxu0
          %v1610 = vadd.f32 0.0, %v1609
          %v1611 = vpop.f32.mrb[0].mxu0
          %v1612 = vadd.f32 0.0, %v1611
          %v1613 = vpop.f32.mrb[0].mxu0
          %v1614 = vadd.f32 0.0, %v1613
          %v1615 = vpop.f32.mrb[0].mxu0
          %v1616 = vadd.f32 0.0, %v1615
          %1617 = vmatprep.mubr.bf16.mxu0 0
          %1618 = vmatmul.mubr.bf16.gmra.mrb[0].mxu0 %v481
          %v1619 = vpop.f32.mrb[0].mxu0
          %v1620 = vadd.f32 0.0, %v1619
          %v1621 = vpop.f32.mrb[0].mxu0
          %v1622 = vadd.f32 0.0, %v1621
          %v1623 = vpop.f32.mrb[0].mxu0
          %v1624 = vadd.f32 0.0, %v1623
          %v1625 = vpop.f32.mrb[0].mxu0
          %v1626 = vadd.f32 0.0, %v1625
          %1627 = vmatprep.mubr.bf16.mxu0 0
          %1628 = vmatmul.mubr.bf16.gmra.mrb[0].mxu0 %v482
          %v1629 = vpop.f32.mrb[0].mxu0
          %v1630 = vadd.f32 0.0, %v1629
          %v1631 = vpop.f32.mrb[0].mxu0
          %v1632 = vadd.f32 0.0, %v1631
          %v1633 = vpop.f32.mrb[0].mxu0
          %v1634 = vadd.f32 0.0, %v1633
          %v1635 = vpop.f32.mrb[0].mxu0
          %v1636 = vadd.f32 0.0, %v1635
          %1637 = vdwg.mxu0
          %1638 = vmatprep.subr.bf16.mxu0 %v886
          %1639 = vmatpush1.bf16.msra.mxu0 %v885
          %1640 = vmatprep.subr.bf16.mxu0 %v902
          %1641 = vmatpush1.bf16.msra.mxu0 %v901
          %1642 = vmatprep.subr.bf16.mxu0 %v918
          %1643 = vmatpush1.bf16.msra.mxu0 %v917
          %1644 = vmatprep.subr.bf16.mxu0 %v934
          %1645 = vmatpush1.bf16.msra.mxu0 %v933
          %1646 = vmatprep.subr.bf16.mxu0 %v950
          %1647 = vmatpush1.bf16.msra.mxu0 %v949
          %1648 = vmatprep.subr.bf16.mxu0 %v966
          %1649 = vmatpush1.bf16.msra.mxu0 %v965
          %1650 = vmatprep.subr.bf16.mxu0 %v982
          %1651 = vmatpush1.bf16.msra.mxu0 %v981
          %1652 = vmatprep.subr.bf16.mxu0 %v998
          %1653 = vmatpush1.bf16.msra.mxu0 %v997
          %1654 = vmatprep.subr.bf16.mxu0 0
          %1655 = vmatpush1.bf16.msra.mxu0 0
          %1656 = vmatprep.subr.bf16.mxu0 0
          %1657 = vmatpush1.bf16.msra.mxu0 0
          %1658 = vmatprep.subr.bf16.mxu0 0
          %1659 = vmatpush1.bf16.msra.mxu0 0
          %1660 = vmatprep.subr.bf16.mxu0 0
          %1661 = vmatpush1.bf16.msra.mxu0 0
          %1662 = vmatprep.subr.bf16.mxu0 0
          %1663 = vmatpush1.bf16.msra.mxu0 0
          %1664 = vmatprep.subr.bf16.mxu0 0
          %1665 = vmatpush1.bf16.msra.mxu0 0
          %1666 = vmatprep.subr.bf16.mxu0 0
          %1667 = vmatpush1.bf16.msra.mxu0 0
          %1668 = vmatprep.subr.bf16.mxu0 0
          %1669 = vmatpush1.bf16.msra.mxu0 0
          %1670 = vmatprep.mubr.bf16.mxu0 0
          %1671 = vmatmul.mubr.bf16.gmra.mrb[0].mxu0 %v479
          %v1672 = vpop.f32.mrb[0].mxu0
          %v1673 = vadd.f32 0.0, %v1672
          %v1674 = vpop.f32.mrb[0].mxu0
          %v1675 = vadd.f32 0.0, %v1674
          %v1676 = vpop.f32.mrb[0].mxu0
          %v1677 = vadd.f32 0.0, %v1676
          %v1678 = vpop.f32.mrb[0].mxu0
          %v1679 = vadd.f32 0.0, %v1678
          %1680 = vmatprep.mubr.bf16.mxu0 0
          %1681 = vmatmul.mubr.bf16.gmra.mrb[0].mxu0 %v480
          %v1682 = vpop.f32.mrb[0].mxu0
          %v1683 = vadd.f32 0.0, %v1682
          %v1684 = vpop.f32.mrb[0].mxu0
          %v1685 = vadd.f32 0.0, %v1684
          %v1686 = vpop.f32.mrb[0].mxu0
          %v1687 = vadd.f32 0.0, %v1686
          %v1688 = vpop.f32.mrb[0].mxu0
          %v1689 = vadd.f32 0.0, %v1688
          %1690 = vmatprep.mubr.bf16.mxu0 0
          %1691 = vmatmul.mubr.bf16.gmra.mrb[0].mxu0 %v481
          %v1692 = vpop.f32.mrb[0].mxu0
          %v1693 = vadd.f32 0.0, %v1692
          %v1694 = vpop.f32.mrb[0].mxu0
          %v1695 = vadd.f32 0.0, %v1694
          %v1696 = vpop.f32.mrb[0].mxu0
          %v1697 = vadd.f32 0.0, %v1696
          %v1698 = vpop.f32.mrb[0].mxu0
          %v1699 = vadd.f32 0.0, %v1698
          %1700 = vmatprep.mubr.bf16.mxu0 0
          %1701 = vmatmul.mubr.bf16.gmra.mrb[0].mxu0 %v482
          %v1702 = vpop.f32.mrb[0].mxu0
          %v1703 = vadd.f32 0.0, %v1702
          %v1704 = vpop.f32.mrb[0].mxu0
          %v1705 = vadd.f32 0.0, %v1704
          %v1706 = vpop.f32.mrb[0].mxu0
          %v1707 = vadd.f32 0.0, %v1706
          %v1708 = vpop.f32.mrb[0].mxu0
          %v1709 = vadd.f32 0.0, %v1708
          %1710 = vdwg.mxu0
          %v1711 = vmax.f32 %v1162, %v1172
          %v1712 = vmax.f32 %v1164, %v1174
          %v1713 = vmax.f32 %v1235, %v1245
          %v1714 = vmax.f32 %v1237, %v1247
          %v1715 = vmax.f32 %v1308, %v1318
          %v1716 = vmax.f32 %v1310, %v1320
          %v1717 = vmax.f32 %v1381, %v1391
          %v1718 = vmax.f32 %v1383, %v1393
          %v1719 = vmax.f32 %v1454, %v1464
          %v1720 = vmax.f32 %v1456, %v1466
          %v1721 = vmax.f32 %v1527, %v1537
          %v1722 = vmax.f32 %v1529, %v1539
          %v1723 = vmax.f32 %v1600, %v1610
          %v1724 = vmax.f32 %v1602, %v1612
          %v1725 = vmax.f32 %v1673, %v1683
          %v1726 = vmax.f32 %v1675, %v1685
          %v1727 = vmax.f32 %v1166, %v1176
          %v1728 = vmax.f32 %v1168, %v1178
          %v1729 = vmax.f32 %v1239, %v1249
          %v1730 = vmax.f32 %v1241, %v1251
          %v1731 = vmax.f32 %v1312, %v1322
          %v1732 = vmax.f32 %v1314, %v1324
          %v1733 = vmax.f32 %v1385, %v1395
          %v1734 = vmax.f32 %v1387, %v1397
          %v1735 = vmax.f32 %v1458, %v1468
          %v1736 = vmax.f32 %v1460, %v1470
          %v1737 = vmax.f32 %v1531, %v1541
          %v1738 = vmax.f32 %v1533, %v1543
          %v1739 = vmax.f32 %v1604, %v1614
          %v1740 = vmax.f32 %v1606, %v1616
          %v1741 = vmax.f32 %v1677, %v1687
          %v1742 = vmax.f32 %v1679, %v1689
          %v1743 = vmax.f32 %v1182, %v1192
          %v1744 = vmax.f32 %v1184, %v1194
          %v1745 = vmax.f32 %v1255, %v1265
          %v1746 = vmax.f32 %v1257, %v1267
          %v1747 = vmax.f32 %v1328, %v1338
          %v1748 = vmax.f32 %v1330, %v1340
          %v1749 = vmax.f32 %v1401, %v1411
          %v1750 = vmax.f32 %v1403, %v1413
          %v1751 = vmax.f32 %v1474, %v1484
          %v1752 = vmax.f32 %v1476, %v1486
          %v1753 = vmax.f32 %v1547, %v1557
          %v1754 = vmax.f32 %v1549, %v1559
          %v1755 = vmax.f32 %v1620, %v1630
          %v1756 = vmax.f32 %v1622, %v1632
          %v1757 = vmax.f32 %v1693, %v1703
          %v1758 = vmax.f32 %v1695, %v1705
          %v1759 = vmax.f32 %v1186, %v1196
          %v1760 = vmax.f32 %v1188, %v1198
          %v1761 = vmax.f32 %v1259, %v1269
          %v1762 = vmax.f32 %v1261, %v1271
          %v1763 = vmax.f32 %v1332, %v1342
          %v1764 = vmax.f32 %v1334, %v1344
          %v1765 = vmax.f32 %v1405, %v1415
          %v1766 = vmax.f32 %v1407, %v1417
          %v1767 = vmax.f32 %v1478, %v1488
          %v1768 = vmax.f32 %v1480, %v1490
          %v1769 = vmax.f32 %v1551, %v1561
          %v1770 = vmax.f32 %v1553, %v1563
          %v1771 = vmax.f32 %v1624, %v1634
          %v1772 = vmax.f32 %v1626, %v1636
          %v1773 = vmax.f32 %v1697, %v1707
          %v1774 = vmax.f32 %v1699, %v1709
          %v1775 = vmax.f32 %v1711, %v1743
          %v1776 = vmax.f32 %v1712, %v1744
          %v1777 = vmax.f32 %v1713, %v1745
          %v1778 = vmax.f32 %v1714, %v1746
          %v1779 = vmax.f32 %v1715, %v1747
          %v1780 = vmax.f32 %v1716, %v1748
          %v1781 = vmax.f32 %v1717, %v1749
          %v1782 = vmax.f32 %v1718, %v1750
          %v1783 = vmax.f32 %v1719, %v1751
          %v1784 = vmax.f32 %v1720, %v1752
          %v1785 = vmax.f32 %v1721, %v1753
          %v1786 = vmax.f32 %v1722, %v1754
          %v1787 = vmax.f32 %v1723, %v1755
          %v1788 = vmax.f32 %v1724, %v1756
          %v1789 = vmax.f32 %v1725, %v1757
          %v1790 = vmax.f32 %v1726, %v1758
          %v1791 = vmax.f32 %v1727, %v1759
          %v1792 = vmax.f32 %v1728, %v1760
          %v1793 = vmax.f32 %v1729, %v1761
          %v1794 = vmax.f32 %v1730, %v1762
          %v1795 = vmax.f32 %v1731, %v1763
          %v1796 = vmax.f32 %v1732, %v1764
          %v1797 = vmax.f32 %v1733, %v1765
          %v1798 = vmax.f32 %v1734, %v1766
          %v1799 = vmax.f32 %v1735, %v1767
          %v1800 = vmax.f32 %v1736, %v1768
          %v1801 = vmax.f32 %v1737, %v1769
          %v1802 = vmax.f32 %v1738, %v1770
          %v1803 = vmax.f32 %v1739, %v1771
          %v1804 = vmax.f32 %v1740, %v1772
          %v1805 = vmax.f32 %v1741, %v1773
          %v1806 = vmax.f32 %v1742, %v1774
          %v1807 = vld [vmem:[%s2] sm:$0xff]
          %v1808 = vld [vmem:[%s2 + $0x8] sm:$0xff]
          %1810 = vset.pattern.permute.xlu0 0
          %1811 = vperm.xlu0 %1810, %v1807
          %v1812 = vpop.permute.xlu0 %1811
          %1815 = vset.pattern.permute.xlu0 0
          %1816 = vperm.xlu0 %1815, %v1808
          %v1817 = vpop.permute.xlu0 %1816
          %v1819 = vadd.f32 %v1775, %v1812
          %v1820 = vadd.f32 %v1776, %v1812
          %v1821 = vadd.f32 %v1777, %v1812
          %v1822 = vadd.f32 %v1778, %v1812
          %v1823 = vadd.f32 %v1779, %v1812
          %v1824 = vadd.f32 %v1780, %v1812
          %v1825 = vadd.f32 %v1781, %v1812
          %v1826 = vadd.f32 %v1782, %v1812
          %v1827 = vadd.f32 %v1783, %v1812
          %v1828 = vadd.f32 %v1784, %v1812
          %v1829 = vadd.f32 %v1785, %v1812
          %v1830 = vadd.f32 %v1786, %v1812
          %v1831 = vadd.f32 %v1787, %v1812
          %v1832 = vadd.f32 %v1788, %v1812
          %v1833 = vadd.f32 %v1789, %v1812
          %v1834 = vadd.f32 %v1790, %v1812
          %v1835 = vadd.f32 %v1791, %v1817
          %v1836 = vadd.f32 %v1792, %v1817
          %v1837 = vadd.f32 %v1793, %v1817
          %v1838 = vadd.f32 %v1794, %v1817
          %v1839 = vadd.f32 %v1795, %v1817
          %v1840 = vadd.f32 %v1796, %v1817
          %v1841 = vadd.f32 %v1797, %v1817
          %v1842 = vadd.f32 %v1798, %v1817
          %v1843 = vadd.f32 %v1799, %v1817
          %v1844 = vadd.f32 %v1800, %v1817
          %v1845 = vadd.f32 %v1801, %v1817
          %v1846 = vadd.f32 %v1802, %v1817
          %v1847 = vadd.f32 %v1803, %v1817
          %v1848 = vadd.f32 %v1804, %v1817
          %v1849 = vadd.f32 %v1805, %v1817
          %v1850 = vadd.f32 %v1806, %v1817
          %v1851 = vmax.f32 %v1819, 0.0
          %v1852 = vmax.f32 %v1820, 0.0
          %v1853 = vmax.f32 %v1821, 0.0
          %v1854 = vmax.f32 %v1822, 0.0
          %v1855 = vmax.f32 %v1823, 0.0
          %v1856 = vmax.f32 %v1824, 0.0
          %v1857 = vmax.f32 %v1825, 0.0
          %v1858 = vmax.f32 %v1826, 0.0
          %v1859 = vmax.f32 %v1827, 0.0
          %v1860 = vmax.f32 %v1828, 0.0
          %v1861 = vmax.f32 %v1829, 0.0
          %v1862 = vmax.f32 %v1830, 0.0
          %v1863 = vmax.f32 %v1831, 0.0
          %v1864 = vmax.f32 %v1832, 0.0
          %v1865 = vmax.f32 %v1833, 0.0
          %v1866 = vmax.f32 %v1834, 0.0
          %v1867 = vmax.f32 %v1835, 0.0
          %v1868 = vmax.f32 %v1836, 0.0
          %v1869 = vmax.f32 %v1837, 0.0
          %v1870 = vmax.f32 %v1838, 0.0
          %v1871 = vmax.f32 %v1839, 0.0
          %v1872 = vmax.f32 %v1840, 0.0
          %v1873 = vmax.f32 %v1841, 0.0
          %v1874 = vmax.f32 %v1842, 0.0
          %v1875 = vmax.f32 %v1843, 0.0
          %v1876 = vmax.f32 %v1844, 0.0
          %v1877 = vmax.f32 %v1845, 0.0
          %v1878 = vmax.f32 %v1846, 0.0
          %v1879 = vmax.f32 %v1847, 0.0
          %v1880 = vmax.f32 %v1848, 0.0
          %v1881 = vmax.f32 %v1849, 0.0
          %v1882 = vmax.f32 %v1850, 0.0
          %v1891 = vcombine.low %v1851, %v1852
          %v1892 = vcombine.low %v1853, %v1854
          %v1893 = vcombine.low %v1855, %v1856
          %v1894 = vcombine.low %v1857, %v1858
          %v1896 = vunpack.c.l.s4 1966171168
          %v1897 = vunpack.c.0.s8 %v1896
          %v1898 = vlaneseq
          %v1899 = vshrl.u32 %v1898, 7
          %v1900 = vsub.s32 %v1897, %v1899
          %v1901 = vrot.slane %v1891, %v1900
          %v1903 = vunpack.c.l.s4 1966171168
          %v1904 = vunpack.c.0.s8 %v1903
          %v1905 = vlaneseq
          %v1906 = vshrl.u32 %v1905, 7
          %v1907 = vsub.s32 %v1904, %v1906
          %v1908 = vrot.slane %v1892, %v1907
          %v1910 = vunpack.c.l.s4 1966171168
          %v1911 = vunpack.c.0.s8 %v1910
          %v1912 = vlaneseq
          %v1913 = vshrl.u32 %v1912, 7
          %v1914 = vsub.s32 %v1911, %v1913
          %v1915 = vrot.slane %v1893, %v1914
          %v1917 = vunpack.c.l.s4 1966171168
          %v1918 = vunpack.c.0.s8 %v1917
          %v1919 = vlaneseq
          %v1920 = vshrl.u32 %v1919, 7
          %v1921 = vsub.s32 %v1918, %v1920
          %v1922 = vrot.slane %v1894, %v1921
          %v1923 = vcombine.low %v1901, %v1908
          %v1924 = vcombine.low %v1915, %v1922
          %v1926 = vunpack.c.l.s4 1966171168
          %v1927 = vunpack.c.0.s8 %v1926
          %v1928 = vlaneseq
          %v1929 = vshrl.u32 %v1928, 7
          %v1930 = vsub.s32 %v1927, %v1929
          %v1931 = vrot.slane %v1923, %v1930
          %v1933 = vunpack.c.l.s4 1966171168
          %v1934 = vunpack.c.0.s8 %v1933
          %v1935 = vlaneseq
          %v1936 = vshrl.u32 %v1935, 7
          %v1937 = vsub.s32 %v1934, %v1936
          %v1938 = vrot.slane %v1924, %v1937
          %v1939 = vcombine.low %v1931, %v1938
          %1941 = vst [vmem:[#allocation2] ss:$2 sm:$0xff] %v1939
          %v1942 = vcombine.high %v1901, %v1908
          %v1943 = vcombine.high %v1915, %v1922
          %v1945 = vunpack.c.l.s4 1966171168
          %v1946 = vunpack.c.0.s8 %v1945
          %v1947 = vlaneseq
          %v1948 = vshrl.u32 %v1947, 7
          %v1949 = vsub.s32 %v1946, %v1948
          %v1950 = vrot.slane %v1942, %v1949
          %v1952 = vunpack.c.l.s4 1966171168
          %v1953 = vunpack.c.0.s8 %v1952
          %v1954 = vlaneseq
          %v1955 = vshrl.u32 %v1954, 7
          %v1956 = vsub.s32 %v1953, %v1955
          %v1957 = vrot.slane %v1943, %v1956
          %v1958 = vcombine.low %v1950, %v1957
          %s1960 = scalar_lea.vmem [#allocation2], 16
          %1961 = vst [vmem:[%s1960] ss:$2 sm:$0xff] %v1958
          %v1962 = vcombine.high %v1931, %v1938
          %s1964 = scalar_lea.vmem [#allocation2], 32
          %1965 = vst [vmem:[%s1964] ss:$2 sm:$0xff] %v1962
          %v1966 = vcombine.high %v1950, %v1957
          %s1968 = scalar_lea.vmem [#allocation2], 48
          %1969 = vst [vmem:[%s1968] ss:$2 sm:$0xff] %v1966
          %v1970 = vcombine.high %v1851, %v1852
          %v1971 = vcombine.high %v1853, %v1854
          %v1972 = vcombine.high %v1855, %v1856
          %v1973 = vcombine.high %v1857, %v1858
          %v1975 = vunpack.c.l.s4 1966171168
          %v1976 = vunpack.c.0.s8 %v1975
          %v1977 = vlaneseq
          %v1978 = vshrl.u32 %v1977, 7
          %v1979 = vsub.s32 %v1976, %v1978
          %v1980 = vrot.slane %v1970, %v1979
          %v1982 = vunpack.c.l.s4 1966171168
          %v1983 = vunpack.c.0.s8 %v1982
          %v1984 = vlaneseq
          %v1985 = vshrl.u32 %v1984, 7
          %v1986 = vsub.s32 %v1983, %v1985
          %v1987 = vrot.slane %v1971, %v1986
          %v1989 = vunpack.c.l.s4 1966171168
          %v1990 = vunpack.c.0.s8 %v1989
          %v1991 = vlaneseq
          %v1992 = vshrl.u32 %v1991, 7
          %v1993 = vsub.s32 %v1990, %v1992
          %v1994 = vrot.slane %v1972, %v1993
          %v1996 = vunpack.c.l.s4 1966171168
          %v1997 = vunpack.c.0.s8 %v1996
          %v1998 = vlaneseq
          %v1999 = vshrl.u32 %v1998, 7
          %v2000 = vsub.s32 %v1997, %v1999
          %v2001 = vrot.slane %v1973, %v2000
          %v2002 = vcombine.low %v1980, %v1987
          %v2003 = vcombine.low %v1994, %v2001
          %v2005 = vunpack.c.l.s4 1966171168
          %v2006 = vunpack.c.0.s8 %v2005
          %v2007 = vlaneseq
          %v2008 = vshrl.u32 %v2007, 7
          %v2009 = vsub.s32 %v2006, %v2008
          %v2010 = vrot.slane %v2002, %v2009
          %v2012 = vunpack.c.l.s4 1966171168
          %v2013 = vunpack.c.0.s8 %v2012
          %v2014 = vlaneseq
          %v2015 = vshrl.u32 %v2014, 7
          %v2016 = vsub.s32 %v2013, %v2015
          %v2017 = vrot.slane %v2003, %v2016
          %v2018 = vcombine.low %v2010, %v2017
          %s2020 = scalar_lea.vmem [#allocation2], 64
          %2021 = vst [vmem:[%s2020] ss:$2 sm:$0xff] %v2018
          %v2022 = vcombine.high %v1980, %v1987
          %v2023 = vcombine.high %v1994, %v2001
          %v2025 = vunpack.c.l.s4 1966171168
          %v2026 = vunpack.c.0.s8 %v2025
          %v2027 = vlaneseq
          %v2028 = vshrl.u32 %v2027, 7
          %v2029 = vsub.s32 %v2026, %v2028
          %v2030 = vrot.slane %v2022, %v2029
          %v2032 = vunpack.c.l.s4 1966171168
          %v2033 = vunpack.c.0.s8 %v2032
          %v2034 = vlaneseq
          %v2035 = vshrl.u32 %v2034, 7
          %v2036 = vsub.s32 %v2033, %v2035
          %v2037 = vrot.slane %v2023, %v2036
          %v2038 = vcombine.low %v2030, %v2037
          %s2040 = scalar_lea.vmem [#allocation2], 80
          %2041 = vst [vmem:[%s2040] ss:$2 sm:$0xff] %v2038
          %v2042 = vcombine.high %v2010, %v2017
          %s2044 = scalar_lea.vmem [#allocation2], 96
          %2045 = vst [vmem:[%s2044] ss:$2 sm:$0xff] %v2042
          %v2046 = vcombine.high %v2030, %v2037
          %s2048 = scalar_lea.vmem [#allocation2], 112
          %2049 = vst [vmem:[%s2048] ss:$2 sm:$0xff] %v2046
          %v2058 = vcombine.low %v1867, %v1868
          %v2059 = vcombine.low %v1869, %v1870
          %v2060 = vcombine.low %v1871, %v1872
          %v2061 = vcombine.low %v1873, %v1874
          %v2063 = vunpack.c.l.s4 1966171168
          %v2064 = vunpack.c.0.s8 %v2063
          %v2065 = vlaneseq
          %v2066 = vshrl.u32 %v2065, 7
          %v2067 = vsub.s32 %v2064, %v2066
          %v2068 = vrot.slane %v2058, %v2067
          %v2070 = vunpack.c.l.s4 1966171168
          %v2071 = vunpack.c.0.s8 %v2070
          %v2072 = vlaneseq
          %v2073 = vshrl.u32 %v2072, 7
          %v2074 = vsub.s32 %v2071, %v2073
          %v2075 = vrot.slane %v2059, %v2074
          %v2077 = vunpack.c.l.s4 1966171168
          %v2078 = vunpack.c.0.s8 %v2077
          %v2079 = vlaneseq
          %v2080 = vshrl.u32 %v2079, 7
          %v2081 = vsub.s32 %v2078, %v2080
          %v2082 = vrot.slane %v2060, %v2081
          %v2084 = vunpack.c.l.s4 1966171168
          %v2085 = vunpack.c.0.s8 %v2084
          %v2086 = vlaneseq
          %v2087 = vshrl.u32 %v2086, 7
          %v2088 = vsub.s32 %v2085, %v2087
          %v2089 = vrot.slane %v2061, %v2088
          %v2090 = vcombine.low %v2068, %v2075
          %v2091 = vcombine.low %v2082, %v2089
          %v2093 = vunpack.c.l.s4 1966171168
          %v2094 = vunpack.c.0.s8 %v2093
          %v2095 = vlaneseq
          %v2096 = vshrl.u32 %v2095, 7
          %v2097 = vsub.s32 %v2094, %v2096
          %v2098 = vrot.slane %v2090, %v2097
          %v2100 = vunpack.c.l.s4 1966171168
          %v2101 = vunpack.c.0.s8 %v2100
          %v2102 = vlaneseq
          %v2103 = vshrl.u32 %v2102, 7
          %v2104 = vsub.s32 %v2101, %v2103
          %v2105 = vrot.slane %v2091, %v2104
          %v2106 = vcombine.low %v2098, %v2105
          %s2108 = scalar_lea.vmem [#allocation2], 128
          %2109 = vst [vmem:[%s2108] ss:$2 sm:$0xff] %v2106
          %v2110 = vcombine.high %v2068, %v2075
          %v2111 = vcombine.high %v2082, %v2089
          %v2113 = vunpack.c.l.s4 1966171168
          %v2114 = vunpack.c.0.s8 %v2113
          %v2115 = vlaneseq
          %v2116 = vshrl.u32 %v2115, 7
          %v2117 = vsub.s32 %v2114, %v2116
          %v2118 = vrot.slane %v2110, %v2117
          %v2120 = vunpack.c.l.s4 1966171168
          %v2121 = vunpack.c.0.s8 %v2120
          %v2122 = vlaneseq
          %v2123 = vshrl.u32 %v2122, 7
          %v2124 = vsub.s32 %v2121, %v2123
          %v2125 = vrot.slane %v2111, %v2124
          %v2126 = vcombine.low %v2118, %v2125
          %s2128 = scalar_lea.vmem [#allocation2], 144
          %2129 = vst [vmem:[%s2128] ss:$2 sm:$0xff] %v2126
          %v2130 = vcombine.high %v2098, %v2105
          %s2132 = scalar_lea.vmem [#allocation2], 160
          %2133 = vst [vmem:[%s2132] ss:$2 sm:$0xff] %v2130
          %v2134 = vcombine.high %v2118, %v2125
          %s2136 = scalar_lea.vmem [#allocation2], 176
          %2137 = vst [vmem:[%s2136] ss:$2 sm:$0xff] %v2134
          %v2138 = vcombine.high %v1867, %v1868
          %v2139 = vcombine.high %v1869, %v1870
          %v2140 = vcombine.high %v1871, %v1872
          %v2141 = vcombine.high %v1873, %v1874
          %v2143 = vunpack.c.l.s4 1966171168
          %v2144 = vunpack.c.0.s8 %v2143
          %v2145 = vlaneseq
          %v2146 = vshrl.u32 %v2145, 7
          %v2147 = vsub.s32 %v2144, %v2146
          %v2148 = vrot.slane %v2138, %v2147
          %v2150 = vunpack.c.l.s4 1966171168
          %v2151 = vunpack.c.0.s8 %v2150
          %v2152 = vlaneseq
          %v2153 = vshrl.u32 %v2152, 7
          %v2154 = vsub.s32 %v2151, %v2153
          %v2155 = vrot.slane %v2139, %v2154
          %v2157 = vunpack.c.l.s4 1966171168
          %v2158 = vunpack.c.0.s8 %v2157
          %v2159 = vlaneseq
          %v2160 = vshrl.u32 %v2159, 7
          %v2161 = vsub.s32 %v2158, %v2160
          %v2162 = vrot.slane %v2140, %v2161
          %v2164 = vunpack.c.l.s4 1966171168
          %v2165 = vunpack.c.0.s8 %v2164
          %v2166 = vlaneseq
          %v2167 = vshrl.u32 %v2166, 7
          %v2168 = vsub.s32 %v2165, %v2167
          %v2169 = vrot.slane %v2141, %v2168
          %v2170 = vcombine.low %v2148, %v2155
          %v2171 = vcombine.low %v2162, %v2169
          %v2173 = vunpack.c.l.s4 1966171168
          %v2174 = vunpack.c.0.s8 %v2173
          %v2175 = vlaneseq
          %v2176 = vshrl.u32 %v2175, 7
          %v2177 = vsub.s32 %v2174, %v2176
          %v2178 = vrot.slane %v2170, %v2177
          %v2180 = vunpack.c.l.s4 1966171168
          %v2181 = vunpack.c.0.s8 %v2180
          %v2182 = vlaneseq
          %v2183 = vshrl.u32 %v2182, 7
          %v2184 = vsub.s32 %v2181, %v2183
          %v2185 = vrot.slane %v2171, %v2184
          %v2186 = vcombine.low %v2178, %v2185
          %s2188 = scalar_lea.vmem [#allocation2], 192
          %2189 = vst [vmem:[%s2188] ss:$2 sm:$0xff] %v2186
          %v2190 = vcombine.high %v2148, %v2155
          %v2191 = vcombine.high %v2162, %v2169
          %v2193 = vunpack.c.l.s4 1966171168
          %v2194 = vunpack.c.0.s8 %v2193
          %v2195 = vlaneseq
          %v2196 = vshrl.u32 %v2195, 7
          %v2197 = vsub.s32 %v2194, %v2196
          %v2198 = vrot.slane %v2190, %v2197
          %v2200 = vunpack.c.l.s4 1966171168
          %v2201 = vunpack.c.0.s8 %v2200
          %v2202 = vlaneseq
          %v2203 = vshrl.u32 %v2202, 7
          %v2204 = vsub.s32 %v2201, %v2203
          %v2205 = vrot.slane %v2191, %v2204
          %v2206 = vcombine.low %v2198, %v2205
          %s2208 = scalar_lea.vmem [#allocation2], 208
          %2209 = vst [vmem:[%s2208] ss:$2 sm:$0xff] %v2206
          %v2210 = vcombine.high %v2178, %v2185
          %s2212 = scalar_lea.vmem [#allocation2], 224
          %2213 = vst [vmem:[%s2212] ss:$2 sm:$0xff] %v2210
          %v2214 = vcombine.high %v2198, %v2205
          %s2216 = scalar_lea.vmem [#allocation2], 240
          %2217 = vst [vmem:[%s2216] ss:$2 sm:$0xff] %v2214
          %v2226 = vcombine.low %v1859, %v1860
          %v2227 = vcombine.low %v1861, %v1862
          %v2228 = vcombine.low %v1863, %v1864
          %v2229 = vcombine.low %v1865, %v1866
          %v2231 = vunpack.c.l.s4 1966171168
          %v2232 = vunpack.c.0.s8 %v2231
          %v2233 = vlaneseq
          %v2234 = vshrl.u32 %v2233, 7
          %v2235 = vsub.s32 %v2232, %v2234
          %v2236 = vrot.slane %v2226, %v2235
          %v2238 = vunpack.c.l.s4 1966171168
          %v2239 = vunpack.c.0.s8 %v2238
          %v2240 = vlaneseq
          %v2241 = vshrl.u32 %v2240, 7
          %v2242 = vsub.s32 %v2239, %v2241
          %v2243 = vrot.slane %v2227, %v2242
          %v2245 = vunpack.c.l.s4 1966171168
          %v2246 = vunpack.c.0.s8 %v2245
          %v2247 = vlaneseq
          %v2248 = vshrl.u32 %v2247, 7
          %v2249 = vsub.s32 %v2246, %v2248
          %v2250 = vrot.slane %v2228, %v2249
          %v2252 = vunpack.c.l.s4 1966171168
          %v2253 = vunpack.c.0.s8 %v2252
          %v2254 = vlaneseq
          %v2255 = vshrl.u32 %v2254, 7
          %v2256 = vsub.s32 %v2253, %v2255
          %v2257 = vrot.slane %v2229, %v2256
          %v2258 = vcombine.low %v2236, %v2243
          %v2259 = vcombine.low %v2250, %v2257
          %v2261 = vunpack.c.l.s4 1966171168
          %v2262 = vunpack.c.0.s8 %v2261
          %v2263 = vlaneseq
          %v2264 = vshrl.u32 %v2263, 7
          %v2265 = vsub.s32 %v2262, %v2264
          %v2266 = vrot.slane %v2258, %v2265
          %v2268 = vunpack.c.l.s4 1966171168
          %v2269 = vunpack.c.0.s8 %v2268
          %v2270 = vlaneseq
          %v2271 = vshrl.u32 %v2270, 7
          %v2272 = vsub.s32 %v2269, %v2271
          %v2273 = vrot.slane %v2259, %v2272
          %v2274 = vcombine.low %v2266, %v2273
          %s2276 = scalar_lea.vmem [#allocation2], 1
          %2277 = vst [vmem:[%s2276] ss:$2 sm:$0xff] %v2274
          %v2278 = vcombine.high %v2236, %v2243
          %v2279 = vcombine.high %v2250, %v2257
          %v2281 = vunpack.c.l.s4 1966171168
          %v2282 = vunpack.c.0.s8 %v2281
          %v2283 = vlaneseq
          %v2284 = vshrl.u32 %v2283, 7
          %v2285 = vsub.s32 %v2282, %v2284
          %v2286 = vrot.slane %v2278, %v2285
          %v2288 = vunpack.c.l.s4 1966171168
          %v2289 = vunpack.c.0.s8 %v2288
          %v2290 = vlaneseq
          %v2291 = vshrl.u32 %v2290, 7
          %v2292 = vsub.s32 %v2289, %v2291
          %v2293 = vrot.slane %v2279, %v2292
          %v2294 = vcombine.low %v2286, %v2293
          %s2296 = scalar_lea.vmem [#allocation2], 17
          %2297 = vst [vmem:[%s2296] ss:$2 sm:$0xff] %v2294
          %v2298 = vcombine.high %v2266, %v2273
          %s2300 = scalar_lea.vmem [#allocation2], 33
          %2301 = vst [vmem:[%s2300] ss:$2 sm:$0xff] %v2298
          %v2302 = vcombine.high %v2286, %v2293
          %s2304 = scalar_lea.vmem [#allocation2], 49
          %2305 = vst [vmem:[%s2304] ss:$2 sm:$0xff] %v2302
          %v2306 = vcombine.high %v1859, %v1860
          %v2307 = vcombine.high %v1861, %v1862
          %v2308 = vcombine.high %v1863, %v1864
          %v2309 = vcombine.high %v1865, %v1866
          %v2311 = vunpack.c.l.s4 1966171168
          %v2312 = vunpack.c.0.s8 %v2311
          %v2313 = vlaneseq
          %v2314 = vshrl.u32 %v2313, 7
          %v2315 = vsub.s32 %v2312, %v2314
          %v2316 = vrot.slane %v2306, %v2315
          %v2318 = vunpack.c.l.s4 1966171168
          %v2319 = vunpack.c.0.s8 %v2318
          %v2320 = vlaneseq
          %v2321 = vshrl.u32 %v2320, 7
          %v2322 = vsub.s32 %v2319, %v2321
          %v2323 = vrot.slane %v2307, %v2322
          %v2325 = vunpack.c.l.s4 1966171168
          %v2326 = vunpack.c.0.s8 %v2325
          %v2327 = vlaneseq
          %v2328 = vshrl.u32 %v2327, 7
          %v2329 = vsub.s32 %v2326, %v2328
          %v2330 = vrot.slane %v2308, %v2329
          %v2332 = vunpack.c.l.s4 1966171168
          %v2333 = vunpack.c.0.s8 %v2332
          %v2334 = vlaneseq
          %v2335 = vshrl.u32 %v2334, 7
          %v2336 = vsub.s32 %v2333, %v2335
          %v2337 = vrot.slane %v2309, %v2336
          %v2338 = vcombine.low %v2316, %v2323
          %v2339 = vcombine.low %v2330, %v2337
          %v2341 = vunpack.c.l.s4 1966171168
          %v2342 = vunpack.c.0.s8 %v2341
          %v2343 = vlaneseq
          %v2344 = vshrl.u32 %v2343, 7
          %v2345 = vsub.s32 %v2342, %v2344
          %v2346 = vrot.slane %v2338, %v2345
          %v2348 = vunpack.c.l.s4 1966171168
          %v2349 = vunpack.c.0.s8 %v2348
          %v2350 = vlaneseq
          %v2351 = vshrl.u32 %v2350, 7
          %v2352 = vsub.s32 %v2349, %v2351
          %v2353 = vrot.slane %v2339, %v2352
          %v2354 = vcombine.low %v2346, %v2353
          %s2356 = scalar_lea.vmem [#allocation2], 65
          %2357 = vst [vmem:[%s2356] ss:$2 sm:$0xff] %v2354
          %v2358 = vcombine.high %v2316, %v2323
          %v2359 = vcombine.high %v2330, %v2337
          %v2361 = vunpack.c.l.s4 1966171168
          %v2362 = vunpack.c.0.s8 %v2361
          %v2363 = vlaneseq
          %v2364 = vshrl.u32 %v2363, 7
          %v2365 = vsub.s32 %v2362, %v2364
          %v2366 = vrot.slane %v2358, %v2365
          %v2368 = vunpack.c.l.s4 1966171168
          %v2369 = vunpack.c.0.s8 %v2368
          %v2370 = vlaneseq
          %v2371 = vshrl.u32 %v2370, 7
          %v2372 = vsub.s32 %v2369, %v2371
          %v2373 = vrot.slane %v2359, %v2372
          %v2374 = vcombine.low %v2366, %v2373
          %s2376 = scalar_lea.vmem [#allocation2], 81
          %2377 = vst [vmem:[%s2376] ss:$2 sm:$0xff] %v2374
          %v2378 = vcombine.high %v2346, %v2353
          %s2380 = scalar_lea.vmem [#allocation2], 97
          %2381 = vst [vmem:[%s2380] ss:$2 sm:$0xff] %v2378
          %v2382 = vcombine.high %v2366, %v2373
          %s2384 = scalar_lea.vmem [#allocation2], 113
          %2385 = vst [vmem:[%s2384] ss:$2 sm:$0xff] %v2382
          %v2394 = vcombine.low %v1875, %v1876
          %v2395 = vcombine.low %v1877, %v1878
          %v2396 = vcombine.low %v1879, %v1880
          %v2397 = vcombine.low %v1881, %v1882
          %v2399 = vunpack.c.l.s4 1966171168
          %v2400 = vunpack.c.0.s8 %v2399
          %v2401 = vlaneseq
          %v2402 = vshrl.u32 %v2401, 7
          %v2403 = vsub.s32 %v2400, %v2402
          %v2404 = vrot.slane %v2394, %v2403
          %v2406 = vunpack.c.l.s4 1966171168
          %v2407 = vunpack.c.0.s8 %v2406
          %v2408 = vlaneseq
          %v2409 = vshrl.u32 %v2408, 7
          %v2410 = vsub.s32 %v2407, %v2409
          %v2411 = vrot.slane %v2395, %v2410
          %v2413 = vunpack.c.l.s4 1966171168
          %v2414 = vunpack.c.0.s8 %v2413
          %v2415 = vlaneseq
          %v2416 = vshrl.u32 %v2415, 7
          %v2417 = vsub.s32 %v2414, %v2416
          %v2418 = vrot.slane %v2396, %v2417
          %v2420 = vunpack.c.l.s4 1966171168
          %v2421 = vunpack.c.0.s8 %v2420
          %v2422 = vlaneseq
          %v2423 = vshrl.u32 %v2422, 7
          %v2424 = vsub.s32 %v2421, %v2423
          %v2425 = vrot.slane %v2397, %v2424
          %v2426 = vcombine.low %v2404, %v2411
          %v2427 = vcombine.low %v2418, %v2425
          %v2429 = vunpack.c.l.s4 1966171168
          %v2430 = vunpack.c.0.s8 %v2429
          %v2431 = vlaneseq
          %v2432 = vshrl.u32 %v2431, 7
          %v2433 = vsub.s32 %v2430, %v2432
          %v2434 = vrot.slane %v2426, %v2433
          %v2436 = vunpack.c.l.s4 1966171168
          %v2437 = vunpack.c.0.s8 %v2436
          %v2438 = vlaneseq
          %v2439 = vshrl.u32 %v2438, 7
          %v2440 = vsub.s32 %v2437, %v2439
          %v2441 = vrot.slane %v2427, %v2440
          %v2442 = vcombine.low %v2434, %v2441
          %s2444 = scalar_lea.vmem [#allocation2], 129
          %2445 = vst [vmem:[%s2444] ss:$2 sm:$0xff] %v2442
          %v2446 = vcombine.high %v2404, %v2411
          %v2447 = vcombine.high %v2418, %v2425
          %v2449 = vunpack.c.l.s4 1966171168
          %v2450 = vunpack.c.0.s8 %v2449
          %v2451 = vlaneseq
          %v2452 = vshrl.u32 %v2451, 7
          %v2453 = vsub.s32 %v2450, %v2452
          %v2454 = vrot.slane %v2446, %v2453
          %v2456 = vunpack.c.l.s4 1966171168
          %v2457 = vunpack.c.0.s8 %v2456
          %v2458 = vlaneseq
          %v2459 = vshrl.u32 %v2458, 7
          %v2460 = vsub.s32 %v2457, %v2459
          %v2461 = vrot.slane %v2447, %v2460
          %v2462 = vcombine.low %v2454, %v2461
          %s2464 = scalar_lea.vmem [#allocation2], 145
          %2465 = vst [vmem:[%s2464] ss:$2 sm:$0xff] %v2462
          %v2466 = vcombine.high %v2434, %v2441
          %s2468 = scalar_lea.vmem [#allocation2], 161
          %2469 = vst [vmem:[%s2468] ss:$2 sm:$0xff] %v2466
          %v2470 = vcombine.high %v2454, %v2461
          %s2472 = scalar_lea.vmem [#allocation2], 177
          %2473 = vst [vmem:[%s2472] ss:$2 sm:$0xff] %v2470
          %v2474 = vcombine.high %v1875, %v1876
          %v2475 = vcombine.high %v1877, %v1878
          %v2476 = vcombine.high %v1879, %v1880
          %v2477 = vcombine.high %v1881, %v1882
          %v2479 = vunpack.c.l.s4 1966171168
          %v2480 = vunpack.c.0.s8 %v2479
          %v2481 = vlaneseq
          %v2482 = vshrl.u32 %v2481, 7
          %v2483 = vsub.s32 %v2480, %v2482
          %v2484 = vrot.slane %v2474, %v2483
          %v2486 = vunpack.c.l.s4 1966171168
          %v2487 = vunpack.c.0.s8 %v2486
          %v2488 = vlaneseq
          %v2489 = vshrl.u32 %v2488, 7
          %v2490 = vsub.s32 %v2487, %v2489
          %v2491 = vrot.slane %v2475, %v2490
          %v2493 = vunpack.c.l.s4 1966171168
          %v2494 = vunpack.c.0.s8 %v2493
          %v2495 = vlaneseq
          %v2496 = vshrl.u32 %v2495, 7
          %v2497 = vsub.s32 %v2494, %v2496
          %v2498 = vrot.slane %v2476, %v2497
          %v2500 = vunpack.c.l.s4 1966171168
          %v2501 = vunpack.c.0.s8 %v2500
          %v2502 = vlaneseq
          %v2503 = vshrl.u32 %v2502, 7
          %v2504 = vsub.s32 %v2501, %v2503
          %v2505 = vrot.slane %v2477, %v2504
          %v2506 = vcombine.low %v2484, %v2491
          %v2507 = vcombine.low %v2498, %v2505
          %v2509 = vunpack.c.l.s4 1966171168
          %v2510 = vunpack.c.0.s8 %v2509
          %v2511 = vlaneseq
          %v2512 = vshrl.u32 %v2511, 7
          %v2513 = vsub.s32 %v2510, %v2512
          %v2514 = vrot.slane %v2506, %v2513
          %v2516 = vunpack.c.l.s4 1966171168
          %v2517 = vunpack.c.0.s8 %v2516
          %v2518 = vlaneseq
          %v2519 = vshrl.u32 %v2518, 7
          %v2520 = vsub.s32 %v2517, %v2519
          %v2521 = vrot.slane %v2507, %v2520
          %v2522 = vcombine.low %v2514, %v2521
          %s2524 = scalar_lea.vmem [#allocation2], 193
          %2525 = vst [vmem:[%s2524] ss:$2 sm:$0xff] %v2522
          %v2526 = vcombine.high %v2484, %v2491
          %v2527 = vcombine.high %v2498, %v2505
          %v2529 = vunpack.c.l.s4 1966171168
          %v2530 = vunpack.c.0.s8 %v2529
          %v2531 = vlaneseq
          %v2532 = vshrl.u32 %v2531, 7
          %v2533 = vsub.s32 %v2530, %v2532
          %v2534 = vrot.slane %v2526, %v2533
          %v2536 = vunpack.c.l.s4 1966171168
          %v2537 = vunpack.c.0.s8 %v2536
          %v2538 = vlaneseq
          %v2539 = vshrl.u32 %v2538, 7
          %v2540 = vsub.s32 %v2537, %v2539
          %v2541 = vrot.slane %v2527, %v2540
          %v2542 = vcombine.low %v2534, %v2541
          %s2544 = scalar_lea.vmem [#allocation2], 209
          %2545 = vst [vmem:[%s2544] ss:$2 sm:$0xff] %v2542
          %v2546 = vcombine.high %v2514, %v2521
          %s2548 = scalar_lea.vmem [#allocation2], 225
          %2549 = vst [vmem:[%s2548] ss:$2 sm:$0xff] %v2546
          %v2550 = vcombine.high %v2534, %v2541
          %s2552 = scalar_lea.vmem [#allocation2], 241
          %2553 = vst [vmem:[%s2552] ss:$2 sm:$0xff] %v2550
        $region60: #{image_nn_forward.1} parent=55 // pred_fallthru
          _
        %s2554 = smul.u32 %s21, 8192
        %s2555 = sshra.s32 %s2554, 7
        %s2556 = sand.u32 %s2554, 127
        %s2557 = smul.addr %s2555, 2
        %s2558 = scalar_lea.vmem [#allocation2], %s2557
        %v2559 = vld [vmem:[%s2558] sm:$0xff]
        %v2560 = vld [vmem:[%s2558 + $0x8] sm:$0xff]
        %v2561 = vld [vmem:[%s2558 + $0x10] sm:$0xff]
        %v2562 = vld [vmem:[%s2558 + $0x18] sm:$0xff]
        %v2563 = vld [vmem:[%s2558 + $0x20] sm:$0xff]
        %v2564 = vld [vmem:[%s2558 + $0x28] sm:$0xff]
        %v2565 = vld [vmem:[%s2558 + $0x30] sm:$0xff]
        %v2566 = vld [vmem:[%s2558 + $0x38] sm:$0xff]
        %v2567 = vld [vmem:[%s2558 + $0x40] sm:$0xff]
        %v2568 = vld [vmem:[%s2558 + $0x48] sm:$0xff]
        %v2569 = vld [vmem:[%s2558 + $0x50] sm:$0xff]
        %v2570 = vld [vmem:[%s2558 + $0x58] sm:$0xff]
        %v2571 = vld [vmem:[%s2558 + $0x60] sm:$0xff]
        %v2572 = vld [vmem:[%s2558 + $0x68] sm:$0xff]
        %v2573 = vld [vmem:[%s2558 + $0x70] sm:$0xff]
        %v2574 = vld [vmem:[%s2558 + $0x78] sm:$0xff]
        %v2591 = vcombine.high %v2559, %v2559
        %v2593 = vunpack.c.l.s4 1983009808
        %v2594 = vunpack.c.0.s8 %v2593
        %v2595 = vlaneseq
        %v2596 = vshrl.u32 %v2595, 7
        %v2597 = vsub.s32 %v2594, %v2596
        %v2598 = vrot.slane %v2559, %v2597
        %v2600 = vunpack.c.l.s4 1983009808
        %v2601 = vunpack.c.0.s8 %v2600
        %v2602 = vlaneseq
        %v2603 = vshrl.u32 %v2602, 7
        %v2604 = vsub.s32 %v2601, %v2603
        %v2605 = vrot.slane %v2591, %v2604
        %v2606 = vcombine.high %v2598, %v2598
        %v2607 = vcombine.high %v2605, %v2605
        %v2608 = vcombine.high %v2560, %v2560
        %v2610 = vunpack.c.l.s4 1983009808
        %v2611 = vunpack.c.0.s8 %v2610
        %v2612 = vlaneseq
        %v2613 = vshrl.u32 %v2612, 7
        %v2614 = vsub.s32 %v2611, %v2613
        %v2615 = vrot.slane %v2560, %v2614
        %v2617 = vunpack.c.l.s4 1983009808
        %v2618 = vunpack.c.0.s8 %v2617
        %v2619 = vlaneseq
        %v2620 = vshrl.u32 %v2619, 7
        %v2621 = vsub.s32 %v2618, %v2620
        %v2622 = vrot.slane %v2608, %v2621
        %v2623 = vcombine.high %v2615, %v2615
        %v2624 = vcombine.high %v2622, %v2622
        %v2625 = vcombine.high %v2561, %v2561
        %v2627 = vunpack.c.l.s4 1983009808
        %v2628 = vunpack.c.0.s8 %v2627
        %v2629 = vlaneseq
        %v2630 = vshrl.u32 %v2629, 7
        %v2631 = vsub.s32 %v2628, %v2630
        %v2632 = vrot.slane %v2561, %v2631
        %v2634 = vunpack.c.l.s4 1983009808
        %v2635 = vunpack.c.0.s8 %v2634
        %v2636 = vlaneseq
        %v2637 = vshrl.u32 %v2636, 7
        %v2638 = vsub.s32 %v2635, %v2637
        %v2639 = vrot.slane %v2625, %v2638
        %v2640 = vcombine.high %v2632, %v2632
        %v2641 = vcombine.high %v2639, %v2639
        %v2642 = vcombine.high %v2562, %v2562
        %v2644 = vunpack.c.l.s4 1983009808
        %v2645 = vunpack.c.0.s8 %v2644
        %v2646 = vlaneseq
        %v2647 = vshrl.u32 %v2646, 7
        %v2648 = vsub.s32 %v2645, %v2647
        %v2649 = vrot.slane %v2562, %v2648
        %v2651 = vunpack.c.l.s4 1983009808
        %v2652 = vunpack.c.0.s8 %v2651
        %v2653 = vlaneseq
        %v2654 = vshrl.u32 %v2653, 7
        %v2655 = vsub.s32 %v2652, %v2654
        %v2656 = vrot.slane %v2642, %v2655
        %v2657 = vcombine.high %v2649, %v2649
        %v2658 = vcombine.high %v2656, %v2656
        %v2659 = vcombine.high %v2563, %v2563
        %v2661 = vunpack.c.l.s4 1983009808
        %v2662 = vunpack.c.0.s8 %v2661
        %v2663 = vlaneseq
        %v2664 = vshrl.u32 %v2663, 7
        %v2665 = vsub.s32 %v2662, %v2664
        %v2666 = vrot.slane %v2563, %v2665
        %v2668 = vunpack.c.l.s4 1983009808
        %v2669 = vunpack.c.0.s8 %v2668
        %v2670 = vlaneseq
        %v2671 = vshrl.u32 %v2670, 7
        %v2672 = vsub.s32 %v2669, %v2671
        %v2673 = vrot.slane %v2659, %v2672
        %v2674 = vcombine.high %v2666, %v2666
        %v2675 = vcombine.high %v2673, %v2673
        %v2676 = vcombine.high %v2564, %v2564
        %v2678 = vunpack.c.l.s4 1983009808
        %v2679 = vunpack.c.0.s8 %v2678
        %v2680 = vlaneseq
        %v2681 = vshrl.u32 %v2680, 7
        %v2682 = vsub.s32 %v2679, %v2681
        %v2683 = vrot.slane %v2564, %v2682
        %v2685 = vunpack.c.l.s4 1983009808
        %v2686 = vunpack.c.0.s8 %v2685
        %v2687 = vlaneseq
        %v2688 = vshrl.u32 %v2687, 7
        %v2689 = vsub.s32 %v2686, %v2688
        %v2690 = vrot.slane %v2676, %v2689
        %v2691 = vcombine.high %v2683, %v2683
        %v2692 = vcombine.high %v2690, %v2690
        %v2693 = vcombine.high %v2565, %v2565
        %v2695 = vunpack.c.l.s4 1983009808
        %v2696 = vunpack.c.0.s8 %v2695
        %v2697 = vlaneseq
        %v2698 = vshrl.u32 %v2697, 7
        %v2699 = vsub.s32 %v2696, %v2698
        %v2700 = vrot.slane %v2565, %v2699
        %v2702 = vunpack.c.l.s4 1983009808
        %v2703 = vunpack.c.0.s8 %v2702
        %v2704 = vlaneseq
        %v2705 = vshrl.u32 %v2704, 7
        %v2706 = vsub.s32 %v2703, %v2705
        %v2707 = vrot.slane %v2693, %v2706
        %v2708 = vcombine.high %v2700, %v2700
        %v2709 = vcombine.high %v2707, %v2707
        %v2710 = vcombine.high %v2566, %v2566
        %v2712 = vunpack.c.l.s4 1983009808
        %v2713 = vunpack.c.0.s8 %v2712
        %v2714 = vlaneseq
        %v2715 = vshrl.u32 %v2714, 7
        %v2716 = vsub.s32 %v2713, %v2715
        %v2717 = vrot.slane %v2566, %v2716
        %v2719 = vunpack.c.l.s4 1983009808
        %v2720 = vunpack.c.0.s8 %v2719
        %v2721 = vlaneseq
        %v2722 = vshrl.u32 %v2721, 7
        %v2723 = vsub.s32 %v2720, %v2722
        %v2724 = vrot.slane %v2710, %v2723
        %v2725 = vcombine.high %v2717, %v2717
        %v2726 = vcombine.high %v2724, %v2724
        %v2727 = vcombine.high %v2567, %v2567
        %v2729 = vunpack.c.l.s4 1983009808
        %v2730 = vunpack.c.0.s8 %v2729
        %v2731 = vlaneseq
        %v2732 = vshrl.u32 %v2731, 7
        %v2733 = vsub.s32 %v2730, %v2732
        %v2734 = vrot.slane %v2567, %v2733
        %v2736 = vunpack.c.l.s4 1983009808
        %v2737 = vunpack.c.0.s8 %v2736
        %v2738 = vlaneseq
        %v2739 = vshrl.u32 %v2738, 7
        %v2740 = vsub.s32 %v2737, %v2739
        %v2741 = vrot.slane %v2727, %v2740
        %v2742 = vcombine.high %v2734, %v2734
        %v2743 = vcombine.high %v2741, %v2741
        %v2744 = vcombine.high %v2568, %v2568
        %v2746 = vunpack.c.l.s4 1983009808
        %v2747 = vunpack.c.0.s8 %v2746
        %v2748 = vlaneseq
        %v2749 = vshrl.u32 %v2748, 7
        %v2750 = vsub.s32 %v2747, %v2749
        %v2751 = vrot.slane %v2568, %v2750
        %v2753 = vunpack.c.l.s4 1983009808
        %v2754 = vunpack.c.0.s8 %v2753
        %v2755 = vlaneseq
        %v2756 = vshrl.u32 %v2755, 7
        %v2757 = vsub.s32 %v2754, %v2756
        %v2758 = vrot.slane %v2744, %v2757
        %v2759 = vcombine.high %v2751, %v2751
        %v2760 = vcombine.high %v2758, %v2758
        %v2761 = vcombine.high %v2569, %v2569
        %v2763 = vunpack.c.l.s4 1983009808
        %v2764 = vunpack.c.0.s8 %v2763
        %v2765 = vlaneseq
        %v2766 = vshrl.u32 %v2765, 7
        %v2767 = vsub.s32 %v2764, %v2766
        %v2768 = vrot.slane %v2569, %v2767
        %v2770 = vunpack.c.l.s4 1983009808
        %v2771 = vunpack.c.0.s8 %v2770
        %v2772 = vlaneseq
        %v2773 = vshrl.u32 %v2772, 7
        %v2774 = vsub.s32 %v2771, %v2773
        %v2775 = vrot.slane %v2761, %v2774
        %v2776 = vcombine.high %v2768, %v2768
        %v2777 = vcombine.high %v2775, %v2775
        %v2778 = vcombine.high %v2570, %v2570
        %v2780 = vunpack.c.l.s4 1983009808
        %v2781 = vunpack.c.0.s8 %v2780
        %v2782 = vlaneseq
        %v2783 = vshrl.u32 %v2782, 7
        %v2784 = vsub.s32 %v2781, %v2783
        %v2785 = vrot.slane %v2570, %v2784
        %v2787 = vunpack.c.l.s4 1983009808
        %v2788 = vunpack.c.0.s8 %v2787
        %v2789 = vlaneseq
        %v2790 = vshrl.u32 %v2789, 7
        %v2791 = vsub.s32 %v2788, %v2790
        %v2792 = vrot.slane %v2778, %v2791
        %v2793 = vcombine.high %v2785, %v2785
        %v2794 = vcombine.high %v2792, %v2792
        %v2795 = vcombine.high %v2571, %v2571
        %v2797 = vunpack.c.l.s4 1983009808
        %v2798 = vunpack.c.0.s8 %v2797
        %v2799 = vlaneseq
        %v2800 = vshrl.u32 %v2799, 7
        %v2801 = vsub.s32 %v2798, %v2800
        %v2802 = vrot.slane %v2571, %v2801
        %v2804 = vunpack.c.l.s4 1983009808
        %v2805 = vunpack.c.0.s8 %v2804
        %v2806 = vlaneseq
        %v2807 = vshrl.u32 %v2806, 7
        %v2808 = vsub.s32 %v2805, %v2807
        %v2809 = vrot.slane %v2795, %v2808
        %v2810 = vcombine.high %v2802, %v2802
        %v2811 = vcombine.high %v2809, %v2809
        %v2812 = vcombine.high %v2572, %v2572
        %v2814 = vunpack.c.l.s4 1983009808
        %v2815 = vunpack.c.0.s8 %v2814
        %v2816 = vlaneseq
        %v2817 = vshrl.u32 %v2816, 7
        %v2818 = vsub.s32 %v2815, %v2817
        %v2819 = vrot.slane %v2572, %v2818
        %v2821 = vunpack.c.l.s4 1983009808
        %v2822 = vunpack.c.0.s8 %v2821
        %v2823 = vlaneseq
        %v2824 = vshrl.u32 %v2823, 7
        %v2825 = vsub.s32 %v2822, %v2824
        %v2826 = vrot.slane %v2812, %v2825
        %v2827 = vcombine.high %v2819, %v2819
        %v2828 = vcombine.high %v2826, %v2826
        %v2829 = vcombine.high %v2573, %v2573
        %v2831 = vunpack.c.l.s4 1983009808
        %v2832 = vunpack.c.0.s8 %v2831
        %v2833 = vlaneseq
        %v2834 = vshrl.u32 %v2833, 7
        %v2835 = vsub.s32 %v2832, %v2834
        %v2836 = vrot.slane %v2573, %v2835
        %v2838 = vunpack.c.l.s4 1983009808
        %v2839 = vunpack.c.0.s8 %v2838
        %v2840 = vlaneseq
        %v2841 = vshrl.u32 %v2840, 7
        %v2842 = vsub.s32 %v2839, %v2841
        %v2843 = vrot.slane %v2829, %v2842
        %v2844 = vcombine.high %v2836, %v2836
        %v2845 = vcombine.high %v2843, %v2843
        %v2846 = vcombine.high %v2574, %v2574
        %v2848 = vunpack.c.l.s4 1983009808
        %v2849 = vunpack.c.0.s8 %v2848
        %v2850 = vlaneseq
        %v2851 = vshrl.u32 %v2850, 7
        %v2852 = vsub.s32 %v2849, %v2851
        %v2853 = vrot.slane %v2574, %v2852
        %v2855 = vunpack.c.l.s4 1983009808
        %v2856 = vunpack.c.0.s8 %v2855
        %v2857 = vlaneseq
        %v2858 = vshrl.u32 %v2857, 7
        %v2859 = vsub.s32 %v2856, %v2858
        %v2860 = vrot.slane %v2846, %v2859
        %v2861 = vcombine.high %v2853, %v2853
        %v2862 = vcombine.high %v2860, %v2860
        %v2927 = vpack.c.bf16 %v2598, %v2598
        %v2928 = vpack.c.bf16 %v2606, %v2606
        %v2929 = vpack.c.bf16 %v2605, %v2605
        %v2930 = vpack.c.bf16 %v2607, %v2607
        %v2931 = vpack.c.bf16 %v2615, %v2615
        %v2932 = vpack.c.bf16 %v2623, %v2623
        %v2933 = vpack.c.bf16 %v2622, %v2622
        %v2934 = vpack.c.bf16 %v2624, %v2624
        %v2935 = vpack.c.bf16 %v2632, %v2632
        %v2936 = vpack.c.bf16 %v2640, %v2640
        %v2937 = vpack.c.bf16 %v2639, %v2639
        %v2938 = vpack.c.bf16 %v2641, %v2641
        %v2939 = vpack.c.bf16 %v2649, %v2649
        %v2940 = vpack.c.bf16 %v2657, %v2657
        %v2941 = vpack.c.bf16 %v2656, %v2656
        %v2942 = vpack.c.bf16 %v2658, %v2658
        %v2943 = vpack.c.bf16 %v2666, %v2666
        %v2944 = vpack.c.bf16 %v2674, %v2674
        %v2945 = vpack.c.bf16 %v2673, %v2673
        %v2946 = vpack.c.bf16 %v2675, %v2675
        %v2947 = vpack.c.bf16 %v2683, %v2683
        %v2948 = vpack.c.bf16 %v2691, %v2691
        %v2949 = vpack.c.bf16 %v2690, %v2690
        %v2950 = vpack.c.bf16 %v2692, %v2692
        %v2951 = vpack.c.bf16 %v2700, %v2700
        %v2952 = vpack.c.bf16 %v2708, %v2708
        %v2953 = vpack.c.bf16 %v2707, %v2707
        %v2954 = vpack.c.bf16 %v2709, %v2709
        %v2955 = vpack.c.bf16 %v2717, %v2717
        %v2956 = vpack.c.bf16 %v2725, %v2725
        %v2957 = vpack.c.bf16 %v2724, %v2724
        %v2958 = vpack.c.bf16 %v2726, %v2726
        %v2959 = vpack.c.bf16 %v2734, %v2734
        %v2960 = vpack.c.bf16 %v2742, %v2742
        %v2961 = vpack.c.bf16 %v2741, %v2741
        %v2962 = vpack.c.bf16 %v2743, %v2743
        %v2963 = vpack.c.bf16 %v2751, %v2751
        %v2964 = vpack.c.bf16 %v2759, %v2759
        %v2965 = vpack.c.bf16 %v2758, %v2758
        %v2966 = vpack.c.bf16 %v2760, %v2760
        %v2967 = vpack.c.bf16 %v2768, %v2768
        %v2968 = vpack.c.bf16 %v2776, %v2776
        %v2969 = vpack.c.bf16 %v2775, %v2775
        %v2970 = vpack.c.bf16 %v2777, %v2777
        %v2971 = vpack.c.bf16 %v2785, %v2785
        %v2972 = vpack.c.bf16 %v2793, %v2793
        %v2973 = vpack.c.bf16 %v2792, %v2792
        %v2974 = vpack.c.bf16 %v2794, %v2794
        %v2975 = vpack.c.bf16 %v2802, %v2802
        %v2976 = vpack.c.bf16 %v2810, %v2810
        %v2977 = vpack.c.bf16 %v2809, %v2809
        %v2978 = vpack.c.bf16 %v2811, %v2811
        %v2979 = vpack.c.bf16 %v2819, %v2819
        %v2980 = vpack.c.bf16 %v2827, %v2827
        %v2981 = vpack.c.bf16 %v2826, %v2826
        %v2982 = vpack.c.bf16 %v2828, %v2828
        %v2983 = vpack.c.bf16 %v2836, %v2836
        %v2984 = vpack.c.bf16 %v2844, %v2844
        %v2985 = vpack.c.bf16 %v2843, %v2843
        %v2986 = vpack.c.bf16 %v2845, %v2845
        %v2987 = vpack.c.bf16 %v2853, %v2853
        %v2988 = vpack.c.bf16 %v2861, %v2861
        %v2989 = vpack.c.bf16 %v2860, %v2860
        %v2990 = vpack.c.bf16 %v2862, %v2862
        %v2991 = vld [vmem:[#allocation3] sm:$0x3]
        %v2992 = vld [vmem:[%s319] sm:$0xf]
        %v2993 = vld [vmem:[%s319 + $0x4] sm:$0xf]
        %v2994 = vld [vmem:[%s319 + $0x8] sm:$0xf]
        %v2995 = vld [vmem:[%s319 + $0xc] sm:$0xf]
        %v2996 = vld [vmem:[%s319 + $0x10] sm:$0xf]
        %v2997 = vld [vmem:[%s319 + $0x14] sm:$0xf]
        %v2998 = vld [vmem:[%s319 + $0x18] sm:$0xf]
        %v2999 = vld [vmem:[%s319 + $0x1c] sm:$0xf]
        %v3000 = vld [vmem:[%s319 + $0x20] sm:$0xf]
        %v3001 = vld [vmem:[%s319 + $0x24] sm:$0xf]
        %v3002 = vld [vmem:[%s319 + $0x28] sm:$0xf]
        %v3003 = vld [vmem:[%s319 + $0x2c] sm:$0xf]
        %v3004 = vld [vmem:[%s319 + $0x30] sm:$0xf]
        %v3005 = vld [vmem:[%s319 + $0x34] sm:$0xf]
        %v3006 = vld [vmem:[%s319 + $0x38] sm:$0xf]
        %v3007 = vld [vmem:[%s319 + $0x3c] sm:$0xf]
        %v3008 = vld [vmem:[%s319 + $0x40] sm:$0xf]
        %v3009 = vld [vmem:[%s319 + $0x44] sm:$0xf]
        %v3010 = vld [vmem:[%s319 + $0x48] sm:$0xf]
        %v3011 = vld [vmem:[%s319 + $0x4c] sm:$0xf]
        %v3012 = vld [vmem:[%s319 + $0x50] sm:$0xf]
        %v3013 = vld [vmem:[%s319 + $0x54] sm:$0xf]
        %v3014 = vld [vmem:[%s319 + $0x58] sm:$0xf]
        %v3015 = vld [vmem:[%s319 + $0x5c] sm:$0xf]
        %v3016 = vld [vmem:[%s319 + $0x60] sm:$0xf]
        %v3017 = vld [vmem:[%s319 + $0x64] sm:$0xf]
        %v3018 = vld [vmem:[%s319 + $0x68] sm:$0xf]
        %v3019 = vld [vmem:[%s319 + $0x6c] sm:$0xf]
        %v3020 = vld [vmem:[%s319 + $0x70] sm:$0xf]
        %v3021 = vld [vmem:[%s319 + $0x74] sm:$0xf]
        %v3022 = vld [vmem:[%s319 + $0x78] sm:$0xf]
        %v3023 = vld [vmem:[%s319 + $0x7c] sm:$0xf]
        %v3024 = vld [vmem:[%s319 + $0x80] sm:$0xf]
        %v3025 = vld [vmem:[%s319 + $0x84] sm:$0xf]
        %v3026 = vld [vmem:[%s319 + $0x88] sm:$0xf]
        %v3027 = vld [vmem:[%s319 + $0x8c] sm:$0xf]
        %v3028 = vld [vmem:[%s319 + $0x90] sm:$0xf]
        %v3029 = vld [vmem:[%s319 + $0x94] sm:$0xf]
        %v3030 = vld [vmem:[%s319 + $0x98] sm:$0xf]
        %v3031 = vld [vmem:[%s319 + $0x9c] sm:$0xf]
        %v3032 = vld [vmem:[%s319 + $0xa0] sm:$0xf]
        %v3033 = vld [vmem:[%s319 + $0xa4] sm:$0xf]
        %v3034 = vld [vmem:[%s319 + $0xa8] sm:$0xf]
        %v3035 = vld [vmem:[%s319 + $0xac] sm:$0xf]
        %v3036 = vld [vmem:[%s319 + $0xb0] sm:$0xf]
        %v3037 = vld [vmem:[%s319 + $0xb4] sm:$0xf]
        %v3038 = vld [vmem:[%s319 + $0xb8] sm:$0xf]
        %v3039 = vld [vmem:[%s319 + $0xbc] sm:$0xf]
        %v3040 = vld [vmem:[%s319 + $0xc0] sm:$0xf]
        %v3041 = vld [vmem:[%s319 + $0xc4] sm:$0xf]
        %v3042 = vld [vmem:[%s319 + $0xc8] sm:$0xf]
        %v3043 = vld [vmem:[%s319 + $0xcc] sm:$0xf]
        %v3044 = vld [vmem:[%s319 + $0xd0] sm:$0xf]
        %v3045 = vld [vmem:[%s319 + $0xd4] sm:$0xf]
        %v3046 = vld [vmem:[%s319 + $0xd8] sm:$0xf]
        %v3047 = vld [vmem:[%s319 + $0xdc] sm:$0xf]
        %v3048 = vld [vmem:[%s319 + $0xe0] sm:$0xf]
        %v3049 = vld [vmem:[%s319 + $0xe4] sm:$0xf]
        %v3050 = vld [vmem:[%s319 + $0xe8] sm:$0xf]
        %v3051 = vld [vmem:[%s319 + $0xec] sm:$0xf]
        %v3052 = vld [vmem:[%s319 + $0xf0] sm:$0xf]
        %v3053 = vld [vmem:[%s319 + $0xf4] sm:$0xf]
        %v3054 = vld [vmem:[%s319 + $0xf8] sm:$0xf]
        %v3055 = vld [vmem:[%s319 + $0xfc] sm:$0xf]
        %v3056 = vld [vmem:[%s319 + $0x100] sm:$0xf]
        %v3057 = vld [vmem:[%s319 + $0x104] sm:$0xf]
        %v3058 = vld [vmem:[%s319 + $0x108] sm:$0xf]
        %v3059 = vld [vmem:[%s319 + $0x10c] sm:$0xf]
        %v3060 = vld [vmem:[%s319 + $0x110] sm:$0xf]
        %v3061 = vld [vmem:[%s319 + $0x114] sm:$0xf]
        %v3062 = vld [vmem:[%s319 + $0x118] sm:$0xf]
        %v3063 = vld [vmem:[%s319 + $0x11c] sm:$0xf]
        %v3064 = vld [vmem:[%s319 + $0x120] sm:$0xf]
        %v3065 = vld [vmem:[%s319 + $0x124] sm:$0xf]
        %v3066 = vld [vmem:[%s319 + $0x128] sm:$0xf]
        %v3067 = vld [vmem:[%s319 + $0x12c] sm:$0xf]
        %v3068 = vld [vmem:[%s319 + $0x130] sm:$0xf]
        %v3069 = vld [vmem:[%s319 + $0x134] sm:$0xf]
        %v3070 = vld [vmem:[%s319 + $0x138] sm:$0xf]
        %v3071 = vld [vmem:[%s319 + $0x13c] sm:$0xf]
        %v3072 = vld [vmem:[%s319 + $0x140] sm:$0xf]
        %v3073 = vld [vmem:[%s319 + $0x144] sm:$0xf]
        %v3074 = vld [vmem:[%s319 + $0x148] sm:$0xf]
        %v3075 = vld [vmem:[%s319 + $0x14c] sm:$0xf]
        %v3076 = vld [vmem:[%s319 + $0x150] sm:$0xf]
        %v3077 = vld [vmem:[%s319 + $0x154] sm:$0xf]
        %v3078 = vld [vmem:[%s319 + $0x158] sm:$0xf]
        %v3079 = vld [vmem:[%s319 + $0x15c] sm:$0xf]
        %v3080 = vld [vmem:[%s319 + $0x160] sm:$0xf]
        %v3081 = vld [vmem:[%s319 + $0x164] sm:$0xf]
        %v3082 = vld [vmem:[%s319 + $0x168] sm:$0xf]
        %v3083 = vld [vmem:[%s319 + $0x16c] sm:$0xf]
        %v3084 = vld [vmem:[%s319 + $0x170] sm:$0xf]
        %v3085 = vld [vmem:[%s319 + $0x174] sm:$0xf]
        %v3086 = vld [vmem:[%s319 + $0x178] sm:$0xf]
        %v3087 = vld [vmem:[%s319 + $0x17c] sm:$0xf]
        %v3088 = vld [vmem:[%s319 + $0x180] sm:$0xf]
        %v3089 = vld [vmem:[%s319 + $0x184] sm:$0xf]
        %v3090 = vld [vmem:[%s319 + $0x188] sm:$0xf]
        %v3091 = vld [vmem:[%s319 + $0x18c] sm:$0xf]
        %v3092 = vld [vmem:[%s319 + $0x190] sm:$0xf]
        %v3093 = vld [vmem:[%s319 + $0x194] sm:$0xf]
        %v3094 = vld [vmem:[%s319 + $0x198] sm:$0xf]
        %v3095 = vld [vmem:[%s319 + $0x19c] sm:$0xf]
        %v3096 = vld [vmem:[%s319 + $0x1a0] sm:$0xf]
        %v3097 = vld [vmem:[%s319 + $0x1a4] sm:$0xf]
        %v3098 = vld [vmem:[%s319 + $0x1a8] sm:$0xf]
        %v3099 = vld [vmem:[%s319 + $0x1ac] sm:$0xf]
        %v3100 = vld [vmem:[%s319 + $0x1b0] sm:$0xf]
        %v3101 = vld [vmem:[%s319 + $0x1b4] sm:$0xf]
        %v3102 = vld [vmem:[%s319 + $0x1b8] sm:$0xf]
        %v3103 = vld [vmem:[%s319 + $0x1bc] sm:$0xf]
        %v3104 = vld [vmem:[%s319 + $0x1c0] sm:$0xf]
        %v3105 = vld [vmem:[%s319 + $0x1c4] sm:$0xf]
        %v3106 = vld [vmem:[%s319 + $0x1c8] sm:$0xf]
        %v3107 = vld [vmem:[%s319 + $0x1cc] sm:$0xf]
        %v3108 = vld [vmem:[%s319 + $0x1d0] sm:$0xf]
        %v3109 = vld [vmem:[%s319 + $0x1d4] sm:$0xf]
        %v3110 = vld [vmem:[%s319 + $0x1d8] sm:$0xf]
        %v3111 = vld [vmem:[%s319 + $0x1dc] sm:$0xf]
        %v3112 = vld [vmem:[%s319 + $0x1e0] sm:$0xf]
        %v3113 = vld [vmem:[%s319 + $0x1e4] sm:$0xf]
        %v3114 = vld [vmem:[%s319 + $0x1e8] sm:$0xf]
        %v3115 = vld [vmem:[%s319 + $0x1ec] sm:$0xf]
        %v3116 = vld [vmem:[%s319 + $0x1f0] sm:$0xf]
        %v3117 = vld [vmem:[%s319 + $0x1f4] sm:$0xf]
        %v3118 = vld [vmem:[%s319 + $0x1f8] sm:$0xf]
        %v3119 = vld [vmem:[%s319 + $0x1fc] sm:$0xf]
        %v3120 = vld [vmem:[%s319 + $0x200] sm:$0xf]
        %v3121 = vld [vmem:[%s319 + $0x204] sm:$0xf]
        %v3122 = vld [vmem:[%s319 + $0x208] sm:$0xf]
        %v3123 = vld [vmem:[%s319 + $0x20c] sm:$0xf]
        %v3124 = vld [vmem:[%s319 + $0x210] sm:$0xf]
        %v3125 = vld [vmem:[%s319 + $0x214] sm:$0xf]
        %v3126 = vld [vmem:[%s319 + $0x218] sm:$0xf]
        %v3127 = vld [vmem:[%s319 + $0x21c] sm:$0xf]
        %v3128 = vld [vmem:[%s319 + $0x220] sm:$0xf]
        %v3129 = vld [vmem:[%s319 + $0x224] sm:$0xf]
        %v3130 = vld [vmem:[%s319 + $0x228] sm:$0xf]
        %v3131 = vld [vmem:[%s319 + $0x22c] sm:$0xf]
        %v3132 = vld [vmem:[%s319 + $0x230] sm:$0xf]
        %v3133 = vld [vmem:[%s319 + $0x234] sm:$0xf]
        %v3134 = vld [vmem:[%s319 + $0x238] sm:$0xf]
        %v3135 = vld [vmem:[%s319 + $0x23c] sm:$0xf]
        %v3136 = vld [vmem:[%s319 + $0x240] sm:$0xf]
        %v3137 = vld [vmem:[%s319 + $0x244] sm:$0xf]
        %v3138 = vld [vmem:[%s319 + $0x248] sm:$0xf]
        %v3139 = vld [vmem:[%s319 + $0x24c] sm:$0xf]
        %v3140 = vld [vmem:[%s319 + $0x250] sm:$0xf]
        %v3141 = vld [vmem:[%s319 + $0x254] sm:$0xf]
        %v3142 = vld [vmem:[%s319 + $0x258] sm:$0xf]
        %v3143 = vld [vmem:[%s319 + $0x25c] sm:$0xf]
        %v3144 = vld [vmem:[%s319 + $0x260] sm:$0xf]
        %v3145 = vld [vmem:[%s319 + $0x264] sm:$0xf]
        %v3146 = vld [vmem:[%s319 + $0x268] sm:$0xf]
        %v3147 = vld [vmem:[%s319 + $0x26c] sm:$0xf]
        %v3148 = vld [vmem:[%s319 + $0x270] sm:$0xf]
        %v3149 = vld [vmem:[%s319 + $0x274] sm:$0xf]
        %v3150 = vld [vmem:[%s319 + $0x278] sm:$0xf]
        %v3151 = vld [vmem:[%s319 + $0x27c] sm:$0xf]
        %v3152 = vld [vmem:[%s319 + $0x280] sm:$0xf]
        %v3153 = vld [vmem:[%s319 + $0x284] sm:$0xf]
        %v3154 = vld [vmem:[%s319 + $0x288] sm:$0xf]
        %v3155 = vld [vmem:[%s319 + $0x28c] sm:$0xf]
        %v3156 = vld [vmem:[%s319 + $0x290] sm:$0xf]
        %v3157 = vld [vmem:[%s319 + $0x294] sm:$0xf]
        %v3158 = vld [vmem:[%s319 + $0x298] sm:$0xf]
        %v3159 = vld [vmem:[%s319 + $0x29c] sm:$0xf]
        %v3160 = vld [vmem:[%s319 + $0x2a0] sm:$0xf]
        %v3161 = vld [vmem:[%s319 + $0x2a4] sm:$0xf]
        %v3162 = vld [vmem:[%s319 + $0x2a8] sm:$0xf]
        %v3163 = vld [vmem:[%s319 + $0x2ac] sm:$0xf]
        %v3164 = vld [vmem:[%s319 + $0x2b0] sm:$0xf]
        %v3165 = vld [vmem:[%s319 + $0x2b4] sm:$0xf]
        %v3166 = vld [vmem:[%s319 + $0x2b8] sm:$0xf]
        %v3167 = vld [vmem:[%s319 + $0x2bc] sm:$0xf]
        %v3168 = vld [vmem:[%s319 + $0x2c0] sm:$0xf]
        %v3169 = vld [vmem:[%s319 + $0x2c4] sm:$0xf]
        %v3170 = vld [vmem:[%s319 + $0x2c8] sm:$0xf]
        %v3171 = vld [vmem:[%s319 + $0x2cc] sm:$0xf]
        %v3172 = vld [vmem:[%s319 + $0x2d0] sm:$0xf]
        %v3173 = vld [vmem:[%s319 + $0x2d4] sm:$0xf]
        %v3174 = vld [vmem:[%s319 + $0x2d8] sm:$0xf]
        %v3175 = vld [vmem:[%s319 + $0x2dc] sm:$0xf]
        %v3176 = vld [vmem:[%s319 + $0x2e0] sm:$0xf]
        %v3177 = vld [vmem:[%s319 + $0x2e4] sm:$0xf]
        %v3178 = vld [vmem:[%s319 + $0x2e8] sm:$0xf]
        %v3179 = vld [vmem:[%s319 + $0x2ec] sm:$0xf]
        %v3180 = vld [vmem:[%s319 + $0x2f0] sm:$0xf]
        %v3181 = vld [vmem:[%s319 + $0x2f4] sm:$0xf]
        %v3182 = vld [vmem:[%s319 + $0x2f8] sm:$0xf]
        %v3183 = vld [vmem:[%s319 + $0x2fc] sm:$0xf]
        %v3184 = vld [vmem:[%s319 + $0x300] sm:$0xf]
        %v3185 = vld [vmem:[%s319 + $0x304] sm:$0xf]
        %v3186 = vld [vmem:[%s319 + $0x308] sm:$0xf]
        %v3187 = vld [vmem:[%s319 + $0x30c] sm:$0xf]
        %v3188 = vld [vmem:[%s319 + $0x310] sm:$0xf]
        %v3189 = vld [vmem:[%s319 + $0x314] sm:$0xf]
        %v3190 = vld [vmem:[%s319 + $0x318] sm:$0xf]
        %v3191 = vld [vmem:[%s319 + $0x31c] sm:$0xf]
        %v3192 = vld [vmem:[%s319 + $0x320] sm:$0xf]
        %v3193 = vld [vmem:[%s319 + $0x324] sm:$0xf]
        %v3194 = vld [vmem:[%s319 + $0x328] sm:$0xf]
        %v3195 = vld [vmem:[%s319 + $0x32c] sm:$0xf]
        %v3196 = vld [vmem:[%s319 + $0x330] sm:$0xf]
        %v3197 = vld [vmem:[%s319 + $0x334] sm:$0xf]
        %v3198 = vld [vmem:[%s319 + $0x338] sm:$0xf]
        %v3199 = vld [vmem:[%s319 + $0x33c] sm:$0xf]
        %v3200 = vld [vmem:[%s319 + $0x340] sm:$0xf]
        %v3201 = vld [vmem:[%s319 + $0x344] sm:$0xf]
        %v3202 = vld [vmem:[%s319 + $0x348] sm:$0xf]
        %v3203 = vld [vmem:[%s319 + $0x34c] sm:$0xf]
        %v3204 = vld [vmem:[%s319 + $0x350] sm:$0xf]
        %v3205 = vld [vmem:[%s319 + $0x354] sm:$0xf]
        %v3206 = vld [vmem:[%s319 + $0x358] sm:$0xf]
        %v3207 = vld [vmem:[%s319 + $0x35c] sm:$0xf]
        %v3208 = vld [vmem:[%s319 + $0x360] sm:$0xf]
        %v3209 = vld [vmem:[%s319 + $0x364] sm:$0xf]
        %v3210 = vld [vmem:[%s319 + $0x368] sm:$0xf]
        %v3211 = vld [vmem:[%s319 + $0x36c] sm:$0xf]
        %v3212 = vld [vmem:[%s319 + $0x370] sm:$0xf]
        %v3213 = vld [vmem:[%s319 + $0x374] sm:$0xf]
        %v3214 = vld [vmem:[%s319 + $0x378] sm:$0xf]
        %v3215 = vld [vmem:[%s319 + $0x37c] sm:$0xf]
        %v3216 = vld [vmem:[%s319 + $0x380] sm:$0xf]
        %v3217 = vld [vmem:[%s319 + $0x384] sm:$0xf]
        %v3218 = vld [vmem:[%s319 + $0x388] sm:$0xf]
        %v3219 = vld [vmem:[%s319 + $0x38c] sm:$0xf]
        %v3220 = vld [vmem:[%s319 + $0x390] sm:$0xf]
        %v3221 = vld [vmem:[%s319 + $0x394] sm:$0xf]
        %v3222 = vld [vmem:[%s319 + $0x398] sm:$0xf]
        %v3223 = vld [vmem:[%s319 + $0x39c] sm:$0xf]
        %v3224 = vld [vmem:[%s319 + $0x3a0] sm:$0xf]
        %v3225 = vld [vmem:[%s319 + $0x3a4] sm:$0xf]
        %v3226 = vld [vmem:[%s319 + $0x3a8] sm:$0xf]
        %v3227 = vld [vmem:[%s319 + $0x3ac] sm:$0xf]
        %v3228 = vld [vmem:[%s319 + $0x3b0] sm:$0xf]
        %v3229 = vld [vmem:[%s319 + $0x3b4] sm:$0xf]
        %v3230 = vld [vmem:[%s319 + $0x3b8] sm:$0xf]
        %v3231 = vld [vmem:[%s319 + $0x3bc] sm:$0xf]
        %v3232 = vld [vmem:[%s319 + $0x3c0] sm:$0xf]
        %v3233 = vld [vmem:[%s319 + $0x3c4] sm:$0xf]
        %v3234 = vld [vmem:[%s319 + $0x3c8] sm:$0xf]
        %v3235 = vld [vmem:[%s319 + $0x3cc] sm:$0xf]
        %v3236 = vld [vmem:[%s319 + $0x3d0] sm:$0xf]
        %v3237 = vld [vmem:[%s319 + $0x3d4] sm:$0xf]
        %v3238 = vld [vmem:[%s319 + $0x3d8] sm:$0xf]
        %v3239 = vld [vmem:[%s319 + $0x3dc] sm:$0xf]
        %v3240 = vld [vmem:[%s319 + $0x3e0] sm:$0xf]
        %v3241 = vld [vmem:[%s319 + $0x3e4] sm:$0xf]
        %v3242 = vld [vmem:[%s319 + $0x3e8] sm:$0xf]
        %v3243 = vld [vmem:[%s319 + $0x3ec] sm:$0xf]
        %v3244 = vld [vmem:[%s319 + $0x3f0] sm:$0xf]
        %v3245 = vld [vmem:[%s319 + $0x3f4] sm:$0xf]
        %v3246 = vld [vmem:[%s319 + $0x3f8] sm:$0xf]
        %v3247 = vld [vmem:[%s319 + $0x3fc] sm:$0xf]
        %v3248 = vld [vmem:[%s319 + $0x400] sm:$0xf]
        %v3249 = vld [vmem:[%s319 + $0x404] sm:$0xf]
        %v3250 = vld [vmem:[%s319 + $0x408] sm:$0xf]
        %v3251 = vld [vmem:[%s319 + $0x40c] sm:$0xf]
        %v3252 = vld [vmem:[%s319 + $0x410] sm:$0xf]
        %v3253 = vld [vmem:[%s319 + $0x414] sm:$0xf]
        %v3254 = vld [vmem:[%s319 + $0x418] sm:$0xf]
        %v3255 = vld [vmem:[%s319 + $0x41c] sm:$0xf]
        %v3256 = vld [vmem:[%s319 + $0x420] sm:$0xf]
        %v3257 = vld [vmem:[%s319 + $0x424] sm:$0xf]
        %v3258 = vld [vmem:[%s319 + $0x428] sm:$0xf]
        %v3259 = vld [vmem:[%s319 + $0x42c] sm:$0xf]
        %v3260 = vld [vmem:[%s319 + $0x430] sm:$0xf]
        %v3261 = vld [vmem:[%s319 + $0x434] sm:$0xf]
        %v3262 = vld [vmem:[%s319 + $0x438] sm:$0xf]
        %v3263 = vld [vmem:[%s319 + $0x43c] sm:$0xf]
        %v3264 = vld [vmem:[%s319 + $0x440] sm:$0xf]
        %v3265 = vld [vmem:[%s319 + $0x444] sm:$0xf]
        %v3266 = vld [vmem:[%s319 + $0x448] sm:$0xf]
        %v3267 = vld [vmem:[%s319 + $0x44c] sm:$0xf]
        %v3268 = vld [vmem:[%s319 + $0x450] sm:$0xf]
        %v3269 = vld [vmem:[%s319 + $0x454] sm:$0xf]
        %v3270 = vld [vmem:[%s319 + $0x458] sm:$0xf]
        %v3271 = vld [vmem:[%s319 + $0x45c] sm:$0xf]
        %v3272 = vld [vmem:[%s319 + $0x460] sm:$0xf]
        %v3273 = vld [vmem:[%s319 + $0x464] sm:$0xf]
        %v3274 = vld [vmem:[%s319 + $0x468] sm:$0xf]
        %v3275 = vld [vmem:[%s319 + $0x46c] sm:$0xf]
        %v3276 = vld [vmem:[%s319 + $0x470] sm:$0xf]
        %v3277 = vld [vmem:[%s319 + $0x474] sm:$0xf]
        %v3278 = vld [vmem:[%s319 + $0x478] sm:$0xf]
        %v3279 = vld [vmem:[%s319 + $0x47c] sm:$0xf]
        %v3280 = vld [vmem:[%s319 + $0x480] sm:$0xf]
        %v3281 = vld [vmem:[%s319 + $0x484] sm:$0xf]
        %v3282 = vld [vmem:[%s319 + $0x488] sm:$0xf]
        %v3283 = vld [vmem:[%s319 + $0x48c] sm:$0xf]
        %v3284 = vld [vmem:[%s319 + $0x490] sm:$0xf]
        %v3285 = vld [vmem:[%s319 + $0x494] sm:$0xf]
        %v3286 = vld [vmem:[%s319 + $0x498] sm:$0xf]
        %v3287 = vld [vmem:[%s319 + $0x49c] sm:$0xf]
        %v3288 = vld [vmem:[%s319 + $0x4a0] sm:$0xf]
        %v3289 = vld [vmem:[%s319 + $0x4a4] sm:$0xf]
        %v3290 = vld [vmem:[%s319 + $0x4a8] sm:$0xf]
        %v3291 = vld [vmem:[%s319 + $0x4ac] sm:$0xf]
        %v3292 = vld [vmem:[%s319 + $0x4b0] sm:$0xf]
        %v3293 = vld [vmem:[%s319 + $0x4b4] sm:$0xf]
        %v3294 = vld [vmem:[%s319 + $0x4b8] sm:$0xf]
        %v3295 = vld [vmem:[%s319 + $0x4bc] sm:$0xf]
        %v3296 = vld [vmem:[%s319 + $0x4c0] sm:$0xf]
        %v3297 = vld [vmem:[%s319 + $0x4c4] sm:$0xf]
        %v3298 = vld [vmem:[%s319 + $0x4c8] sm:$0xf]
        %v3299 = vld [vmem:[%s319 + $0x4cc] sm:$0xf]
        %v3300 = vld [vmem:[%s319 + $0x4d0] sm:$0xf]
        %v3301 = vld [vmem:[%s319 + $0x4d4] sm:$0xf]
        %v3302 = vld [vmem:[%s319 + $0x4d8] sm:$0xf]
        %v3303 = vld [vmem:[%s319 + $0x4dc] sm:$0xf]
        %v3304 = vld [vmem:[%s319 + $0x4e0] sm:$0xf]
        %v3305 = vld [vmem:[%s319 + $0x4e4] sm:$0xf]
        %v3306 = vld [vmem:[%s319 + $0x4e8] sm:$0xf]
        %v3307 = vld [vmem:[%s319 + $0x4ec] sm:$0xf]
        %v3308 = vld [vmem:[%s319 + $0x4f0] sm:$0xf]
        %v3309 = vld [vmem:[%s319 + $0x4f4] sm:$0xf]
        %v3310 = vld [vmem:[%s319 + $0x4f8] sm:$0xf]
        %v3311 = vld [vmem:[%s319 + $0x4fc] sm:$0xf]
        %v3312 = vld [vmem:[%s319 + $0x500] sm:$0xf]
        %v3313 = vld [vmem:[%s319 + $0x504] sm:$0xf]
        %v3314 = vld [vmem:[%s319 + $0x508] sm:$0xf]
        %v3315 = vld [vmem:[%s319 + $0x50c] sm:$0xf]
        %v3316 = vld [vmem:[%s319 + $0x510] sm:$0xf]
        %v3317 = vld [vmem:[%s319 + $0x514] sm:$0xf]
        %v3318 = vld [vmem:[%s319 + $0x518] sm:$0xf]
        %v3319 = vld [vmem:[%s319 + $0x51c] sm:$0xf]
        %v3320 = vld [vmem:[%s319 + $0x520] sm:$0xf]
        %v3321 = vld [vmem:[%s319 + $0x524] sm:$0xf]
        %v3322 = vld [vmem:[%s319 + $0x528] sm:$0xf]
        %v3323 = vld [vmem:[%s319 + $0x52c] sm:$0xf]
        %v3324 = vld [vmem:[%s319 + $0x530] sm:$0xf]
        %v3325 = vld [vmem:[%s319 + $0x534] sm:$0xf]
        %v3326 = vld [vmem:[%s319 + $0x538] sm:$0xf]
        %v3327 = vld [vmem:[%s319 + $0x53c] sm:$0xf]
        %v3328 = vld [vmem:[%s319 + $0x540] sm:$0xf]
        %v3329 = vld [vmem:[%s319 + $0x544] sm:$0xf]
        %v3330 = vld [vmem:[%s319 + $0x548] sm:$0xf]
        %v3331 = vld [vmem:[%s319 + $0x54c] sm:$0xf]
        %v3332 = vld [vmem:[%s319 + $0x550] sm:$0xf]
        %v3333 = vld [vmem:[%s319 + $0x554] sm:$0xf]
        %v3334 = vld [vmem:[%s319 + $0x558] sm:$0xf]
        %v3335 = vld [vmem:[%s319 + $0x55c] sm:$0xf]
        %v3336 = vld [vmem:[%s319 + $0x560] sm:$0xf]
        %v3337 = vld [vmem:[%s319 + $0x564] sm:$0xf]
        %v3338 = vld [vmem:[%s319 + $0x568] sm:$0xf]
        %v3339 = vld [vmem:[%s319 + $0x56c] sm:$0xf]
        %v3340 = vld [vmem:[%s319 + $0x570] sm:$0xf]
        %v3341 = vld [vmem:[%s319 + $0x574] sm:$0xf]
        %v3342 = vld [vmem:[%s319 + $0x578] sm:$0xf]
        %v3343 = vld [vmem:[%s319 + $0x57c] sm:$0xf]
        %v3344 = vld [vmem:[%s319 + $0x580] sm:$0xf]
        %v3345 = vld [vmem:[%s319 + $0x584] sm:$0xf]
        %v3346 = vld [vmem:[%s319 + $0x588] sm:$0xf]
        %v3347 = vld [vmem:[%s319 + $0x58c] sm:$0xf]
        %v3348 = vld [vmem:[%s319 + $0x590] sm:$0xf]
        %v3349 = vld [vmem:[%s319 + $0x594] sm:$0xf]
        %v3350 = vld [vmem:[%s319 + $0x598] sm:$0xf]
        %v3351 = vld [vmem:[%s319 + $0x59c] sm:$0xf]
        %v3352 = vld [vmem:[%s319 + $0x5a0] sm:$0xf]
        %v3353 = vld [vmem:[%s319 + $0x5a4] sm:$0xf]
        %v3354 = vld [vmem:[%s319 + $0x5a8] sm:$0xf]
        %v3355 = vld [vmem:[%s319 + $0x5ac] sm:$0xf]
        %v3356 = vld [vmem:[%s319 + $0x5b0] sm:$0xf]
        %v3357 = vld [vmem:[%s319 + $0x5b4] sm:$0xf]
        %v3358 = vld [vmem:[%s319 + $0x5b8] sm:$0xf]
        %v3359 = vld [vmem:[%s319 + $0x5bc] sm:$0xf]
        %v3360 = vld [vmem:[%s319 + $0x5c0] sm:$0xf]
        %v3361 = vld [vmem:[%s319 + $0x5c4] sm:$0xf]
        %v3362 = vld [vmem:[%s319 + $0x5c8] sm:$0xf]
        %v3363 = vld [vmem:[%s319 + $0x5cc] sm:$0xf]
        %v3364 = vld [vmem:[%s319 + $0x5d0] sm:$0xf]
        %v3365 = vld [vmem:[%s319 + $0x5d4] sm:$0xf]
        %v3366 = vld [vmem:[%s319 + $0x5d8] sm:$0xf]
        %v3367 = vld [vmem:[%s319 + $0x5dc] sm:$0xf]
        %v3368 = vld [vmem:[%s319 + $0x5e0] sm:$0xf]
        %v3369 = vld [vmem:[%s319 + $0x5e4] sm:$0xf]
        %v3370 = vld [vmem:[%s319 + $0x5e8] sm:$0xf]
        %v3371 = vld [vmem:[%s319 + $0x5ec] sm:$0xf]
        %v3372 = vld [vmem:[%s319 + $0x5f0] sm:$0xf]
        %v3373 = vld [vmem:[%s319 + $0x5f4] sm:$0xf]
        %v3374 = vld [vmem:[%s319 + $0x5f8] sm:$0xf]
        %v3375 = vld [vmem:[%s319 + $0x5fc] sm:$0xf]
        %v3376 = vld [vmem:[%s319 + $0x600] sm:$0xf]
        %v3377 = vld [vmem:[%s319 + $0x604] sm:$0xf]
        %v3378 = vld [vmem:[%s319 + $0x608] sm:$0xf]
        %v3379 = vld [vmem:[%s319 + $0x60c] sm:$0xf]
        %v3380 = vld [vmem:[%s319 + $0x610] sm:$0xf]
        %v3381 = vld [vmem:[%s319 + $0x614] sm:$0xf]
        %v3382 = vld [vmem:[%s319 + $0x618] sm:$0xf]
        %v3383 = vld [vmem:[%s319 + $0x61c] sm:$0xf]
        %v3384 = vld [vmem:[%s319 + $0x620] sm:$0xf]
        %v3385 = vld [vmem:[%s319 + $0x624] sm:$0xf]
        %v3386 = vld [vmem:[%s319 + $0x628] sm:$0xf]
        %v3387 = vld [vmem:[%s319 + $0x62c] sm:$0xf]
        %v3388 = vld [vmem:[%s319 + $0x630] sm:$0xf]
        %v3389 = vld [vmem:[%s319 + $0x634] sm:$0xf]
        %v3390 = vld [vmem:[%s319 + $0x638] sm:$0xf]
        %v3391 = vld [vmem:[%s319 + $0x63c] sm:$0xf]
        %v3392 = vld [vmem:[%s319 + $0x640] sm:$0xf]
        %v3393 = vld [vmem:[%s319 + $0x644] sm:$0xf]
        %v3394 = vld [vmem:[%s319 + $0x648] sm:$0xf]
        %v3395 = vld [vmem:[%s319 + $0x64c] sm:$0xf]
        %v3396 = vld [vmem:[%s319 + $0x650] sm:$0xf]
        %v3397 = vld [vmem:[%s319 + $0x654] sm:$0xf]
        %v3398 = vld [vmem:[%s319 + $0x658] sm:$0xf]
        %v3399 = vld [vmem:[%s319 + $0x65c] sm:$0xf]
        %v3400 = vld [vmem:[%s319 + $0x660] sm:$0xf]
        %v3401 = vld [vmem:[%s319 + $0x664] sm:$0xf]
        %v3402 = vld [vmem:[%s319 + $0x668] sm:$0xf]
        %v3403 = vld [vmem:[%s319 + $0x66c] sm:$0xf]
        %v3404 = vld [vmem:[%s319 + $0x670] sm:$0xf]
        %v3405 = vld [vmem:[%s319 + $0x674] sm:$0xf]
        %v3406 = vld [vmem:[%s319 + $0x678] sm:$0xf]
        %v3407 = vld [vmem:[%s319 + $0x67c] sm:$0xf]
        %v3408 = vld [vmem:[%s319 + $0x680] sm:$0xf]
        %v3409 = vld [vmem:[%s319 + $0x684] sm:$0xf]
        %v3410 = vld [vmem:[%s319 + $0x688] sm:$0xf]
        %v3411 = vld [vmem:[%s319 + $0x68c] sm:$0xf]
        %v3412 = vld [vmem:[%s319 + $0x690] sm:$0xf]
        %v3413 = vld [vmem:[%s319 + $0x694] sm:$0xf]
        %v3414 = vld [vmem:[%s319 + $0x698] sm:$0xf]
        %v3415 = vld [vmem:[%s319 + $0x69c] sm:$0xf]
        %v3416 = vld [vmem:[%s319 + $0x6a0] sm:$0xf]
        %v3417 = vld [vmem:[%s319 + $0x6a4] sm:$0xf]
        %v3418 = vld [vmem:[%s319 + $0x6a8] sm:$0xf]
        %v3419 = vld [vmem:[%s319 + $0x6ac] sm:$0xf]
        %v3420 = vld [vmem:[%s319 + $0x6b0] sm:$0xf]
        %v3421 = vld [vmem:[%s319 + $0x6b4] sm:$0xf]
        %v3422 = vld [vmem:[%s319 + $0x6b8] sm:$0xf]
        %v3423 = vld [vmem:[%s319 + $0x6bc] sm:$0xf]
        %v3424 = vld [vmem:[%s319 + $0x6c0] sm:$0xf]
        %v3425 = vld [vmem:[%s319 + $0x6c4] sm:$0xf]
        %v3426 = vld [vmem:[%s319 + $0x6c8] sm:$0xf]
        %v3427 = vld [vmem:[%s319 + $0x6cc] sm:$0xf]
        %v3428 = vld [vmem:[%s319 + $0x6d0] sm:$0xf]
        %v3429 = vld [vmem:[%s319 + $0x6d4] sm:$0xf]
        %v3430 = vld [vmem:[%s319 + $0x6d8] sm:$0xf]
        %v3431 = vld [vmem:[%s319 + $0x6dc] sm:$0xf]
        %v3432 = vld [vmem:[%s319 + $0x6e0] sm:$0xf]
        %v3433 = vld [vmem:[%s319 + $0x6e4] sm:$0xf]
        %v3434 = vld [vmem:[%s319 + $0x6e8] sm:$0xf]
        %v3435 = vld [vmem:[%s319 + $0x6ec] sm:$0xf]
        %v3436 = vld [vmem:[%s319 + $0x6f0] sm:$0xf]
        %v3437 = vld [vmem:[%s319 + $0x6f4] sm:$0xf]
        %v3438 = vld [vmem:[%s319 + $0x6f8] sm:$0xf]
        %v3439 = vld [vmem:[%s319 + $0x6fc] sm:$0xf]
        %v3440 = vld [vmem:[%s319 + $0x700] sm:$0xf]
        %v3441 = vld [vmem:[%s319 + $0x704] sm:$0xf]
        %v3442 = vld [vmem:[%s319 + $0x708] sm:$0xf]
        %v3443 = vld [vmem:[%s319 + $0x70c] sm:$0xf]
        %v3444 = vld [vmem:[%s319 + $0x710] sm:$0xf]
        %v3445 = vld [vmem:[%s319 + $0x714] sm:$0xf]
        %v3446 = vld [vmem:[%s319 + $0x718] sm:$0xf]
        %v3447 = vld [vmem:[%s319 + $0x71c] sm:$0xf]
        %v3448 = vld [vmem:[%s319 + $0x720] sm:$0xf]
        %v3449 = vld [vmem:[%s319 + $0x724] sm:$0xf]
        %v3450 = vld [vmem:[%s319 + $0x728] sm:$0xf]
        %v3451 = vld [vmem:[%s319 + $0x72c] sm:$0xf]
        %v3452 = vld [vmem:[%s319 + $0x730] sm:$0xf]
        %v3453 = vld [vmem:[%s319 + $0x734] sm:$0xf]
        %v3454 = vld [vmem:[%s319 + $0x738] sm:$0xf]
        %v3455 = vld [vmem:[%s319 + $0x73c] sm:$0xf]
        %v3456 = vld [vmem:[%s319 + $0x740] sm:$0xf]
        %v3457 = vld [vmem:[%s319 + $0x744] sm:$0xf]
        %v3458 = vld [vmem:[%s319 + $0x748] sm:$0xf]
        %v3459 = vld [vmem:[%s319 + $0x74c] sm:$0xf]
        %v3460 = vld [vmem:[%s319 + $0x750] sm:$0xf]
        %v3461 = vld [vmem:[%s319 + $0x754] sm:$0xf]
        %v3462 = vld [vmem:[%s319 + $0x758] sm:$0xf]
        %v3463 = vld [vmem:[%s319 + $0x75c] sm:$0xf]
        %v3464 = vld [vmem:[%s319 + $0x760] sm:$0xf]
        %v3465 = vld [vmem:[%s319 + $0x764] sm:$0xf]
        %v3466 = vld [vmem:[%s319 + $0x768] sm:$0xf]
        %v3467 = vld [vmem:[%s319 + $0x76c] sm:$0xf]
        %v3468 = vld [vmem:[%s319 + $0x770] sm:$0xf]
        %v3469 = vld [vmem:[%s319 + $0x774] sm:$0xf]
        %v3470 = vld [vmem:[%s319 + $0x778] sm:$0xf]
        %v3471 = vld [vmem:[%s319 + $0x77c] sm:$0xf]
        %v3472 = vld [vmem:[%s319 + $0x780] sm:$0xf]
        %v3473 = vld [vmem:[%s319 + $0x784] sm:$0xf]
        %v3474 = vld [vmem:[%s319 + $0x788] sm:$0xf]
        %v3475 = vld [vmem:[%s319 + $0x78c] sm:$0xf]
        %v3476 = vld [vmem:[%s319 + $0x790] sm:$0xf]
        %v3477 = vld [vmem:[%s319 + $0x794] sm:$0xf]
        %v3478 = vld [vmem:[%s319 + $0x798] sm:$0xf]
        %v3479 = vld [vmem:[%s319 + $0x79c] sm:$0xf]
        %v3480 = vld [vmem:[%s319 + $0x7a0] sm:$0xf]
        %v3481 = vld [vmem:[%s319 + $0x7a4] sm:$0xf]
        %v3482 = vld [vmem:[%s319 + $0x7a8] sm:$0xf]
        %v3483 = vld [vmem:[%s319 + $0x7ac] sm:$0xf]
        %v3484 = vld [vmem:[%s319 + $0x7b0] sm:$0xf]
        %v3485 = vld [vmem:[%s319 + $0x7b4] sm:$0xf]
        %v3486 = vld [vmem:[%s319 + $0x7b8] sm:$0xf]
        %v3487 = vld [vmem:[%s319 + $0x7bc] sm:$0xf]
        %v3488 = vld [vmem:[%s319 + $0x7c0] sm:$0xf]
        %v3489 = vld [vmem:[%s319 + $0x7c4] sm:$0xf]
        %v3490 = vld [vmem:[%s319 + $0x7c8] sm:$0xf]
        %v3491 = vld [vmem:[%s319 + $0x7cc] sm:$0xf]
        %v3492 = vld [vmem:[%s319 + $0x7d0] sm:$0xf]
        %v3493 = vld [vmem:[%s319 + $0x7d4] sm:$0xf]
        %v3494 = vld [vmem:[%s319 + $0x7d8] sm:$0xf]
        %v3495 = vld [vmem:[%s319 + $0x7dc] sm:$0xf]
        %v3496 = vld [vmem:[%s319 + $0x7e0] sm:$0xf]
        %v3497 = vld [vmem:[%s319 + $0x7e4] sm:$0xf]
        %v3498 = vld [vmem:[%s319 + $0x7e8] sm:$0xf]
        %v3499 = vld [vmem:[%s319 + $0x7ec] sm:$0xf]
        %v3500 = vld [vmem:[%s319 + $0x7f0] sm:$0xf]
        %v3501 = vld [vmem:[%s319 + $0x7f4] sm:$0xf]
        %v3502 = vld [vmem:[%s319 + $0x7f8] sm:$0xf]
        %v3503 = vld [vmem:[%s319 + $0x7fc] sm:$0xf]
        %v3504 = vld [vmem:[%s319 + $0x800] sm:$0xf]
        %v3505 = vld [vmem:[%s319 + $0x804] sm:$0xf]
        %v3506 = vld [vmem:[%s319 + $0x808] sm:$0xf]
        %v3507 = vld [vmem:[%s319 + $0x80c] sm:$0xf]
        %v3508 = vld [vmem:[%s319 + $0x810] sm:$0xf]
        %v3509 = vld [vmem:[%s319 + $0x814] sm:$0xf]
        %v3510 = vld [vmem:[%s319 + $0x818] sm:$0xf]
        %v3511 = vld [vmem:[%s319 + $0x81c] sm:$0xf]
        %v3512 = vld [vmem:[%s319 + $0x820] sm:$0xf]
        %v3513 = vld [vmem:[%s319 + $0x824] sm:$0xf]
        %v3514 = vld [vmem:[%s319 + $0x828] sm:$0xf]
        %v3515 = vld [vmem:[%s319 + $0x82c] sm:$0xf]
        %v3516 = vld [vmem:[%s319 + $0x830] sm:$0xf]
        %v3517 = vld [vmem:[%s319 + $0x834] sm:$0xf]
        %v3518 = vld [vmem:[%s319 + $0x838] sm:$0xf]
        %v3519 = vld [vmem:[%s319 + $0x83c] sm:$0xf]
        %v3520 = vld [vmem:[%s319 + $0x840] sm:$0xf]
        %v3521 = vld [vmem:[%s319 + $0x844] sm:$0xf]
        %v3522 = vld [vmem:[%s319 + $0x848] sm:$0xf]
        %v3523 = vld [vmem:[%s319 + $0x84c] sm:$0xf]
        %v3524 = vld [vmem:[%s319 + $0x850] sm:$0xf]
        %v3525 = vld [vmem:[%s319 + $0x854] sm:$0xf]
        %v3526 = vld [vmem:[%s319 + $0x858] sm:$0xf]
        %v3527 = vld [vmem:[%s319 + $0x85c] sm:$0xf]
        %v3528 = vld [vmem:[%s319 + $0x860] sm:$0xf]
        %v3529 = vld [vmem:[%s319 + $0x864] sm:$0xf]
        %v3530 = vld [vmem:[%s319 + $0x868] sm:$0xf]
        %v3531 = vld [vmem:[%s319 + $0x86c] sm:$0xf]
        %v3532 = vld [vmem:[%s319 + $0x870] sm:$0xf]
        %v3533 = vld [vmem:[%s319 + $0x874] sm:$0xf]
        %v3534 = vld [vmem:[%s319 + $0x878] sm:$0xf]
        %v3535 = vld [vmem:[%s319 + $0x87c] sm:$0xf]
        %v3536 = vld [vmem:[%s319 + $0x880] sm:$0xf]
        %v3537 = vld [vmem:[%s319 + $0x884] sm:$0xf]
        %v3538 = vld [vmem:[%s319 + $0x888] sm:$0xf]
        %v3539 = vld [vmem:[%s319 + $0x88c] sm:$0xf]
        %v3540 = vld [vmem:[%s319 + $0x890] sm:$0xf]
        %v3541 = vld [vmem:[%s319 + $0x894] sm:$0xf]
        %v3542 = vld [vmem:[%s319 + $0x898] sm:$0xf]
        %v3543 = vld [vmem:[%s319 + $0x89c] sm:$0xf]
        %v3544 = vld [vmem:[%s319 + $0x8a0] sm:$0xf]
        %v3545 = vld [vmem:[%s319 + $0x8a4] sm:$0xf]
        %v3546 = vld [vmem:[%s319 + $0x8a8] sm:$0xf]
        %v3547 = vld [vmem:[%s319 + $0x8ac] sm:$0xf]
        %v3548 = vld [vmem:[%s319 + $0x8b0] sm:$0xf]
        %v3549 = vld [vmem:[%s319 + $0x8b4] sm:$0xf]
        %v3550 = vld [vmem:[%s319 + $0x8b8] sm:$0xf]
        %v3551 = vld [vmem:[%s319 + $0x8bc] sm:$0xf]
        %v3552 = vld [vmem:[%s319 + $0x8c0] sm:$0xf]
        %v3553 = vld [vmem:[%s319 + $0x8c4] sm:$0xf]
        %v3554 = vld [vmem:[%s319 + $0x8c8] sm:$0xf]
        %v3555 = vld [vmem:[%s319 + $0x8cc] sm:$0xf]
        %v3556 = vld [vmem:[%s319 + $0x8d0] sm:$0xf]
        %v3557 = vld [vmem:[%s319 + $0x8d4] sm:$0xf]
        %v3558 = vld [vmem:[%s319 + $0x8d8] sm:$0xf]
        %v3559 = vld [vmem:[%s319 + $0x8dc] sm:$0xf]
        %v3560 = vld [vmem:[%s319 + $0x8e0] sm:$0xf]
        %v3561 = vld [vmem:[%s319 + $0x8e4] sm:$0xf]
        %v3562 = vld [vmem:[%s319 + $0x8e8] sm:$0xf]
        %v3563 = vld [vmem:[%s319 + $0x8ec] sm:$0xf]
        %v3564 = vld [vmem:[%s319 + $0x8f0] sm:$0xf]
        %v3565 = vld [vmem:[%s319 + $0x8f4] sm:$0xf]
        %v3566 = vld [vmem:[%s319 + $0x8f8] sm:$0xf]
        %v3567 = vld [vmem:[%s319 + $0x8fc] sm:$0xf]
        %v3568 = vld [vmem:[%s319 + $0x900] sm:$0xf]
        %v3569 = vld [vmem:[%s319 + $0x904] sm:$0xf]
        %v3570 = vld [vmem:[%s319 + $0x908] sm:$0xf]
        %v3571 = vld [vmem:[%s319 + $0x90c] sm:$0xf]
        %v3572 = vld [vmem:[%s319 + $0x910] sm:$0xf]
        %v3573 = vld [vmem:[%s319 + $0x914] sm:$0xf]
        %v3574 = vld [vmem:[%s319 + $0x918] sm:$0xf]
        %v3575 = vld [vmem:[%s319 + $0x91c] sm:$0xf]
        %v3576 = vld [vmem:[%s319 + $0x920] sm:$0xf]
        %v3577 = vld [vmem:[%s319 + $0x924] sm:$0xf]
        %v3578 = vld [vmem:[%s319 + $0x928] sm:$0xf]
        %v3579 = vld [vmem:[%s319 + $0x92c] sm:$0xf]
        %v3580 = vld [vmem:[%s319 + $0x930] sm:$0xf]
        %v3581 = vld [vmem:[%s319 + $0x934] sm:$0xf]
        %v3582 = vld [vmem:[%s319 + $0x938] sm:$0xf]
        %v3583 = vld [vmem:[%s319 + $0x93c] sm:$0xf]
        %v3584 = vld [vmem:[%s319 + $0x940] sm:$0xf]
        %v3585 = vld [vmem:[%s319 + $0x944] sm:$0xf]
        %v3586 = vld [vmem:[%s319 + $0x948] sm:$0xf]
        %v3587 = vld [vmem:[%s319 + $0x94c] sm:$0xf]
        %v3588 = vld [vmem:[%s319 + $0x950] sm:$0xf]
        %v3589 = vld [vmem:[%s319 + $0x954] sm:$0xf]
        %v3590 = vld [vmem:[%s319 + $0x958] sm:$0xf]
        %v3591 = vld [vmem:[%s319 + $0x95c] sm:$0xf]
        %v3592 = vld [vmem:[%s319 + $0x960] sm:$0xf]
        %v3593 = vld [vmem:[%s319 + $0x964] sm:$0xf]
        %v3594 = vld [vmem:[%s319 + $0x968] sm:$0xf]
        %v3595 = vld [vmem:[%s319 + $0x96c] sm:$0xf]
        %v3596 = vld [vmem:[%s319 + $0x970] sm:$0xf]
        %v3597 = vld [vmem:[%s319 + $0x974] sm:$0xf]
        %v3598 = vld [vmem:[%s319 + $0x978] sm:$0xf]
        %v3599 = vld [vmem:[%s319 + $0x97c] sm:$0xf]
        %v3600 = vld [vmem:[%s319 + $0x980] sm:$0xf]
        %v3601 = vld [vmem:[%s319 + $0x984] sm:$0xf]
        %v3602 = vld [vmem:[%s319 + $0x988] sm:$0xf]
        %v3603 = vld [vmem:[%s319 + $0x98c] sm:$0xf]
        %v3604 = vld [vmem:[%s319 + $0x990] sm:$0xf]
        %v3605 = vld [vmem:[%s319 + $0x994] sm:$0xf]
        %v3606 = vld [vmem:[%s319 + $0x998] sm:$0xf]
        %v3607 = vld [vmem:[%s319 + $0x99c] sm:$0xf]
        %v3608 = vld [vmem:[%s319 + $0x9a0] sm:$0xf]
        %v3609 = vld [vmem:[%s319 + $0x9a4] sm:$0xf]
        %v3610 = vld [vmem:[%s319 + $0x9a8] sm:$0xf]
        %v3611 = vld [vmem:[%s319 + $0x9ac] sm:$0xf]
        %v3612 = vld [vmem:[%s319 + $0x9b0] sm:$0xf]
        %v3613 = vld [vmem:[%s319 + $0x9b4] sm:$0xf]
        %v3614 = vld [vmem:[%s319 + $0x9b8] sm:$0xf]
        %v3615 = vld [vmem:[%s319 + $0x9bc] sm:$0xf]
        %v3616 = vld [vmem:[%s319 + $0x9c0] sm:$0xf]
        %v3617 = vld [vmem:[%s319 + $0x9c4] sm:$0xf]
        %v3618 = vld [vmem:[%s319 + $0x9c8] sm:$0xf]
        %v3619 = vld [vmem:[%s319 + $0x9cc] sm:$0xf]
        %v3620 = vld [vmem:[%s319 + $0x9d0] sm:$0xf]
        %v3621 = vld [vmem:[%s319 + $0x9d4] sm:$0xf]
        %v3622 = vld [vmem:[%s319 + $0x9d8] sm:$0xf]
        %v3623 = vld [vmem:[%s319 + $0x9dc] sm:$0xf]
        %v3624 = vld [vmem:[%s319 + $0x9e0] sm:$0xf]
        %v3625 = vld [vmem:[%s319 + $0x9e4] sm:$0xf]
        %v3626 = vld [vmem:[%s319 + $0x9e8] sm:$0xf]
        %v3627 = vld [vmem:[%s319 + $0x9ec] sm:$0xf]
        %v3628 = vld [vmem:[%s319 + $0x9f0] sm:$0xf]
        %v3629 = vld [vmem:[%s319 + $0x9f4] sm:$0xf]
        %v3630 = vld [vmem:[%s319 + $0x9f8] sm:$0xf]
        %v3631 = vld [vmem:[%s319 + $0x9fc] sm:$0xf]
        %v3632 = vld [vmem:[%s319 + $0xa00] sm:$0xf]
        %v3633 = vld [vmem:[%s319 + $0xa04] sm:$0xf]
        %v3634 = vld [vmem:[%s319 + $0xa08] sm:$0xf]
        %v3635 = vld [vmem:[%s319 + $0xa0c] sm:$0xf]
        %v3636 = vld [vmem:[%s319 + $0xa10] sm:$0xf]
        %v3637 = vld [vmem:[%s319 + $0xa14] sm:$0xf]
        %v3638 = vld [vmem:[%s319 + $0xa18] sm:$0xf]
        %v3639 = vld [vmem:[%s319 + $0xa1c] sm:$0xf]
        %v3640 = vld [vmem:[%s319 + $0xa20] sm:$0xf]
        %v3641 = vld [vmem:[%s319 + $0xa24] sm:$0xf]
        %v3642 = vld [vmem:[%s319 + $0xa28] sm:$0xf]
        %v3643 = vld [vmem:[%s319 + $0xa2c] sm:$0xf]
        %v3644 = vld [vmem:[%s319 + $0xa30] sm:$0xf]
        %v3645 = vld [vmem:[%s319 + $0xa34] sm:$0xf]
        %v3646 = vld [vmem:[%s319 + $0xa38] sm:$0xf]
        %v3647 = vld [vmem:[%s319 + $0xa3c] sm:$0xf]
        %v3648 = vld [vmem:[%s319 + $0xa40] sm:$0xf]
        %v3649 = vld [vmem:[%s319 + $0xa44] sm:$0xf]
        %v3650 = vld [vmem:[%s319 + $0xa48] sm:$0xf]
        %v3651 = vld [vmem:[%s319 + $0xa4c] sm:$0xf]
        %v3652 = vld [vmem:[%s319 + $0xa50] sm:$0xf]
        %v3653 = vld [vmem:[%s319 + $0xa54] sm:$0xf]
        %v3654 = vld [vmem:[%s319 + $0xa58] sm:$0xf]
        %v3655 = vld [vmem:[%s319 + $0xa5c] sm:$0xf]
        %v3656 = vld [vmem:[%s319 + $0xa60] sm:$0xf]
        %v3657 = vld [vmem:[%s319 + $0xa64] sm:$0xf]
        %v3658 = vld [vmem:[%s319 + $0xa68] sm:$0xf]
        %v3659 = vld [vmem:[%s319 + $0xa6c] sm:$0xf]
        %v3660 = vld [vmem:[%s319 + $0xa70] sm:$0xf]
        %v3661 = vld [vmem:[%s319 + $0xa74] sm:$0xf]
        %v3662 = vld [vmem:[%s319 + $0xa78] sm:$0xf]
        %v3663 = vld [vmem:[%s319 + $0xa7c] sm:$0xf]
        %v3664 = vld [vmem:[%s319 + $0xa80] sm:$0xf]
        %v3665 = vld [vmem:[%s319 + $0xa84] sm:$0xf]
        %v3666 = vld [vmem:[%s319 + $0xa88] sm:$0xf]
        %v3667 = vld [vmem:[%s319 + $0xa8c] sm:$0xf]
        %v3668 = vld [vmem:[%s319 + $0xa90] sm:$0xf]
        %v3669 = vld [vmem:[%s319 + $0xa94] sm:$0xf]
        %v3670 = vld [vmem:[%s319 + $0xa98] sm:$0xf]
        %v3671 = vld [vmem:[%s319 + $0xa9c] sm:$0xf]
        %v3672 = vld [vmem:[%s319 + $0xaa0] sm:$0xf]
        %v3673 = vld [vmem:[%s319 + $0xaa4] sm:$0xf]
        %v3674 = vld [vmem:[%s319 + $0xaa8] sm:$0xf]
        %v3675 = vld [vmem:[%s319 + $0xaac] sm:$0xf]
        %v3676 = vld [vmem:[%s319 + $0xab0] sm:$0xf]
        %v3677 = vld [vmem:[%s319 + $0xab4] sm:$0xf]
        %v3678 = vld [vmem:[%s319 + $0xab8] sm:$0xf]
        %v3679 = vld [vmem:[%s319 + $0xabc] sm:$0xf]
        %v3680 = vld [vmem:[%s319 + $0xac0] sm:$0xf]
        %v3681 = vld [vmem:[%s319 + $0xac4] sm:$0xf]
        %v3682 = vld [vmem:[%s319 + $0xac8] sm:$0xf]
        %v3683 = vld [vmem:[%s319 + $0xacc] sm:$0xf]
        %v3684 = vld [vmem:[%s319 + $0xad0] sm:$0xf]
        %v3685 = vld [vmem:[%s319 + $0xad4] sm:$0xf]
        %v3686 = vld [vmem:[%s319 + $0xad8] sm:$0xf]
        %v3687 = vld [vmem:[%s319 + $0xadc] sm:$0xf]
        %v3688 = vld [vmem:[%s319 + $0xae0] sm:$0xf]
        %v3689 = vld [vmem:[%s319 + $0xae4] sm:$0xf]
        %v3690 = vld [vmem:[%s319 + $0xae8] sm:$0xf]
        %v3691 = vld [vmem:[%s319 + $0xaec] sm:$0xf]
        %v3692 = vld [vmem:[%s319 + $0xaf0] sm:$0xf]
        %v3693 = vld [vmem:[%s319 + $0xaf4] sm:$0xf]
        %v3694 = vld [vmem:[%s319 + $0xaf8] sm:$0xf]
        %v3695 = vld [vmem:[%s319 + $0xafc] sm:$0xf]
        %v3696 = vld [vmem:[%s319 + $0xb00] sm:$0xf]
        %v3697 = vld [vmem:[%s319 + $0xb04] sm:$0xf]
        %v3698 = vld [vmem:[%s319 + $0xb08] sm:$0xf]
        %v3699 = vld [vmem:[%s319 + $0xb0c] sm:$0xf]
        %v3700 = vld [vmem:[%s319 + $0xb10] sm:$0xf]
        %v3701 = vld [vmem:[%s319 + $0xb14] sm:$0xf]
        %v3702 = vld [vmem:[%s319 + $0xb18] sm:$0xf]
        %v3703 = vld [vmem:[%s319 + $0xb1c] sm:$0xf]
        %v3704 = vld [vmem:[%s319 + $0xb20] sm:$0xf]
        %v3705 = vld [vmem:[%s319 + $0xb24] sm:$0xf]
        %v3706 = vld [vmem:[%s319 + $0xb28] sm:$0xf]
        %v3707 = vld [vmem:[%s319 + $0xb2c] sm:$0xf]
        %v3708 = vld [vmem:[%s319 + $0xb30] sm:$0xf]
        %v3709 = vld [vmem:[%s319 + $0xb34] sm:$0xf]
        %v3710 = vld [vmem:[%s319 + $0xb38] sm:$0xf]
        %v3711 = vld [vmem:[%s319 + $0xb3c] sm:$0xf]
        %v3712 = vld [vmem:[%s319 + $0xb40] sm:$0xf]
        %v3713 = vld [vmem:[%s319 + $0xb44] sm:$0xf]
        %v3714 = vld [vmem:[%s319 + $0xb48] sm:$0xf]
        %v3715 = vld [vmem:[%s319 + $0xb4c] sm:$0xf]
        %v3716 = vld [vmem:[%s319 + $0xb50] sm:$0xf]
        %v3717 = vld [vmem:[%s319 + $0xb54] sm:$0xf]
        %v3718 = vld [vmem:[%s319 + $0xb58] sm:$0xf]
        %v3719 = vld [vmem:[%s319 + $0xb5c] sm:$0xf]
        %v3720 = vld [vmem:[%s319 + $0xb60] sm:$0xf]
        %v3721 = vld [vmem:[%s319 + $0xb64] sm:$0xf]
        %v3722 = vld [vmem:[%s319 + $0xb68] sm:$0xf]
        %v3723 = vld [vmem:[%s319 + $0xb6c] sm:$0xf]
        %v3724 = vld [vmem:[%s319 + $0xb70] sm:$0xf]
        %v3725 = vld [vmem:[%s319 + $0xb74] sm:$0xf]
        %v3726 = vld [vmem:[%s319 + $0xb78] sm:$0xf]
        %v3727 = vld [vmem:[%s319 + $0xb7c] sm:$0xf]
        %v3728 = vld [vmem:[%s319 + $0xb80] sm:$0xf]
        %v3729 = vld [vmem:[%s319 + $0xb84] sm:$0xf]
        %v3730 = vld [vmem:[%s319 + $0xb88] sm:$0xf]
        %v3731 = vld [vmem:[%s319 + $0xb8c] sm:$0xf]
        %v3732 = vld [vmem:[%s319 + $0xb90] sm:$0xf]
        %v3733 = vld [vmem:[%s319 + $0xb94] sm:$0xf]
        %v3734 = vld [vmem:[%s319 + $0xb98] sm:$0xf]
        %v3735 = vld [vmem:[%s319 + $0xb9c] sm:$0xf]
        %v3736 = vld [vmem:[%s319 + $0xba0] sm:$0xf]
        %v3737 = vld [vmem:[%s319 + $0xba4] sm:$0xf]
        %v3738 = vld [vmem:[%s319 + $0xba8] sm:$0xf]
        %v3739 = vld [vmem:[%s319 + $0xbac] sm:$0xf]
        %v3740 = vld [vmem:[%s319 + $0xbb0] sm:$0xf]
        %v3741 = vld [vmem:[%s319 + $0xbb4] sm:$0xf]
        %v3742 = vld [vmem:[%s319 + $0xbb8] sm:$0xf]
        %v3743 = vld [vmem:[%s319 + $0xbbc] sm:$0xf]
        %v3744 = vld [vmem:[%s319 + $0xbc0] sm:$0xf]
        %v3745 = vld [vmem:[%s319 + $0xbc4] sm:$0xf]
        %v3746 = vld [vmem:[%s319 + $0xbc8] sm:$0xf]
        %v3747 = vld [vmem:[%s319 + $0xbcc] sm:$0xf]
        %v3748 = vld [vmem:[%s319 + $0xbd0] sm:$0xf]
        %v3749 = vld [vmem:[%s319 + $0xbd4] sm:$0xf]
        %v3750 = vld [vmem:[%s319 + $0xbd8] sm:$0xf]
        %v3751 = vld [vmem:[%s319 + $0xbdc] sm:$0xf]
        %v3752 = vld [vmem:[%s319 + $0xbe0] sm:$0xf]
        %v3753 = vld [vmem:[%s319 + $0xbe4] sm:$0xf]
        %v3754 = vld [vmem:[%s319 + $0xbe8] sm:$0xf]
        %v3755 = vld [vmem:[%s319 + $0xbec] sm:$0xf]
        %v3756 = vld [vmem:[%s319 + $0xbf0] sm:$0xf]
        %v3757 = vld [vmem:[%s319 + $0xbf4] sm:$0xf]
        %v3758 = vld [vmem:[%s319 + $0xbf8] sm:$0xf]
        %v3759 = vld [vmem:[%s319 + $0xbfc] sm:$0xf]
        %v3760 = vld [vmem:[%s319 + $0xc00] sm:$0xf]
        %v3761 = vld [vmem:[%s319 + $0xc04] sm:$0xf]
        %v3762 = vld [vmem:[%s319 + $0xc08] sm:$0xf]
        %v3763 = vld [vmem:[%s319 + $0xc0c] sm:$0xf]
        %v3764 = vld [vmem:[%s319 + $0xc10] sm:$0xf]
        %v3765 = vld [vmem:[%s319 + $0xc14] sm:$0xf]
        %v3766 = vld [vmem:[%s319 + $0xc18] sm:$0xf]
        %v3767 = vld [vmem:[%s319 + $0xc1c] sm:$0xf]
        %v3768 = vld [vmem:[%s319 + $0xc20] sm:$0xf]
        %v3769 = vld [vmem:[%s319 + $0xc24] sm:$0xf]
        %v3770 = vld [vmem:[%s319 + $0xc28] sm:$0xf]
        %v3771 = vld [vmem:[%s319 + $0xc2c] sm:$0xf]
        %v3772 = vld [vmem:[%s319 + $0xc30] sm:$0xf]
        %v3773 = vld [vmem:[%s319 + $0xc34] sm:$0xf]
        %v3774 = vld [vmem:[%s319 + $0xc38] sm:$0xf]
        %v3775 = vld [vmem:[%s319 + $0xc3c] sm:$0xf]
        %v3776 = vld [vmem:[%s319 + $0xc40] sm:$0xf]
        %v3777 = vld [vmem:[%s319 + $0xc44] sm:$0xf]
        %v3778 = vld [vmem:[%s319 + $0xc48] sm:$0xf]
        %v3779 = vld [vmem:[%s319 + $0xc4c] sm:$0xf]
        %v3780 = vld [vmem:[%s319 + $0xc50] sm:$0xf]
        %v3781 = vld [vmem:[%s319 + $0xc54] sm:$0xf]
        %v3782 = vld [vmem:[%s319 + $0xc58] sm:$0xf]
        %v3783 = vld [vmem:[%s319 + $0xc5c] sm:$0xf]
        %v3784 = vld [vmem:[%s319 + $0xc60] sm:$0xf]
        %v3785 = vld [vmem:[%s319 + $0xc64] sm:$0xf]
        %v3786 = vld [vmem:[%s319 + $0xc68] sm:$0xf]
        %v3787 = vld [vmem:[%s319 + $0xc6c] sm:$0xf]
        %v3788 = vld [vmem:[%s319 + $0xc70] sm:$0xf]
        %v3789 = vld [vmem:[%s319 + $0xc74] sm:$0xf]
        %v3790 = vld [vmem:[%s319 + $0xc78] sm:$0xf]
        %v3791 = vld [vmem:[%s319 + $0xc7c] sm:$0xf]
        %v3792 = vld [vmem:[%s319 + $0xc80] sm:$0xf]
        %v3793 = vld [vmem:[%s319 + $0xc84] sm:$0xf]
        %v3794 = vld [vmem:[%s319 + $0xc88] sm:$0xf]
        %v3795 = vld [vmem:[%s319 + $0xc8c] sm:$0xf]
        %v3796 = vld [vmem:[%s319 + $0xc90] sm:$0xf]
        %v3797 = vld [vmem:[%s319 + $0xc94] sm:$0xf]
        %v3798 = vld [vmem:[%s319 + $0xc98] sm:$0xf]
        %v3799 = vld [vmem:[%s319 + $0xc9c] sm:$0xf]
        %v3800 = vld [vmem:[%s319 + $0xca0] sm:$0xf]
        %v3801 = vld [vmem:[%s319 + $0xca4] sm:$0xf]
        %v3802 = vld [vmem:[%s319 + $0xca8] sm:$0xf]
        %v3803 = vld [vmem:[%s319 + $0xcac] sm:$0xf]
        %v3804 = vld [vmem:[%s319 + $0xcb0] sm:$0xf]
        %v3805 = vld [vmem:[%s319 + $0xcb4] sm:$0xf]
        %v3806 = vld [vmem:[%s319 + $0xcb8] sm:$0xf]
        %v3807 = vld [vmem:[%s319 + $0xcbc] sm:$0xf]
        %v3808 = vld [vmem:[%s319 + $0xcc0] sm:$0xf]
        %v3809 = vld [vmem:[%s319 + $0xcc4] sm:$0xf]
        %v3810 = vld [vmem:[%s319 + $0xcc8] sm:$0xf]
        %v3811 = vld [vmem:[%s319 + $0xccc] sm:$0xf]
        %v3812 = vld [vmem:[%s319 + $0xcd0] sm:$0xf]
        %v3813 = vld [vmem:[%s319 + $0xcd4] sm:$0xf]
        %v3814 = vld [vmem:[%s319 + $0xcd8] sm:$0xf]
        %v3815 = vld [vmem:[%s319 + $0xcdc] sm:$0xf]
        %v3816 = vld [vmem:[%s319 + $0xce0] sm:$0xf]
        %v3817 = vld [vmem:[%s319 + $0xce4] sm:$0xf]
        %v3818 = vld [vmem:[%s319 + $0xce8] sm:$0xf]
        %v3819 = vld [vmem:[%s319 + $0xcec] sm:$0xf]
        %v3820 = vld [vmem:[%s319 + $0xcf0] sm:$0xf]
        %v3821 = vld [vmem:[%s319 + $0xcf4] sm:$0xf]
        %v3822 = vld [vmem:[%s319 + $0xcf8] sm:$0xf]
        %v3823 = vld [vmem:[%s319 + $0xcfc] sm:$0xf]
        %v3824 = vld [vmem:[%s319 + $0xd00] sm:$0xf]
        %v3825 = vld [vmem:[%s319 + $0xd04] sm:$0xf]
        %v3826 = vld [vmem:[%s319 + $0xd08] sm:$0xf]
        %v3827 = vld [vmem:[%s319 + $0xd0c] sm:$0xf]
        %v3828 = vld [vmem:[%s319 + $0xd10] sm:$0xf]
        %v3829 = vld [vmem:[%s319 + $0xd14] sm:$0xf]
        %v3830 = vld [vmem:[%s319 + $0xd18] sm:$0xf]
        %v3831 = vld [vmem:[%s319 + $0xd1c] sm:$0xf]
        %v3832 = vld [vmem:[%s319 + $0xd20] sm:$0xf]
        %v3833 = vld [vmem:[%s319 + $0xd24] sm:$0xf]
        %v3834 = vld [vmem:[%s319 + $0xd28] sm:$0xf]
        %v3835 = vld [vmem:[%s319 + $0xd2c] sm:$0xf]
        %v3836 = vld [vmem:[%s319 + $0xd30] sm:$0xf]
        %v3837 = vld [vmem:[%s319 + $0xd34] sm:$0xf]
        %v3838 = vld [vmem:[%s319 + $0xd38] sm:$0xf]
        %v3839 = vld [vmem:[%s319 + $0xd3c] sm:$0xf]
        %v3840 = vld [vmem:[%s319 + $0xd40] sm:$0xf]
        %v3841 = vld [vmem:[%s319 + $0xd44] sm:$0xf]
        %v3842 = vld [vmem:[%s319 + $0xd48] sm:$0xf]
        %v3843 = vld [vmem:[%s319 + $0xd4c] sm:$0xf]
        %v3844 = vld [vmem:[%s319 + $0xd50] sm:$0xf]
        %v3845 = vld [vmem:[%s319 + $0xd54] sm:$0xf]
        %v3846 = vld [vmem:[%s319 + $0xd58] sm:$0xf]
        %v3847 = vld [vmem:[%s319 + $0xd5c] sm:$0xf]
        %v3848 = vld [vmem:[%s319 + $0xd60] sm:$0xf]
        %v3849 = vld [vmem:[%s319 + $0xd64] sm:$0xf]
        %v3850 = vld [vmem:[%s319 + $0xd68] sm:$0xf]
        %v3851 = vld [vmem:[%s319 + $0xd6c] sm:$0xf]
        %v3852 = vld [vmem:[%s319 + $0xd70] sm:$0xf]
        %v3853 = vld [vmem:[%s319 + $0xd74] sm:$0xf]
        %v3854 = vld [vmem:[%s319 + $0xd78] sm:$0xf]
        %v3855 = vld [vmem:[%s319 + $0xd7c] sm:$0xf]
        %v3856 = vld [vmem:[%s319 + $0xd80] sm:$0xf]
        %v3857 = vld [vmem:[%s319 + $0xd84] sm:$0xf]
        %v3858 = vld [vmem:[%s319 + $0xd88] sm:$0xf]
        %v3859 = vld [vmem:[%s319 + $0xd8c] sm:$0xf]
        %v3860 = vld [vmem:[%s319 + $0xd90] sm:$0xf]
        %v3861 = vld [vmem:[%s319 + $0xd94] sm:$0xf]
        %v3862 = vld [vmem:[%s319 + $0xd98] sm:$0xf]
        %v3863 = vld [vmem:[%s319 + $0xd9c] sm:$0xf]
        %v3864 = vld [vmem:[%s319 + $0xda0] sm:$0xf]
        %v3865 = vld [vmem:[%s319 + $0xda4] sm:$0xf]
        %v3866 = vld [vmem:[%s319 + $0xda8] sm:$0xf]
        %v3867 = vld [vmem:[%s319 + $0xdac] sm:$0xf]
        %v3868 = vld [vmem:[%s319 + $0xdb0] sm:$0xf]
        %v3869 = vld [vmem:[%s319 + $0xdb4] sm:$0xf]
        %v3870 = vld [vmem:[%s319 + $0xdb8] sm:$0xf]
        %v3871 = vld [vmem:[%s319 + $0xdbc] sm:$0xf]
        %v3872 = vld [vmem:[%s319 + $0xdc0] sm:$0xf]
        %v3873 = vld [vmem:[%s319 + $0xdc4] sm:$0xf]
        %v3874 = vld [vmem:[%s319 + $0xdc8] sm:$0xf]
        %v3875 = vld [vmem:[%s319 + $0xdcc] sm:$0xf]
        %v3876 = vld [vmem:[%s319 + $0xdd0] sm:$0xf]
        %v3877 = vld [vmem:[%s319 + $0xdd4] sm:$0xf]
        %v3878 = vld [vmem:[%s319 + $0xdd8] sm:$0xf]
        %v3879 = vld [vmem:[%s319 + $0xddc] sm:$0xf]
        %v3880 = vld [vmem:[%s319 + $0xde0] sm:$0xf]
        %v3881 = vld [vmem:[%s319 + $0xde4] sm:$0xf]
        %v3882 = vld [vmem:[%s319 + $0xde8] sm:$0xf]
        %v3883 = vld [vmem:[%s319 + $0xdec] sm:$0xf]
        %v3884 = vld [vmem:[%s319 + $0xdf0] sm:$0xf]
        %v3885 = vld [vmem:[%s319 + $0xdf4] sm:$0xf]
        %v3886 = vld [vmem:[%s319 + $0xdf8] sm:$0xf]
        %v3887 = vld [vmem:[%s319 + $0xdfc] sm:$0xf]
        %v3888 = vld [vmem:[%s319 + $0xe00] sm:$0xf]
        %v3889 = vld [vmem:[%s319 + $0xe04] sm:$0xf]
        %v3890 = vld [vmem:[%s319 + $0xe08] sm:$0xf]
        %v3891 = vld [vmem:[%s319 + $0xe0c] sm:$0xf]
        %v3892 = vld [vmem:[%s319 + $0xe10] sm:$0xf]
        %v3893 = vld [vmem:[%s319 + $0xe14] sm:$0xf]
        %v3894 = vld [vmem:[%s319 + $0xe18] sm:$0xf]
        %v3895 = vld [vmem:[%s319 + $0xe1c] sm:$0xf]
        %v3896 = vld [vmem:[%s319 + $0xe20] sm:$0xf]
        %v3897 = vld [vmem:[%s319 + $0xe24] sm:$0xf]
        %v3898 = vld [vmem:[%s319 + $0xe28] sm:$0xf]
        %v3899 = vld [vmem:[%s319 + $0xe2c] sm:$0xf]
        %v3900 = vld [vmem:[%s319 + $0xe30] sm:$0xf]
        %v3901 = vld [vmem:[%s319 + $0xe34] sm:$0xf]
        %v3902 = vld [vmem:[%s319 + $0xe38] sm:$0xf]
        %v3903 = vld [vmem:[%s319 + $0xe3c] sm:$0xf]
        %v3904 = vld [vmem:[%s319 + $0xe40] sm:$0xf]
        %v3905 = vld [vmem:[%s319 + $0xe44] sm:$0xf]
        %v3906 = vld [vmem:[%s319 + $0xe48] sm:$0xf]
        %v3907 = vld [vmem:[%s319 + $0xe4c] sm:$0xf]
        %v3908 = vld [vmem:[%s319 + $0xe50] sm:$0xf]
        %v3909 = vld [vmem:[%s319 + $0xe54] sm:$0xf]
        %v3910 = vld [vmem:[%s319 + $0xe58] sm:$0xf]
        %v3911 = vld [vmem:[%s319 + $0xe5c] sm:$0xf]
        %v3912 = vld [vmem:[%s319 + $0xe60] sm:$0xf]
        %v3913 = vld [vmem:[%s319 + $0xe64] sm:$0xf]
        %v3914 = vld [vmem:[%s319 + $0xe68] sm:$0xf]
        %v3915 = vld [vmem:[%s319 + $0xe6c] sm:$0xf]
        %v3916 = vld [vmem:[%s319 + $0xe70] sm:$0xf]
        %v3917 = vld [vmem:[%s319 + $0xe74] sm:$0xf]
        %v3918 = vld [vmem:[%s319 + $0xe78] sm:$0xf]
        %v3919 = vld [vmem:[%s319 + $0xe7c] sm:$0xf]
        %v3920 = vld [vmem:[%s319 + $0xe80] sm:$0xf]
        %v3921 = vld [vmem:[%s319 + $0xe84] sm:$0xf]
        %v3922 = vld [vmem:[%s319 + $0xe88] sm:$0xf]
        %v3923 = vld [vmem:[%s319 + $0xe8c] sm:$0xf]
        %v3924 = vld [vmem:[%s319 + $0xe90] sm:$0xf]
        %v3925 = vld [vmem:[%s319 + $0xe94] sm:$0xf]
        %v3926 = vld [vmem:[%s319 + $0xe98] sm:$0xf]
        %v3927 = vld [vmem:[%s319 + $0xe9c] sm:$0xf]
        %v3928 = vld [vmem:[%s319 + $0xea0] sm:$0xf]
        %v3929 = vld [vmem:[%s319 + $0xea4] sm:$0xf]
        %v3930 = vld [vmem:[%s319 + $0xea8] sm:$0xf]
        %v3931 = vld [vmem:[%s319 + $0xeac] sm:$0xf]
        %v3932 = vld [vmem:[%s319 + $0xeb0] sm:$0xf]
        %v3933 = vld [vmem:[%s319 + $0xeb4] sm:$0xf]
        %v3934 = vld [vmem:[%s319 + $0xeb8] sm:$0xf]
        %v3935 = vld [vmem:[%s319 + $0xebc] sm:$0xf]
        %v3936 = vld [vmem:[%s319 + $0xec0] sm:$0xf]
        %v3937 = vld [vmem:[%s319 + $0xec4] sm:$0xf]
        %v3938 = vld [vmem:[%s319 + $0xec8] sm:$0xf]
        %v3939 = vld [vmem:[%s319 + $0xecc] sm:$0xf]
        %v3940 = vld [vmem:[%s319 + $0xed0] sm:$0xf]
        %v3941 = vld [vmem:[%s319 + $0xed4] sm:$0xf]
        %v3942 = vld [vmem:[%s319 + $0xed8] sm:$0xf]
        %v3943 = vld [vmem:[%s319 + $0xedc] sm:$0xf]
        %v3944 = vld [vmem:[%s319 + $0xee0] sm:$0xf]
        %v3945 = vld [vmem:[%s319 + $0xee4] sm:$0xf]
        %v3946 = vld [vmem:[%s319 + $0xee8] sm:$0xf]
        %v3947 = vld [vmem:[%s319 + $0xeec] sm:$0xf]
        %v3948 = vld [vmem:[%s319 + $0xef0] sm:$0xf]
        %v3949 = vld [vmem:[%s319 + $0xef4] sm:$0xf]
        %v3950 = vld [vmem:[%s319 + $0xef8] sm:$0xf]
        %v3951 = vld [vmem:[%s319 + $0xefc] sm:$0xf]
        %v3952 = vld [vmem:[%s319 + $0xf00] sm:$0xf]
        %v3953 = vld [vmem:[%s319 + $0xf04] sm:$0xf]
        %v3954 = vld [vmem:[%s319 + $0xf08] sm:$0xf]
        %v3955 = vld [vmem:[%s319 + $0xf0c] sm:$0xf]
        %v3956 = vld [vmem:[%s319 + $0xf10] sm:$0xf]
        %v3957 = vld [vmem:[%s319 + $0xf14] sm:$0xf]
        %v3958 = vld [vmem:[%s319 + $0xf18] sm:$0xf]
        %v3959 = vld [vmem:[%s319 + $0xf1c] sm:$0xf]
        %v3960 = vld [vmem:[%s319 + $0xf20] sm:$0xf]
        %v3961 = vld [vmem:[%s319 + $0xf24] sm:$0xf]
        %v3962 = vld [vmem:[%s319 + $0xf28] sm:$0xf]
        %v3963 = vld [vmem:[%s319 + $0xf2c] sm:$0xf]
        %v3964 = vld [vmem:[%s319 + $0xf30] sm:$0xf]
        %v3965 = vld [vmem:[%s319 + $0xf34] sm:$0xf]
        %v3966 = vld [vmem:[%s319 + $0xf38] sm:$0xf]
        %v3967 = vld [vmem:[%s319 + $0xf3c] sm:$0xf]
        %v3968 = vld [vmem:[%s319 + $0xf40] sm:$0xf]
        %v3969 = vld [vmem:[%s319 + $0xf44] sm:$0xf]
        %v3970 = vld [vmem:[%s319 + $0xf48] sm:$0xf]
        %v3971 = vld [vmem:[%s319 + $0xf4c] sm:$0xf]
        %v3972 = vld [vmem:[%s319 + $0xf50] sm:$0xf]
        %v3973 = vld [vmem:[%s319 + $0xf54] sm:$0xf]
        %v3974 = vld [vmem:[%s319 + $0xf58] sm:$0xf]
        %v3975 = vld [vmem:[%s319 + $0xf5c] sm:$0xf]
        %v3976 = vld [vmem:[%s319 + $0xf60] sm:$0xf]
        %v3977 = vld [vmem:[%s319 + $0xf64] sm:$0xf]
        %v3978 = vld [vmem:[%s319 + $0xf68] sm:$0xf]
        %v3979 = vld [vmem:[%s319 + $0xf6c] sm:$0xf]
        %v3980 = vld [vmem:[%s319 + $0xf70] sm:$0xf]
        %v3981 = vld [vmem:[%s319 + $0xf74] sm:$0xf]
        %v3982 = vld [vmem:[%s319 + $0xf78] sm:$0xf]
        %v3983 = vld [vmem:[%s319 + $0xf7c] sm:$0xf]
        %v3984 = vld [vmem:[%s319 + $0xf80] sm:$0xf]
        %v3985 = vld [vmem:[%s319 + $0xf84] sm:$0xf]
        %v3986 = vld [vmem:[%s319 + $0xf88] sm:$0xf]
        %v3987 = vld [vmem:[%s319 + $0xf8c] sm:$0xf]
        %v3988 = vld [vmem:[%s319 + $0xf90] sm:$0xf]
        %v3989 = vld [vmem:[%s319 + $0xf94] sm:$0xf]
        %v3990 = vld [vmem:[%s319 + $0xf98] sm:$0xf]
        %v3991 = vld [vmem:[%s319 + $0xf9c] sm:$0xf]
        %v3992 = vld [vmem:[%s319 + $0xfa0] sm:$0xf]
        %v3993 = vld [vmem:[%s319 + $0xfa4] sm:$0xf]
        %v3994 = vld [vmem:[%s319 + $0xfa8] sm:$0xf]
        %v3995 = vld [vmem:[%s319 + $0xfac] sm:$0xf]
        %v3996 = vld [vmem:[%s319 + $0xfb0] sm:$0xf]
        %v3997 = vld [vmem:[%s319 + $0xfb4] sm:$0xf]
        %v3998 = vld [vmem:[%s319 + $0xfb8] sm:$0xf]
        %v3999 = vld [vmem:[%s319 + $0xfbc] sm:$0xf]
        %v4000 = vld [vmem:[%s319 + $0xfc0] sm:$0xf]
        %v4001 = vld [vmem:[%s319 + $0xfc4] sm:$0xf]
        %v4002 = vld [vmem:[%s319 + $0xfc8] sm:$0xf]
        %v4003 = vld [vmem:[%s319 + $0xfcc] sm:$0xf]
        %v4004 = vld [vmem:[%s319 + $0xfd0] sm:$0xf]
        %v4005 = vld [vmem:[%s319 + $0xfd4] sm:$0xf]
        %v4006 = vld [vmem:[%s319 + $0xfd8] sm:$0xf]
        %v4007 = vld [vmem:[%s319 + $0xfdc] sm:$0xf]
        %v4008 = vld [vmem:[%s319 + $0xfe0] sm:$0xf]
        %v4009 = vld [vmem:[%s319 + $0xfe4] sm:$0xf]
        %v4010 = vld [vmem:[%s319 + $0xfe8] sm:$0xf]
        %v4011 = vld [vmem:[%s319 + $0xfec] sm:$0xf]
        %v4012 = vld [vmem:[%s319 + $0xff0] sm:$0xf]
        %v4013 = vld [vmem:[%s319 + $0xff4] sm:$0xf]
        %v4014 = vld [vmem:[%s319 + $0xff8] sm:$0xf]
        %v4015 = vld [vmem:[%s319 + $0xffc] sm:$0xf]
        %v5040 = vunpack.c.l.b16 %v2992
        %v5041 = vunpack.c.l.b16 %v2993
        %v5042 = vunpack.c.l.b16 %v2994
        %v5043 = vunpack.c.l.b16 %v2995
        %v5044 = vunpack.c.l.b16 %v2996
        %v5045 = vunpack.c.l.b16 %v2997
        %v5046 = vunpack.c.l.b16 %v2998
        %v5047 = vunpack.c.l.b16 %v2999
        %v5048 = vunpack.c.l.b16 %v3000
        %v5049 = vunpack.c.l.b16 %v3001
        %v5050 = vunpack.c.l.b16 %v3002
        %v5051 = vunpack.c.l.b16 %v3003
        %v5052 = vunpack.c.l.b16 %v3004
        %v5053 = vunpack.c.l.b16 %v3005
        %v5054 = vunpack.c.l.b16 %v3006
        %v5055 = vunpack.c.l.b16 %v3007
        %v5056 = vunpack.c.l.b16 %v3008
        %v5057 = vunpack.c.l.b16 %v3009
        %v5058 = vunpack.c.l.b16 %v3010
        %v5059 = vunpack.c.l.b16 %v3011
        %v5060 = vunpack.c.l.b16 %v3012
        %v5061 = vunpack.c.l.b16 %v3013
        %v5062 = vunpack.c.l.b16 %v3014
        %v5063 = vunpack.c.l.b16 %v3015
        %v5064 = vunpack.c.l.b16 %v3016
        %v5065 = vunpack.c.l.b16 %v3017
        %v5066 = vunpack.c.l.b16 %v3018
        %v5067 = vunpack.c.l.b16 %v3019
        %v5068 = vunpack.c.l.b16 %v3020
        %v5069 = vunpack.c.l.b16 %v3021
        %v5070 = vunpack.c.l.b16 %v3022
        %v5071 = vunpack.c.l.b16 %v3023
        %v5072 = vunpack.c.l.b16 %v3024
        %v5073 = vunpack.c.l.b16 %v3025
        %v5074 = vunpack.c.l.b16 %v3026
        %v5075 = vunpack.c.l.b16 %v3027
        %v5076 = vunpack.c.l.b16 %v3028
        %v5077 = vunpack.c.l.b16 %v3029
        %v5078 = vunpack.c.l.b16 %v3030
        %v5079 = vunpack.c.l.b16 %v3031
        %v5080 = vunpack.c.l.b16 %v3032
        %v5081 = vunpack.c.l.b16 %v3033
        %v5082 = vunpack.c.l.b16 %v3034
        %v5083 = vunpack.c.l.b16 %v3035
        %v5084 = vunpack.c.l.b16 %v3036
        %v5085 = vunpack.c.l.b16 %v3037
        %v5086 = vunpack.c.l.b16 %v3038
        %v5087 = vunpack.c.l.b16 %v3039
        %v5088 = vunpack.c.l.b16 %v3040
        %v5089 = vunpack.c.l.b16 %v3041
        %v5090 = vunpack.c.l.b16 %v3042
        %v5091 = vunpack.c.l.b16 %v3043
        %v5092 = vunpack.c.l.b16 %v3044
        %v5093 = vunpack.c.l.b16 %v3045
        %v5094 = vunpack.c.l.b16 %v3046
        %v5095 = vunpack.c.l.b16 %v3047
        %v5096 = vunpack.c.l.b16 %v3048
        %v5097 = vunpack.c.l.b16 %v3049
        %v5098 = vunpack.c.l.b16 %v3050
        %v5099 = vunpack.c.l.b16 %v3051
        %v5100 = vunpack.c.l.b16 %v3052
        %v5101 = vunpack.c.l.b16 %v3053
        %v5102 = vunpack.c.l.b16 %v3054
        %v5103 = vunpack.c.l.b16 %v3055
        %v5104 = vunpack.c.l.b16 %v3056
        %v5105 = vunpack.c.l.b16 %v3057
        %v5106 = vunpack.c.l.b16 %v3058
        %v5107 = vunpack.c.l.b16 %v3059
        %v5108 = vunpack.c.l.b16 %v3060
        %v5109 = vunpack.c.l.b16 %v3061
        %v5110 = vunpack.c.l.b16 %v3062
        %v5111 = vunpack.c.l.b16 %v3063
        %v5112 = vunpack.c.l.b16 %v3064
        %v5113 = vunpack.c.l.b16 %v3065
        %v5114 = vunpack.c.l.b16 %v3066
        %v5115 = vunpack.c.l.b16 %v3067
        %v5116 = vunpack.c.l.b16 %v3068
        %v5117 = vunpack.c.l.b16 %v3069
        %v5118 = vunpack.c.l.b16 %v3070
        %v5119 = vunpack.c.l.b16 %v3071
        %v5120 = vunpack.c.l.b16 %v3072
        %v5121 = vunpack.c.l.b16 %v3073
        %v5122 = vunpack.c.l.b16 %v3074
        %v5123 = vunpack.c.l.b16 %v3075
        %v5124 = vunpack.c.l.b16 %v3076
        %v5125 = vunpack.c.l.b16 %v3077
        %v5126 = vunpack.c.l.b16 %v3078
        %v5127 = vunpack.c.l.b16 %v3079
        %v5128 = vunpack.c.l.b16 %v3080
        %v5129 = vunpack.c.l.b16 %v3081
        %v5130 = vunpack.c.l.b16 %v3082
        %v5131 = vunpack.c.l.b16 %v3083
        %v5132 = vunpack.c.l.b16 %v3084
        %v5133 = vunpack.c.l.b16 %v3085
        %v5134 = vunpack.c.l.b16 %v3086
        %v5135 = vunpack.c.l.b16 %v3087
        %v5136 = vunpack.c.l.b16 %v3088
        %v5137 = vunpack.c.l.b16 %v3089
        %v5138 = vunpack.c.l.b16 %v3090
        %v5139 = vunpack.c.l.b16 %v3091
        %v5140 = vunpack.c.l.b16 %v3092
        %v5141 = vunpack.c.l.b16 %v3093
        %v5142 = vunpack.c.l.b16 %v3094
        %v5143 = vunpack.c.l.b16 %v3095
        %v5144 = vunpack.c.l.b16 %v3096
        %v5145 = vunpack.c.l.b16 %v3097
        %v5146 = vunpack.c.l.b16 %v3098
        %v5147 = vunpack.c.l.b16 %v3099
        %v5148 = vunpack.c.l.b16 %v3100
        %v5149 = vunpack.c.l.b16 %v3101
        %v5150 = vunpack.c.l.b16 %v3102
        %v5151 = vunpack.c.l.b16 %v3103
        %v5152 = vunpack.c.l.b16 %v3104
        %v5153 = vunpack.c.l.b16 %v3105
        %v5154 = vunpack.c.l.b16 %v3106
        %v5155 = vunpack.c.l.b16 %v3107
        %v5156 = vunpack.c.l.b16 %v3108
        %v5157 = vunpack.c.l.b16 %v3109
        %v5158 = vunpack.c.l.b16 %v3110
        %v5159 = vunpack.c.l.b16 %v3111
        %v5160 = vunpack.c.l.b16 %v3112
        %v5161 = vunpack.c.l.b16 %v3113
        %v5162 = vunpack.c.l.b16 %v3114
        %v5163 = vunpack.c.l.b16 %v3115
        %v5164 = vunpack.c.l.b16 %v3116
        %v5165 = vunpack.c.l.b16 %v3117
        %v5166 = vunpack.c.l.b16 %v3118
        %v5167 = vunpack.c.l.b16 %v3119
        %v5168 = vunpack.c.l.b16 %v3120
        %v5169 = vunpack.c.l.b16 %v3121
        %v5170 = vunpack.c.l.b16 %v3122
        %v5171 = vunpack.c.l.b16 %v3123
        %v5172 = vunpack.c.l.b16 %v3124
        %v5173 = vunpack.c.l.b16 %v3125
        %v5174 = vunpack.c.l.b16 %v3126
        %v5175 = vunpack.c.l.b16 %v3127
        %v5176 = vunpack.c.l.b16 %v3128
        %v5177 = vunpack.c.l.b16 %v3129
        %v5178 = vunpack.c.l.b16 %v3130
        %v5179 = vunpack.c.l.b16 %v3131
        %v5180 = vunpack.c.l.b16 %v3132
        %v5181 = vunpack.c.l.b16 %v3133
        %v5182 = vunpack.c.l.b16 %v3134
        %v5183 = vunpack.c.l.b16 %v3135
        %v5184 = vunpack.c.l.b16 %v3136
        %v5185 = vunpack.c.l.b16 %v3137
        %v5186 = vunpack.c.l.b16 %v3138
        %v5187 = vunpack.c.l.b16 %v3139
        %v5188 = vunpack.c.l.b16 %v3140
        %v5189 = vunpack.c.l.b16 %v3141
        %v5190 = vunpack.c.l.b16 %v3142
        %v5191 = vunpack.c.l.b16 %v3143
        %v5192 = vunpack.c.l.b16 %v3144
        %v5193 = vunpack.c.l.b16 %v3145
        %v5194 = vunpack.c.l.b16 %v3146
        %v5195 = vunpack.c.l.b16 %v3147
        %v5196 = vunpack.c.l.b16 %v3148
        %v5197 = vunpack.c.l.b16 %v3149
        %v5198 = vunpack.c.l.b16 %v3150
        %v5199 = vunpack.c.l.b16 %v3151
        %v5200 = vunpack.c.l.b16 %v3152
        %v5201 = vunpack.c.l.b16 %v3153
        %v5202 = vunpack.c.l.b16 %v3154
        %v5203 = vunpack.c.l.b16 %v3155
        %v5204 = vunpack.c.l.b16 %v3156
        %v5205 = vunpack.c.l.b16 %v3157
        %v5206 = vunpack.c.l.b16 %v3158
        %v5207 = vunpack.c.l.b16 %v3159
        %v5208 = vunpack.c.l.b16 %v3160
        %v5209 = vunpack.c.l.b16 %v3161
        %v5210 = vunpack.c.l.b16 %v3162
        %v5211 = vunpack.c.l.b16 %v3163
        %v5212 = vunpack.c.l.b16 %v3164
        %v5213 = vunpack.c.l.b16 %v3165
        %v5214 = vunpack.c.l.b16 %v3166
        %v5215 = vunpack.c.l.b16 %v3167
        %v5216 = vunpack.c.l.b16 %v3168
        %v5217 = vunpack.c.l.b16 %v3169
        %v5218 = vunpack.c.l.b16 %v3170
        %v5219 = vunpack.c.l.b16 %v3171
        %v5220 = vunpack.c.l.b16 %v3172
        %v5221 = vunpack.c.l.b16 %v3173
        %v5222 = vunpack.c.l.b16 %v3174
        %v5223 = vunpack.c.l.b16 %v3175
        %v5224 = vunpack.c.l.b16 %v3176
        %v5225 = vunpack.c.l.b16 %v3177
        %v5226 = vunpack.c.l.b16 %v3178
        %v5227 = vunpack.c.l.b16 %v3179
        %v5228 = vunpack.c.l.b16 %v3180
        %v5229 = vunpack.c.l.b16 %v3181
        %v5230 = vunpack.c.l.b16 %v3182
        %v5231 = vunpack.c.l.b16 %v3183
        %v5232 = vunpack.c.l.b16 %v3184
        %v5233 = vunpack.c.l.b16 %v3185
        %v5234 = vunpack.c.l.b16 %v3186
        %v5235 = vunpack.c.l.b16 %v3187
        %v5236 = vunpack.c.l.b16 %v3188
        %v5237 = vunpack.c.l.b16 %v3189
        %v5238 = vunpack.c.l.b16 %v3190
        %v5239 = vunpack.c.l.b16 %v3191
        %v5240 = vunpack.c.l.b16 %v3192
        %v5241 = vunpack.c.l.b16 %v3193
        %v5242 = vunpack.c.l.b16 %v3194
        %v5243 = vunpack.c.l.b16 %v3195
        %v5244 = vunpack.c.l.b16 %v3196
        %v5245 = vunpack.c.l.b16 %v3197
        %v5246 = vunpack.c.l.b16 %v3198
        %v5247 = vunpack.c.l.b16 %v3199
        %v5248 = vunpack.c.l.b16 %v3200
        %v5249 = vunpack.c.l.b16 %v3201
        %v5250 = vunpack.c.l.b16 %v3202
        %v5251 = vunpack.c.l.b16 %v3203
        %v5252 = vunpack.c.l.b16 %v3204
        %v5253 = vunpack.c.l.b16 %v3205
        %v5254 = vunpack.c.l.b16 %v3206
        %v5255 = vunpack.c.l.b16 %v3207
        %v5256 = vunpack.c.l.b16 %v3208
        %v5257 = vunpack.c.l.b16 %v3209
        %v5258 = vunpack.c.l.b16 %v3210
        %v5259 = vunpack.c.l.b16 %v3211
        %v5260 = vunpack.c.l.b16 %v3212
        %v5261 = vunpack.c.l.b16 %v3213
        %v5262 = vunpack.c.l.b16 %v3214
        %v5263 = vunpack.c.l.b16 %v3215
        %v5264 = vunpack.c.l.b16 %v3216
        %v5265 = vunpack.c.l.b16 %v3217
        %v5266 = vunpack.c.l.b16 %v3218
        %v5267 = vunpack.c.l.b16 %v3219
        %v5268 = vunpack.c.l.b16 %v3220
        %v5269 = vunpack.c.l.b16 %v3221
        %v5270 = vunpack.c.l.b16 %v3222
        %v5271 = vunpack.c.l.b16 %v3223
        %v5272 = vunpack.c.l.b16 %v3224
        %v5273 = vunpack.c.l.b16 %v3225
        %v5274 = vunpack.c.l.b16 %v3226
        %v5275 = vunpack.c.l.b16 %v3227
        %v5276 = vunpack.c.l.b16 %v3228
        %v5277 = vunpack.c.l.b16 %v3229
        %v5278 = vunpack.c.l.b16 %v3230
        %v5279 = vunpack.c.l.b16 %v3231
        %v5280 = vunpack.c.l.b16 %v3232
        %v5281 = vunpack.c.l.b16 %v3233
        %v5282 = vunpack.c.l.b16 %v3234
        %v5283 = vunpack.c.l.b16 %v3235
        %v5284 = vunpack.c.l.b16 %v3236
        %v5285 = vunpack.c.l.b16 %v3237
        %v5286 = vunpack.c.l.b16 %v3238
        %v5287 = vunpack.c.l.b16 %v3239
        %v5288 = vunpack.c.l.b16 %v3240
        %v5289 = vunpack.c.l.b16 %v3241
        %v5290 = vunpack.c.l.b16 %v3242
        %v5291 = vunpack.c.l.b16 %v3243
        %v5292 = vunpack.c.l.b16 %v3244
        %v5293 = vunpack.c.l.b16 %v3245
        %v5294 = vunpack.c.l.b16 %v3246
        %v5295 = vunpack.c.l.b16 %v3247
        %v5296 = vunpack.c.l.b16 %v3248
        %v5297 = vunpack.c.l.b16 %v3249
        %v5298 = vunpack.c.l.b16 %v3250
        %v5299 = vunpack.c.l.b16 %v3251
        %v5300 = vunpack.c.l.b16 %v3252
        %v5301 = vunpack.c.l.b16 %v3253
        %v5302 = vunpack.c.l.b16 %v3254
        %v5303 = vunpack.c.l.b16 %v3255
        %v5304 = vunpack.c.l.b16 %v3256
        %v5305 = vunpack.c.l.b16 %v3257
        %v5306 = vunpack.c.l.b16 %v3258
        %v5307 = vunpack.c.l.b16 %v3259
        %v5308 = vunpack.c.l.b16 %v3260
        %v5309 = vunpack.c.l.b16 %v3261
        %v5310 = vunpack.c.l.b16 %v3262
        %v5311 = vunpack.c.l.b16 %v3263
        %v5312 = vunpack.c.l.b16 %v3264
        %v5313 = vunpack.c.l.b16 %v3265
        %v5314 = vunpack.c.l.b16 %v3266
        %v5315 = vunpack.c.l.b16 %v3267
        %v5316 = vunpack.c.l.b16 %v3268
        %v5317 = vunpack.c.l.b16 %v3269
        %v5318 = vunpack.c.l.b16 %v3270
        %v5319 = vunpack.c.l.b16 %v3271
        %v5320 = vunpack.c.l.b16 %v3272
        %v5321 = vunpack.c.l.b16 %v3273
        %v5322 = vunpack.c.l.b16 %v3274
        %v5323 = vunpack.c.l.b16 %v3275
        %v5324 = vunpack.c.l.b16 %v3276
        %v5325 = vunpack.c.l.b16 %v3277
        %v5326 = vunpack.c.l.b16 %v3278
        %v5327 = vunpack.c.l.b16 %v3279
        %v5328 = vunpack.c.l.b16 %v3280
        %v5329 = vunpack.c.l.b16 %v3281
        %v5330 = vunpack.c.l.b16 %v3282
        %v5331 = vunpack.c.l.b16 %v3283
        %v5332 = vunpack.c.l.b16 %v3284
        %v5333 = vunpack.c.l.b16 %v3285
        %v5334 = vunpack.c.l.b16 %v3286
        %v5335 = vunpack.c.l.b16 %v3287
        %v5336 = vunpack.c.l.b16 %v3288
        %v5337 = vunpack.c.l.b16 %v3289
        %v5338 = vunpack.c.l.b16 %v3290
        %v5339 = vunpack.c.l.b16 %v3291
        %v5340 = vunpack.c.l.b16 %v3292
        %v5341 = vunpack.c.l.b16 %v3293
        %v5342 = vunpack.c.l.b16 %v3294
        %v5343 = vunpack.c.l.b16 %v3295
        %v5344 = vunpack.c.l.b16 %v3296
        %v5345 = vunpack.c.l.b16 %v3297
        %v5346 = vunpack.c.l.b16 %v3298
        %v5347 = vunpack.c.l.b16 %v3299
        %v5348 = vunpack.c.l.b16 %v3300
        %v5349 = vunpack.c.l.b16 %v3301
        %v5350 = vunpack.c.l.b16 %v3302
        %v5351 = vunpack.c.l.b16 %v3303
        %v5352 = vunpack.c.l.b16 %v3304
        %v5353 = vunpack.c.l.b16 %v3305
        %v5354 = vunpack.c.l.b16 %v3306
        %v5355 = vunpack.c.l.b16 %v3307
        %v5356 = vunpack.c.l.b16 %v3308
        %v5357 = vunpack.c.l.b16 %v3309
        %v5358 = vunpack.c.l.b16 %v3310
        %v5359 = vunpack.c.l.b16 %v3311
        %v5360 = vunpack.c.l.b16 %v3312
        %v5361 = vunpack.c.l.b16 %v3313
        %v5362 = vunpack.c.l.b16 %v3314
        %v5363 = vunpack.c.l.b16 %v3315
        %v5364 = vunpack.c.l.b16 %v3316
        %v5365 = vunpack.c.l.b16 %v3317
        %v5366 = vunpack.c.l.b16 %v3318
        %v5367 = vunpack.c.l.b16 %v3319
        %v5368 = vunpack.c.l.b16 %v3320
        %v5369 = vunpack.c.l.b16 %v3321
        %v5370 = vunpack.c.l.b16 %v3322
        %v5371 = vunpack.c.l.b16 %v3323
        %v5372 = vunpack.c.l.b16 %v3324
        %v5373 = vunpack.c.l.b16 %v3325
        %v5374 = vunpack.c.l.b16 %v3326
        %v5375 = vunpack.c.l.b16 %v3327
        %v5376 = vunpack.c.l.b16 %v3328
        %v5377 = vunpack.c.l.b16 %v3329
        %v5378 = vunpack.c.l.b16 %v3330
        %v5379 = vunpack.c.l.b16 %v3331
        %v5380 = vunpack.c.l.b16 %v3332
        %v5381 = vunpack.c.l.b16 %v3333
        %v5382 = vunpack.c.l.b16 %v3334
        %v5383 = vunpack.c.l.b16 %v3335
        %v5384 = vunpack.c.l.b16 %v3336
        %v5385 = vunpack.c.l.b16 %v3337
        %v5386 = vunpack.c.l.b16 %v3338
        %v5387 = vunpack.c.l.b16 %v3339
        %v5388 = vunpack.c.l.b16 %v3340
        %v5389 = vunpack.c.l.b16 %v3341
        %v5390 = vunpack.c.l.b16 %v3342
        %v5391 = vunpack.c.l.b16 %v3343
        %v5392 = vunpack.c.l.b16 %v3344
        %v5393 = vunpack.c.l.b16 %v3345
        %v5394 = vunpack.c.l.b16 %v3346
        %v5395 = vunpack.c.l.b16 %v3347
        %v5396 = vunpack.c.l.b16 %v3348
        %v5397 = vunpack.c.l.b16 %v3349
        %v5398 = vunpack.c.l.b16 %v3350
        %v5399 = vunpack.c.l.b16 %v3351
        %v5400 = vunpack.c.l.b16 %v3352
        %v5401 = vunpack.c.l.b16 %v3353
        %v5402 = vunpack.c.l.b16 %v3354
        %v5403 = vunpack.c.l.b16 %v3355
        %v5404 = vunpack.c.l.b16 %v3356
        %v5405 = vunpack.c.l.b16 %v3357
        %v5406 = vunpack.c.l.b16 %v3358
        %v5407 = vunpack.c.l.b16 %v3359
        %v5408 = vunpack.c.l.b16 %v3360
        %v5409 = vunpack.c.l.b16 %v3361
        %v5410 = vunpack.c.l.b16 %v3362
        %v5411 = vunpack.c.l.b16 %v3363
        %v5412 = vunpack.c.l.b16 %v3364
        %v5413 = vunpack.c.l.b16 %v3365
        %v5414 = vunpack.c.l.b16 %v3366
        %v5415 = vunpack.c.l.b16 %v3367
        %v5416 = vunpack.c.l.b16 %v3368
        %v5417 = vunpack.c.l.b16 %v3369
        %v5418 = vunpack.c.l.b16 %v3370
        %v5419 = vunpack.c.l.b16 %v3371
        %v5420 = vunpack.c.l.b16 %v3372
        %v5421 = vunpack.c.l.b16 %v3373
        %v5422 = vunpack.c.l.b16 %v3374
        %v5423 = vunpack.c.l.b16 %v3375
        %v5424 = vunpack.c.l.b16 %v3376
        %v5425 = vunpack.c.l.b16 %v3377
        %v5426 = vunpack.c.l.b16 %v3378
        %v5427 = vunpack.c.l.b16 %v3379
        %v5428 = vunpack.c.l.b16 %v3380
        %v5429 = vunpack.c.l.b16 %v3381
        %v5430 = vunpack.c.l.b16 %v3382
        %v5431 = vunpack.c.l.b16 %v3383
        %v5432 = vunpack.c.l.b16 %v3384
        %v5433 = vunpack.c.l.b16 %v3385
        %v5434 = vunpack.c.l.b16 %v3386
        %v5435 = vunpack.c.l.b16 %v3387
        %v5436 = vunpack.c.l.b16 %v3388
        %v5437 = vunpack.c.l.b16 %v3389
        %v5438 = vunpack.c.l.b16 %v3390
        %v5439 = vunpack.c.l.b16 %v3391
        %v5440 = vunpack.c.l.b16 %v3392
        %v5441 = vunpack.c.l.b16 %v3393
        %v5442 = vunpack.c.l.b16 %v3394
        %v5443 = vunpack.c.l.b16 %v3395
        %v5444 = vunpack.c.l.b16 %v3396
        %v5445 = vunpack.c.l.b16 %v3397
        %v5446 = vunpack.c.l.b16 %v3398
        %v5447 = vunpack.c.l.b16 %v3399
        %v5448 = vunpack.c.l.b16 %v3400
        %v5449 = vunpack.c.l.b16 %v3401
        %v5450 = vunpack.c.l.b16 %v3402
        %v5451 = vunpack.c.l.b16 %v3403
        %v5452 = vunpack.c.l.b16 %v3404
        %v5453 = vunpack.c.l.b16 %v3405
        %v5454 = vunpack.c.l.b16 %v3406
        %v5455 = vunpack.c.l.b16 %v3407
        %v5456 = vunpack.c.l.b16 %v3408
        %v5457 = vunpack.c.l.b16 %v3409
        %v5458 = vunpack.c.l.b16 %v3410
        %v5459 = vunpack.c.l.b16 %v3411
        %v5460 = vunpack.c.l.b16 %v3412
        %v5461 = vunpack.c.l.b16 %v3413
        %v5462 = vunpack.c.l.b16 %v3414
        %v5463 = vunpack.c.l.b16 %v3415
        %v5464 = vunpack.c.l.b16 %v3416
        %v5465 = vunpack.c.l.b16 %v3417
        %v5466 = vunpack.c.l.b16 %v3418
        %v5467 = vunpack.c.l.b16 %v3419
        %v5468 = vunpack.c.l.b16 %v3420
        %v5469 = vunpack.c.l.b16 %v3421
        %v5470 = vunpack.c.l.b16 %v3422
        %v5471 = vunpack.c.l.b16 %v3423
        %v5472 = vunpack.c.l.b16 %v3424
        %v5473 = vunpack.c.l.b16 %v3425
        %v5474 = vunpack.c.l.b16 %v3426
        %v5475 = vunpack.c.l.b16 %v3427
        %v5476 = vunpack.c.l.b16 %v3428
        %v5477 = vunpack.c.l.b16 %v3429
        %v5478 = vunpack.c.l.b16 %v3430
        %v5479 = vunpack.c.l.b16 %v3431
        %v5480 = vunpack.c.l.b16 %v3432
        %v5481 = vunpack.c.l.b16 %v3433
        %v5482 = vunpack.c.l.b16 %v3434
        %v5483 = vunpack.c.l.b16 %v3435
        %v5484 = vunpack.c.l.b16 %v3436
        %v5485 = vunpack.c.l.b16 %v3437
        %v5486 = vunpack.c.l.b16 %v3438
        %v5487 = vunpack.c.l.b16 %v3439
        %v5488 = vunpack.c.l.b16 %v3440
        %v5489 = vunpack.c.l.b16 %v3441
        %v5490 = vunpack.c.l.b16 %v3442
        %v5491 = vunpack.c.l.b16 %v3443
        %v5492 = vunpack.c.l.b16 %v3444
        %v5493 = vunpack.c.l.b16 %v3445
        %v5494 = vunpack.c.l.b16 %v3446
        %v5495 = vunpack.c.l.b16 %v3447
        %v5496 = vunpack.c.l.b16 %v3448
        %v5497 = vunpack.c.l.b16 %v3449
        %v5498 = vunpack.c.l.b16 %v3450
        %v5499 = vunpack.c.l.b16 %v3451
        %v5500 = vunpack.c.l.b16 %v3452
        %v5501 = vunpack.c.l.b16 %v3453
        %v5502 = vunpack.c.l.b16 %v3454
        %v5503 = vunpack.c.l.b16 %v3455
        %v5504 = vunpack.c.l.b16 %v3456
        %v5505 = vunpack.c.l.b16 %v3457
        %v5506 = vunpack.c.l.b16 %v3458
        %v5507 = vunpack.c.l.b16 %v3459
        %v5508 = vunpack.c.l.b16 %v3460
        %v5509 = vunpack.c.l.b16 %v3461
        %v5510 = vunpack.c.l.b16 %v3462
        %v5511 = vunpack.c.l.b16 %v3463
        %v5512 = vunpack.c.l.b16 %v3464
        %v5513 = vunpack.c.l.b16 %v3465
        %v5514 = vunpack.c.l.b16 %v3466
        %v5515 = vunpack.c.l.b16 %v3467
        %v5516 = vunpack.c.l.b16 %v3468
        %v5517 = vunpack.c.l.b16 %v3469
        %v5518 = vunpack.c.l.b16 %v3470
        %v5519 = vunpack.c.l.b16 %v3471
        %v5520 = vunpack.c.l.b16 %v3472
        %v5521 = vunpack.c.l.b16 %v3473
        %v5522 = vunpack.c.l.b16 %v3474
        %v5523 = vunpack.c.l.b16 %v3475
        %v5524 = vunpack.c.l.b16 %v3476
        %v5525 = vunpack.c.l.b16 %v3477
        %v5526 = vunpack.c.l.b16 %v3478
        %v5527 = vunpack.c.l.b16 %v3479
        %v5528 = vunpack.c.l.b16 %v3480
        %v5529 = vunpack.c.l.b16 %v3481
        %v5530 = vunpack.c.l.b16 %v3482
        %v5531 = vunpack.c.l.b16 %v3483
        %v5532 = vunpack.c.l.b16 %v3484
        %v5533 = vunpack.c.l.b16 %v3485
        %v5534 = vunpack.c.l.b16 %v3486
        %v5535 = vunpack.c.l.b16 %v3487
        %v5536 = vunpack.c.l.b16 %v3488
        %v5537 = vunpack.c.l.b16 %v3489
        %v5538 = vunpack.c.l.b16 %v3490
        %v5539 = vunpack.c.l.b16 %v3491
        %v5540 = vunpack.c.l.b16 %v3492
        %v5541 = vunpack.c.l.b16 %v3493
        %v5542 = vunpack.c.l.b16 %v3494
        %v5543 = vunpack.c.l.b16 %v3495
        %v5544 = vunpack.c.l.b16 %v3496
        %v5545 = vunpack.c.l.b16 %v3497
        %v5546 = vunpack.c.l.b16 %v3498
        %v5547 = vunpack.c.l.b16 %v3499
        %v5548 = vunpack.c.l.b16 %v3500
        %v5549 = vunpack.c.l.b16 %v3501
        %v5550 = vunpack.c.l.b16 %v3502
        %v5551 = vunpack.c.l.b16 %v3503
        %v5552 = vunpack.c.l.b16 %v3504
        %v5553 = vunpack.c.l.b16 %v3505
        %v5554 = vunpack.c.l.b16 %v3506
        %v5555 = vunpack.c.l.b16 %v3507
        %v5556 = vunpack.c.l.b16 %v3508
        %v5557 = vunpack.c.l.b16 %v3509
        %v5558 = vunpack.c.l.b16 %v3510
        %v5559 = vunpack.c.l.b16 %v3511
        %v5560 = vunpack.c.l.b16 %v3512
        %v5561 = vunpack.c.l.b16 %v3513
        %v5562 = vunpack.c.l.b16 %v3514
        %v5563 = vunpack.c.l.b16 %v3515
        %v5564 = vunpack.c.l.b16 %v3516
        %v5565 = vunpack.c.l.b16 %v3517
        %v5566 = vunpack.c.l.b16 %v3518
        %v5567 = vunpack.c.l.b16 %v3519
        %v5568 = vunpack.c.l.b16 %v3520
        %v5569 = vunpack.c.l.b16 %v3521
        %v5570 = vunpack.c.l.b16 %v3522
        %v5571 = vunpack.c.l.b16 %v3523
        %v5572 = vunpack.c.l.b16 %v3524
        %v5573 = vunpack.c.l.b16 %v3525
        %v5574 = vunpack.c.l.b16 %v3526
        %v5575 = vunpack.c.l.b16 %v3527
        %v5576 = vunpack.c.l.b16 %v3528
        %v5577 = vunpack.c.l.b16 %v3529
        %v5578 = vunpack.c.l.b16 %v3530
        %v5579 = vunpack.c.l.b16 %v3531
        %v5580 = vunpack.c.l.b16 %v3532
        %v5581 = vunpack.c.l.b16 %v3533
        %v5582 = vunpack.c.l.b16 %v3534
        %v5583 = vunpack.c.l.b16 %v3535
        %v5584 = vunpack.c.l.b16 %v3536
        %v5585 = vunpack.c.l.b16 %v3537
        %v5586 = vunpack.c.l.b16 %v3538
        %v5587 = vunpack.c.l.b16 %v3539
        %v5588 = vunpack.c.l.b16 %v3540
        %v5589 = vunpack.c.l.b16 %v3541
        %v5590 = vunpack.c.l.b16 %v3542
        %v5591 = vunpack.c.l.b16 %v3543
        %v5592 = vunpack.c.l.b16 %v3544
        %v5593 = vunpack.c.l.b16 %v3545
        %v5594 = vunpack.c.l.b16 %v3546
        %v5595 = vunpack.c.l.b16 %v3547
        %v5596 = vunpack.c.l.b16 %v3548
        %v5597 = vunpack.c.l.b16 %v3549
        %v5598 = vunpack.c.l.b16 %v3550
        %v5599 = vunpack.c.l.b16 %v3551
        %v5600 = vunpack.c.l.b16 %v3552
        %v5601 = vunpack.c.l.b16 %v3553
        %v5602 = vunpack.c.l.b16 %v3554
        %v5603 = vunpack.c.l.b16 %v3555
        %v5604 = vunpack.c.l.b16 %v3556
        %v5605 = vunpack.c.l.b16 %v3557
        %v5606 = vunpack.c.l.b16 %v3558
        %v5607 = vunpack.c.l.b16 %v3559
        %v5608 = vunpack.c.l.b16 %v3560
        %v5609 = vunpack.c.l.b16 %v3561
        %v5610 = vunpack.c.l.b16 %v3562
        %v5611 = vunpack.c.l.b16 %v3563
        %v5612 = vunpack.c.l.b16 %v3564
        %v5613 = vunpack.c.l.b16 %v3565
        %v5614 = vunpack.c.l.b16 %v3566
        %v5615 = vunpack.c.l.b16 %v3567
        %v5616 = vunpack.c.l.b16 %v3568
        %v5617 = vunpack.c.l.b16 %v3569
        %v5618 = vunpack.c.l.b16 %v3570
        %v5619 = vunpack.c.l.b16 %v3571
        %v5620 = vunpack.c.l.b16 %v3572
        %v5621 = vunpack.c.l.b16 %v3573
        %v5622 = vunpack.c.l.b16 %v3574
        %v5623 = vunpack.c.l.b16 %v3575
        %v5624 = vunpack.c.l.b16 %v3576
        %v5625 = vunpack.c.l.b16 %v3577
        %v5626 = vunpack.c.l.b16 %v3578
        %v5627 = vunpack.c.l.b16 %v3579
        %v5628 = vunpack.c.l.b16 %v3580
        %v5629 = vunpack.c.l.b16 %v3581
        %v5630 = vunpack.c.l.b16 %v3582
        %v5631 = vunpack.c.l.b16 %v3583
        %v5632 = vunpack.c.l.b16 %v3584
        %v5633 = vunpack.c.l.b16 %v3585
        %v5634 = vunpack.c.l.b16 %v3586
        %v5635 = vunpack.c.l.b16 %v3587
        %v5636 = vunpack.c.l.b16 %v3588
        %v5637 = vunpack.c.l.b16 %v3589
        %v5638 = vunpack.c.l.b16 %v3590
        %v5639 = vunpack.c.l.b16 %v3591
        %v5640 = vunpack.c.l.b16 %v3592
        %v5641 = vunpack.c.l.b16 %v3593
        %v5642 = vunpack.c.l.b16 %v3594
        %v5643 = vunpack.c.l.b16 %v3595
        %v5644 = vunpack.c.l.b16 %v3596
        %v5645 = vunpack.c.l.b16 %v3597
        %v5646 = vunpack.c.l.b16 %v3598
        %v5647 = vunpack.c.l.b16 %v3599
        %v5648 = vunpack.c.l.b16 %v3600
        %v5649 = vunpack.c.l.b16 %v3601
        %v5650 = vunpack.c.l.b16 %v3602
        %v5651 = vunpack.c.l.b16 %v3603
        %v5652 = vunpack.c.l.b16 %v3604
        %v5653 = vunpack.c.l.b16 %v3605
        %v5654 = vunpack.c.l.b16 %v3606
        %v5655 = vunpack.c.l.b16 %v3607
        %v5656 = vunpack.c.l.b16 %v3608
        %v5657 = vunpack.c.l.b16 %v3609
        %v5658 = vunpack.c.l.b16 %v3610
        %v5659 = vunpack.c.l.b16 %v3611
        %v5660 = vunpack.c.l.b16 %v3612
        %v5661 = vunpack.c.l.b16 %v3613
        %v5662 = vunpack.c.l.b16 %v3614
        %v5663 = vunpack.c.l.b16 %v3615
        %v5664 = vunpack.c.l.b16 %v3616
        %v5665 = vunpack.c.l.b16 %v3617
        %v5666 = vunpack.c.l.b16 %v3618
        %v5667 = vunpack.c.l.b16 %v3619
        %v5668 = vunpack.c.l.b16 %v3620
        %v5669 = vunpack.c.l.b16 %v3621
        %v5670 = vunpack.c.l.b16 %v3622
        %v5671 = vunpack.c.l.b16 %v3623
        %v5672 = vunpack.c.l.b16 %v3624
        %v5673 = vunpack.c.l.b16 %v3625
        %v5674 = vunpack.c.l.b16 %v3626
        %v5675 = vunpack.c.l.b16 %v3627
        %v5676 = vunpack.c.l.b16 %v3628
        %v5677 = vunpack.c.l.b16 %v3629
        %v5678 = vunpack.c.l.b16 %v3630
        %v5679 = vunpack.c.l.b16 %v3631
        %v5680 = vunpack.c.l.b16 %v3632
        %v5681 = vunpack.c.l.b16 %v3633
        %v5682 = vunpack.c.l.b16 %v3634
        %v5683 = vunpack.c.l.b16 %v3635
        %v5684 = vunpack.c.l.b16 %v3636
        %v5685 = vunpack.c.l.b16 %v3637
        %v5686 = vunpack.c.l.b16 %v3638
        %v5687 = vunpack.c.l.b16 %v3639
        %v5688 = vunpack.c.l.b16 %v3640
        %v5689 = vunpack.c.l.b16 %v3641
        %v5690 = vunpack.c.l.b16 %v3642
        %v5691 = vunpack.c.l.b16 %v3643
        %v5692 = vunpack.c.l.b16 %v3644
        %v5693 = vunpack.c.l.b16 %v3645
        %v5694 = vunpack.c.l.b16 %v3646
        %v5695 = vunpack.c.l.b16 %v3647
        %v5696 = vunpack.c.l.b16 %v3648
        %v5697 = vunpack.c.l.b16 %v3649
        %v5698 = vunpack.c.l.b16 %v3650
        %v5699 = vunpack.c.l.b16 %v3651
        %v5700 = vunpack.c.l.b16 %v3652
        %v5701 = vunpack.c.l.b16 %v3653
        %v5702 = vunpack.c.l.b16 %v3654
        %v5703 = vunpack.c.l.b16 %v3655
        %v5704 = vunpack.c.l.b16 %v3656
        %v5705 = vunpack.c.l.b16 %v3657
        %v5706 = vunpack.c.l.b16 %v3658
        %v5707 = vunpack.c.l.b16 %v3659
        %v5708 = vunpack.c.l.b16 %v3660
        %v5709 = vunpack.c.l.b16 %v3661
        %v5710 = vunpack.c.l.b16 %v3662
        %v5711 = vunpack.c.l.b16 %v3663
        %v5712 = vunpack.c.l.b16 %v3664
        %v5713 = vunpack.c.l.b16 %v3665
        %v5714 = vunpack.c.l.b16 %v3666
        %v5715 = vunpack.c.l.b16 %v3667
        %v5716 = vunpack.c.l.b16 %v3668
        %v5717 = vunpack.c.l.b16 %v3669
        %v5718 = vunpack.c.l.b16 %v3670
        %v5719 = vunpack.c.l.b16 %v3671
        %v5720 = vunpack.c.l.b16 %v3672
        %v5721 = vunpack.c.l.b16 %v3673
        %v5722 = vunpack.c.l.b16 %v3674
        %v5723 = vunpack.c.l.b16 %v3675
        %v5724 = vunpack.c.l.b16 %v3676
        %v5725 = vunpack.c.l.b16 %v3677
        %v5726 = vunpack.c.l.b16 %v3678
        %v5727 = vunpack.c.l.b16 %v3679
        %v5728 = vunpack.c.l.b16 %v3680
        %v5729 = vunpack.c.l.b16 %v3681
        %v5730 = vunpack.c.l.b16 %v3682
        %v5731 = vunpack.c.l.b16 %v3683
        %v5732 = vunpack.c.l.b16 %v3684
        %v5733 = vunpack.c.l.b16 %v3685
        %v5734 = vunpack.c.l.b16 %v3686
        %v5735 = vunpack.c.l.b16 %v3687
        %v5736 = vunpack.c.l.b16 %v3688
        %v5737 = vunpack.c.l.b16 %v3689
        %v5738 = vunpack.c.l.b16 %v3690
        %v5739 = vunpack.c.l.b16 %v3691
        %v5740 = vunpack.c.l.b16 %v3692
        %v5741 = vunpack.c.l.b16 %v3693
        %v5742 = vunpack.c.l.b16 %v3694
        %v5743 = vunpack.c.l.b16 %v3695
        %v5744 = vunpack.c.l.b16 %v3696
        %v5745 = vunpack.c.l.b16 %v3697
        %v5746 = vunpack.c.l.b16 %v3698
        %v5747 = vunpack.c.l.b16 %v3699
        %v5748 = vunpack.c.l.b16 %v3700
        %v5749 = vunpack.c.l.b16 %v3701
        %v5750 = vunpack.c.l.b16 %v3702
        %v5751 = vunpack.c.l.b16 %v3703
        %v5752 = vunpack.c.l.b16 %v3704
        %v5753 = vunpack.c.l.b16 %v3705
        %v5754 = vunpack.c.l.b16 %v3706
        %v5755 = vunpack.c.l.b16 %v3707
        %v5756 = vunpack.c.l.b16 %v3708
        %v5757 = vunpack.c.l.b16 %v3709
        %v5758 = vunpack.c.l.b16 %v3710
        %v5759 = vunpack.c.l.b16 %v3711
        %v5760 = vunpack.c.l.b16 %v3712
        %v5761 = vunpack.c.l.b16 %v3713
        %v5762 = vunpack.c.l.b16 %v3714
        %v5763 = vunpack.c.l.b16 %v3715
        %v5764 = vunpack.c.l.b16 %v3716
        %v5765 = vunpack.c.l.b16 %v3717
        %v5766 = vunpack.c.l.b16 %v3718
        %v5767 = vunpack.c.l.b16 %v3719
        %v5768 = vunpack.c.l.b16 %v3720
        %v5769 = vunpack.c.l.b16 %v3721
        %v5770 = vunpack.c.l.b16 %v3722
        %v5771 = vunpack.c.l.b16 %v3723
        %v5772 = vunpack.c.l.b16 %v3724
        %v5773 = vunpack.c.l.b16 %v3725
        %v5774 = vunpack.c.l.b16 %v3726
        %v5775 = vunpack.c.l.b16 %v3727
        %v5776 = vunpack.c.l.b16 %v3728
        %v5777 = vunpack.c.l.b16 %v3729
        %v5778 = vunpack.c.l.b16 %v3730
        %v5779 = vunpack.c.l.b16 %v3731
        %v5780 = vunpack.c.l.b16 %v3732
        %v5781 = vunpack.c.l.b16 %v3733
        %v5782 = vunpack.c.l.b16 %v3734
        %v5783 = vunpack.c.l.b16 %v3735
        %v5784 = vunpack.c.l.b16 %v3736
        %v5785 = vunpack.c.l.b16 %v3737
        %v5786 = vunpack.c.l.b16 %v3738
        %v5787 = vunpack.c.l.b16 %v3739
        %v5788 = vunpack.c.l.b16 %v3740
        %v5789 = vunpack.c.l.b16 %v3741
        %v5790 = vunpack.c.l.b16 %v3742
        %v5791 = vunpack.c.l.b16 %v3743
        %v5792 = vunpack.c.l.b16 %v3744
        %v5793 = vunpack.c.l.b16 %v3745
        %v5794 = vunpack.c.l.b16 %v3746
        %v5795 = vunpack.c.l.b16 %v3747
        %v5796 = vunpack.c.l.b16 %v3748
        %v5797 = vunpack.c.l.b16 %v3749
        %v5798 = vunpack.c.l.b16 %v3750
        %v5799 = vunpack.c.l.b16 %v3751
        %v5800 = vunpack.c.l.b16 %v3752
        %v5801 = vunpack.c.l.b16 %v3753
        %v5802 = vunpack.c.l.b16 %v3754
        %v5803 = vunpack.c.l.b16 %v3755
        %v5804 = vunpack.c.l.b16 %v3756
        %v5805 = vunpack.c.l.b16 %v3757
        %v5806 = vunpack.c.l.b16 %v3758
        %v5807 = vunpack.c.l.b16 %v3759
        %v5808 = vunpack.c.l.b16 %v3760
        %v5809 = vunpack.c.l.b16 %v3761
        %v5810 = vunpack.c.l.b16 %v3762
        %v5811 = vunpack.c.l.b16 %v3763
        %v5812 = vunpack.c.l.b16 %v3764
        %v5813 = vunpack.c.l.b16 %v3765
        %v5814 = vunpack.c.l.b16 %v3766
        %v5815 = vunpack.c.l.b16 %v3767
        %v5816 = vunpack.c.l.b16 %v3768
        %v5817 = vunpack.c.l.b16 %v3769
        %v5818 = vunpack.c.l.b16 %v3770
        %v5819 = vunpack.c.l.b16 %v3771
        %v5820 = vunpack.c.l.b16 %v3772
        %v5821 = vunpack.c.l.b16 %v3773
        %v5822 = vunpack.c.l.b16 %v3774
        %v5823 = vunpack.c.l.b16 %v3775
        %v5824 = vunpack.c.l.b16 %v3776
        %v5825 = vunpack.c.l.b16 %v3777
        %v5826 = vunpack.c.l.b16 %v3778
        %v5827 = vunpack.c.l.b16 %v3779
        %v5828 = vunpack.c.l.b16 %v3780
        %v5829 = vunpack.c.l.b16 %v3781
        %v5830 = vunpack.c.l.b16 %v3782
        %v5831 = vunpack.c.l.b16 %v3783
        %v5832 = vunpack.c.l.b16 %v3784
        %v5833 = vunpack.c.l.b16 %v3785
        %v5834 = vunpack.c.l.b16 %v3786
        %v5835 = vunpack.c.l.b16 %v3787
        %v5836 = vunpack.c.l.b16 %v3788
        %v5837 = vunpack.c.l.b16 %v3789
        %v5838 = vunpack.c.l.b16 %v3790
        %v5839 = vunpack.c.l.b16 %v3791
        %v5840 = vunpack.c.l.b16 %v3792
        %v5841 = vunpack.c.l.b16 %v3793
        %v5842 = vunpack.c.l.b16 %v3794
        %v5843 = vunpack.c.l.b16 %v3795
        %v5844 = vunpack.c.l.b16 %v3796
        %v5845 = vunpack.c.l.b16 %v3797
        %v5846 = vunpack.c.l.b16 %v3798
        %v5847 = vunpack.c.l.b16 %v3799
        %v5848 = vunpack.c.l.b16 %v3800
        %v5849 = vunpack.c.l.b16 %v3801
        %v5850 = vunpack.c.l.b16 %v3802
        %v5851 = vunpack.c.l.b16 %v3803
        %v5852 = vunpack.c.l.b16 %v3804
        %v5853 = vunpack.c.l.b16 %v3805
        %v5854 = vunpack.c.l.b16 %v3806
        %v5855 = vunpack.c.l.b16 %v3807
        %v5856 = vunpack.c.l.b16 %v3808
        %v5857 = vunpack.c.l.b16 %v3809
        %v5858 = vunpack.c.l.b16 %v3810
        %v5859 = vunpack.c.l.b16 %v3811
        %v5860 = vunpack.c.l.b16 %v3812
        %v5861 = vunpack.c.l.b16 %v3813
        %v5862 = vunpack.c.l.b16 %v3814
        %v5863 = vunpack.c.l.b16 %v3815
        %v5864 = vunpack.c.l.b16 %v3816
        %v5865 = vunpack.c.l.b16 %v3817
        %v5866 = vunpack.c.l.b16 %v3818
        %v5867 = vunpack.c.l.b16 %v3819
        %v5868 = vunpack.c.l.b16 %v3820
        %v5869 = vunpack.c.l.b16 %v3821
        %v5870 = vunpack.c.l.b16 %v3822
        %v5871 = vunpack.c.l.b16 %v3823
        %v5872 = vunpack.c.l.b16 %v3824
        %v5873 = vunpack.c.l.b16 %v3825
        %v5874 = vunpack.c.l.b16 %v3826
        %v5875 = vunpack.c.l.b16 %v3827
        %v5876 = vunpack.c.l.b16 %v3828
        %v5877 = vunpack.c.l.b16 %v3829
        %v5878 = vunpack.c.l.b16 %v3830
        %v5879 = vunpack.c.l.b16 %v3831
        %v5880 = vunpack.c.l.b16 %v3832
        %v5881 = vunpack.c.l.b16 %v3833
        %v5882 = vunpack.c.l.b16 %v3834
        %v5883 = vunpack.c.l.b16 %v3835
        %v5884 = vunpack.c.l.b16 %v3836
        %v5885 = vunpack.c.l.b16 %v3837
        %v5886 = vunpack.c.l.b16 %v3838
        %v5887 = vunpack.c.l.b16 %v3839
        %v5888 = vunpack.c.l.b16 %v3840
        %v5889 = vunpack.c.l.b16 %v3841
        %v5890 = vunpack.c.l.b16 %v3842
        %v5891 = vunpack.c.l.b16 %v3843
        %v5892 = vunpack.c.l.b16 %v3844
        %v5893 = vunpack.c.l.b16 %v3845
        %v5894 = vunpack.c.l.b16 %v3846
        %v5895 = vunpack.c.l.b16 %v3847
        %v5896 = vunpack.c.l.b16 %v3848
        %v5897 = vunpack.c.l.b16 %v3849
        %v5898 = vunpack.c.l.b16 %v3850
        %v5899 = vunpack.c.l.b16 %v3851
        %v5900 = vunpack.c.l.b16 %v3852
        %v5901 = vunpack.c.l.b16 %v3853
        %v5902 = vunpack.c.l.b16 %v3854
        %v5903 = vunpack.c.l.b16 %v3855
        %v5904 = vunpack.c.l.b16 %v3856
        %v5905 = vunpack.c.l.b16 %v3857
        %v5906 = vunpack.c.l.b16 %v3858
        %v5907 = vunpack.c.l.b16 %v3859
        %v5908 = vunpack.c.l.b16 %v3860
        %v5909 = vunpack.c.l.b16 %v3861
        %v5910 = vunpack.c.l.b16 %v3862
        %v5911 = vunpack.c.l.b16 %v3863
        %v5912 = vunpack.c.l.b16 %v3864
        %v5913 = vunpack.c.l.b16 %v3865
        %v5914 = vunpack.c.l.b16 %v3866
        %v5915 = vunpack.c.l.b16 %v3867
        %v5916 = vunpack.c.l.b16 %v3868
        %v5917 = vunpack.c.l.b16 %v3869
        %v5918 = vunpack.c.l.b16 %v3870
        %v5919 = vunpack.c.l.b16 %v3871
        %v5920 = vunpack.c.l.b16 %v3872
        %v5921 = vunpack.c.l.b16 %v3873
        %v5922 = vunpack.c.l.b16 %v3874
        %v5923 = vunpack.c.l.b16 %v3875
        %v5924 = vunpack.c.l.b16 %v3876
        %v5925 = vunpack.c.l.b16 %v3877
        %v5926 = vunpack.c.l.b16 %v3878
        %v5927 = vunpack.c.l.b16 %v3879
        %v5928 = vunpack.c.l.b16 %v3880
        %v5929 = vunpack.c.l.b16 %v3881
        %v5930 = vunpack.c.l.b16 %v3882
        %v5931 = vunpack.c.l.b16 %v3883
        %v5932 = vunpack.c.l.b16 %v3884
        %v5933 = vunpack.c.l.b16 %v3885
        %v5934 = vunpack.c.l.b16 %v3886
        %v5935 = vunpack.c.l.b16 %v3887
        %v5936 = vunpack.c.l.b16 %v3888
        %v5937 = vunpack.c.l.b16 %v3889
        %v5938 = vunpack.c.l.b16 %v3890
        %v5939 = vunpack.c.l.b16 %v3891
        %v5940 = vunpack.c.l.b16 %v3892
        %v5941 = vunpack.c.l.b16 %v3893
        %v5942 = vunpack.c.l.b16 %v3894
        %v5943 = vunpack.c.l.b16 %v3895
        %v5944 = vunpack.c.l.b16 %v3896
        %v5945 = vunpack.c.l.b16 %v3897
        %v5946 = vunpack.c.l.b16 %v3898
        %v5947 = vunpack.c.l.b16 %v3899
        %v5948 = vunpack.c.l.b16 %v3900
        %v5949 = vunpack.c.l.b16 %v3901
        %v5950 = vunpack.c.l.b16 %v3902
        %v5951 = vunpack.c.l.b16 %v3903
        %v5952 = vunpack.c.l.b16 %v3904
        %v5953 = vunpack.c.l.b16 %v3905
        %v5954 = vunpack.c.l.b16 %v3906
        %v5955 = vunpack.c.l.b16 %v3907
        %v5956 = vunpack.c.l.b16 %v3908
        %v5957 = vunpack.c.l.b16 %v3909
        %v5958 = vunpack.c.l.b16 %v3910
        %v5959 = vunpack.c.l.b16 %v3911
        %v5960 = vunpack.c.l.b16 %v3912
        %v5961 = vunpack.c.l.b16 %v3913
        %v5962 = vunpack.c.l.b16 %v3914
        %v5963 = vunpack.c.l.b16 %v3915
        %v5964 = vunpack.c.l.b16 %v3916
        %v5965 = vunpack.c.l.b16 %v3917
        %v5966 = vunpack.c.l.b16 %v3918
        %v5967 = vunpack.c.l.b16 %v3919
        %v5968 = vunpack.c.l.b16 %v3920
        %v5969 = vunpack.c.l.b16 %v3921
        %v5970 = vunpack.c.l.b16 %v3922
        %v5971 = vunpack.c.l.b16 %v3923
        %v5972 = vunpack.c.l.b16 %v3924
        %v5973 = vunpack.c.l.b16 %v3925
        %v5974 = vunpack.c.l.b16 %v3926
        %v5975 = vunpack.c.l.b16 %v3927
        %v5976 = vunpack.c.l.b16 %v3928
        %v5977 = vunpack.c.l.b16 %v3929
        %v5978 = vunpack.c.l.b16 %v3930
        %v5979 = vunpack.c.l.b16 %v3931
        %v5980 = vunpack.c.l.b16 %v3932
        %v5981 = vunpack.c.l.b16 %v3933
        %v5982 = vunpack.c.l.b16 %v3934
        %v5983 = vunpack.c.l.b16 %v3935
        %v5984 = vunpack.c.l.b16 %v3936
        %v5985 = vunpack.c.l.b16 %v3937
        %v5986 = vunpack.c.l.b16 %v3938
        %v5987 = vunpack.c.l.b16 %v3939
        %v5988 = vunpack.c.l.b16 %v3940
        %v5989 = vunpack.c.l.b16 %v3941
        %v5990 = vunpack.c.l.b16 %v3942
        %v5991 = vunpack.c.l.b16 %v3943
        %v5992 = vunpack.c.l.b16 %v3944
        %v5993 = vunpack.c.l.b16 %v3945
        %v5994 = vunpack.c.l.b16 %v3946
        %v5995 = vunpack.c.l.b16 %v3947
        %v5996 = vunpack.c.l.b16 %v3948
        %v5997 = vunpack.c.l.b16 %v3949
        %v5998 = vunpack.c.l.b16 %v3950
        %v5999 = vunpack.c.l.b16 %v3951
        %v6000 = vunpack.c.l.b16 %v3952
        %v6001 = vunpack.c.l.b16 %v3953
        %v6002 = vunpack.c.l.b16 %v3954
        %v6003 = vunpack.c.l.b16 %v3955
        %v6004 = vunpack.c.l.b16 %v3956
        %v6005 = vunpack.c.l.b16 %v3957
        %v6006 = vunpack.c.l.b16 %v3958
        %v6007 = vunpack.c.l.b16 %v3959
        %v6008 = vunpack.c.l.b16 %v3960
        %v6009 = vunpack.c.l.b16 %v3961
        %v6010 = vunpack.c.l.b16 %v3962
        %v6011 = vunpack.c.l.b16 %v3963
        %v6012 = vunpack.c.l.b16 %v3964
        %v6013 = vunpack.c.l.b16 %v3965
        %v6014 = vunpack.c.l.b16 %v3966
        %v6015 = vunpack.c.l.b16 %v3967
        %v6016 = vunpack.c.l.b16 %v3968
        %v6017 = vunpack.c.l.b16 %v3969
        %v6018 = vunpack.c.l.b16 %v3970
        %v6019 = vunpack.c.l.b16 %v3971
        %v6020 = vunpack.c.l.b16 %v3972
        %v6021 = vunpack.c.l.b16 %v3973
        %v6022 = vunpack.c.l.b16 %v3974
        %v6023 = vunpack.c.l.b16 %v3975
        %v6024 = vunpack.c.l.b16 %v3976
        %v6025 = vunpack.c.l.b16 %v3977
        %v6026 = vunpack.c.l.b16 %v3978
        %v6027 = vunpack.c.l.b16 %v3979
        %v6028 = vunpack.c.l.b16 %v3980
        %v6029 = vunpack.c.l.b16 %v3981
        %v6030 = vunpack.c.l.b16 %v3982
        %v6031 = vunpack.c.l.b16 %v3983
        %v6032 = vunpack.c.l.b16 %v3984
        %v6033 = vunpack.c.l.b16 %v3985
        %v6034 = vunpack.c.l.b16 %v3986
        %v6035 = vunpack.c.l.b16 %v3987
        %v6036 = vunpack.c.l.b16 %v3988
        %v6037 = vunpack.c.l.b16 %v3989
        %v6038 = vunpack.c.l.b16 %v3990
        %v6039 = vunpack.c.l.b16 %v3991
        %v6040 = vunpack.c.l.b16 %v3992
        %v6041 = vunpack.c.l.b16 %v3993
        %v6042 = vunpack.c.l.b16 %v3994
        %v6043 = vunpack.c.l.b16 %v3995
        %v6044 = vunpack.c.l.b16 %v3996
        %v6045 = vunpack.c.l.b16 %v3997
        %v6046 = vunpack.c.l.b16 %v3998
        %v6047 = vunpack.c.l.b16 %v3999
        %v6048 = vunpack.c.l.b16 %v4000
        %v6049 = vunpack.c.l.b16 %v4001
        %v6050 = vunpack.c.l.b16 %v4002
        %v6051 = vunpack.c.l.b16 %v4003
        %v6052 = vunpack.c.l.b16 %v4004
        %v6053 = vunpack.c.l.b16 %v4005
        %v6054 = vunpack.c.l.b16 %v4006
        %v6055 = vunpack.c.l.b16 %v4007
        %v6056 = vunpack.c.l.b16 %v4008
        %v6057 = vunpack.c.l.b16 %v4009
        %v6058 = vunpack.c.l.b16 %v4010
        %v6059 = vunpack.c.l.b16 %v4011
        %v6060 = vunpack.c.l.b16 %v4012
        %v6061 = vunpack.c.l.b16 %v4013
        %v6062 = vunpack.c.l.b16 %v4014
        %v6063 = vunpack.c.l.b16 %v4015
        %v6064 = vpack.c.b16 %v5041, %v5040
        %v6065 = vpack.c.b16 %v5043, %v5042
        %v6066 = vpack.c.b16 %v5045, %v5044
        %v6067 = vpack.c.b16 %v5047, %v5046
        %v6068 = vpack.c.b16 %v5049, %v5048
        %v6069 = vpack.c.b16 %v5051, %v5050
        %v6070 = vpack.c.b16 %v5053, %v5052
        %v6071 = vpack.c.b16 %v5055, %v5054
        %v6072 = vpack.c.b16 %v5057, %v5056
        %v6073 = vpack.c.b16 %v5059, %v5058
        %v6074 = vpack.c.b16 %v5061, %v5060
        %v6075 = vpack.c.b16 %v5063, %v5062
        %v6076 = vpack.c.b16 %v5065, %v5064
        %v6077 = vpack.c.b16 %v5067, %v5066
        %v6078 = vpack.c.b16 %v5069, %v5068
        %v6079 = vpack.c.b16 %v5071, %v5070
        %v6080 = vpack.c.b16 %v5073, %v5072
        %v6081 = vpack.c.b16 %v5075, %v5074
        %v6082 = vpack.c.b16 %v5077, %v5076
        %v6083 = vpack.c.b16 %v5079, %v5078
        %v6084 = vpack.c.b16 %v5081, %v5080
        %v6085 = vpack.c.b16 %v5083, %v5082
        %v6086 = vpack.c.b16 %v5085, %v5084
        %v6087 = vpack.c.b16 %v5087, %v5086
        %v6088 = vpack.c.b16 %v5089, %v5088
        %v6089 = vpack.c.b16 %v5091, %v5090
        %v6090 = vpack.c.b16 %v5093, %v5092
        %v6091 = vpack.c.b16 %v5095, %v5094
        %v6092 = vpack.c.b16 %v5097, %v5096
        %v6093 = vpack.c.b16 %v5099, %v5098
        %v6094 = vpack.c.b16 %v5101, %v5100
        %v6095 = vpack.c.b16 %v5103, %v5102
        %v6096 = vpack.c.b16 %v5105, %v5104
        %v6097 = vpack.c.b16 %v5107, %v5106
        %v6098 = vpack.c.b16 %v5109, %v5108
        %v6099 = vpack.c.b16 %v5111, %v5110
        %v6100 = vpack.c.b16 %v5113, %v5112
        %v6101 = vpack.c.b16 %v5115, %v5114
        %v6102 = vpack.c.b16 %v5117, %v5116
        %v6103 = vpack.c.b16 %v5119, %v5118
        %v6104 = vpack.c.b16 %v5121, %v5120
        %v6105 = vpack.c.b16 %v5123, %v5122
        %v6106 = vpack.c.b16 %v5125, %v5124
        %v6107 = vpack.c.b16 %v5127, %v5126
        %v6108 = vpack.c.b16 %v5129, %v5128
        %v6109 = vpack.c.b16 %v5131, %v5130
        %v6110 = vpack.c.b16 %v5133, %v5132
        %v6111 = vpack.c.b16 %v5135, %v5134
        %v6112 = vpack.c.b16 %v5137, %v5136
        %v6113 = vpack.c.b16 %v5139, %v5138
        %v6114 = vpack.c.b16 %v5141, %v5140
        %v6115 = vpack.c.b16 %v5143, %v5142
        %v6116 = vpack.c.b16 %v5145, %v5144
        %v6117 = vpack.c.b16 %v5147, %v5146
        %v6118 = vpack.c.b16 %v5149, %v5148
        %v6119 = vpack.c.b16 %v5151, %v5150
        %v6120 = vpack.c.b16 %v5153, %v5152
        %v6121 = vpack.c.b16 %v5155, %v5154
        %v6122 = vpack.c.b16 %v5157, %v5156
        %v6123 = vpack.c.b16 %v5159, %v5158
        %v6124 = vpack.c.b16 %v5161, %v5160
        %v6125 = vpack.c.b16 %v5163, %v5162
        %v6126 = vpack.c.b16 %v5165, %v5164
        %v6127 = vpack.c.b16 %v5167, %v5166
        %v6128 = vpack.c.b16 %v5169, %v5168
        %v6129 = vpack.c.b16 %v5171, %v5170
        %v6130 = vpack.c.b16 %v5173, %v5172
        %v6131 = vpack.c.b16 %v5175, %v5174
        %v6132 = vpack.c.b16 %v5177, %v5176
        %v6133 = vpack.c.b16 %v5179, %v5178
        %v6134 = vpack.c.b16 %v5181, %v5180
        %v6135 = vpack.c.b16 %v5183, %v5182
        %v6136 = vpack.c.b16 %v5185, %v5184
        %v6137 = vpack.c.b16 %v5187, %v5186
        %v6138 = vpack.c.b16 %v5189, %v5188
        %v6139 = vpack.c.b16 %v5191, %v5190
        %v6140 = vpack.c.b16 %v5193, %v5192
        %v6141 = vpack.c.b16 %v5195, %v5194
        %v6142 = vpack.c.b16 %v5197, %v5196
        %v6143 = vpack.c.b16 %v5199, %v5198
        %v6144 = vpack.c.b16 %v5201, %v5200
        %v6145 = vpack.c.b16 %v5203, %v5202
        %v6146 = vpack.c.b16 %v5205, %v5204
        %v6147 = vpack.c.b16 %v5207, %v5206
        %v6148 = vpack.c.b16 %v5209, %v5208
        %v6149 = vpack.c.b16 %v5211, %v5210
        %v6150 = vpack.c.b16 %v5213, %v5212
        %v6151 = vpack.c.b16 %v5215, %v5214
        %v6152 = vpack.c.b16 %v5217, %v5216
        %v6153 = vpack.c.b16 %v5219, %v5218
        %v6154 = vpack.c.b16 %v5221, %v5220
        %v6155 = vpack.c.b16 %v5223, %v5222
        %v6156 = vpack.c.b16 %v5225, %v5224
        %v6157 = vpack.c.b16 %v5227, %v5226
        %v6158 = vpack.c.b16 %v5229, %v5228
        %v6159 = vpack.c.b16 %v5231, %v5230
        %v6160 = vpack.c.b16 %v5233, %v5232
        %v6161 = vpack.c.b16 %v5235, %v5234
        %v6162 = vpack.c.b16 %v5237, %v5236
        %v6163 = vpack.c.b16 %v5239, %v5238
        %v6164 = vpack.c.b16 %v5241, %v5240
        %v6165 = vpack.c.b16 %v5243, %v5242
        %v6166 = vpack.c.b16 %v5245, %v5244
        %v6167 = vpack.c.b16 %v5247, %v5246
        %v6168 = vpack.c.b16 %v5249, %v5248
        %v6169 = vpack.c.b16 %v5251, %v5250
        %v6170 = vpack.c.b16 %v5253, %v5252
        %v6171 = vpack.c.b16 %v5255, %v5254
        %v6172 = vpack.c.b16 %v5257, %v5256
        %v6173 = vpack.c.b16 %v5259, %v5258
        %v6174 = vpack.c.b16 %v5261, %v5260
        %v6175 = vpack.c.b16 %v5263, %v5262
        %v6176 = vpack.c.b16 %v5265, %v5264
        %v6177 = vpack.c.b16 %v5267, %v5266
        %v6178 = vpack.c.b16 %v5269, %v5268
        %v6179 = vpack.c.b16 %v5271, %v5270
        %v6180 = vpack.c.b16 %v5273, %v5272
        %v6181 = vpack.c.b16 %v5275, %v5274
        %v6182 = vpack.c.b16 %v5277, %v5276
        %v6183 = vpack.c.b16 %v5279, %v5278
        %v6184 = vpack.c.b16 %v5281, %v5280
        %v6185 = vpack.c.b16 %v5283, %v5282
        %v6186 = vpack.c.b16 %v5285, %v5284
        %v6187 = vpack.c.b16 %v5287, %v5286
        %v6188 = vpack.c.b16 %v5289, %v5288
        %v6189 = vpack.c.b16 %v5291, %v5290
        %v6190 = vpack.c.b16 %v5293, %v5292
        %v6191 = vpack.c.b16 %v5295, %v5294
        %v6192 = vpack.c.b16 %v5297, %v5296
        %v6193 = vpack.c.b16 %v5299, %v5298
        %v6194 = vpack.c.b16 %v5301, %v5300
        %v6195 = vpack.c.b16 %v5303, %v5302
        %v6196 = vpack.c.b16 %v5305, %v5304
        %v6197 = vpack.c.b16 %v5307, %v5306
        %v6198 = vpack.c.b16 %v5309, %v5308
        %v6199 = vpack.c.b16 %v5311, %v5310
        %v6200 = vpack.c.b16 %v5313, %v5312
        %v6201 = vpack.c.b16 %v5315, %v5314
        %v6202 = vpack.c.b16 %v5317, %v5316
        %v6203 = vpack.c.b16 %v5319, %v5318
        %v6204 = vpack.c.b16 %v5321, %v5320
        %v6205 = vpack.c.b16 %v5323, %v5322
        %v6206 = vpack.c.b16 %v5325, %v5324
        %v6207 = vpack.c.b16 %v5327, %v5326
        %v6208 = vpack.c.b16 %v5329, %v5328
        %v6209 = vpack.c.b16 %v5331, %v5330
        %v6210 = vpack.c.b16 %v5333, %v5332
        %v6211 = vpack.c.b16 %v5335, %v5334
        %v6212 = vpack.c.b16 %v5337, %v5336
        %v6213 = vpack.c.b16 %v5339, %v5338
        %v6214 = vpack.c.b16 %v5341, %v5340
        %v6215 = vpack.c.b16 %v5343, %v5342
        %v6216 = vpack.c.b16 %v5345, %v5344
        %v6217 = vpack.c.b16 %v5347, %v5346
        %v6218 = vpack.c.b16 %v5349, %v5348
        %v6219 = vpack.c.b16 %v5351, %v5350
        %v6220 = vpack.c.b16 %v5353, %v5352
        %v6221 = vpack.c.b16 %v5355, %v5354
        %v6222 = vpack.c.b16 %v5357, %v5356
        %v6223 = vpack.c.b16 %v5359, %v5358
        %v6224 = vpack.c.b16 %v5361, %v5360
        %v6225 = vpack.c.b16 %v5363, %v5362
        %v6226 = vpack.c.b16 %v5365, %v5364
        %v6227 = vpack.c.b16 %v5367, %v5366
        %v6228 = vpack.c.b16 %v5369, %v5368
        %v6229 = vpack.c.b16 %v5371, %v5370
        %v6230 = vpack.c.b16 %v5373, %v5372
        %v6231 = vpack.c.b16 %v5375, %v5374
        %v6232 = vpack.c.b16 %v5377, %v5376
        %v6233 = vpack.c.b16 %v5379, %v5378
        %v6234 = vpack.c.b16 %v5381, %v5380
        %v6235 = vpack.c.b16 %v5383, %v5382
        %v6236 = vpack.c.b16 %v5385, %v5384
        %v6237 = vpack.c.b16 %v5387, %v5386
        %v6238 = vpack.c.b16 %v5389, %v5388
        %v6239 = vpack.c.b16 %v5391, %v5390
        %v6240 = vpack.c.b16 %v5393, %v5392
        %v6241 = vpack.c.b16 %v5395, %v5394
        %v6242 = vpack.c.b16 %v5397, %v5396
        %v6243 = vpack.c.b16 %v5399, %v5398
        %v6244 = vpack.c.b16 %v5401, %v5400
        %v6245 = vpack.c.b16 %v5403, %v5402
        %v6246 = vpack.c.b16 %v5405, %v5404
        %v6247 = vpack.c.b16 %v5407, %v5406
        %v6248 = vpack.c.b16 %v5409, %v5408
        %v6249 = vpack.c.b16 %v5411, %v5410
        %v6250 = vpack.c.b16 %v5413, %v5412
        %v6251 = vpack.c.b16 %v5415, %v5414
        %v6252 = vpack.c.b16 %v5417, %v5416
        %v6253 = vpack.c.b16 %v5419, %v5418
        %v6254 = vpack.c.b16 %v5421, %v5420
        %v6255 = vpack.c.b16 %v5423, %v5422
        %v6256 = vpack.c.b16 %v5425, %v5424
        %v6257 = vpack.c.b16 %v5427, %v5426
        %v6258 = vpack.c.b16 %v5429, %v5428
        %v6259 = vpack.c.b16 %v5431, %v5430
        %v6260 = vpack.c.b16 %v5433, %v5432
        %v6261 = vpack.c.b16 %v5435, %v5434
        %v6262 = vpack.c.b16 %v5437, %v5436
        %v6263 = vpack.c.b16 %v5439, %v5438
        %v6264 = vpack.c.b16 %v5441, %v5440
        %v6265 = vpack.c.b16 %v5443, %v5442
        %v6266 = vpack.c.b16 %v5445, %v5444
        %v6267 = vpack.c.b16 %v5447, %v5446
        %v6268 = vpack.c.b16 %v5449, %v5448
        %v6269 = vpack.c.b16 %v5451, %v5450
        %v6270 = vpack.c.b16 %v5453, %v5452
        %v6271 = vpack.c.b16 %v5455, %v5454
        %v6272 = vpack.c.b16 %v5457, %v5456
        %v6273 = vpack.c.b16 %v5459, %v5458
        %v6274 = vpack.c.b16 %v5461, %v5460
        %v6275 = vpack.c.b16 %v5463, %v5462
        %v6276 = vpack.c.b16 %v5465, %v5464
        %v6277 = vpack.c.b16 %v5467, %v5466
        %v6278 = vpack.c.b16 %v5469, %v5468
        %v6279 = vpack.c.b16 %v5471, %v5470
        %v6280 = vpack.c.b16 %v5473, %v5472
        %v6281 = vpack.c.b16 %v5475, %v5474
        %v6282 = vpack.c.b16 %v5477, %v5476
        %v6283 = vpack.c.b16 %v5479, %v5478
        %v6284 = vpack.c.b16 %v5481, %v5480
        %v6285 = vpack.c.b16 %v5483, %v5482
        %v6286 = vpack.c.b16 %v5485, %v5484
        %v6287 = vpack.c.b16 %v5487, %v5486
        %v6288 = vpack.c.b16 %v5489, %v5488
        %v6289 = vpack.c.b16 %v5491, %v5490
        %v6290 = vpack.c.b16 %v5493, %v5492
        %v6291 = vpack.c.b16 %v5495, %v5494
        %v6292 = vpack.c.b16 %v5497, %v5496
        %v6293 = vpack.c.b16 %v5499, %v5498
        %v6294 = vpack.c.b16 %v5501, %v5500
        %v6295 = vpack.c.b16 %v5503, %v5502
        %v6296 = vpack.c.b16 %v5505, %v5504
        %v6297 = vpack.c.b16 %v5507, %v5506
        %v6298 = vpack.c.b16 %v5509, %v5508
        %v6299 = vpack.c.b16 %v5511, %v5510
        %v6300 = vpack.c.b16 %v5513, %v5512
        %v6301 = vpack.c.b16 %v5515, %v5514
        %v6302 = vpack.c.b16 %v5517, %v5516
        %v6303 = vpack.c.b16 %v5519, %v5518
        %v6304 = vpack.c.b16 %v5521, %v5520
        %v6305 = vpack.c.b16 %v5523, %v5522
        %v6306 = vpack.c.b16 %v5525, %v5524
        %v6307 = vpack.c.b16 %v5527, %v5526
        %v6308 = vpack.c.b16 %v5529, %v5528
        %v6309 = vpack.c.b16 %v5531, %v5530
        %v6310 = vpack.c.b16 %v5533, %v5532
        %v6311 = vpack.c.b16 %v5535, %v5534
        %v6312 = vpack.c.b16 %v5537, %v5536
        %v6313 = vpack.c.b16 %v5539, %v5538
        %v6314 = vpack.c.b16 %v5541, %v5540
        %v6315 = vpack.c.b16 %v5543, %v5542
        %v6316 = vpack.c.b16 %v5545, %v5544
        %v6317 = vpack.c.b16 %v5547, %v5546
        %v6318 = vpack.c.b16 %v5549, %v5548
        %v6319 = vpack.c.b16 %v5551, %v5550
        %v6320 = vpack.c.b16 %v5553, %v5552
        %v6321 = vpack.c.b16 %v5555, %v5554
        %v6322 = vpack.c.b16 %v5557, %v5556
        %v6323 = vpack.c.b16 %v5559, %v5558
        %v6324 = vpack.c.b16 %v5561, %v5560
        %v6325 = vpack.c.b16 %v5563, %v5562
        %v6326 = vpack.c.b16 %v5565, %v5564
        %v6327 = vpack.c.b16 %v5567, %v5566
        %v6328 = vpack.c.b16 %v5569, %v5568
        %v6329 = vpack.c.b16 %v5571, %v5570
        %v6330 = vpack.c.b16 %v5573, %v5572
        %v6331 = vpack.c.b16 %v5575, %v5574
        %v6332 = vpack.c.b16 %v5577, %v5576
        %v6333 = vpack.c.b16 %v5579, %v5578
        %v6334 = vpack.c.b16 %v5581, %v5580
        %v6335 = vpack.c.b16 %v5583, %v5582
        %v6336 = vpack.c.b16 %v5585, %v5584
        %v6337 = vpack.c.b16 %v5587, %v5586
        %v6338 = vpack.c.b16 %v5589, %v5588
        %v6339 = vpack.c.b16 %v5591, %v5590
        %v6340 = vpack.c.b16 %v5593, %v5592
        %v6341 = vpack.c.b16 %v5595, %v5594
        %v6342 = vpack.c.b16 %v5597, %v5596
        %v6343 = vpack.c.b16 %v5599, %v5598
        %v6344 = vpack.c.b16 %v5601, %v5600
        %v6345 = vpack.c.b16 %v5603, %v5602
        %v6346 = vpack.c.b16 %v5605, %v5604
        %v6347 = vpack.c.b16 %v5607, %v5606
        %v6348 = vpack.c.b16 %v5609, %v5608
        %v6349 = vpack.c.b16 %v5611, %v5610
        %v6350 = vpack.c.b16 %v5613, %v5612
        %v6351 = vpack.c.b16 %v5615, %v5614
        %v6352 = vpack.c.b16 %v5617, %v5616
        %v6353 = vpack.c.b16 %v5619, %v5618
        %v6354 = vpack.c.b16 %v5621, %v5620
        %v6355 = vpack.c.b16 %v5623, %v5622
        %v6356 = vpack.c.b16 %v5625, %v5624
        %v6357 = vpack.c.b16 %v5627, %v5626
        %v6358 = vpack.c.b16 %v5629, %v5628
        %v6359 = vpack.c.b16 %v5631, %v5630
        %v6360 = vpack.c.b16 %v5633, %v5632
        %v6361 = vpack.c.b16 %v5635, %v5634
        %v6362 = vpack.c.b16 %v5637, %v5636
        %v6363 = vpack.c.b16 %v5639, %v5638
        %v6364 = vpack.c.b16 %v5641, %v5640
        %v6365 = vpack.c.b16 %v5643, %v5642
        %v6366 = vpack.c.b16 %v5645, %v5644
        %v6367 = vpack.c.b16 %v5647, %v5646
        %v6368 = vpack.c.b16 %v5649, %v5648
        %v6369 = vpack.c.b16 %v5651, %v5650
        %v6370 = vpack.c.b16 %v5653, %v5652
        %v6371 = vpack.c.b16 %v5655, %v5654
        %v6372 = vpack.c.b16 %v5657, %v5656
        %v6373 = vpack.c.b16 %v5659, %v5658
        %v6374 = vpack.c.b16 %v5661, %v5660
        %v6375 = vpack.c.b16 %v5663, %v5662
        %v6376 = vpack.c.b16 %v5665, %v5664
        %v6377 = vpack.c.b16 %v5667, %v5666
        %v6378 = vpack.c.b16 %v5669, %v5668
        %v6379 = vpack.c.b16 %v5671, %v5670
        %v6380 = vpack.c.b16 %v5673, %v5672
        %v6381 = vpack.c.b16 %v5675, %v5674
        %v6382 = vpack.c.b16 %v5677, %v5676
        %v6383 = vpack.c.b16 %v5679, %v5678
        %v6384 = vpack.c.b16 %v5681, %v5680
        %v6385 = vpack.c.b16 %v5683, %v5682
        %v6386 = vpack.c.b16 %v5685, %v5684
        %v6387 = vpack.c.b16 %v5687, %v5686
        %v6388 = vpack.c.b16 %v5689, %v5688
        %v6389 = vpack.c.b16 %v5691, %v5690
        %v6390 = vpack.c.b16 %v5693, %v5692
        %v6391 = vpack.c.b16 %v5695, %v5694
        %v6392 = vpack.c.b16 %v5697, %v5696
        %v6393 = vpack.c.b16 %v5699, %v5698
        %v6394 = vpack.c.b16 %v5701, %v5700
        %v6395 = vpack.c.b16 %v5703, %v5702
        %v6396 = vpack.c.b16 %v5705, %v5704
        %v6397 = vpack.c.b16 %v5707, %v5706
        %v6398 = vpack.c.b16 %v5709, %v5708
        %v6399 = vpack.c.b16 %v5711, %v5710
        %v6400 = vpack.c.b16 %v5713, %v5712
        %v6401 = vpack.c.b16 %v5715, %v5714
        %v6402 = vpack.c.b16 %v5717, %v5716
        %v6403 = vpack.c.b16 %v5719, %v5718
        %v6404 = vpack.c.b16 %v5721, %v5720
        %v6405 = vpack.c.b16 %v5723, %v5722
        %v6406 = vpack.c.b16 %v5725, %v5724
        %v6407 = vpack.c.b16 %v5727, %v5726
        %v6408 = vpack.c.b16 %v5729, %v5728
        %v6409 = vpack.c.b16 %v5731, %v5730
        %v6410 = vpack.c.b16 %v5733, %v5732
        %v6411 = vpack.c.b16 %v5735, %v5734
        %v6412 = vpack.c.b16 %v5737, %v5736
        %v6413 = vpack.c.b16 %v5739, %v5738
        %v6414 = vpack.c.b16 %v5741, %v5740
        %v6415 = vpack.c.b16 %v5743, %v5742
        %v6416 = vpack.c.b16 %v5745, %v5744
        %v6417 = vpack.c.b16 %v5747, %v5746
        %v6418 = vpack.c.b16 %v5749, %v5748
        %v6419 = vpack.c.b16 %v5751, %v5750
        %v6420 = vpack.c.b16 %v5753, %v5752
        %v6421 = vpack.c.b16 %v5755, %v5754
        %v6422 = vpack.c.b16 %v5757, %v5756
        %v6423 = vpack.c.b16 %v5759, %v5758
        %v6424 = vpack.c.b16 %v5761, %v5760
        %v6425 = vpack.c.b16 %v5763, %v5762
        %v6426 = vpack.c.b16 %v5765, %v5764
        %v6427 = vpack.c.b16 %v5767, %v5766
        %v6428 = vpack.c.b16 %v5769, %v5768
        %v6429 = vpack.c.b16 %v5771, %v5770
        %v6430 = vpack.c.b16 %v5773, %v5772
        %v6431 = vpack.c.b16 %v5775, %v5774
        %v6432 = vpack.c.b16 %v5777, %v5776
        %v6433 = vpack.c.b16 %v5779, %v5778
        %v6434 = vpack.c.b16 %v5781, %v5780
        %v6435 = vpack.c.b16 %v5783, %v5782
        %v6436 = vpack.c.b16 %v5785, %v5784
        %v6437 = vpack.c.b16 %v5787, %v5786
        %v6438 = vpack.c.b16 %v5789, %v5788
        %v6439 = vpack.c.b16 %v5791, %v5790
        %v6440 = vpack.c.b16 %v5793, %v5792
        %v6441 = vpack.c.b16 %v5795, %v5794
        %v6442 = vpack.c.b16 %v5797, %v5796
        %v6443 = vpack.c.b16 %v5799, %v5798
        %v6444 = vpack.c.b16 %v5801, %v5800
        %v6445 = vpack.c.b16 %v5803, %v5802
        %v6446 = vpack.c.b16 %v5805, %v5804
        %v6447 = vpack.c.b16 %v5807, %v5806
        %v6448 = vpack.c.b16 %v5809, %v5808
        %v6449 = vpack.c.b16 %v5811, %v5810
        %v6450 = vpack.c.b16 %v5813, %v5812
        %v6451 = vpack.c.b16 %v5815, %v5814
        %v6452 = vpack.c.b16 %v5817, %v5816
        %v6453 = vpack.c.b16 %v5819, %v5818
        %v6454 = vpack.c.b16 %v5821, %v5820
        %v6455 = vpack.c.b16 %v5823, %v5822
        %v6456 = vpack.c.b16 %v5825, %v5824
        %v6457 = vpack.c.b16 %v5827, %v5826
        %v6458 = vpack.c.b16 %v5829, %v5828
        %v6459 = vpack.c.b16 %v5831, %v5830
        %v6460 = vpack.c.b16 %v5833, %v5832
        %v6461 = vpack.c.b16 %v5835, %v5834
        %v6462 = vpack.c.b16 %v5837, %v5836
        %v6463 = vpack.c.b16 %v5839, %v5838
        %v6464 = vpack.c.b16 %v5841, %v5840
        %v6465 = vpack.c.b16 %v5843, %v5842
        %v6466 = vpack.c.b16 %v5845, %v5844
        %v6467 = vpack.c.b16 %v5847, %v5846
        %v6468 = vpack.c.b16 %v5849, %v5848
        %v6469 = vpack.c.b16 %v5851, %v5850
        %v6470 = vpack.c.b16 %v5853, %v5852
        %v6471 = vpack.c.b16 %v5855, %v5854
        %v6472 = vpack.c.b16 %v5857, %v5856
        %v6473 = vpack.c.b16 %v5859, %v5858
        %v6474 = vpack.c.b16 %v5861, %v5860
        %v6475 = vpack.c.b16 %v5863, %v5862
        %v6476 = vpack.c.b16 %v5865, %v5864
        %v6477 = vpack.c.b16 %v5867, %v5866
        %v6478 = vpack.c.b16 %v5869, %v5868
        %v6479 = vpack.c.b16 %v5871, %v5870
        %v6480 = vpack.c.b16 %v5873, %v5872
        %v6481 = vpack.c.b16 %v5875, %v5874
        %v6482 = vpack.c.b16 %v5877, %v5876
        %v6483 = vpack.c.b16 %v5879, %v5878
        %v6484 = vpack.c.b16 %v5881, %v5880
        %v6485 = vpack.c.b16 %v5883, %v5882
        %v6486 = vpack.c.b16 %v5885, %v5884
        %v6487 = vpack.c.b16 %v5887, %v5886
        %v6488 = vpack.c.b16 %v5889, %v5888
        %v6489 = vpack.c.b16 %v5891, %v5890
        %v6490 = vpack.c.b16 %v5893, %v5892
        %v6491 = vpack.c.b16 %v5895, %v5894
        %v6492 = vpack.c.b16 %v5897, %v5896
        %v6493 = vpack.c.b16 %v5899, %v5898
        %v6494 = vpack.c.b16 %v5901, %v5900
        %v6495 = vpack.c.b16 %v5903, %v5902
        %v6496 = vpack.c.b16 %v5905, %v5904
        %v6497 = vpack.c.b16 %v5907, %v5906
        %v6498 = vpack.c.b16 %v5909, %v5908
        %v6499 = vpack.c.b16 %v5911, %v5910
        %v6500 = vpack.c.b16 %v5913, %v5912
        %v6501 = vpack.c.b16 %v5915, %v5914
        %v6502 = vpack.c.b16 %v5917, %v5916
        %v6503 = vpack.c.b16 %v5919, %v5918
        %v6504 = vpack.c.b16 %v5921, %v5920
        %v6505 = vpack.c.b16 %v5923, %v5922
        %v6506 = vpack.c.b16 %v5925, %v5924
        %v6507 = vpack.c.b16 %v5927, %v5926
        %v6508 = vpack.c.b16 %v5929, %v5928
        %v6509 = vpack.c.b16 %v5931, %v5930
        %v6510 = vpack.c.b16 %v5933, %v5932
        %v6511 = vpack.c.b16 %v5935, %v5934
        %v6512 = vpack.c.b16 %v5937, %v5936
        %v6513 = vpack.c.b16 %v5939, %v5938
        %v6514 = vpack.c.b16 %v5941, %v5940
        %v6515 = vpack.c.b16 %v5943, %v5942
        %v6516 = vpack.c.b16 %v5945, %v5944
        %v6517 = vpack.c.b16 %v5947, %v5946
        %v6518 = vpack.c.b16 %v5949, %v5948
        %v6519 = vpack.c.b16 %v5951, %v5950
        %v6520 = vpack.c.b16 %v5953, %v5952
        %v6521 = vpack.c.b16 %v5955, %v5954
        %v6522 = vpack.c.b16 %v5957, %v5956
        %v6523 = vpack.c.b16 %v5959, %v5958
        %v6524 = vpack.c.b16 %v5961, %v5960
        %v6525 = vpack.c.b16 %v5963, %v5962
        %v6526 = vpack.c.b16 %v5965, %v5964
        %v6527 = vpack.c.b16 %v5967, %v5966
        %v6528 = vpack.c.b16 %v5969, %v5968
        %v6529 = vpack.c.b16 %v5971, %v5970
        %v6530 = vpack.c.b16 %v5973, %v5972
        %v6531 = vpack.c.b16 %v5975, %v5974
        %v6532 = vpack.c.b16 %v5977, %v5976
        %v6533 = vpack.c.b16 %v5979, %v5978
        %v6534 = vpack.c.b16 %v5981, %v5980
        %v6535 = vpack.c.b16 %v5983, %v5982
        %v6536 = vpack.c.b16 %v5985, %v5984
        %v6537 = vpack.c.b16 %v5987, %v5986
        %v6538 = vpack.c.b16 %v5989, %v5988
        %v6539 = vpack.c.b16 %v5991, %v5990
        %v6540 = vpack.c.b16 %v5993, %v5992
        %v6541 = vpack.c.b16 %v5995, %v5994
        %v6542 = vpack.c.b16 %v5997, %v5996
        %v6543 = vpack.c.b16 %v5999, %v5998
        %v6544 = vpack.c.b16 %v6001, %v6000
        %v6545 = vpack.c.b16 %v6003, %v6002
        %v6546 = vpack.c.b16 %v6005, %v6004
        %v6547 = vpack.c.b16 %v6007, %v6006
        %v6548 = vpack.c.b16 %v6009, %v6008
        %v6549 = vpack.c.b16 %v6011, %v6010
        %v6550 = vpack.c.b16 %v6013, %v6012
        %v6551 = vpack.c.b16 %v6015, %v6014
        %v6552 = vpack.c.b16 %v6017, %v6016
        %v6553 = vpack.c.b16 %v6019, %v6018
        %v6554 = vpack.c.b16 %v6021, %v6020
        %v6555 = vpack.c.b16 %v6023, %v6022
        %v6556 = vpack.c.b16 %v6025, %v6024
        %v6557 = vpack.c.b16 %v6027, %v6026
        %v6558 = vpack.c.b16 %v6029, %v6028
        %v6559 = vpack.c.b16 %v6031, %v6030
        %v6560 = vpack.c.b16 %v6033, %v6032
        %v6561 = vpack.c.b16 %v6035, %v6034
        %v6562 = vpack.c.b16 %v6037, %v6036
        %v6563 = vpack.c.b16 %v6039, %v6038
        %v6564 = vpack.c.b16 %v6041, %v6040
        %v6565 = vpack.c.b16 %v6043, %v6042
        %v6566 = vpack.c.b16 %v6045, %v6044
        %v6567 = vpack.c.b16 %v6047, %v6046
        %v6568 = vpack.c.b16 %v6049, %v6048
        %v6569 = vpack.c.b16 %v6051, %v6050
        %v6570 = vpack.c.b16 %v6053, %v6052
        %v6571 = vpack.c.b16 %v6055, %v6054
        %v6572 = vpack.c.b16 %v6057, %v6056
        %v6573 = vpack.c.b16 %v6059, %v6058
        %v6574 = vpack.c.b16 %v6061, %v6060
        %v6575 = vpack.c.b16 %v6063, %v6062
        %7088 = vmatprep.subr.bf16.mxu0 0
        %7089 = vmatpush1.bf16.msra.mxu0 %v6064
        %7090 = vmatprep.subr.bf16.mxu0 0
        %7091 = vmatpush1.bf16.msra.mxu0 %v6065
        %7092 = vmatprep.subr.bf16.mxu0 0
        %7093 = vmatpush1.bf16.msra.mxu0 %v6066
        %7094 = vmatprep.subr.bf16.mxu0 0
        %7095 = vmatpush1.bf16.msra.mxu0 %v6067
        %7096 = vmatprep.subr.bf16.mxu0 0
        %7097 = vmatpush1.bf16.msra.mxu0 %v6068
        %7098 = vmatprep.subr.bf16.mxu0 0
        %7099 = vmatpush1.bf16.msra.mxu0 %v6069
        %7100 = vmatprep.subr.bf16.mxu0 0
        %7101 = vmatpush1.bf16.msra.mxu0 %v6070
        %7102 = vmatprep.subr.bf16.mxu0 0
        %7103 = vmatpush1.bf16.msra.mxu0 %v6071
        %7104 = vmatprep.subr.bf16.mxu0 0
        %7105 = vmatpush1.bf16.msra.mxu0 %v6072
        %7106 = vmatprep.subr.bf16.mxu0 0
        %7107 = vmatpush1.bf16.msra.mxu0 %v6073
        %7108 = vmatprep.subr.bf16.mxu0 0
        %7109 = vmatpush1.bf16.msra.mxu0 %v6074
        %7110 = vmatprep.subr.bf16.mxu0 0
        %7111 = vmatpush1.bf16.msra.mxu0 %v6075
        %7112 = vmatprep.subr.bf16.mxu0 0
        %7113 = vmatpush1.bf16.msra.mxu0 %v6076
        %7114 = vmatprep.subr.bf16.mxu0 0
        %7115 = vmatpush1.bf16.msra.mxu0 %v6077
        %7116 = vmatprep.subr.bf16.mxu0 0
        %7117 = vmatpush1.bf16.msra.mxu0 %v6078
        %7118 = vmatprep.subr.bf16.mxu0 0
        %7119 = vmatpush1.bf16.msra.mxu0 %v6079
        %7120 = vmatprep.mubr.bf16.mxu0 %v2928
        %7121 = vmatmul.mubr.bf16.gmra.mrb[0].mxu0 %v2927
        %v7122 = vpop.f32.mrb[0].mxu0
        %v7123 = vadd.f32 0.0, %v7122
        %v7124 = vpop.f32.mrb[0].mxu0
        %v7125 = vpop.f32.mrb[0].mxu0
        %v7126 = vpop.f32.mrb[0].mxu0
        %7127 = vdwg.mxu0
        %7128 = vmatprep.subr.bf16.mxu0 0
        %7129 = vmatpush1.bf16.msra.mxu0 %v6080
        %7130 = vmatprep.subr.bf16.mxu0 0
        %7131 = vmatpush1.bf16.msra.mxu0 %v6081
        %7132 = vmatprep.subr.bf16.mxu0 0
        %7133 = vmatpush1.bf16.msra.mxu0 %v6082
        %7134 = vmatprep.subr.bf16.mxu0 0
        %7135 = vmatpush1.bf16.msra.mxu0 %v6083
        %7136 = vmatprep.subr.bf16.mxu0 0
        %7137 = vmatpush1.bf16.msra.mxu0 %v6084
        %7138 = vmatprep.subr.bf16.mxu0 0
        %7139 = vmatpush1.bf16.msra.mxu0 %v6085
        %7140 = vmatprep.subr.bf16.mxu0 0
        %7141 = vmatpush1.bf16.msra.mxu0 %v6086
        %7142 = vmatprep.subr.bf16.mxu0 0
        %7143 = vmatpush1.bf16.msra.mxu0 %v6087
        %7144 = vmatprep.subr.bf16.mxu0 0
        %7145 = vmatpush1.bf16.msra.mxu0 %v6088
        %7146 = vmatprep.subr.bf16.mxu0 0
        %7147 = vmatpush1.bf16.msra.mxu0 %v6089
        %7148 = vmatprep.subr.bf16.mxu0 0
        %7149 = vmatpush1.bf16.msra.mxu0 %v6090
        %7150 = vmatprep.subr.bf16.mxu0 0
        %7151 = vmatpush1.bf16.msra.mxu0 %v6091
        %7152 = vmatprep.subr.bf16.mxu0 0
        %7153 = vmatpush1.bf16.msra.mxu0 %v6092
        %7154 = vmatprep.subr.bf16.mxu0 0
        %7155 = vmatpush1.bf16.msra.mxu0 %v6093
        %7156 = vmatprep.subr.bf16.mxu0 0
        %7157 = vmatpush1.bf16.msra.mxu0 %v6094
        %7158 = vmatprep.subr.bf16.mxu0 0
        %7159 = vmatpush1.bf16.msra.mxu0 %v6095
        %7160 = vmatprep.mubr.bf16.mxu0 %v2930
        %7161 = vmatmul.mubr.bf16.gmra.mrb[0].mxu0 %v2929
        %v7162 = vpop.f32.mrb[0].mxu0
        %v7163 = vadd.f32 %v7123, %v7162
        %v7164 = vpop.f32.mrb[0].mxu0
        %v7165 = vpop.f32.mrb[0].mxu0
        %v7166 = vpop.f32.mrb[0].mxu0
        %7167 = vdwg.mxu0
        %7168 = vmatprep.subr.bf16.mxu0 0
        %7169 = vmatpush1.bf16.msra.mxu0 %v6096
        %7170 = vmatprep.subr.bf16.mxu0 0
        %7171 = vmatpush1.bf16.msra.mxu0 %v6097
        %7172 = vmatprep.subr.bf16.mxu0 0
        %7173 = vmatpush1.bf16.msra.mxu0 %v6098
        %7174 = vmatprep.subr.bf16.mxu0 0
        %7175 = vmatpush1.bf16.msra.mxu0 %v6099
        %7176 = vmatprep.subr.bf16.mxu0 0
        %7177 = vmatpush1.bf16.msra.mxu0 %v6100
        %7178 = vmatprep.subr.bf16.mxu0 0
        %7179 = vmatpush1.bf16.msra.mxu0 %v6101
        %7180 = vmatprep.subr.bf16.mxu0 0
        %7181 = vmatpush1.bf16.msra.mxu0 %v6102
        %7182 = vmatprep.subr.bf16.mxu0 0
        %7183 = vmatpush1.bf16.msra.mxu0 %v6103
        %7184 = vmatprep.subr.bf16.mxu0 0
        %7185 = vmatpush1.bf16.msra.mxu0 %v6104
        %7186 = vmatprep.subr.bf16.mxu0 0
        %7187 = vmatpush1.bf16.msra.mxu0 %v6105
        %7188 = vmatprep.subr.bf16.mxu0 0
        %7189 = vmatpush1.bf16.msra.mxu0 %v6106
        %7190 = vmatprep.subr.bf16.mxu0 0
        %7191 = vmatpush1.bf16.msra.mxu0 %v6107
        %7192 = vmatprep.subr.bf16.mxu0 0
        %7193 = vmatpush1.bf16.msra.mxu0 %v6108
        %7194 = vmatprep.subr.bf16.mxu0 0
        %7195 = vmatpush1.bf16.msra.mxu0 %v6109
        %7196 = vmatprep.subr.bf16.mxu0 0
        %7197 = vmatpush1.bf16.msra.mxu0 %v6110
        %7198 = vmatprep.subr.bf16.mxu0 0
        %7199 = vmatpush1.bf16.msra.mxu0 %v6111
        %7200 = vmatprep.mubr.bf16.mxu0 %v2932
        %7201 = vmatmul.mubr.bf16.gmra.mrb[0].mxu0 %v2931
        %v7202 = vpop.f32.mrb[0].mxu0
        %v7203 = vadd.f32 %v7163, %v7202
        %v7204 = vpop.f32.mrb[0].mxu0
        %v7205 = vpop.f32.mrb[0].mxu0
        %v7206 = vpop.f32.mrb[0].mxu0
        %7207 = vdwg.mxu0
        %7208 = vmatprep.subr.bf16.mxu0 0
        %7209 = vmatpush1.bf16.msra.mxu0 %v6112
        %7210 = vmatprep.subr.bf16.mxu0 0
        %7211 = vmatpush1.bf16.msra.mxu0 %v6113
        %7212 = vmatprep.subr.bf16.mxu0 0
        %7213 = vmatpush1.bf16.msra.mxu0 %v6114
        %7214 = vmatprep.subr.bf16.mxu0 0
        %7215 = vmatpush1.bf16.msra.mxu0 %v6115
        %7216 = vmatprep.subr.bf16.mxu0 0
        %7217 = vmatpush1.bf16.msra.mxu0 %v6116
        %7218 = vmatprep.subr.bf16.mxu0 0
        %7219 = vmatpush1.bf16.msra.mxu0 %v6117
        %7220 = vmatprep.subr.bf16.mxu0 0
        %7221 = vmatpush1.bf16.msra.mxu0 %v6118
        %7222 = vmatprep.subr.bf16.mxu0 0
        %7223 = vmatpush1.bf16.msra.mxu0 %v6119
        %7224 = vmatprep.subr.bf16.mxu0 0
        %7225 = vmatpush1.bf16.msra.mxu0 %v6120
        %7226 = vmatprep.subr.bf16.mxu0 0
        %7227 = vmatpush1.bf16.msra.mxu0 %v6121
        %7228 = vmatprep.subr.bf16.mxu0 0
        %7229 = vmatpush1.bf16.msra.mxu0 %v6122
        %7230 = vmatprep.subr.bf16.mxu0 0
        %7231 = vmatpush1.bf16.msra.mxu0 %v6123
        %7232 = vmatprep.subr.bf16.mxu0 0
        %7233 = vmatpush1.bf16.msra.mxu0 %v6124
        %7234 = vmatprep.subr.bf16.mxu0 0
        %7235 = vmatpush1.bf16.msra.mxu0 %v6125
        %7236 = vmatprep.subr.bf16.mxu0 0
        %7237 = vmatpush1.bf16.msra.mxu0 %v6126
        %7238 = vmatprep.subr.bf16.mxu0 0
        %7239 = vmatpush1.bf16.msra.mxu0 %v6127
        %7240 = vmatprep.mubr.bf16.mxu0 %v2934
        %7241 = vmatmul.mubr.bf16.gmra.mrb[0].mxu0 %v2933
        %v7242 = vpop.f32.mrb[0].mxu0
        %v7243 = vadd.f32 %v7203, %v7242
        %v7244 = vpop.f32.mrb[0].mxu0
        %v7245 = vpop.f32.mrb[0].mxu0
        %v7246 = vpop.f32.mrb[0].mxu0
        %7247 = vdwg.mxu0
        %7248 = vmatprep.subr.bf16.mxu0 0
        %7249 = vmatpush1.bf16.msra.mxu0 %v6128
        %7250 = vmatprep.subr.bf16.mxu0 0
        %7251 = vmatpush1.bf16.msra.mxu0 %v6129
        %7252 = vmatprep.subr.bf16.mxu0 0
        %7253 = vmatpush1.bf16.msra.mxu0 %v6130
        %7254 = vmatprep.subr.bf16.mxu0 0
        %7255 = vmatpush1.bf16.msra.mxu0 %v6131
        %7256 = vmatprep.subr.bf16.mxu0 0
        %7257 = vmatpush1.bf16.msra.mxu0 %v6132
        %7258 = vmatprep.subr.bf16.mxu0 0
        %7259 = vmatpush1.bf16.msra.mxu0 %v6133
        %7260 = vmatprep.subr.bf16.mxu0 0
        %7261 = vmatpush1.bf16.msra.mxu0 %v6134
        %7262 = vmatprep.subr.bf16.mxu0 0
        %7263 = vmatpush1.bf16.msra.mxu0 %v6135
        %7264 = vmatprep.subr.bf16.mxu0 0
        %7265 = vmatpush1.bf16.msra.mxu0 %v6136
        %7266 = vmatprep.subr.bf16.mxu0 0
        %7267 = vmatpush1.bf16.msra.mxu0 %v6137
        %7268 = vmatprep.subr.bf16.mxu0 0
        %7269 = vmatpush1.bf16.msra.mxu0 %v6138
        %7270 = vmatprep.subr.bf16.mxu0 0
        %7271 = vmatpush1.bf16.msra.mxu0 %v6139
        %7272 = vmatprep.subr.bf16.mxu0 0
        %7273 = vmatpush1.bf16.msra.mxu0 %v6140
        %7274 = vmatprep.subr.bf16.mxu0 0
        %7275 = vmatpush1.bf16.msra.mxu0 %v6141
        %7276 = vmatprep.subr.bf16.mxu0 0
        %7277 = vmatpush1.bf16.msra.mxu0 %v6142
        %7278 = vmatprep.subr.bf16.mxu0 0
        %7279 = vmatpush1.bf16.msra.mxu0 %v6143
        %7280 = vmatprep.mubr.bf16.mxu0 %v2936
        %7281 = vmatmul.mubr.bf16.gmra.mrb[0].mxu0 %v2935
        %v7282 = vpop.f32.mrb[0].mxu0
        %v7283 = vadd.f32 %v7243, %v7282
        %v7284 = vpop.f32.mrb[0].mxu0
        %v7285 = vpop.f32.mrb[0].mxu0
        %v7286 = vpop.f32.mrb[0].mxu0
        %7287 = vdwg.mxu0
        %7288 = vmatprep.subr.bf16.mxu0 0
        %7289 = vmatpush1.bf16.msra.mxu0 %v6144
        %7290 = vmatprep.subr.bf16.mxu0 0
        %7291 = vmatpush1.bf16.msra.mxu0 %v6145
        %7292 = vmatprep.subr.bf16.mxu0 0
        %7293 = vmatpush1.bf16.msra.mxu0 %v6146
        %7294 = vmatprep.subr.bf16.mxu0 0
        %7295 = vmatpush1.bf16.msra.mxu0 %v6147
        %7296 = vmatprep.subr.bf16.mxu0 0
        %7297 = vmatpush1.bf16.msra.mxu0 %v6148
        %7298 = vmatprep.subr.bf16.mxu0 0
        %7299 = vmatpush1.bf16.msra.mxu0 %v6149
        %7300 = vmatprep.subr.bf16.mxu0 0
        %7301 = vmatpush1.bf16.msra.mxu0 %v6150
        %7302 = vmatprep.subr.bf16.mxu0 0
        %7303 = vmatpush1.bf16.msra.mxu0 %v6151
        %7304 = vmatprep.subr.bf16.mxu0 0
        %7305 = vmatpush1.bf16.msra.mxu0 %v6152
        %7306 = vmatprep.subr.bf16.mxu0 0
        %7307 = vmatpush1.bf16.msra.mxu0 %v6153
        %7308 = vmatprep.subr.bf16.mxu0 0
        %7309 = vmatpush1.bf16.msra.mxu0 %v6154
        %7310 = vmatprep.subr.bf16.mxu0 0
        %7311 = vmatpush1.bf16.msra.mxu0 %v6155
        %7312 = vmatprep.subr.bf16.mxu0 0
        %7313 = vmatpush1.bf16.msra.mxu0 %v6156
        %7314 = vmatprep.subr.bf16.mxu0 0
        %7315 = vmatpush1.bf16.msra.mxu0 %v6157
        %7316 = vmatprep.subr.bf16.mxu0 0
        %7317 = vmatpush1.bf16.msra.mxu0 %v6158
        %7318 = vmatprep.subr.bf16.mxu0 0
        %7319 = vmatpush1.bf16.msra.mxu0 %v6159
        %7320 = vmatprep.mubr.bf16.mxu0 %v2938
        %7321 = vmatmul.mubr.bf16.gmra.mrb[0].mxu0 %v2937
        %v7322 = vpop.f32.mrb[0].mxu0
        %v7323 = vadd.f32 %v7283, %v7322
        %v7324 = vpop.f32.mrb[0].mxu0
        %v7325 = vpop.f32.mrb[0].mxu0
        %v7326 = vpop.f32.mrb[0].mxu0
        %7327 = vdwg.mxu0
        %7328 = vmatprep.subr.bf16.mxu0 0
        %7329 = vmatpush1.bf16.msra.mxu0 %v6160
        %7330 = vmatprep.subr.bf16.mxu0 0
        %7331 = vmatpush1.bf16.msra.mxu0 %v6161
        %7332 = vmatprep.subr.bf16.mxu0 0
        %7333 = vmatpush1.bf16.msra.mxu0 %v6162
        %7334 = vmatprep.subr.bf16.mxu0 0
        %7335 = vmatpush1.bf16.msra.mxu0 %v6163
        %7336 = vmatprep.subr.bf16.mxu0 0
        %7337 = vmatpush1.bf16.msra.mxu0 %v6164
        %7338 = vmatprep.subr.bf16.mxu0 0
        %7339 = vmatpush1.bf16.msra.mxu0 %v6165
        %7340 = vmatprep.subr.bf16.mxu0 0
        %7341 = vmatpush1.bf16.msra.mxu0 %v6166
        %7342 = vmatprep.subr.bf16.mxu0 0
        %7343 = vmatpush1.bf16.msra.mxu0 %v6167
        %7344 = vmatprep.subr.bf16.mxu0 0
        %7345 = vmatpush1.bf16.msra.mxu0 %v6168
        %7346 = vmatprep.subr.bf16.mxu0 0
        %7347 = vmatpush1.bf16.msra.mxu0 %v6169
        %7348 = vmatprep.subr.bf16.mxu0 0
        %7349 = vmatpush1.bf16.msra.mxu0 %v6170
        %7350 = vmatprep.subr.bf16.mxu0 0
        %7351 = vmatpush1.bf16.msra.mxu0 %v6171
        %7352 = vmatprep.subr.bf16.mxu0 0
        %7353 = vmatpush1.bf16.msra.mxu0 %v6172
        %7354 = vmatprep.subr.bf16.mxu0 0
        %7355 = vmatpush1.bf16.msra.mxu0 %v6173
        %7356 = vmatprep.subr.bf16.mxu0 0
        %7357 = vmatpush1.bf16.msra.mxu0 %v6174
        %7358 = vmatprep.subr.bf16.mxu0 0
        %7359 = vmatpush1.bf16.msra.mxu0 %v6175
        %7360 = vmatprep.mubr.bf16.mxu0 %v2940
        %7361 = vmatmul.mubr.bf16.gmra.mrb[0].mxu0 %v2939
        %v7362 = vpop.f32.mrb[0].mxu0
        %v7363 = vadd.f32 %v7323, %v7362
        %v7364 = vpop.f32.mrb[0].mxu0
        %v7365 = vpop.f32.mrb[0].mxu0
        %v7366 = vpop.f32.mrb[0].mxu0
        %7367 = vdwg.mxu0
        %7368 = vmatprep.subr.bf16.mxu0 0
        %7369 = vmatpush1.bf16.msra.mxu0 %v6176
        %7370 = vmatprep.subr.bf16.mxu0 0
        %7371 = vmatpush1.bf16.msra.mxu0 %v6177
        %7372 = vmatprep.subr.bf16.mxu0 0
        %7373 = vmatpush1.bf16.msra.mxu0 %v6178
        %7374 = vmatprep.subr.bf16.mxu0 0
        %7375 = vmatpush1.bf16.msra.mxu0 %v6179
        %7376 = vmatprep.subr.bf16.mxu0 0
        %7377 = vmatpush1.bf16.msra.mxu0 %v6180
        %7378 = vmatprep.subr.bf16.mxu0 0
        %7379 = vmatpush1.bf16.msra.mxu0 %v6181
        %7380 = vmatprep.subr.bf16.mxu0 0
        %7381 = vmatpush1.bf16.msra.mxu0 %v6182
        %7382 = vmatprep.subr.bf16.mxu0 0
        %7383 = vmatpush1.bf16.msra.mxu0 %v6183
        %7384 = vmatprep.subr.bf16.mxu0 0
        %7385 = vmatpush1.bf16.msra.mxu0 %v6184
        %7386 = vmatprep.subr.bf16.mxu0 0
        %7387 = vmatpush1.bf16.msra.mxu0 %v6185
        %7388 = vmatprep.subr.bf16.mxu0 0
        %7389 = vmatpush1.bf16.msra.mxu0 %v6186
        %7390 = vmatprep.subr.bf16.mxu0 0
        %7391 = vmatpush1.bf16.msra.mxu0 %v6187
        %7392 = vmatprep.subr.bf16.mxu0 0
        %7393 = vmatpush1.bf16.msra.mxu0 %v6188
        %7394 = vmatprep.subr.bf16.mxu0 0
        %7395 = vmatpush1.bf16.msra.mxu0 %v6189
        %7396 = vmatprep.subr.bf16.mxu0 0
        %7397 = vmatpush1.bf16.msra.mxu0 %v6190
        %7398 = vmatprep.subr.bf16.mxu0 0
        %7399 = vmatpush1.bf16.msra.mxu0 %v6191
        %7400 = vmatprep.mubr.bf16.mxu0 %v2942
        %7401 = vmatmul.mubr.bf16.gmra.mrb[0].mxu0 %v2941
        %v7402 = vpop.f32.mrb[0].mxu0
        %v7403 = vadd.f32 %v7363, %v7402
        %v7404 = vpop.f32.mrb[0].mxu0
        %v7405 = vpop.f32.mrb[0].mxu0
        %v7406 = vpop.f32.mrb[0].mxu0
        %7407 = vdwg.mxu0
        %7408 = vmatprep.subr.bf16.mxu0 0
        %7409 = vmatpush1.bf16.msra.mxu0 %v6192
        %7410 = vmatprep.subr.bf16.mxu0 0
        %7411 = vmatpush1.bf16.msra.mxu0 %v6193
        %7412 = vmatprep.subr.bf16.mxu0 0
        %7413 = vmatpush1.bf16.msra.mxu0 %v6194
        %7414 = vmatprep.subr.bf16.mxu0 0
        %7415 = vmatpush1.bf16.msra.mxu0 %v6195
        %7416 = vmatprep.subr.bf16.mxu0 0
        %7417 = vmatpush1.bf16.msra.mxu0 %v6196
        %7418 = vmatprep.subr.bf16.mxu0 0
        %7419 = vmatpush1.bf16.msra.mxu0 %v6197
        %7420 = vmatprep.subr.bf16.mxu0 0
        %7421 = vmatpush1.bf16.msra.mxu0 %v6198
        %7422 = vmatprep.subr.bf16.mxu0 0
        %7423 = vmatpush1.bf16.msra.mxu0 %v6199
        %7424 = vmatprep.subr.bf16.mxu0 0
        %7425 = vmatpush1.bf16.msra.mxu0 %v6200
        %7426 = vmatprep.subr.bf16.mxu0 0
        %7427 = vmatpush1.bf16.msra.mxu0 %v6201
        %7428 = vmatprep.subr.bf16.mxu0 0
        %7429 = vmatpush1.bf16.msra.mxu0 %v6202
        %7430 = vmatprep.subr.bf16.mxu0 0
        %7431 = vmatpush1.bf16.msra.mxu0 %v6203
        %7432 = vmatprep.subr.bf16.mxu0 0
        %7433 = vmatpush1.bf16.msra.mxu0 %v6204
        %7434 = vmatprep.subr.bf16.mxu0 0
        %7435 = vmatpush1.bf16.msra.mxu0 %v6205
        %7436 = vmatprep.subr.bf16.mxu0 0
        %7437 = vmatpush1.bf16.msra.mxu0 %v6206
        %7438 = vmatprep.subr.bf16.mxu0 0
        %7439 = vmatpush1.bf16.msra.mxu0 %v6207
        %7440 = vmatprep.mubr.bf16.mxu0 %v2944
        %7441 = vmatmul.mubr.bf16.gmra.mrb[0].mxu0 %v2943
        %v7442 = vpop.f32.mrb[0].mxu0
        %v7443 = vadd.f32 %v7403, %v7442
        %v7444 = vpop.f32.mrb[0].mxu0
        %v7445 = vpop.f32.mrb[0].mxu0
        %v7446 = vpop.f32.mrb[0].mxu0
        %7447 = vdwg.mxu0
        %7448 = vmatprep.subr.bf16.mxu0 0
        %7449 = vmatpush1.bf16.msra.mxu0 %v6208
        %7450 = vmatprep.subr.bf16.mxu0 0
        %7451 = vmatpush1.bf16.msra.mxu0 %v6209
        %7452 = vmatprep.subr.bf16.mxu0 0
        %7453 = vmatpush1.bf16.msra.mxu0 %v6210
        %7454 = vmatprep.subr.bf16.mxu0 0
        %7455 = vmatpush1.bf16.msra.mxu0 %v6211
        %7456 = vmatprep.subr.bf16.mxu0 0
        %7457 = vmatpush1.bf16.msra.mxu0 %v6212
        %7458 = vmatprep.subr.bf16.mxu0 0
        %7459 = vmatpush1.bf16.msra.mxu0 %v6213
        %7460 = vmatprep.subr.bf16.mxu0 0
        %7461 = vmatpush1.bf16.msra.mxu0 %v6214
        %7462 = vmatprep.subr.bf16.mxu0 0
        %7463 = vmatpush1.bf16.msra.mxu0 %v6215
        %7464 = vmatprep.subr.bf16.mxu0 0
        %7465 = vmatpush1.bf16.msra.mxu0 %v6216
        %7466 = vmatprep.subr.bf16.mxu0 0
        %7467 = vmatpush1.bf16.msra.mxu0 %v6217
        %7468 = vmatprep.subr.bf16.mxu0 0
        %7469 = vmatpush1.bf16.msra.mxu0 %v6218
        %7470 = vmatprep.subr.bf16.mxu0 0
        %7471 = vmatpush1.bf16.msra.mxu0 %v6219
        %7472 = vmatprep.subr.bf16.mxu0 0
        %7473 = vmatpush1.bf16.msra.mxu0 %v6220
        %7474 = vmatprep.subr.bf16.mxu0 0
        %7475 = vmatpush1.bf16.msra.mxu0 %v6221
        %7476 = vmatprep.subr.bf16.mxu0 0
        %7477 = vmatpush1.bf16.msra.mxu0 %v6222
        %7478 = vmatprep.subr.bf16.mxu0 0
        %7479 = vmatpush1.bf16.msra.mxu0 %v6223
        %7480 = vmatprep.mubr.bf16.mxu0 %v2946
        %7481 = vmatmul.mubr.bf16.gmra.mrb[0].mxu0 %v2945
        %v7482 = vpop.f32.mrb[0].mxu0
        %v7483 = vadd.f32 %v7443, %v7482
        %v7484 = vpop.f32.mrb[0].mxu0
        %v7485 = vpop.f32.mrb[0].mxu0
        %v7486 = vpop.f32.mrb[0].mxu0
        %7487 = vdwg.mxu0
        %7488 = vmatprep.subr.bf16.mxu0 0
        %7489 = vmatpush1.bf16.msra.mxu0 %v6224
        %7490 = vmatprep.subr.bf16.mxu0 0
        %7491 = vmatpush1.bf16.msra.mxu0 %v6225
        %7492 = vmatprep.subr.bf16.mxu0 0
        %7493 = vmatpush1.bf16.msra.mxu0 %v6226
        %7494 = vmatprep.subr.bf16.mxu0 0
        %7495 = vmatpush1.bf16.msra.mxu0 %v6227
        %7496 = vmatprep.subr.bf16.mxu0 0
        %7497 = vmatpush1.bf16.msra.mxu0 %v6228
        %7498 = vmatprep.subr.bf16.mxu0 0
        %7499 = vmatpush1.bf16.msra.mxu0 %v6229
        %7500 = vmatprep.subr.bf16.mxu0 0
        %7501 = vmatpush1.bf16.msra.mxu0 %v6230
        %7502 = vmatprep.subr.bf16.mxu0 0
        %7503 = vmatpush1.bf16.msra.mxu0 %v6231
        %7504 = vmatprep.subr.bf16.mxu0 0
        %7505 = vmatpush1.bf16.msra.mxu0 %v6232
        %7506 = vmatprep.subr.bf16.mxu0 0
        %7507 = vmatpush1.bf16.msra.mxu0 %v6233
        %7508 = vmatprep.subr.bf16.mxu0 0
        %7509 = vmatpush1.bf16.msra.mxu0 %v6234
        %7510 = vmatprep.subr.bf16.mxu0 0
        %7511 = vmatpush1.bf16.msra.mxu0 %v6235
        %7512 = vmatprep.subr.bf16.mxu0 0
        %7513 = vmatpush1.bf16.msra.mxu0 %v6236
        %7514 = vmatprep.subr.bf16.mxu0 0
        %7515 = vmatpush1.bf16.msra.mxu0 %v6237
        %7516 = vmatprep.subr.bf16.mxu0 0
        %7517 = vmatpush1.bf16.msra.mxu0 %v6238
        %7518 = vmatprep.subr.bf16.mxu0 0
        %7519 = vmatpush1.bf16.msra.mxu0 %v6239
        %7520 = vmatprep.mubr.bf16.mxu0 %v2948
        %7521 = vmatmul.mubr.bf16.gmra.mrb[0].mxu0 %v2947
        %v7522 = vpop.f32.mrb[0].mxu0
        %v7523 = vadd.f32 %v7483, %v7522
        %v7524 = vpop.f32.mrb[0].mxu0
        %v7525 = vpop.f32.mrb[0].mxu0
        %v7526 = vpop.f32.mrb[0].mxu0
        %7527 = vdwg.mxu0
        %7528 = vmatprep.subr.bf16.mxu0 0
        %7529 = vmatpush1.bf16.msra.mxu0 %v6240
        %7530 = vmatprep.subr.bf16.mxu0 0
        %7531 = vmatpush1.bf16.msra.mxu0 %v6241
        %7532 = vmatprep.subr.bf16.mxu0 0
        %7533 = vmatpush1.bf16.msra.mxu0 %v6242
        %7534 = vmatprep.subr.bf16.mxu0 0
        %7535 = vmatpush1.bf16.msra.mxu0 %v6243
        %7536 = vmatprep.subr.bf16.mxu0 0
        %7537 = vmatpush1.bf16.msra.mxu0 %v6244
        %7538 = vmatprep.subr.bf16.mxu0 0
        %7539 = vmatpush1.bf16.msra.mxu0 %v6245
        %7540 = vmatprep.subr.bf16.mxu0 0
        %7541 = vmatpush1.bf16.msra.mxu0 %v6246
        %7542 = vmatprep.subr.bf16.mxu0 0
        %7543 = vmatpush1.bf16.msra.mxu0 %v6247
        %7544 = vmatprep.subr.bf16.mxu0 0
        %7545 = vmatpush1.bf16.msra.mxu0 %v6248
        %7546 = vmatprep.subr.bf16.mxu0 0
        %7547 = vmatpush1.bf16.msra.mxu0 %v6249
        %7548 = vmatprep.subr.bf16.mxu0 0
        %7549 = vmatpush1.bf16.msra.mxu0 %v6250
        %7550 = vmatprep.subr.bf16.mxu0 0
        %7551 = vmatpush1.bf16.msra.mxu0 %v6251
        %7552 = vmatprep.subr.bf16.mxu0 0
        %7553 = vmatpush1.bf16.msra.mxu0 %v6252
        %7554 = vmatprep.subr.bf16.mxu0 0
        %7555 = vmatpush1.bf16.msra.mxu0 %v6253
        %7556 = vmatprep.subr.bf16.mxu0 0
        %7557 = vmatpush1.bf16.msra.mxu0 %v6254
        %7558 = vmatprep.subr.bf16.mxu0 0
        %7559 = vmatpush1.bf16.msra.mxu0 %v6255
        %7560 = vmatprep.mubr.bf16.mxu0 %v2950
        %7561 = vmatmul.mubr.bf16.gmra.mrb[0].mxu0 %v2949
        %v7562 = vpop.f32.mrb[0].mxu0
        %v7563 = vadd.f32 %v7523, %v7562
        %v7564 = vpop.f32.mrb[0].mxu0
        %v7565 = vpop.f32.mrb[0].mxu0
        %v7566 = vpop.f32.mrb[0].mxu0
        %7567 = vdwg.mxu0
        %7568 = vmatprep.subr.bf16.mxu0 0
        %7569 = vmatpush1.bf16.msra.mxu0 %v6256
        %7570 = vmatprep.subr.bf16.mxu0 0
        %7571 = vmatpush1.bf16.msra.mxu0 %v6257
        %7572 = vmatprep.subr.bf16.mxu0 0
        %7573 = vmatpush1.bf16.msra.mxu0 %v6258
        %7574 = vmatprep.subr.bf16.mxu0 0
        %7575 = vmatpush1.bf16.msra.mxu0 %v6259
        %7576 = vmatprep.subr.bf16.mxu0 0
        %7577 = vmatpush1.bf16.msra.mxu0 %v6260
        %7578 = vmatprep.subr.bf16.mxu0 0
        %7579 = vmatpush1.bf16.msra.mxu0 %v6261
        %7580 = vmatprep.subr.bf16.mxu0 0
        %7581 = vmatpush1.bf16.msra.mxu0 %v6262
        %7582 = vmatprep.subr.bf16.mxu0 0
        %7583 = vmatpush1.bf16.msra.mxu0 %v6263
        %7584 = vmatprep.subr.bf16.mxu0 0
        %7585 = vmatpush1.bf16.msra.mxu0 %v6264
        %7586 = vmatprep.subr.bf16.mxu0 0
        %7587 = vmatpush1.bf16.msra.mxu0 %v6265
        %7588 = vmatprep.subr.bf16.mxu0 0
        %7589 = vmatpush1.bf16.msra.mxu0 %v6266
        %7590 = vmatprep.subr.bf16.mxu0 0
        %7591 = vmatpush1.bf16.msra.mxu0 %v6267
        %7592 = vmatprep.subr.bf16.mxu0 0
        %7593 = vmatpush1.bf16.msra.mxu0 %v6268
        %7594 = vmatprep.subr.bf16.mxu0 0
        %7595 = vmatpush1.bf16.msra.mxu0 %v6269
        %7596 = vmatprep.subr.bf16.mxu0 0
        %7597 = vmatpush1.bf16.msra.mxu0 %v6270
        %7598 = vmatprep.subr.bf16.mxu0 0
        %7599 = vmatpush1.bf16.msra.mxu0 %v6271
        %7600 = vmatprep.mubr.bf16.mxu0 %v2952
        %7601 = vmatmul.mubr.bf16.gmra.mrb[0].mxu0 %v2951
        %v7602 = vpop.f32.mrb[0].mxu0
        %v7603 = vadd.f32 %v7563, %v7602
        %v7604 = vpop.f32.mrb[0].mxu0
        %v7605 = vpop.f32.mrb[0].mxu0
        %v7606 = vpop.f32.mrb[0].mxu0
        %7607 = vdwg.mxu0
        %7608 = vmatprep.subr.bf16.mxu0 0
        %7609 = vmatpush1.bf16.msra.mxu0 %v6272
        %7610 = vmatprep.subr.bf16.mxu0 0
        %7611 = vmatpush1.bf16.msra.mxu0 %v6273
        %7612 = vmatprep.subr.bf16.mxu0 0
        %7613 = vmatpush1.bf16.msra.mxu0 %v6274
        %7614 = vmatprep.subr.bf16.mxu0 0
        %7615 = vmatpush1.bf16.msra.mxu0 %v6275
        %7616 = vmatprep.subr.bf16.mxu0 0
        %7617 = vmatpush1.bf16.msra.mxu0 %v6276
        %7618 = vmatprep.subr.bf16.mxu0 0
        %7619 = vmatpush1.bf16.msra.mxu0 %v6277
        %7620 = vmatprep.subr.bf16.mxu0 0
        %7621 = vmatpush1.bf16.msra.mxu0 %v6278
        %7622 = vmatprep.subr.bf16.mxu0 0
        %7623 = vmatpush1.bf16.msra.mxu0 %v6279
        %7624 = vmatprep.subr.bf16.mxu0 0
        %7625 = vmatpush1.bf16.msra.mxu0 %v6280
        %7626 = vmatprep.subr.bf16.mxu0 0
        %7627 = vmatpush1.bf16.msra.mxu0 %v6281
        %7628 = vmatprep.subr.bf16.mxu0 0
        %7629 = vmatpush1.bf16.msra.mxu0 %v6282
        %7630 = vmatprep.subr.bf16.mxu0 0
        %7631 = vmatpush1.bf16.msra.mxu0 %v6283
        %7632 = vmatprep.subr.bf16.mxu0 0
        %7633 = vmatpush1.bf16.msra.mxu0 %v6284
        %7634 = vmatprep.subr.bf16.mxu0 0
        %7635 = vmatpush1.bf16.msra.mxu0 %v6285
        %7636 = vmatprep.subr.bf16.mxu0 0
        %7637 = vmatpush1.bf16.msra.mxu0 %v6286
        %7638 = vmatprep.subr.bf16.mxu0 0
        %7639 = vmatpush1.bf16.msra.mxu0 %v6287
        %7640 = vmatprep.mubr.bf16.mxu0 %v2954
        %7641 = vmatmul.mubr.bf16.gmra.mrb[0].mxu0 %v2953
        %v7642 = vpop.f32.mrb[0].mxu0
        %v7643 = vadd.f32 %v7603, %v7642
        %v7644 = vpop.f32.mrb[0].mxu0
        %v7645 = vpop.f32.mrb[0].mxu0
        %v7646 = vpop.f32.mrb[0].mxu0
        %7647 = vdwg.mxu0
        %7648 = vmatprep.subr.bf16.mxu0 0
        %7649 = vmatpush1.bf16.msra.mxu0 %v6288
        %7650 = vmatprep.subr.bf16.mxu0 0
        %7651 = vmatpush1.bf16.msra.mxu0 %v6289
        %7652 = vmatprep.subr.bf16.mxu0 0
        %7653 = vmatpush1.bf16.msra.mxu0 %v6290
        %7654 = vmatprep.subr.bf16.mxu0 0
        %7655 = vmatpush1.bf16.msra.mxu0 %v6291
        %7656 = vmatprep.subr.bf16.mxu0 0
        %7657 = vmatpush1.bf16.msra.mxu0 %v6292
        %7658 = vmatprep.subr.bf16.mxu0 0
        %7659 = vmatpush1.bf16.msra.mxu0 %v6293
        %7660 = vmatprep.subr.bf16.mxu0 0
        %7661 = vmatpush1.bf16.msra.mxu0 %v6294
        %7662 = vmatprep.subr.bf16.mxu0 0
        %7663 = vmatpush1.bf16.msra.mxu0 %v6295
        %7664 = vmatprep.subr.bf16.mxu0 0
        %7665 = vmatpush1.bf16.msra.mxu0 %v6296
        %7666 = vmatprep.subr.bf16.mxu0 0
        %7667 = vmatpush1.bf16.msra.mxu0 %v6297
        %7668 = vmatprep.subr.bf16.mxu0 0
        %7669 = vmatpush1.bf16.msra.mxu0 %v6298
        %7670 = vmatprep.subr.bf16.mxu0 0
        %7671 = vmatpush1.bf16.msra.mxu0 %v6299
        %7672 = vmatprep.subr.bf16.mxu0 0
        %7673 = vmatpush1.bf16.msra.mxu0 %v6300
        %7674 = vmatprep.subr.bf16.mxu0 0
        %7675 = vmatpush1.bf16.msra.mxu0 %v6301
        %7676 = vmatprep.subr.bf16.mxu0 0
        %7677 = vmatpush1.bf16.msra.mxu0 %v6302
        %7678 = vmatprep.subr.bf16.mxu0 0
        %7679 = vmatpush1.bf16.msra.mxu0 %v6303
        %7680 = vmatprep.mubr.bf16.mxu0 %v2956
        %7681 = vmatmul.mubr.bf16.gmra.mrb[0].mxu0 %v2955
        %v7682 = vpop.f32.mrb[0].mxu0
        %v7683 = vadd.f32 %v7643, %v7682
        %v7684 = vpop.f32.mrb[0].mxu0
        %v7685 = vpop.f32.mrb[0].mxu0
        %v7686 = vpop.f32.mrb[0].mxu0
        %7687 = vdwg.mxu0
        %7688 = vmatprep.subr.bf16.mxu0 0
        %7689 = vmatpush1.bf16.msra.mxu0 %v6304
        %7690 = vmatprep.subr.bf16.mxu0 0
        %7691 = vmatpush1.bf16.msra.mxu0 %v6305
        %7692 = vmatprep.subr.bf16.mxu0 0
        %7693 = vmatpush1.bf16.msra.mxu0 %v6306
        %7694 = vmatprep.subr.bf16.mxu0 0
        %7695 = vmatpush1.bf16.msra.mxu0 %v6307
        %7696 = vmatprep.subr.bf16.mxu0 0
        %7697 = vmatpush1.bf16.msra.mxu0 %v6308
        %7698 = vmatprep.subr.bf16.mxu0 0
        %7699 = vmatpush1.bf16.msra.mxu0 %v6309
        %7700 = vmatprep.subr.bf16.mxu0 0
        %7701 = vmatpush1.bf16.msra.mxu0 %v6310
        %7702 = vmatprep.subr.bf16.mxu0 0
        %7703 = vmatpush1.bf16.msra.mxu0 %v6311
        %7704 = vmatprep.subr.bf16.mxu0 0
        %7705 = vmatpush1.bf16.msra.mxu0 %v6312
        %7706 = vmatprep.subr.bf16.mxu0 0
        %7707 = vmatpush1.bf16.msra.mxu0 %v6313
        %7708 = vmatprep.subr.bf16.mxu0 0
        %7709 = vmatpush1.bf16.msra.mxu0 %v6314
        %7710 = vmatprep.subr.bf16.mxu0 0
        %7711 = vmatpush1.bf16.msra.mxu0 %v6315
        %7712 = vmatprep.subr.bf16.mxu0 0
        %7713 = vmatpush1.bf16.msra.mxu0 %v6316
        %7714 = vmatprep.subr.bf16.mxu0 0
        %7715 = vmatpush1.bf16.msra.mxu0 %v6317
        %7716 = vmatprep.subr.bf16.mxu0 0
        %7717 = vmatpush1.bf16.msra.mxu0 %v6318
        %7718 = vmatprep.subr.bf16.mxu0 0
        %7719 = vmatpush1.bf16.msra.mxu0 %v6319
        %7720 = vmatprep.mubr.bf16.mxu0 %v2958
        %7721 = vmatmul.mubr.bf16.gmra.mrb[0].mxu0 %v2957
        %v7722 = vpop.f32.mrb[0].mxu0
        %v7723 = vadd.f32 %v7683, %v7722
        %v7724 = vpop.f32.mrb[0].mxu0
        %v7725 = vpop.f32.mrb[0].mxu0
        %v7726 = vpop.f32.mrb[0].mxu0
        %7727 = vdwg.mxu0
        %7728 = vmatprep.subr.bf16.mxu0 0
        %7729 = vmatpush1.bf16.msra.mxu0 %v6320
        %7730 = vmatprep.subr.bf16.mxu0 0
        %7731 = vmatpush1.bf16.msra.mxu0 %v6321
        %7732 = vmatprep.subr.bf16.mxu0 0
        %7733 = vmatpush1.bf16.msra.mxu0 %v6322
        %7734 = vmatprep.subr.bf16.mxu0 0
        %7735 = vmatpush1.bf16.msra.mxu0 %v6323
        %7736 = vmatprep.subr.bf16.mxu0 0
        %7737 = vmatpush1.bf16.msra.mxu0 %v6324
        %7738 = vmatprep.subr.bf16.mxu0 0
        %7739 = vmatpush1.bf16.msra.mxu0 %v6325
        %7740 = vmatprep.subr.bf16.mxu0 0
        %7741 = vmatpush1.bf16.msra.mxu0 %v6326
        %7742 = vmatprep.subr.bf16.mxu0 0
        %7743 = vmatpush1.bf16.msra.mxu0 %v6327
        %7744 = vmatprep.subr.bf16.mxu0 0
        %7745 = vmatpush1.bf16.msra.mxu0 %v6328
        %7746 = vmatprep.subr.bf16.mxu0 0
        %7747 = vmatpush1.bf16.msra.mxu0 %v6329
        %7748 = vmatprep.subr.bf16.mxu0 0
        %7749 = vmatpush1.bf16.msra.mxu0 %v6330
        %7750 = vmatprep.subr.bf16.mxu0 0
        %7751 = vmatpush1.bf16.msra.mxu0 %v6331
        %7752 = vmatprep.subr.bf16.mxu0 0
        %7753 = vmatpush1.bf16.msra.mxu0 %v6332
        %7754 = vmatprep.subr.bf16.mxu0 0
        %7755 = vmatpush1.bf16.msra.mxu0 %v6333
        %7756 = vmatprep.subr.bf16.mxu0 0
        %7757 = vmatpush1.bf16.msra.mxu0 %v6334
        %7758 = vmatprep.subr.bf16.mxu0 0
        %7759 = vmatpush1.bf16.msra.mxu0 %v6335
        %7760 = vmatprep.mubr.bf16.mxu0 %v2960
        %7761 = vmatmul.mubr.bf16.gmra.mrb[0].mxu0 %v2959
        %v7762 = vpop.f32.mrb[0].mxu0
        %v7763 = vadd.f32 %v7723, %v7762
        %v7764 = vpop.f32.mrb[0].mxu0
        %v7765 = vpop.f32.mrb[0].mxu0
        %v7766 = vpop.f32.mrb[0].mxu0
        %7767 = vdwg.mxu0
        %7768 = vmatprep.subr.bf16.mxu0 0
        %7769 = vmatpush1.bf16.msra.mxu0 %v6336
        %7770 = vmatprep.subr.bf16.mxu0 0
        %7771 = vmatpush1.bf16.msra.mxu0 %v6337
        %7772 = vmatprep.subr.bf16.mxu0 0
        %7773 = vmatpush1.bf16.msra.mxu0 %v6338
        %7774 = vmatprep.subr.bf16.mxu0 0
        %7775 = vmatpush1.bf16.msra.mxu0 %v6339
        %7776 = vmatprep.subr.bf16.mxu0 0
        %7777 = vmatpush1.bf16.msra.mxu0 %v6340
        %7778 = vmatprep.subr.bf16.mxu0 0
        %7779 = vmatpush1.bf16.msra.mxu0 %v6341
        %7780 = vmatprep.subr.bf16.mxu0 0
        %7781 = vmatpush1.bf16.msra.mxu0 %v6342
        %7782 = vmatprep.subr.bf16.mxu0 0
        %7783 = vmatpush1.bf16.msra.mxu0 %v6343
        %7784 = vmatprep.subr.bf16.mxu0 0
        %7785 = vmatpush1.bf16.msra.mxu0 %v6344
        %7786 = vmatprep.subr.bf16.mxu0 0
        %7787 = vmatpush1.bf16.msra.mxu0 %v6345
        %7788 = vmatprep.subr.bf16.mxu0 0
        %7789 = vmatpush1.bf16.msra.mxu0 %v6346
        %7790 = vmatprep.subr.bf16.mxu0 0
        %7791 = vmatpush1.bf16.msra.mxu0 %v6347
        %7792 = vmatprep.subr.bf16.mxu0 0
        %7793 = vmatpush1.bf16.msra.mxu0 %v6348
        %7794 = vmatprep.subr.bf16.mxu0 0
        %7795 = vmatpush1.bf16.msra.mxu0 %v6349
        %7796 = vmatprep.subr.bf16.mxu0 0
        %7797 = vmatpush1.bf16.msra.mxu0 %v6350
        %7798 = vmatprep.subr.bf16.mxu0 0
        %7799 = vmatpush1.bf16.msra.mxu0 %v6351
        %7800 = vmatprep.mubr.bf16.mxu0 %v2962
        %7801 = vmatmul.mubr.bf16.gmra.mrb[0].mxu0 %v2961
        %v7802 = vpop.f32.mrb[0].mxu0
        %v7803 = vadd.f32 %v7763, %v7802
        %v7804 = vpop.f32.mrb[0].mxu0
        %v7805 = vpop.f32.mrb[0].mxu0
        %v7806 = vpop.f32.mrb[0].mxu0
        %7807 = vdwg.mxu0
        %7808 = vmatprep.subr.bf16.mxu0 0
        %7809 = vmatpush1.bf16.msra.mxu0 %v6352
        %7810 = vmatprep.subr.bf16.mxu0 0
        %7811 = vmatpush1.bf16.msra.mxu0 %v6353
        %7812 = vmatprep.subr.bf16.mxu0 0
        %7813 = vmatpush1.bf16.msra.mxu0 %v6354
        %7814 = vmatprep.subr.bf16.mxu0 0
        %7815 = vmatpush1.bf16.msra.mxu0 %v6355
        %7816 = vmatprep.subr.bf16.mxu0 0
        %7817 = vmatpush1.bf16.msra.mxu0 %v6356
        %7818 = vmatprep.subr.bf16.mxu0 0
        %7819 = vmatpush1.bf16.msra.mxu0 %v6357
        %7820 = vmatprep.subr.bf16.mxu0 0
        %7821 = vmatpush1.bf16.msra.mxu0 %v6358
        %7822 = vmatprep.subr.bf16.mxu0 0
        %7823 = vmatpush1.bf16.msra.mxu0 %v6359
        %7824 = vmatprep.subr.bf16.mxu0 0
        %7825 = vmatpush1.bf16.msra.mxu0 %v6360
        %7826 = vmatprep.subr.bf16.mxu0 0
        %7827 = vmatpush1.bf16.msra.mxu0 %v6361
        %7828 = vmatprep.subr.bf16.mxu0 0
        %7829 = vmatpush1.bf16.msra.mxu0 %v6362
        %7830 = vmatprep.subr.bf16.mxu0 0
        %7831 = vmatpush1.bf16.msra.mxu0 %v6363
        %7832 = vmatprep.subr.bf16.mxu0 0
        %7833 = vmatpush1.bf16.msra.mxu0 %v6364
        %7834 = vmatprep.subr.bf16.mxu0 0
        %7835 = vmatpush1.bf16.msra.mxu0 %v6365
        %7836 = vmatprep.subr.bf16.mxu0 0
        %7837 = vmatpush1.bf16.msra.mxu0 %v6366
        %7838 = vmatprep.subr.bf16.mxu0 0
        %7839 = vmatpush1.bf16.msra.mxu0 %v6367
        %7840 = vmatprep.mubr.bf16.mxu0 %v2964
        %7841 = vmatmul.mubr.bf16.gmra.mrb[0].mxu0 %v2963
        %v7842 = vpop.f32.mrb[0].mxu0
        %v7843 = vadd.f32 %v7803, %v7842
        %v7844 = vpop.f32.mrb[0].mxu0
        %v7845 = vpop.f32.mrb[0].mxu0
        %v7846 = vpop.f32.mrb[0].mxu0
        %7847 = vdwg.mxu0
        %7848 = vmatprep.subr.bf16.mxu0 0
        %7849 = vmatpush1.bf16.msra.mxu0 %v6368
        %7850 = vmatprep.subr.bf16.mxu0 0
        %7851 = vmatpush1.bf16.msra.mxu0 %v6369
        %7852 = vmatprep.subr.bf16.mxu0 0
        %7853 = vmatpush1.bf16.msra.mxu0 %v6370
        %7854 = vmatprep.subr.bf16.mxu0 0
        %7855 = vmatpush1.bf16.msra.mxu0 %v6371
        %7856 = vmatprep.subr.bf16.mxu0 0
        %7857 = vmatpush1.bf16.msra.mxu0 %v6372
        %7858 = vmatprep.subr.bf16.mxu0 0
        %7859 = vmatpush1.bf16.msra.mxu0 %v6373
        %7860 = vmatprep.subr.bf16.mxu0 0
        %7861 = vmatpush1.bf16.msra.mxu0 %v6374
        %7862 = vmatprep.subr.bf16.mxu0 0
        %7863 = vmatpush1.bf16.msra.mxu0 %v6375
        %7864 = vmatprep.subr.bf16.mxu0 0
        %7865 = vmatpush1.bf16.msra.mxu0 %v6376
        %7866 = vmatprep.subr.bf16.mxu0 0
        %7867 = vmatpush1.bf16.msra.mxu0 %v6377
        %7868 = vmatprep.subr.bf16.mxu0 0
        %7869 = vmatpush1.bf16.msra.mxu0 %v6378
        %7870 = vmatprep.subr.bf16.mxu0 0
        %7871 = vmatpush1.bf16.msra.mxu0 %v6379
        %7872 = vmatprep.subr.bf16.mxu0 0
        %7873 = vmatpush1.bf16.msra.mxu0 %v6380
        %7874 = vmatprep.subr.bf16.mxu0 0
        %7875 = vmatpush1.bf16.msra.mxu0 %v6381
        %7876 = vmatprep.subr.bf16.mxu0 0
        %7877 = vmatpush1.bf16.msra.mxu0 %v6382
        %7878 = vmatprep.subr.bf16.mxu0 0
        %7879 = vmatpush1.bf16.msra.mxu0 %v6383
        %7880 = vmatprep.mubr.bf16.mxu0 %v2966
        %7881 = vmatmul.mubr.bf16.gmra.mrb[0].mxu0 %v2965
        %v7882 = vpop.f32.mrb[0].mxu0
        %v7883 = vadd.f32 %v7843, %v7882
        %v7884 = vpop.f32.mrb[0].mxu0
        %v7885 = vpop.f32.mrb[0].mxu0
        %v7886 = vpop.f32.mrb[0].mxu0
        %7887 = vdwg.mxu0
        %7888 = vmatprep.subr.bf16.mxu0 0
        %7889 = vmatpush1.bf16.msra.mxu0 %v6384
        %7890 = vmatprep.subr.bf16.mxu0 0
        %7891 = vmatpush1.bf16.msra.mxu0 %v6385
        %7892 = vmatprep.subr.bf16.mxu0 0
        %7893 = vmatpush1.bf16.msra.mxu0 %v6386
        %7894 = vmatprep.subr.bf16.mxu0 0
        %7895 = vmatpush1.bf16.msra.mxu0 %v6387
        %7896 = vmatprep.subr.bf16.mxu0 0
        %7897 = vmatpush1.bf16.msra.mxu0 %v6388
        %7898 = vmatprep.subr.bf16.mxu0 0
        %7899 = vmatpush1.bf16.msra.mxu0 %v6389
        %7900 = vmatprep.subr.bf16.mxu0 0
        %7901 = vmatpush1.bf16.msra.mxu0 %v6390
        %7902 = vmatprep.subr.bf16.mxu0 0
        %7903 = vmatpush1.bf16.msra.mxu0 %v6391
        %7904 = vmatprep.subr.bf16.mxu0 0
        %7905 = vmatpush1.bf16.msra.mxu0 %v6392
        %7906 = vmatprep.subr.bf16.mxu0 0
        %7907 = vmatpush1.bf16.msra.mxu0 %v6393
        %7908 = vmatprep.subr.bf16.mxu0 0
        %7909 = vmatpush1.bf16.msra.mxu0 %v6394
        %7910 = vmatprep.subr.bf16.mxu0 0
        %7911 = vmatpush1.bf16.msra.mxu0 %v6395
        %7912 = vmatprep.subr.bf16.mxu0 0
        %7913 = vmatpush1.bf16.msra.mxu0 %v6396
        %7914 = vmatprep.subr.bf16.mxu0 0
        %7915 = vmatpush1.bf16.msra.mxu0 %v6397
        %7916 = vmatprep.subr.bf16.mxu0 0
        %7917 = vmatpush1.bf16.msra.mxu0 %v6398
        %7918 = vmatprep.subr.bf16.mxu0 0
        %7919 = vmatpush1.bf16.msra.mxu0 %v6399
        %7920 = vmatprep.mubr.bf16.mxu0 %v2968
        %7921 = vmatmul.mubr.bf16.gmra.mrb[0].mxu0 %v2967
        %v7922 = vpop.f32.mrb[0].mxu0
        %v7923 = vadd.f32 %v7883, %v7922
        %v7924 = vpop.f32.mrb[0].mxu0
        %v7925 = vpop.f32.mrb[0].mxu0
        %v7926 = vpop.f32.mrb[0].mxu0
        %7927 = vdwg.mxu0
        %7928 = vmatprep.subr.bf16.mxu0 0
        %7929 = vmatpush1.bf16.msra.mxu0 %v6400
        %7930 = vmatprep.subr.bf16.mxu0 0
        %7931 = vmatpush1.bf16.msra.mxu0 %v6401
        %7932 = vmatprep.subr.bf16.mxu0 0
        %7933 = vmatpush1.bf16.msra.mxu0 %v6402
        %7934 = vmatprep.subr.bf16.mxu0 0
        %7935 = vmatpush1.bf16.msra.mxu0 %v6403
        %7936 = vmatprep.subr.bf16.mxu0 0
        %7937 = vmatpush1.bf16.msra.mxu0 %v6404
        %7938 = vmatprep.subr.bf16.mxu0 0
        %7939 = vmatpush1.bf16.msra.mxu0 %v6405
        %7940 = vmatprep.subr.bf16.mxu0 0
        %7941 = vmatpush1.bf16.msra.mxu0 %v6406
        %7942 = vmatprep.subr.bf16.mxu0 0
        %7943 = vmatpush1.bf16.msra.mxu0 %v6407
        %7944 = vmatprep.subr.bf16.mxu0 0
        %7945 = vmatpush1.bf16.msra.mxu0 %v6408
        %7946 = vmatprep.subr.bf16.mxu0 0
        %7947 = vmatpush1.bf16.msra.mxu0 %v6409
        %7948 = vmatprep.subr.bf16.mxu0 0
        %7949 = vmatpush1.bf16.msra.mxu0 %v6410
        %7950 = vmatprep.subr.bf16.mxu0 0
        %7951 = vmatpush1.bf16.msra.mxu0 %v6411
        %7952 = vmatprep.subr.bf16.mxu0 0
        %7953 = vmatpush1.bf16.msra.mxu0 %v6412
        %7954 = vmatprep.subr.bf16.mxu0 0
        %7955 = vmatpush1.bf16.msra.mxu0 %v6413
        %7956 = vmatprep.subr.bf16.mxu0 0
        %7957 = vmatpush1.bf16.msra.mxu0 %v6414
        %7958 = vmatprep.subr.bf16.mxu0 0
        %7959 = vmatpush1.bf16.msra.mxu0 %v6415
        %7960 = vmatprep.mubr.bf16.mxu0 %v2970
        %7961 = vmatmul.mubr.bf16.gmra.mrb[0].mxu0 %v2969
        %v7962 = vpop.f32.mrb[0].mxu0
        %v7963 = vadd.f32 %v7923, %v7962
        %v7964 = vpop.f32.mrb[0].mxu0
        %v7965 = vpop.f32.mrb[0].mxu0
        %v7966 = vpop.f32.mrb[0].mxu0
        %7967 = vdwg.mxu0
        %7968 = vmatprep.subr.bf16.mxu0 0
        %7969 = vmatpush1.bf16.msra.mxu0 %v6416
        %7970 = vmatprep.subr.bf16.mxu0 0
        %7971 = vmatpush1.bf16.msra.mxu0 %v6417
        %7972 = vmatprep.subr.bf16.mxu0 0
        %7973 = vmatpush1.bf16.msra.mxu0 %v6418
        %7974 = vmatprep.subr.bf16.mxu0 0
        %7975 = vmatpush1.bf16.msra.mxu0 %v6419
        %7976 = vmatprep.subr.bf16.mxu0 0
        %7977 = vmatpush1.bf16.msra.mxu0 %v6420
        %7978 = vmatprep.subr.bf16.mxu0 0
        %7979 = vmatpush1.bf16.msra.mxu0 %v6421
        %7980 = vmatprep.subr.bf16.mxu0 0
        %7981 = vmatpush1.bf16.msra.mxu0 %v6422
        %7982 = vmatprep.subr.bf16.mxu0 0
        %7983 = vmatpush1.bf16.msra.mxu0 %v6423
        %7984 = vmatprep.subr.bf16.mxu0 0
        %7985 = vmatpush1.bf16.msra.mxu0 %v6424
        %7986 = vmatprep.subr.bf16.mxu0 0
        %7987 = vmatpush1.bf16.msra.mxu0 %v6425
        %7988 = vmatprep.subr.bf16.mxu0 0
        %7989 = vmatpush1.bf16.msra.mxu0 %v6426
        %7990 = vmatprep.subr.bf16.mxu0 0
        %7991 = vmatpush1.bf16.msra.mxu0 %v6427
        %7992 = vmatprep.subr.bf16.mxu0 0
        %7993 = vmatpush1.bf16.msra.mxu0 %v6428
        %7994 = vmatprep.subr.bf16.mxu0 0
        %7995 = vmatpush1.bf16.msra.mxu0 %v6429
        %7996 = vmatprep.subr.bf16.mxu0 0
        %7997 = vmatpush1.bf16.msra.mxu0 %v6430
        %7998 = vmatprep.subr.bf16.mxu0 0
        %7999 = vmatpush1.bf16.msra.mxu0 %v6431
        %8000 = vmatprep.mubr.bf16.mxu0 %v2972
        %8001 = vmatmul.mubr.bf16.gmra.mrb[0].mxu0 %v2971
        %v8002 = vpop.f32.mrb[0].mxu0
        %v8003 = vadd.f32 %v7963, %v8002
        %v8004 = vpop.f32.mrb[0].mxu0
        %v8005 = vpop.f32.mrb[0].mxu0
        %v8006 = vpop.f32.mrb[0].mxu0
        %8007 = vdwg.mxu0
        %8008 = vmatprep.subr.bf16.mxu0 0
        %8009 = vmatpush1.bf16.msra.mxu0 %v6432
        %8010 = vmatprep.subr.bf16.mxu0 0
        %8011 = vmatpush1.bf16.msra.mxu0 %v6433
        %8012 = vmatprep.subr.bf16.mxu0 0
        %8013 = vmatpush1.bf16.msra.mxu0 %v6434
        %8014 = vmatprep.subr.bf16.mxu0 0
        %8015 = vmatpush1.bf16.msra.mxu0 %v6435
        %8016 = vmatprep.subr.bf16.mxu0 0
        %8017 = vmatpush1.bf16.msra.mxu0 %v6436
        %8018 = vmatprep.subr.bf16.mxu0 0
        %8019 = vmatpush1.bf16.msra.mxu0 %v6437
        %8020 = vmatprep.subr.bf16.mxu0 0
        %8021 = vmatpush1.bf16.msra.mxu0 %v6438
        %8022 = vmatprep.subr.bf16.mxu0 0
        %8023 = vmatpush1.bf16.msra.mxu0 %v6439
        %8024 = vmatprep.subr.bf16.mxu0 0
        %8025 = vmatpush1.bf16.msra.mxu0 %v6440
        %8026 = vmatprep.subr.bf16.mxu0 0
        %8027 = vmatpush1.bf16.msra.mxu0 %v6441
        %8028 = vmatprep.subr.bf16.mxu0 0
        %8029 = vmatpush1.bf16.msra.mxu0 %v6442
        %8030 = vmatprep.subr.bf16.mxu0 0
        %8031 = vmatpush1.bf16.msra.mxu0 %v6443
        %8032 = vmatprep.subr.bf16.mxu0 0
        %8033 = vmatpush1.bf16.msra.mxu0 %v6444
        %8034 = vmatprep.subr.bf16.mxu0 0
        %8035 = vmatpush1.bf16.msra.mxu0 %v6445
        %8036 = vmatprep.subr.bf16.mxu0 0
        %8037 = vmatpush1.bf16.msra.mxu0 %v6446
        %8038 = vmatprep.subr.bf16.mxu0 0
        %8039 = vmatpush1.bf16.msra.mxu0 %v6447
        %8040 = vmatprep.mubr.bf16.mxu0 %v2974
        %8041 = vmatmul.mubr.bf16.gmra.mrb[0].mxu0 %v2973
        %v8042 = vpop.f32.mrb[0].mxu0
        %v8043 = vadd.f32 %v8003, %v8042
        %v8044 = vpop.f32.mrb[0].mxu0
        %v8045 = vpop.f32.mrb[0].mxu0
        %v8046 = vpop.f32.mrb[0].mxu0
        %8047 = vdwg.mxu0
        %8048 = vmatprep.subr.bf16.mxu0 0
        %8049 = vmatpush1.bf16.msra.mxu0 %v6448
        %8050 = vmatprep.subr.bf16.mxu0 0
        %8051 = vmatpush1.bf16.msra.mxu0 %v6449
        %8052 = vmatprep.subr.bf16.mxu0 0
        %8053 = vmatpush1.bf16.msra.mxu0 %v6450
        %8054 = vmatprep.subr.bf16.mxu0 0
        %8055 = vmatpush1.bf16.msra.mxu0 %v6451
        %8056 = vmatprep.subr.bf16.mxu0 0
        %8057 = vmatpush1.bf16.msra.mxu0 %v6452
        %8058 = vmatprep.subr.bf16.mxu0 0
        %8059 = vmatpush1.bf16.msra.mxu0 %v6453
        %8060 = vmatprep.subr.bf16.mxu0 0
        %8061 = vmatpush1.bf16.msra.mxu0 %v6454
        %8062 = vmatprep.subr.bf16.mxu0 0
        %8063 = vmatpush1.bf16.msra.mxu0 %v6455
        %8064 = vmatprep.subr.bf16.mxu0 0
        %8065 = vmatpush1.bf16.msra.mxu0 %v6456
        %8066 = vmatprep.subr.bf16.mxu0 0
        %8067 = vmatpush1.bf16.msra.mxu0 %v6457
        %8068 = vmatprep.subr.bf16.mxu0 0
        %8069 = vmatpush1.bf16.msra.mxu0 %v6458
        %8070 = vmatprep.subr.bf16.mxu0 0
        %8071 = vmatpush1.bf16.msra.mxu0 %v6459
        %8072 = vmatprep.subr.bf16.mxu0 0
        %8073 = vmatpush1.bf16.msra.mxu0 %v6460
        %8074 = vmatprep.subr.bf16.mxu0 0
        %8075 = vmatpush1.bf16.msra.mxu0 %v6461
        %8076 = vmatprep.subr.bf16.mxu0 0
        %8077 = vmatpush1.bf16.msra.mxu0 %v6462
        %8078 = vmatprep.subr.bf16.mxu0 0
        %8079 = vmatpush1.bf16.msra.mxu0 %v6463
        %8080 = vmatprep.mubr.bf16.mxu0 %v2976
        %8081 = vmatmul.mubr.bf16.gmra.mrb[0].mxu0 %v2975
        %v8082 = vpop.f32.mrb[0].mxu0
        %v8083 = vadd.f32 %v8043, %v8082
        %v8084 = vpop.f32.mrb[0].mxu0
        %v8085 = vpop.f32.mrb[0].mxu0
        %v8086 = vpop.f32.mrb[0].mxu0
        %8087 = vdwg.mxu0
        %8088 = vmatprep.subr.bf16.mxu0 0
        %8089 = vmatpush1.bf16.msra.mxu0 %v6464
        %8090 = vmatprep.subr.bf16.mxu0 0
        %8091 = vmatpush1.bf16.msra.mxu0 %v6465
        %8092 = vmatprep.subr.bf16.mxu0 0
        %8093 = vmatpush1.bf16.msra.mxu0 %v6466
        %8094 = vmatprep.subr.bf16.mxu0 0
        %8095 = vmatpush1.bf16.msra.mxu0 %v6467
        %8096 = vmatprep.subr.bf16.mxu0 0
        %8097 = vmatpush1.bf16.msra.mxu0 %v6468
        %8098 = vmatprep.subr.bf16.mxu0 0
        %8099 = vmatpush1.bf16.msra.mxu0 %v6469
        %8100 = vmatprep.subr.bf16.mxu0 0
        %8101 = vmatpush1.bf16.msra.mxu0 %v6470
        %8102 = vmatprep.subr.bf16.mxu0 0
        %8103 = vmatpush1.bf16.msra.mxu0 %v6471
        %8104 = vmatprep.subr.bf16.mxu0 0
        %8105 = vmatpush1.bf16.msra.mxu0 %v6472
        %8106 = vmatprep.subr.bf16.mxu0 0
        %8107 = vmatpush1.bf16.msra.mxu0 %v6473
        %8108 = vmatprep.subr.bf16.mxu0 0
        %8109 = vmatpush1.bf16.msra.mxu0 %v6474
        %8110 = vmatprep.subr.bf16.mxu0 0
        %8111 = vmatpush1.bf16.msra.mxu0 %v6475
        %8112 = vmatprep.subr.bf16.mxu0 0
        %8113 = vmatpush1.bf16.msra.mxu0 %v6476
        %8114 = vmatprep.subr.bf16.mxu0 0
        %8115 = vmatpush1.bf16.msra.mxu0 %v6477
        %8116 = vmatprep.subr.bf16.mxu0 0
        %8117 = vmatpush1.bf16.msra.mxu0 %v6478
        %8118 = vmatprep.subr.bf16.mxu0 0
        %8119 = vmatpush1.bf16.msra.mxu0 %v6479
        %8120 = vmatprep.mubr.bf16.mxu0 %v2978
        %8121 = vmatmul.mubr.bf16.gmra.mrb[0].mxu0 %v2977
        %v8122 = vpop.f32.mrb[0].mxu0
        %v8123 = vadd.f32 %v8083, %v8122
        %v8124 = vpop.f32.mrb[0].mxu0
        %v8125 = vpop.f32.mrb[0].mxu0
        %v8126 = vpop.f32.mrb[0].mxu0
        %8127 = vdwg.mxu0
        %8128 = vmatprep.subr.bf16.mxu0 0
        %8129 = vmatpush1.bf16.msra.mxu0 %v6480
        %8130 = vmatprep.subr.bf16.mxu0 0
        %8131 = vmatpush1.bf16.msra.mxu0 %v6481
        %8132 = vmatprep.subr.bf16.mxu0 0
        %8133 = vmatpush1.bf16.msra.mxu0 %v6482
        %8134 = vmatprep.subr.bf16.mxu0 0
        %8135 = vmatpush1.bf16.msra.mxu0 %v6483
        %8136 = vmatprep.subr.bf16.mxu0 0
        %8137 = vmatpush1.bf16.msra.mxu0 %v6484
        %8138 = vmatprep.subr.bf16.mxu0 0
        %8139 = vmatpush1.bf16.msra.mxu0 %v6485
        %8140 = vmatprep.subr.bf16.mxu0 0
        %8141 = vmatpush1.bf16.msra.mxu0 %v6486
        %8142 = vmatprep.subr.bf16.mxu0 0
        %8143 = vmatpush1.bf16.msra.mxu0 %v6487
        %8144 = vmatprep.subr.bf16.mxu0 0
        %8145 = vmatpush1.bf16.msra.mxu0 %v6488
        %8146 = vmatprep.subr.bf16.mxu0 0
        %8147 = vmatpush1.bf16.msra.mxu0 %v6489
        %8148 = vmatprep.subr.bf16.mxu0 0
        %8149 = vmatpush1.bf16.msra.mxu0 %v6490
        %8150 = vmatprep.subr.bf16.mxu0 0
        %8151 = vmatpush1.bf16.msra.mxu0 %v6491
        %8152 = vmatprep.subr.bf16.mxu0 0
        %8153 = vmatpush1.bf16.msra.mxu0 %v6492
        %8154 = vmatprep.subr.bf16.mxu0 0
        %8155 = vmatpush1.bf16.msra.mxu0 %v6493
        %8156 = vmatprep.subr.bf16.mxu0 0
        %8157 = vmatpush1.bf16.msra.mxu0 %v6494
        %8158 = vmatprep.subr.bf16.mxu0 0
        %8159 = vmatpush1.bf16.msra.mxu0 %v6495
        %8160 = vmatprep.mubr.bf16.mxu0 %v2980
        %8161 = vmatmul.mubr.bf16.gmra.mrb[0].mxu0 %v2979
        %v8162 = vpop.f32.mrb[0].mxu0
        %v8163 = vadd.f32 %v8123, %v8162
        %v8164 = vpop.f32.mrb[0].mxu0
        %v8165 = vpop.f32.mrb[0].mxu0
        %v8166 = vpop.f32.mrb[0].mxu0
        %8167 = vdwg.mxu0
        %8168 = vmatprep.subr.bf16.mxu0 0
        %8169 = vmatpush1.bf16.msra.mxu0 %v6496
        %8170 = vmatprep.subr.bf16.mxu0 0
        %8171 = vmatpush1.bf16.msra.mxu0 %v6497
        %8172 = vmatprep.subr.bf16.mxu0 0
        %8173 = vmatpush1.bf16.msra.mxu0 %v6498
        %8174 = vmatprep.subr.bf16.mxu0 0
        %8175 = vmatpush1.bf16.msra.mxu0 %v6499
        %8176 = vmatprep.subr.bf16.mxu0 0
        %8177 = vmatpush1.bf16.msra.mxu0 %v6500
        %8178 = vmatprep.subr.bf16.mxu0 0
        %8179 = vmatpush1.bf16.msra.mxu0 %v6501
        %8180 = vmatprep.subr.bf16.mxu0 0
        %8181 = vmatpush1.bf16.msra.mxu0 %v6502
        %8182 = vmatprep.subr.bf16.mxu0 0
        %8183 = vmatpush1.bf16.msra.mxu0 %v6503
        %8184 = vmatprep.subr.bf16.mxu0 0
        %8185 = vmatpush1.bf16.msra.mxu0 %v6504
        %8186 = vmatprep.subr.bf16.mxu0 0
        %8187 = vmatpush1.bf16.msra.mxu0 %v6505
        %8188 = vmatprep.subr.bf16.mxu0 0
        %8189 = vmatpush1.bf16.msra.mxu0 %v6506
        %8190 = vmatprep.subr.bf16.mxu0 0
        %8191 = vmatpush1.bf16.msra.mxu0 %v6507
        %8192 = vmatprep.subr.bf16.mxu0 0
        %8193 = vmatpush1.bf16.msra.mxu0 %v6508
        %8194 = vmatprep.subr.bf16.mxu0 0
        %8195 = vmatpush1.bf16.msra.mxu0 %v6509
        %8196 = vmatprep.subr.bf16.mxu0 0
        %8197 = vmatpush1.bf16.msra.mxu0 %v6510
        %8198 = vmatprep.subr.bf16.mxu0 0
        %8199 = vmatpush1.bf16.msra.mxu0 %v6511
        %8200 = vmatprep.mubr.bf16.mxu0 %v2982
        %8201 = vmatmul.mubr.bf16.gmra.mrb[0].mxu0 %v2981
        %v8202 = vpop.f32.mrb[0].mxu0
        %v8203 = vadd.f32 %v8163, %v8202
        %v8204 = vpop.f32.mrb[0].mxu0
        %v8205 = vpop.f32.mrb[0].mxu0
        %v8206 = vpop.f32.mrb[0].mxu0
        %8207 = vdwg.mxu0
        %8208 = vmatprep.subr.bf16.mxu0 0
        %8209 = vmatpush1.bf16.msra.mxu0 %v6512
        %8210 = vmatprep.subr.bf16.mxu0 0
        %8211 = vmatpush1.bf16.msra.mxu0 %v6513
        %8212 = vmatprep.subr.bf16.mxu0 0
        %8213 = vmatpush1.bf16.msra.mxu0 %v6514
        %8214 = vmatprep.subr.bf16.mxu0 0
        %8215 = vmatpush1.bf16.msra.mxu0 %v6515
        %8216 = vmatprep.subr.bf16.mxu0 0
        %8217 = vmatpush1.bf16.msra.mxu0 %v6516
        %8218 = vmatprep.subr.bf16.mxu0 0
        %8219 = vmatpush1.bf16.msra.mxu0 %v6517
        %8220 = vmatprep.subr.bf16.mxu0 0
        %8221 = vmatpush1.bf16.msra.mxu0 %v6518
        %8222 = vmatprep.subr.bf16.mxu0 0
        %8223 = vmatpush1.bf16.msra.mxu0 %v6519
        %8224 = vmatprep.subr.bf16.mxu0 0
        %8225 = vmatpush1.bf16.msra.mxu0 %v6520
        %8226 = vmatprep.subr.bf16.mxu0 0
        %8227 = vmatpush1.bf16.msra.mxu0 %v6521
        %8228 = vmatprep.subr.bf16.mxu0 0
        %8229 = vmatpush1.bf16.msra.mxu0 %v6522
        %8230 = vmatprep.subr.bf16.mxu0 0
        %8231 = vmatpush1.bf16.msra.mxu0 %v6523
        %8232 = vmatprep.subr.bf16.mxu0 0
        %8233 = vmatpush1.bf16.msra.mxu0 %v6524
        %8234 = vmatprep.subr.bf16.mxu0 0
        %8235 = vmatpush1.bf16.msra.mxu0 %v6525
        %8236 = vmatprep.subr.bf16.mxu0 0
        %8237 = vmatpush1.bf16.msra.mxu0 %v6526
        %8238 = vmatprep.subr.bf16.mxu0 0
        %8239 = vmatpush1.bf16.msra.mxu0 %v6527
        %8240 = vmatprep.mubr.bf16.mxu0 %v2984
        %8241 = vmatmul.mubr.bf16.gmra.mrb[0].mxu0 %v2983
        %v8242 = vpop.f32.mrb[0].mxu0
        %v8243 = vadd.f32 %v8203, %v8242
        %v8244 = vpop.f32.mrb[0].mxu0
        %v8245 = vpop.f32.mrb[0].mxu0
        %v8246 = vpop.f32.mrb[0].mxu0
        %8247 = vdwg.mxu0
        %8248 = vmatprep.subr.bf16.mxu0 0
        %8249 = vmatpush1.bf16.msra.mxu0 %v6528
        %8250 = vmatprep.subr.bf16.mxu0 0
        %8251 = vmatpush1.bf16.msra.mxu0 %v6529
        %8252 = vmatprep.subr.bf16.mxu0 0
        %8253 = vmatpush1.bf16.msra.mxu0 %v6530
        %8254 = vmatprep.subr.bf16.mxu0 0
        %8255 = vmatpush1.bf16.msra.mxu0 %v6531
        %8256 = vmatprep.subr.bf16.mxu0 0
        %8257 = vmatpush1.bf16.msra.mxu0 %v6532
        %8258 = vmatprep.subr.bf16.mxu0 0
        %8259 = vmatpush1.bf16.msra.mxu0 %v6533
        %8260 = vmatprep.subr.bf16.mxu0 0
        %8261 = vmatpush1.bf16.msra.mxu0 %v6534
        %8262 = vmatprep.subr.bf16.mxu0 0
        %8263 = vmatpush1.bf16.msra.mxu0 %v6535
        %8264 = vmatprep.subr.bf16.mxu0 0
        %8265 = vmatpush1.bf16.msra.mxu0 %v6536
        %8266 = vmatprep.subr.bf16.mxu0 0
        %8267 = vmatpush1.bf16.msra.mxu0 %v6537
        %8268 = vmatprep.subr.bf16.mxu0 0
        %8269 = vmatpush1.bf16.msra.mxu0 %v6538
        %8270 = vmatprep.subr.bf16.mxu0 0
        %8271 = vmatpush1.bf16.msra.mxu0 %v6539
        %8272 = vmatprep.subr.bf16.mxu0 0
        %8273 = vmatpush1.bf16.msra.mxu0 %v6540
        %8274 = vmatprep.subr.bf16.mxu0 0
        %8275 = vmatpush1.bf16.msra.mxu0 %v6541
        %8276 = vmatprep.subr.bf16.mxu0 0
        %8277 = vmatpush1.bf16.msra.mxu0 %v6542
        %8278 = vmatprep.subr.bf16.mxu0 0
        %8279 = vmatpush1.bf16.msra.mxu0 %v6543
        %8280 = vmatprep.mubr.bf16.mxu0 %v2986
        %8281 = vmatmul.mubr.bf16.gmra.mrb[0].mxu0 %v2985
        %v8282 = vpop.f32.mrb[0].mxu0
        %v8283 = vadd.f32 %v8243, %v8282
        %v8284 = vpop.f32.mrb[0].mxu0
        %v8285 = vpop.f32.mrb[0].mxu0
        %v8286 = vpop.f32.mrb[0].mxu0
        %8287 = vdwg.mxu0
        %8288 = vmatprep.subr.bf16.mxu0 0
        %8289 = vmatpush1.bf16.msra.mxu0 %v6544
        %8290 = vmatprep.subr.bf16.mxu0 0
        %8291 = vmatpush1.bf16.msra.mxu0 %v6545
        %8292 = vmatprep.subr.bf16.mxu0 0
        %8293 = vmatpush1.bf16.msra.mxu0 %v6546
        %8294 = vmatprep.subr.bf16.mxu0 0
        %8295 = vmatpush1.bf16.msra.mxu0 %v6547
        %8296 = vmatprep.subr.bf16.mxu0 0
        %8297 = vmatpush1.bf16.msra.mxu0 %v6548
        %8298 = vmatprep.subr.bf16.mxu0 0
        %8299 = vmatpush1.bf16.msra.mxu0 %v6549
        %8300 = vmatprep.subr.bf16.mxu0 0
        %8301 = vmatpush1.bf16.msra.mxu0 %v6550
        %8302 = vmatprep.subr.bf16.mxu0 0
        %8303 = vmatpush1.bf16.msra.mxu0 %v6551
        %8304 = vmatprep.subr.bf16.mxu0 0
        %8305 = vmatpush1.bf16.msra.mxu0 %v6552
        %8306 = vmatprep.subr.bf16.mxu0 0
        %8307 = vmatpush1.bf16.msra.mxu0 %v6553
        %8308 = vmatprep.subr.bf16.mxu0 0
        %8309 = vmatpush1.bf16.msra.mxu0 %v6554
        %8310 = vmatprep.subr.bf16.mxu0 0
        %8311 = vmatpush1.bf16.msra.mxu0 %v6555
        %8312 = vmatprep.subr.bf16.mxu0 0
        %8313 = vmatpush1.bf16.msra.mxu0 %v6556
        %8314 = vmatprep.subr.bf16.mxu0 0
        %8315 = vmatpush1.bf16.msra.mxu0 %v6557
        %8316 = vmatprep.subr.bf16.mxu0 0
        %8317 = vmatpush1.bf16.msra.mxu0 %v6558
        %8318 = vmatprep.subr.bf16.mxu0 0
        %8319 = vmatpush1.bf16.msra.mxu0 %v6559
        %8320 = vmatprep.mubr.bf16.mxu0 %v2988
        %8321 = vmatmul.mubr.bf16.gmra.mrb[0].mxu0 %v2987
        %v8322 = vpop.f32.mrb[0].mxu0
        %v8323 = vadd.f32 %v8283, %v8322
        %v8324 = vpop.f32.mrb[0].mxu0
        %v8325 = vpop.f32.mrb[0].mxu0
        %v8326 = vpop.f32.mrb[0].mxu0
        %8327 = vdwg.mxu0
        %8328 = vmatprep.subr.bf16.mxu0 0
        %8329 = vmatpush1.bf16.msra.mxu0 %v6560
        %8330 = vmatprep.subr.bf16.mxu0 0
        %8331 = vmatpush1.bf16.msra.mxu0 %v6561
        %8332 = vmatprep.subr.bf16.mxu0 0
        %8333 = vmatpush1.bf16.msra.mxu0 %v6562
        %8334 = vmatprep.subr.bf16.mxu0 0
        %8335 = vmatpush1.bf16.msra.mxu0 %v6563
        %8336 = vmatprep.subr.bf16.mxu0 0
        %8337 = vmatpush1.bf16.msra.mxu0 %v6564
        %8338 = vmatprep.subr.bf16.mxu0 0
        %8339 = vmatpush1.bf16.msra.mxu0 %v6565
        %8340 = vmatprep.subr.bf16.mxu0 0
        %8341 = vmatpush1.bf16.msra.mxu0 %v6566
        %8342 = vmatprep.subr.bf16.mxu0 0
        %8343 = vmatpush1.bf16.msra.mxu0 %v6567
        %8344 = vmatprep.subr.bf16.mxu0 0
        %8345 = vmatpush1.bf16.msra.mxu0 %v6568
        %8346 = vmatprep.subr.bf16.mxu0 0
        %8347 = vmatpush1.bf16.msra.mxu0 %v6569
        %8348 = vmatprep.subr.bf16.mxu0 0
        %8349 = vmatpush1.bf16.msra.mxu0 %v6570
        %8350 = vmatprep.subr.bf16.mxu0 0
        %8351 = vmatpush1.bf16.msra.mxu0 %v6571
        %8352 = vmatprep.subr.bf16.mxu0 0
        %8353 = vmatpush1.bf16.msra.mxu0 %v6572
        %8354 = vmatprep.subr.bf16.mxu0 0
        %8355 = vmatpush1.bf16.msra.mxu0 %v6573
        %8356 = vmatprep.subr.bf16.mxu0 0
        %8357 = vmatpush1.bf16.msra.mxu0 %v6574
        %8358 = vmatprep.subr.bf16.mxu0 0
        %8359 = vmatpush1.bf16.msra.mxu0 %v6575
        %8360 = vmatprep.mubr.bf16.mxu0 %v2990
        %8361 = vmatmul.mubr.bf16.gmra.mrb[0].mxu0 %v2989
        %v8362 = vpop.f32.mrb[0].mxu0
        %v8363 = vadd.f32 %v8323, %v8362
        %v8364 = vpop.f32.mrb[0].mxu0
        %v8365 = vpop.f32.mrb[0].mxu0
        %v8366 = vpop.f32.mrb[0].mxu0
        %8367 = vdwg.mxu0
        %v8368 = vadd.f32 %v2991, %v8363
        %8369 = vst [vmem:[#allocation3] sm:$0x3] %v8368
        %p8370 = scmp.eq.s32.totalorder %s21, 1
        // Predicated region
        $region61: #{image_nn_forward.1} parent=55 // pred_check
          %p8371 = pneg %p8370
        $region62: #{image_nn_forward.1} parent=55 // pred_check_branch
          %8373 = sbr.rel (%p8371) target = $region64
        $region63: #{image_nn_forward.1} parent=55 // pred_region
          %v8374 = vld [vmem:[#allocation3] sm:$0x3]
          %v8375 = vld [vmem:[%s4] sm:$0x1]
          %v8377 = vlaneseq
          %v8378 = vshrl.u32 %v8377, 7
          %v8379 = vsub.s32 0, %v8378
          %v8380 = vrot.slane %v8375, %v8379
          %v8382 = vadd.f32 %v8374, %v8380
          %v8383 = vmax.f32 %v8382, 0.0
          %v8384 = vld [vmem:[%s5] sm:$0xff]
          %v8385 = vld [vmem:[%s5 + $0x8] sm:$0xff]
          %v8386 = vld [vmem:[%s5 + $0x10] sm:$0xff]
          %v8387 = vld [vmem:[%s5 + $0x18] sm:$0xff]
          %v8388 = vld [vmem:[%s5 + $0x20] sm:$0xff]
          %v8389 = vld [vmem:[%s5 + $0x28] sm:$0xff]
          %v8390 = vld [vmem:[%s5 + $0x30] sm:$0xff]
          %v8391 = vld [vmem:[%s5 + $0x38] sm:$0xff]
          %v8392 = vld [vmem:[%s5 + $0x40] sm:$0xff]
          %v8393 = vld [vmem:[%s5 + $0x48] sm:$0xff]
          %v8394 = vld [vmem:[%s5 + $0x50] sm:$0xff]
          %v8395 = vld [vmem:[%s5 + $0x58] sm:$0xff]
          %v8396 = vld [vmem:[%s5 + $0x60] sm:$0xff]
          %v8397 = vld [vmem:[%s5 + $0x68] sm:$0xff]
          %v8398 = vld [vmem:[%s5 + $0x70] sm:$0xff]
          %v8399 = vld [vmem:[%s5 + $0x78] sm:$0xff]
          %v8400 = vld [vmem:[%s6] sm:$0x1]
          %v8402 = vlaneseq
          %v8403 = vshrl.u32 %v8402, 7
          %v8404 = vsub.s32 0, %v8403
          %v8405 = vrot.slane %v8400, %v8404
          %8407 = vmatprep.subr.mxu0 0.0
          %8408 = vmatpush1.msra.mxu0 %v8384
          %8409 = vmatprep.subr.mxu0 0.0
          %8410 = vmatpush1.msra.mxu0 %v8385
          %8411 = vmatprep.subr.mxu0 0.0
          %8412 = vmatpush1.msra.mxu0 %v8386
          %8413 = vmatprep.subr.mxu0 0.0
          %8414 = vmatpush1.msra.mxu0 %v8387
          %8415 = vmatprep.subr.mxu0 0.0
          %8416 = vmatpush1.msra.mxu0 %v8388
          %8417 = vmatprep.subr.mxu0 0.0
          %8418 = vmatpush1.msra.mxu0 %v8389
          %8419 = vmatprep.subr.mxu0 0.0
          %8420 = vmatpush1.msra.mxu0 %v8390
          %8421 = vmatprep.subr.mxu0 0.0
          %8422 = vmatpush1.msra.mxu0 %v8391
          %8423 = vmatprep.subr.mxu0 0.0
          %8424 = vmatpush1.msra.mxu0 %v8392
          %8425 = vmatprep.subr.mxu0 0.0
          %8426 = vmatpush1.msra.mxu0 %v8393
          %8427 = vmatprep.subr.mxu0 0.0
          %8428 = vmatpush1.msra.mxu0 %v8394
          %8429 = vmatprep.subr.mxu0 0.0
          %8430 = vmatpush1.msra.mxu0 %v8395
          %8431 = vmatprep.subr.mxu0 0.0
          %8432 = vmatpush1.msra.mxu0 %v8396
          %8433 = vmatprep.subr.mxu0 0.0
          %8434 = vmatpush1.msra.mxu0 %v8397
          %8435 = vmatprep.subr.mxu0 0.0
          %8436 = vmatpush1.msra.mxu0 %v8398
          %8437 = vmatprep.subr.mxu0 0.0
          %8438 = vmatpush1.msra.mxu0 %v8399
          %8439 = vmatprep.subr.mxu0 0.0
          %8440 = vmatpush1.msra.mxu0 0.0
          %8441 = vmatprep.subr.mxu0 0.0
          %8442 = vmatpush1.msra.mxu0 0.0
          %8443 = vmatprep.subr.mxu0 0.0
          %8444 = vmatpush1.msra.mxu0 0.0
          %8445 = vmatprep.subr.mxu0 0.0
          %8446 = vmatpush1.msra.mxu0 0.0
          %8447 = vmatprep.subr.mxu0 0.0
          %8448 = vmatpush1.msra.mxu0 0.0
          %8449 = vmatprep.subr.mxu0 0.0
          %8450 = vmatpush1.msra.mxu0 0.0
          %8451 = vmatprep.subr.mxu0 0.0
          %8452 = vmatpush1.msra.mxu0 0.0
          %8453 = vmatprep.subr.mxu0 0.0
          %8454 = vmatpush1.msra.mxu0 0.0
          %8455 = vmatprep.subr.mxu0 0.0
          %8456 = vmatpush1.msra.mxu0 0.0
          %8457 = vmatprep.subr.mxu0 0.0
          %8458 = vmatpush1.msra.mxu0 0.0
          %8459 = vmatprep.subr.mxu0 0.0
          %8460 = vmatpush1.msra.mxu0 0.0
          %8461 = vmatprep.subr.mxu0 0.0
          %8462 = vmatpush1.msra.mxu0 0.0
          %8463 = vmatprep.subr.mxu0 0.0
          %8464 = vmatpush1.msra.mxu0 0.0
          %8465 = vmatprep.subr.mxu0 0.0
          %8466 = vmatpush1.msra.mxu0 0.0
          %8467 = vmatprep.subr.mxu0 0.0
          %8468 = vmatpush1.msra.mxu0 0.0
          %8469 = vmatprep.subr.mxu0 0.0
          %8470 = vmatpush1.msra.mxu0 0.0
          %8471 = vmatprep.mubr.f32.mxu0 0.0
          %8472 = vmatmul.mubr.f32.gmra.mrb[0].mxu0 %v8383
          %v8473 = vpop.f32.mrb[0].mxu0
          %v8474 = vadd.f32 %v8405, %v8473
          %v8475 = vpop.f32.mrb[0].mxu0
          %8476 = vdwg.mxu0
          %v8477 = vmax.f32 %v8474, 0.0
          %v8478 = vld [vmem:[%s7] sm:$0xff]
          %v8479 = vld [vmem:[%s7 + $0x8] sm:$0xff]
          %v8480 = vld [vmem:[%s7 + $0x10] sm:$0xff]
          %v8481 = vld [vmem:[%s7 + $0x18] sm:$0xff]
          %v8482 = vld [vmem:[%s7 + $0x20] sm:$0xff]
          %v8483 = vld [vmem:[%s7 + $0x28] sm:$0xff]
          %v8484 = vld [vmem:[%s7 + $0x30] sm:$0xff]
          %v8485 = vld [vmem:[%s7 + $0x38] sm:$0xff]
          %v8486 = vld [vmem:[%s8] sm:$0x1]
          %v8488 = vlaneseq
          %v8489 = vshrl.u32 %v8488, 7
          %v8490 = vsub.s32 0, %v8489
          %v8491 = vrot.slane %v8486, %v8490
          %vm8493 = vcmask 523264
          %v8495 = vsel %vm8493, %v8477, 0
          %8497 = vmatprep.subr.mxu0 0.0
          %8498 = vmatpush1.msra.mxu0 %v8478
          %8499 = vmatprep.subr.mxu0 0.0
          %8500 = vmatpush1.msra.mxu0 %v8479
          %8501 = vmatprep.subr.mxu0 0.0
          %8502 = vmatpush1.msra.mxu0 %v8480
          %8503 = vmatprep.subr.mxu0 0.0
          %8504 = vmatpush1.msra.mxu0 %v8481
          %8505 = vmatprep.subr.mxu0 0.0
          %8506 = vmatpush1.msra.mxu0 %v8482
          %8507 = vmatprep.subr.mxu0 0.0
          %8508 = vmatpush1.msra.mxu0 %v8483
          %8509 = vmatprep.subr.mxu0 0.0
          %8510 = vmatpush1.msra.mxu0 %v8484
          %8511 = vmatprep.subr.mxu0 0.0
          %8512 = vmatpush1.msra.mxu0 %v8485
          %8513 = vmatprep.subr.mxu0 0.0
          %8514 = vmatpush1.msra.mxu0 0.0
          %8515 = vmatprep.subr.mxu0 0.0
          %8516 = vmatpush1.msra.mxu0 0.0
          %8517 = vmatprep.subr.mxu0 0.0
          %8518 = vmatpush1.msra.mxu0 0.0
          %8519 = vmatprep.subr.mxu0 0.0
          %8520 = vmatpush1.msra.mxu0 0.0
          %8521 = vmatprep.subr.mxu0 0.0
          %8522 = vmatpush1.msra.mxu0 0.0
          %8523 = vmatprep.subr.mxu0 0.0
          %8524 = vmatpush1.msra.mxu0 0.0
          %8525 = vmatprep.subr.mxu0 0.0
          %8526 = vmatpush1.msra.mxu0 0.0
          %8527 = vmatprep.subr.mxu0 0.0
          %8528 = vmatpush1.msra.mxu0 0.0
          %8529 = vmatprep.subr.mxu0 0.0
          %8530 = vmatpush1.msra.mxu0 0.0
          %8531 = vmatprep.subr.mxu0 0.0
          %8532 = vmatpush1.msra.mxu0 0.0
          %8533 = vmatprep.subr.mxu0 0.0
          %8534 = vmatpush1.msra.mxu0 0.0
          %8535 = vmatprep.subr.mxu0 0.0
          %8536 = vmatpush1.msra.mxu0 0.0
          %8537 = vmatprep.subr.mxu0 0.0
          %8538 = vmatpush1.msra.mxu0 0.0
          %8539 = vmatprep.subr.mxu0 0.0
          %8540 = vmatpush1.msra.mxu0 0.0
          %8541 = vmatprep.subr.mxu0 0.0
          %8542 = vmatpush1.msra.mxu0 0.0
          %8543 = vmatprep.subr.mxu0 0.0
          %8544 = vmatpush1.msra.mxu0 0.0
          %8545 = vmatprep.subr.mxu0 0.0
          %8546 = vmatpush1.msra.mxu0 0.0
          %8547 = vmatprep.subr.mxu0 0.0
          %8548 = vmatpush1.msra.mxu0 0.0
          %8549 = vmatprep.subr.mxu0 0.0
          %8550 = vmatpush1.msra.mxu0 0.0
          %8551 = vmatprep.subr.mxu0 0.0
          %8552 = vmatpush1.msra.mxu0 0.0
          %8553 = vmatprep.subr.mxu0 0.0
          %8554 = vmatpush1.msra.mxu0 0.0
          %8555 = vmatprep.subr.mxu0 0.0
          %8556 = vmatpush1.msra.mxu0 0.0
          %8557 = vmatprep.subr.mxu0 0.0
          %8558 = vmatpush1.msra.mxu0 0.0
          %8559 = vmatprep.subr.mxu0 0.0
          %8560 = vmatpush1.msra.mxu0 0.0
          %8561 = vmatprep.mubr.f32.mxu0 0.0
          %8562 = vmatmul.mubr.f32.gmra.mrb[0].mxu0 %v8495
          %v8563 = vpop.f32.mrb[0].mxu0
          %v8564 = vadd.f32 %v8491, %v8563
          %v8565 = vpop.f32.mrb[0].mxu0
          %8566 = vdwg.mxu0
          %vm8567 = vcmask 74752
          %8568 = vst.msk [vmem:[#allocation4] sm:$0x3] %vm8567, %v8564
        $region64: #{image_nn_forward.1} parent=55 // pred_fallthru
          _
        // Predicated region
        $region65: #{image_nn_forward.1} parent=55 // pred_check
          %p8569 = pneg %p228
        $region66: #{image_nn_forward.1} parent=55 // pred_check_branch
          %8571 = sbr.rel (%p8569) target = $region68
        $region67: #{image_nn_forward.1} parent=55 // pred_region
          %s8573 = ssub.s32 32, 32
          %8574 = vsyncadd [#allocation5], %s8573
          %s8576 = sshll.u32 [#allocation4], 4
          %s8577 = int_to_ptr.vmem [resolvable:$true] %s8576
          %8579 = dma.vmem_to_hbm [thread:$0]  %s8577, 32, %s9, [#allocation5]
        $region68: #{image_nn_forward.1} parent=55 // pred_fallthru
          _
        // Predicated region
        $region69: #{image_nn_forward.1} parent=55 // pred_check
          %p8580 = pneg %p228
        $region70: #{image_nn_forward.1} parent=55 // pred_check_branch
          %8582 = sbr.rel (%p8580) target = $region72
        $region71: #{image_nn_forward.1} parent=55 // pred_region
          %8583 = dma.done [#allocation5], 32
        $region72: #{image_nn_forward.1} parent=55 // pred_fallthru
          _
      $region56: #{image_nn_forward.1} parent=5 // pred_fallthru
        _
      %p8584 = scmp.le.s32.totalorder 2, %s16
      // Predicated region
      $region73: #{image_nn_forward.1} parent=5 // pred_check
        %p8585 = pneg %p8584
      $region74: #{image_nn_forward.1} parent=5 // pred_check_branch
        %8587 = sbr.rel (%p8585) target = $region76
      $region75: #{image_nn_forward.1} parent=5 // pred_region
        %s8588 = ssub.s32 %s16, 2
      $region76: #{image_nn_forward.1} parent=5 // pred_fallthru
        _
    $region6: #{image_nn_forward.1} parent=1 // loop_footer
      %s20 = sadd.s32 1, %s16
    $region7: #{image_nn_forward.1} parent=1 // loop_footer_branch
      %15 = sbr.rel target = $region3
    $region8: #{image_nn_forward.1} parent=1 // loop_exit
      _
    %8589 = vsyncpa [#allocation5], 1
    %s8590 = scalar_lea.sflag [#allocation5], 1
    %8591 = vsyncpa %s8590, 1

</llo_original>
